<compile_context>
chip_gen: v7x
topology: tpu7x:2x2x1
jax: 0.10.0
libtpu: 0.0.40
codegen_flags: <defaults>
</compile_context>

<pallas_src>
import functools

import jax
import jax.numpy as jnp
from jax.experimental import pallas as pl
from jax.experimental.pallas import tpu as pltpu

BN_EPS = 1e-5
LEAKY_SLOPE = 0.2        # PyG GATConv default negative_slope
NEG_BIG = -1e9           # finite "-inf": keeps fully-masked (padded) rows NaN-free

# Row indices into the packed parameter-vector slab.
(_B1, _BN1_W, _BN1_B, _B2, _PN_W, _PN_B,
 _G1_B, _BNA_W, _BNA_B, _G2_B, _BNB_W, _BNB_B) = range(12)


# ---------------------------------------------------------------------------
# Fused Pallas kernel: whole TemporalGAT forward (edge_time=None, deterministic)
# ---------------------------------------------------------------------------
def temporal_gat_kernel(x_ref, adjb_ref, mrow_ref, ones_ref,
                        w1_ref, w2_ref, g1w_ref, g2w_ref, vecs_ref,
                        out_ref, *, num_heads, head_dim, proj_dim, hidden_dim, gat_total):
    f32 = jnp.float32
    bf16 = jnp.bfloat16

    mrow = mrow_ref[...]                      # [1, Np]  node-mask / num_nodes
    ones_col = ones_ref[...]                  # [Np, 1]
    adj_bias = adjb_ref[...].astype(f32)      # [Np, Np] 0 on edge/self-loop, -1e9 otherwise

    def vec(i, width):
        return vecs_ref[i:i + 1, :width]      # [1, width] static slice of packed slab

    def bn(v, w_idx, b_idx, width):
        # Masked BatchNorm1d (training/batch statistics, biased variance).
        # Sublane reductions done on the MXU:  mean = (mask/N) @ v ; E[x^2] = (mask/N) @ v*v
        mean = jnp.dot(mrow, v, preferred_element_type=f32)        # [1, C]
        ex2 = jnp.dot(mrow, v * v, preferred_element_type=f32)     # [1, C]
        var = ex2 - mean * mean
        return (v - mean) * jax.lax.rsqrt(var + BN_EPS) * vec(w_idx, width) + vec(b_idx, width)

    def elu(v):
        # exp(min(v,0)) keeps the (unused) false-branch finite.
        return jnp.where(v > 0, v, jnp.exp(jnp.minimum(v, 0.0)) - 1.0)

    def gat(h_bf16, gw_ref, bias_idx):
        """One GATConv layer (heads, concat=True, self-loops folded into adj_bias)."""
        # Single fused MXU matmul: [Np, H*F + 2H] = hp | e_dst | e_src
        fused = jnp.dot(h_bf16, gw_ref[...], preferred_element_type=f32)
        hf = num_heads * head_dim
        hp = fused[:, :hf]                                      # [Np, H*F]
        e_dst = fused[:, hf:hf + num_heads]                     # [Np, H]
        e_src = fused[:, hf + num_heads:hf + 2 * num_heads]     # [Np, H]
        e_src_t = e_src.T                                       # [H, Np] one transpose / layer
        hp_mx = hp.astype(bf16)
        head_outs = []
        for hd in range(num_heads):
            lo = hd * head_dim
            logits = e_dst[:, hd:hd + 1] + e_src_t[hd:hd + 1, :]        # [Np_dst, Np_src]
            logits = jnp.where(logits > 0, logits, LEAKY_SLOPE * logits)  # LeakyReLU (VPU)
            logits = logits + adj_bias                                   # additive edge mask
            m = jnp.max(logits, axis=-1, keepdims=True)                  # XLU (must stay)
            p = jnp.exp(logits - m)                                      # EUP
            denom = jnp.dot(p, ones_col, preferred_element_type=f32)     # MXU row-sum
            alpha = p * pl.reciprocal(denom, approx=True)
            # TODO(synk): attention-coefficient dropout skipped (deterministic forward).
            head_outs.append(jnp.dot(alpha.astype(bf16), hp_mx[:, lo:lo + head_dim],
                                     preferred_element_type=f32))        # [Np, F]
        # Assemble all heads + bias once -> single lane-dense value.
        return jnp.concatenate(head_outs, axis=-1) + vec(bias_idx, gat_total)

    # ---- input_projection: Linear -> ReLU -> BN -> (Dropout=id) -> Linear ----
    h = jnp.dot(x_ref[...], w1_ref[...], preferred_element_type=f32) + vec(_B1, proj_dim)
    h = jnp.maximum(h, 0.0)
    h = bn(h, _BN1_W, _BN1_B, proj_dim)
    # TODO(synk): feature dropout is stochastic; treated as identity (deterministic forward).
    h = jnp.dot(h.astype(bf16), w2_ref[...], preferred_element_type=f32) + vec(_B2, hidden_dim)
    # ---- proj_norm + ReLU ----
    h = bn(h, _PN_W, _PN_B, hidden_dim)
    h = jnp.maximum(h, 0.0)

    # ---- gat1 -> BN -> ELU ----
    g = gat(h.astype(bf16), g1w_ref, _G1_B)
    g = elu(bn(g, _BNA_W, _BNA_B, gat_total))
    # ---- gat2 -> BN -> ELU ----
    g = gat(g.astype(bf16), g2w_ref, _G2_B)
    g = elu(bn(g, _BNB_W, _BNB_B, gat_total))

    out_ref[...] = g    # single full-width [Np, H*F] store


# ---------------------------------------------------------------------------
# Parameter construction (deterministic, kaiming-ish normal init)
# ---------------------------------------------------------------------------
def init_params(key, node_features, hidden_channels, num_heads):
    projection_dim = min(hidden_channels * 4, node_features * 2)
    head_dim = hidden_channels // num_heads
    gat_total = head_dim * num_heads
    ks = jax.random.split(key, 8)

    def kaiming(k, fan_in, fan_out):
        std = (2.0 / fan_out) ** 0.5  # kaiming_normal_, mode='fan_out', relu gain
        return std * jax.random.normal(k, (fan_in, fan_out), jnp.float32)

    p = {
        # input_projection
        "w1": kaiming(ks[0], node_features, projection_dim),
        "b1": jnp.zeros((1, projection_dim), jnp.float32),
        "bn1_w": jnp.ones((1, projection_dim), jnp.float32),
        "bn1_b": jnp.zeros((1, projection_dim), jnp.float32),
        "w2": kaiming(ks[1], projection_dim, hidden_channels),
        "b2": jnp.zeros((1, hidden_channels), jnp.float32),
        "pn_w": jnp.ones((1, hidden_channels), jnp.float32),
        "pn_b": jnp.zeros((1, hidden_channels), jnp.float32),
        # gat1
        "gat1_w": 0.1 * jax.random.normal(ks[2], (hidden_channels, gat_total), jnp.float32),
        "gat1_att_src": 0.1 * jax.random.normal(ks[3], (num_heads, head_dim), jnp.float32),
        "gat1_att_dst": 0.1 * jax.random.normal(ks[4], (num_heads, head_dim), jnp.float32),
        "gat1_bias": jnp.zeros((1, gat_total), jnp.float32),
        "bnA_w": jnp.ones((1, gat_total), jnp.float32),
        "bnA_b": jnp.zeros((1, gat_total), jnp.float32),
        # gat2
        "gat2_w": 0.1 * jax.random.normal(ks[5], (gat_total, gat_total), jnp.float32),
        "gat2_att_src": 0.1 * jax.random.normal(ks[6], (num_heads, head_dim), jnp.float32),
        "gat2_att_dst": 0.1 * jax.random.normal(ks[7], (num_heads, head_dim), jnp.float32),
        "gat2_bias": jnp.zeros((1, gat_total), jnp.float32),
        "bnB_w": jnp.ones((1, gat_total), jnp.float32),
        "bnB_b": jnp.zeros((1, gat_total), jnp.float32),
    }
    return p, head_dim, gat_total


def _block_diag_att(att):
    """[H, F] per-head attention vector -> block-diagonal [H*F, H] matrix."""
    num_heads, head_dim = att.shape
    out = jnp.zeros((num_heads * head_dim, num_heads), jnp.float32)
    for hd in range(num_heads):
        out = out.at[hd * head_dim:(hd + 1) * head_dim, hd].set(att[hd])
    return out


def prepare_params(params):
    """Once-per-model host work: fuse attention projections into GAT weights, cast matmul
    operands to bf16 (all TPU generations), pack tiny [1,C] vectors into one slab."""
    bf16 = jnp.bfloat16

    def fuse(w, att_dst, att_src):
        # [K, H*F + 2H] : hp | e_dst | e_src produced by a single matmul in-kernel.
        return jnp.concatenate(
            [w, w @ _block_diag_att(att_dst), w @ _block_diag_att(att_src)],
            axis=1).astype(bf16)

    vec_keys = ("b1", "bn1_w", "bn1_b", "b2", "pn_w", "pn_b",
                "gat1_bias", "bnA_w", "bnA_b", "gat2_bias", "bnB_w", "bnB_b")
    width = max(params[k].shape[1] for k in vec_keys)
    vecs = jnp.concatenate(
        [jnp.pad(params[k], ((0, 0), (0, width - params[k].shape[1]))) for k in vec_keys],
        axis=0)                                              # [12, width] f32 slab

    return {
        "w1": params["w1"].astype(bf16),
        "w2": params["w2"].astype(bf16),
        "g1w": fuse(params["gat1_w"], params["gat1_att_dst"], params["gat1_att_src"]),
        "g2w": fuse(params["gat2_w"], params["gat2_att_dst"], params["gat2_att_src"]),
        "vecs": vecs,
    }


# ---------------------------------------------------------------------------
# Forward (jitted wrapper; no grid, everything resident in VMEM)
# ---------------------------------------------------------------------------
@functools.partial(jax.jit, static_argnames=("num_heads", "head_dim", "num_nodes", "n_pad"))
def temporal_gat_forward(prep, x, edge_index, *, num_heads, head_dim, num_nodes, n_pad=128):
    assert n_pad >= num_nodes and n_pad % 8 == 0
    proj_dim = prep["w1"].shape[1]
    hidden_dim = prep["w2"].shape[1]
    gat_total = num_heads * head_dim

    x_pad = jnp.pad(x, ((0, n_pad - num_nodes), (0, 0))).astype(jnp.bfloat16)

    # Additive adjacency bias mask adj_bias[dst, src]: 0 on edges / self-loops of real
    # nodes, NEG_BIG elsewhere (including all padded rows/cols). Shipped as bf16.
    adj_bias = jnp.full((n_pad, n_pad), NEG_BIG, jnp.float32)
    adj_bias = adj_bias.at[edge_index[1], edge_index[0]].set(0.0)
    idx = jnp.arange(num_nodes)
    adj_bias = adj_bias.at[idx, idx].set(0.0)
    adj_bias = adj_bias.astype(jnp.bfloat16)

    # (mask / N) as a lane-dense row -> BN statistics become MXU matmuls in-kernel.
    mask_row = ((jnp.arange(n_pad) < num_nodes).astype(jnp.float32) / num_nodes
                ).reshape(1, n_pad)
    ones_col = jnp.ones((n_pad, 1), jnp.float32)

    inputs = [x_pad, adj_bias, mask_row, ones_col,
              prep["w1"], prep["w2"], prep["g1w"], prep["g2w"], prep["vecs"]]

    kernel = functools.partial(
        temporal_gat_kernel, num_heads=num_heads, head_dim=head_dim,
        proj_dim=proj_dim, hidden_dim=hidden_dim, gat_total=gat_total)

    vmem_spec = pl.BlockSpec(memory_space=pltpu.MemorySpace.VMEM)
    out = pl.pallas_call(
        kernel,
        out_shape=jax.ShapeDtypeStruct((n_pad, gat_total), jnp.float32),
        in_specs=[vmem_spec] * len(inputs),
        out_specs=vmem_spec,
    )(*inputs)
    # TODO(synk): for large graphs (n_pad >~ 1-2k) the dense [Np,Np] adjacency would need a
    # tiled dst-axis grid + vmem_limit_bytes; at n_pad=128 everything fits comfortably.
    return out[:num_nodes]


# ---------------------------------------------------------------------------
if __name__ == "__main__":
    NODE_FEATURES = 16
    HIDDEN = 32
    NUM_HEADS = 4
    N_NODES = 64
    N_EDGES = 128

    key = jax.random.PRNGKey(0)
    k_param, k_x, k_src, k_dst = jax.random.split(key, 4)

    params, head_dim, gat_total = init_params(k_param, NODE_FEATURES, HIDDEN, NUM_HEADS)
    prep = prepare_params(params)   # host-side once: fuse + bf16 cast + slab pack

    x = jax.random.normal(k_x, (N_NODES, NODE_FEATURES), jnp.float32)
    src = jax.random.randint(k_src, (N_EDGES,), 0, N_NODES, jnp.int32)
    dst = jax.random.randint(k_dst, (N_EDGES,), 0, N_NODES, jnp.int32)
    edge_index = jnp.stack([src, dst], axis=0)          # [2, E]

    out = temporal_gat_forward(prep, x, edge_index, num_heads=NUM_HEADS,
                               head_dim=head_dim, num_nodes=N_NODES, n_pad=128)
    out = jax.block_until_ready(out)
    assert out.shape == (N_NODES, gat_total)
    assert bool(jnp.all(jnp.isfinite(out)))
    print("KERNEL_OK")
</pallas_src>

<mosaic_0001>
module attributes {stable_mosaic.version = 11 : i64} {
  func.func @temporal_gat_kernel(%arg0: memref<128x16xbf16, #tpu.memory_space<vmem>>, %arg1: memref<128x128xbf16, #tpu.memory_space<vmem>>, %arg2: memref<1x128xf32, #tpu.memory_space<vmem>>, %arg3: memref<128x1xf32, #tpu.memory_space<vmem>>, %arg4: memref<16x32xbf16, #tpu.memory_space<vmem>>, %arg5: memref<32x32xbf16, #tpu.memory_space<vmem>>, %arg6: memref<32x40xbf16, #tpu.memory_space<vmem>>, %arg7: memref<32x40xbf16, #tpu.memory_space<vmem>>, %arg8: memref<12x32xf32, #tpu.memory_space<vmem>>, %arg9: memref<128x32xf32, #tpu.memory_space<vmem>>) attributes {dimension_semantics = [], scalar_prefetch = 0 : i64, scratch_operands = 0 : i64, tpu.core_type = #tpu.core_type<tc>} {
    %c0 = arith.constant 0 : index
    %c0_0 = arith.constant 0 : index
    %0 = vector.load %arg2[%c0, %c0_0] : memref<1x128xf32, #tpu.memory_space<vmem>>, vector<1x128xf32>
    %c0_1 = arith.constant 0 : index
    %c0_2 = arith.constant 0 : index
    %1 = vector.load %arg3[%c0_1, %c0_2] : memref<128x1xf32, #tpu.memory_space<vmem>>, vector<128x1xf32>
    %c0_3 = arith.constant 0 : index
    %c0_4 = arith.constant 0 : index
    %2 = vector.load %arg1[%c0_3, %c0_4] : memref<128x128xbf16, #tpu.memory_space<vmem>>, vector<128x128xbf16>
    %3 = arith.extf %2 : vector<128x128xbf16> to vector<128x128xf32>
    %c0_5 = arith.constant 0 : index
    %c0_6 = arith.constant 0 : index
    %4 = vector.load %arg0[%c0_5, %c0_6] : memref<128x16xbf16, #tpu.memory_space<vmem>>, vector<128x16xbf16>
    %c0_7 = arith.constant 0 : index
    %c0_8 = arith.constant 0 : index
    %5 = vector.load %arg4[%c0_7, %c0_8] : memref<16x32xbf16, #tpu.memory_space<vmem>>, vector<16x32xbf16>
    %cst = arith.constant dense<0.000000e+00> : vector<128x32xf32>
    %6 = tpu.matmul %4, %5, %cst {dimension_numbers = #tpu.dot_dimension_numbers<[1], [0], [0], [1], [0, 0, 1, 1], [], []>} : vector<128x16xbf16>, vector<16x32xbf16>, vector<128x32xf32> -> vector<128x32xf32>
    %c0_9 = arith.constant 0 : index
    %c0_10 = arith.constant 0 : index
    %7 = vector.load %arg8[%c0_9, %c0_10] : memref<12x32xf32, #tpu.memory_space<vmem>>, vector<1x32xf32>
    %8 = vector.broadcast %7 : vector<1x32xf32> to vector<128x32xf32>
    %9 = arith.addf %6, %8 : vector<128x32xf32>
    %cst_11 = arith.constant 0.000000e+00 : f32
    %10 = vector.broadcast %cst_11 : f32 to vector<128x32xf32>
    %11 = arith.maximumf %9, %10 : vector<128x32xf32>
    %cst_12 = arith.constant dense<0.000000e+00> : vector<1x32xf32>
    %12 = tpu.matmul %0, %11, %cst_12 {dimension_numbers = #tpu.dot_dimension_numbers<[1], [0], [0], [1], [0, 0, 1, 1], [], []>} : vector<1x128xf32>, vector<128x32xf32>, vector<1x32xf32> -> vector<1x32xf32>
    %13 = arith.mulf %11, %11 : vector<128x32xf32>
    %cst_13 = arith.constant dense<0.000000e+00> : vector<1x32xf32>
    %14 = tpu.matmul %0, %13, %cst_13 {dimension_numbers = #tpu.dot_dimension_numbers<[1], [0], [0], [1], [0, 0, 1, 1], [], []>} : vector<1x128xf32>, vector<128x32xf32>, vector<1x32xf32> -> vector<1x32xf32>
    %15 = arith.mulf %12, %12 : vector<1x32xf32>
    %16 = arith.subf %14, %15 : vector<1x32xf32>
    %17 = vector.broadcast %12 : vector<1x32xf32> to vector<128x32xf32>
    %18 = arith.subf %11, %17 : vector<128x32xf32>
    %cst_14 = arith.constant 9.99999974E-6 : f32
    %19 = vector.broadcast %cst_14 : f32 to vector<1x32xf32>
    %20 = arith.addf %16, %19 : vector<1x32xf32>
    %21 = math.rsqrt %20 : vector<1x32xf32>
    %22 = vector.broadcast %21 : vector<1x32xf32> to vector<128x32xf32>
    %23 = arith.mulf %18, %22 : vector<128x32xf32>
    %c1 = arith.constant 1 : index
    %c0_15 = arith.constant 0 : index
    %24 = vector.load %arg8[%c1, %c0_15] : memref<12x32xf32, #tpu.memory_space<vmem>>, vector<1x32xf32>
    %25 = vector.broadcast %24 : vector<1x32xf32> to vector<128x32xf32>
    %26 = arith.mulf %23, %25 : vector<128x32xf32>
    %c2 = arith.constant 2 : index
    %c0_16 = arith.constant 0 : index
    %27 = vector.load %arg8[%c2, %c0_16] : memref<12x32xf32, #tpu.memory_space<vmem>>, vector<1x32xf32>
    %28 = vector.broadcast %27 : vector<1x32xf32> to vector<128x32xf32>
    %29 = arith.addf %26, %28 : vector<128x32xf32>
    %30 = arith.truncf %29 : vector<128x32xf32> to vector<128x32xbf16>
    %c0_17 = arith.constant 0 : index
    %c0_18 = arith.constant 0 : index
    %31 = vector.load %arg5[%c0_17, %c0_18] : memref<32x32xbf16, #tpu.memory_space<vmem>>, vector<32x32xbf16>
    %cst_19 = arith.constant dense<0.000000e+00> : vector<128x32xf32>
    %32 = tpu.matmul %30, %31, %cst_19 {dimension_numbers = #tpu.dot_dimension_numbers<[1], [0], [0], [1], [0, 0, 1, 1], [], []>} : vector<128x32xbf16>, vector<32x32xbf16>, vector<128x32xf32> -> vector<128x32xf32>
    %c3 = arith.constant 3 : index
    %c0_20 = arith.constant 0 : index
    %33 = vector.load %arg8[%c3, %c0_20] : memref<12x32xf32, #tpu.memory_space<vmem>>, vector<1x32xf32>
    %34 = vector.broadcast %33 : vector<1x32xf32> to vector<128x32xf32>
    %35 = arith.addf %32, %34 : vector<128x32xf32>
    %cst_21 = arith.constant dense<0.000000e+00> : vector<1x32xf32>
    %36 = tpu.matmul %0, %35, %cst_21 {dimension_numbers = #tpu.dot_dimension_numbers<[1], [0], [0], [1], [0, 0, 1, 1], [], []>} : vector<1x128xf32>, vector<128x32xf32>, vector<1x32xf32> -> vector<1x32xf32>
    %37 = arith.mulf %35, %35 : vector<128x32xf32>
    %cst_22 = arith.constant dense<0.000000e+00> : vector<1x32xf32>
    %38 = tpu.matmul %0, %37, %cst_22 {dimension_numbers = #tpu.dot_dimension_numbers<[1], [0], [0], [1], [0, 0, 1, 1], [], []>} : vector<1x128xf32>, vector<128x32xf32>, vector<1x32xf32> -> vector<1x32xf32>
    %39 = arith.mulf %36, %36 : vector<1x32xf32>
    %40 = arith.subf %38, %39 : vector<1x32xf32>
    %41 = vector.broadcast %36 : vector<1x32xf32> to vector<128x32xf32>
    %42 = arith.subf %35, %41 : vector<128x32xf32>
    %cst_23 = arith.constant 9.99999974E-6 : f32
    %43 = vector.broadcast %cst_23 : f32 to vector<1x32xf32>
    %44 = arith.addf %40, %43 : vector<1x32xf32>
    %45 = math.rsqrt %44 : vector<1x32xf32>
    %46 = vector.broadcast %45 : vector<1x32xf32> to vector<128x32xf32>
    %47 = arith.mulf %42, %46 : vector<128x32xf32>
    %c4 = arith.constant 4 : index
    %c0_24 = arith.constant 0 : index
    %48 = vector.load %arg8[%c4, %c0_24] : memref<12x32xf32, #tpu.memory_space<vmem>>, vector<1x32xf32>
    %49 = vector.broadcast %48 : vector<1x32xf32> to vector<128x32xf32>
    %50 = arith.mulf %47, %49 : vector<128x32xf32>
    %c5 = arith.constant 5 : index
    %c0_25 = arith.constant 0 : index
    %51 = vector.load %arg8[%c5, %c0_25] : memref<12x32xf32, #tpu.memory_space<vmem>>, vector<1x32xf32>
    %52 = vector.broadcast %51 : vector<1x32xf32> to vector<128x32xf32>
    %53 = arith.addf %50, %52 : vector<128x32xf32>
    %cst_26 = arith.constant 0.000000e+00 : f32
    %54 = vector.broadcast %cst_26 : f32 to vector<128x32xf32>
    %55 = arith.maximumf %53, %54 : vector<128x32xf32>
    %56 = arith.truncf %55 : vector<128x32xf32> to vector<128x32xbf16>
    %c0_27 = arith.constant 0 : index
    %c0_28 = arith.constant 0 : index
    %57 = vector.load %arg6[%c0_27, %c0_28] : memref<32x40xbf16, #tpu.memory_space<vmem>>, vector<32x40xbf16>
    %cst_29 = arith.constant dense<0.000000e+00> : vector<128x40xf32>
    %58 = tpu.matmul %56, %57, %cst_29 {dimension_numbers = #tpu.dot_dimension_numbers<[1], [0], [0], [1], [0, 0, 1, 1], [], []>} : vector<128x32xbf16>, vector<32x40xbf16>, vector<128x40xf32> -> vector<128x40xf32>
    %59 = vector.extract_strided_slice %58 {offsets = [0, 0], sizes = [128, 32], strides = [1, 1]} : vector<128x40xf32> to vector<128x32xf32>
    %60 = vector.extract_strided_slice %58 {offsets = [0, 32], sizes = [128, 4], strides = [1, 1]} : vector<128x40xf32> to vector<128x4xf32>
    %61 = vector.extract_strided_slice %58 {offsets = [0, 36], sizes = [128, 4], strides = [1, 1]} : vector<128x40xf32> to vector<128x4xf32>
    %62 = tpu.transpose %61, [1, 0] : vector<128x4xf32> -> vector<4x128xf32>
    %63 = arith.truncf %59 : vector<128x32xf32> to vector<128x32xbf16>
    %64 = vector.extract_strided_slice %60 {offsets = [0, 0], sizes = [128, 1], strides = [1, 1]} : vector<128x4xf32> to vector<128x1xf32>
    %65 = vector.extract_strided_slice %62 {offsets = [0, 0], sizes = [1, 128], strides = [1, 1]} : vector<4x128xf32> to vector<1x128xf32>
    %66 = vector.broadcast %64 : vector<128x1xf32> to vector<128x128xf32>
    %67 = vector.broadcast %65 : vector<1x128xf32> to vector<128x128xf32>
    %68 = arith.addf %66, %67 : vector<128x128xf32>
    %cst_30 = arith.constant 0.000000e+00 : f32
    %69 = vector.broadcast %cst_30 : f32 to vector<128x128xf32>
    %70 = arith.cmpf ogt, %68, %69 : vector<128x128xf32>
    %cst_31 = arith.constant 2.000000e-01 : f32
    %71 = vector.broadcast %cst_31 : f32 to vector<128x128xf32>
    %72 = arith.mulf %71, %68 : vector<128x128xf32>
    %73 = arith.select %70, %68, %72 : vector<128x128xi1>, vector<128x128xf32>
    %74 = arith.addf %73, %3 : vector<128x128xf32>
    %cst_32 = arith.constant dense<0xFF800000> : vector<128xf32>
    %75 = vector.multi_reduction <maximumf>, %74, %cst_32 [1] : vector<128x128xf32> to vector<128xf32>
    %76 = vector.shape_cast %75 : vector<128xf32> to vector<128x1xf32>
    %77 = vector.broadcast %76 : vector<128x1xf32> to vector<128x128xf32>
    %78 = arith.subf %74, %77 : vector<128x128xf32>
    %79 = math.exp %78 : vector<128x128xf32>
    %cst_33 = arith.constant dense<0.000000e+00> : vector<128x1xf32>
    %80 = tpu.matmul %79, %1, %cst_33 {dimension_numbers = #tpu.dot_dimension_numbers<[1], [0], [0], [1], [0, 0, 1, 1], [], []>} : vector<128x128xf32>, vector<128x1xf32>, vector<128x1xf32> -> vector<128x1xf32>
    %81 = tpu.reciprocal %80 {approx = true} : vector<128x1xf32> -> vector<128x1xf32>
    %82 = vector.broadcast %81 : vector<128x1xf32> to vector<128x128xf32>
    %83 = arith.mulf %79, %82 : vector<128x128xf32>
    %84 = arith.truncf %83 : vector<128x128xf32> to vector<128x128xbf16>
    %85 = vector.extract_strided_slice %63 {offsets = [0, 0], sizes = [128, 8], strides = [1, 1]} : vector<128x32xbf16> to vector<128x8xbf16>
    %cst_34 = arith.constant dense<0.000000e+00> : vector<128x8xf32>
    %86 = tpu.matmul %84, %85, %cst_34 {dimension_numbers = #tpu.dot_dimension_numbers<[1], [0], [0], [1], [0, 0, 1, 1], [], []>} : vector<128x128xbf16>, vector<128x8xbf16>, vector<128x8xf32> -> vector<128x8xf32>
    %87 = vector.extract_strided_slice %60 {offsets = [0, 1], sizes = [128, 1], strides = [1, 1]} : vector<128x4xf32> to vector<128x1xf32>
    %88 = vector.extract_strided_slice %62 {offsets = [1, 0], sizes = [1, 128], strides = [1, 1]} : vector<4x128xf32> to vector<1x128xf32>
    %89 = vector.broadcast %87 : vector<128x1xf32> to vector<128x128xf32>
    %90 = vector.broadcast %88 : vector<1x128xf32> to vector<128x128xf32>
    %91 = arith.addf %89, %90 : vector<128x128xf32>
    %cst_35 = arith.constant 0.000000e+00 : f32
    %92 = vector.broadcast %cst_35 : f32 to vector<128x128xf32>
    %93 = arith.cmpf ogt, %91, %92 : vector<128x128xf32>
    %cst_36 = arith.constant 2.000000e-01 : f32
    %94 = vector.broadcast %cst_36 : f32 to vector<128x128xf32>
    %95 = arith.mulf %94, %91 : vector<128x128xf32>
    %96 = arith.select %93, %91, %95 : vector<128x128xi1>, vector<128x128xf32>
    %97 = arith.addf %96, %3 : vector<128x128xf32>
    %cst_37 = arith.constant dense<0xFF800000> : vector<128xf32>
    %98 = vector.multi_reduction <maximumf>, %97, %cst_37 [1] : vector<128x128xf32> to vector<128xf32>
    %99 = vector.shape_cast %98 : vector<128xf32> to vector<128x1xf32>
    %100 = vector.broadcast %99 : vector<128x1xf32> to vector<128x128xf32>
    %101 = arith.subf %97, %100 : vector<128x128xf32>
    %102 = math.exp %101 : vector<128x128xf32>
    %cst_38 = arith.constant dense<0.000000e+00> : vector<128x1xf32>
    %103 = tpu.matmul %102, %1, %cst_38 {dimension_numbers = #tpu.dot_dimension_numbers<[1], [0], [0], [1], [0, 0, 1, 1], [], []>} : vector<128x128xf32>, vector<128x1xf32>, vector<128x1xf32> -> vector<128x1xf32>
    %104 = tpu.reciprocal %103 {approx = true} : vector<128x1xf32> -> vector<128x1xf32>
    %105 = vector.broadcast %104 : vector<128x1xf32> to vector<128x128xf32>
    %106 = arith.mulf %102, %105 : vector<128x128xf32>
    %107 = arith.truncf %106 : vector<128x128xf32> to vector<128x128xbf16>
    %108 = vector.extract_strided_slice %63 {offsets = [0, 8], sizes = [128, 8], strides = [1, 1]} : vector<128x32xbf16> to vector<128x8xbf16>
    %cst_39 = arith.constant dense<0.000000e+00> : vector<128x8xf32>
    %109 = tpu.matmul %107, %108, %cst_39 {dimension_numbers = #tpu.dot_dimension_numbers<[1], [0], [0], [1], [0, 0, 1, 1], [], []>} : vector<128x128xbf16>, vector<128x8xbf16>, vector<128x8xf32> -> vector<128x8xf32>
    %110 = vector.extract_strided_slice %60 {offsets = [0, 2], sizes = [128, 1], strides = [1, 1]} : vector<128x4xf32> to vector<128x1xf32>
    %111 = vector.extract_strided_slice %62 {offsets = [2, 0], sizes = [1, 128], strides = [1, 1]} : vector<4x128xf32> to vector<1x128xf32>
    %112 = vector.broadcast %110 : vector<128x1xf32> to vector<128x128xf32>
    %113 = vector.broadcast %111 : vector<1x128xf32> to vector<128x128xf32>
    %114 = arith.addf %112, %113 : vector<128x128xf32>
    %cst_40 = arith.constant 0.000000e+00 : f32
    %115 = vector.broadcast %cst_40 : f32 to vector<128x128xf32>
    %116 = arith.cmpf ogt, %114, %115 : vector<128x128xf32>
    %cst_41 = arith.constant 2.000000e-01 : f32
    %117 = vector.broadcast %cst_41 : f32 to vector<128x128xf32>
    %118 = arith.mulf %117, %114 : vector<128x128xf32>
    %119 = arith.select %116, %114, %118 : vector<128x128xi1>, vector<128x128xf32>
    %120 = arith.addf %119, %3 : vector<128x128xf32>
    %cst_42 = arith.constant dense<0xFF800000> : vector<128xf32>
    %121 = vector.multi_reduction <maximumf>, %120, %cst_42 [1] : vector<128x128xf32> to vector<128xf32>
    %122 = vector.shape_cast %121 : vector<128xf32> to vector<128x1xf32>
    %123 = vector.broadcast %122 : vector<128x1xf32> to vector<128x128xf32>
    %124 = arith.subf %120, %123 : vector<128x128xf32>
    %125 = math.exp %124 : vector<128x128xf32>
    %cst_43 = arith.constant dense<0.000000e+00> : vector<128x1xf32>
    %126 = tpu.matmul %125, %1, %cst_43 {dimension_numbers = #tpu.dot_dimension_numbers<[1], [0], [0], [1], [0, 0, 1, 1], [], []>} : vector<128x128xf32>, vector<128x1xf32>, vector<128x1xf32> -> vector<128x1xf32>
    %127 = tpu.reciprocal %126 {approx = true} : vector<128x1xf32> -> vector<128x1xf32>
    %128 = vector.broadcast %127 : vector<128x1xf32> to vector<128x128xf32>
    %129 = arith.mulf %125, %128 : vector<128x128xf32>
    %130 = arith.truncf %129 : vector<128x128xf32> to vector<128x128xbf16>
    %131 = vector.extract_strided_slice %63 {offsets = [0, 16], sizes = [128, 8], strides = [1, 1]} : vector<128x32xbf16> to vector<128x8xbf16>
    %cst_44 = arith.constant dense<0.000000e+00> : vector<128x8xf32>
    %132 = tpu.matmul %130, %131, %cst_44 {dimension_numbers = #tpu.dot_dimension_numbers<[1], [0], [0], [1], [0, 0, 1, 1], [], []>} : vector<128x128xbf16>, vector<128x8xbf16>, vector<128x8xf32> -> vector<128x8xf32>
    %133 = vector.extract_strided_slice %60 {offsets = [0, 3], sizes = [128, 1], strides = [1, 1]} : vector<128x4xf32> to vector<128x1xf32>
    %134 = vector.extract_strided_slice %62 {offsets = [3, 0], sizes = [1, 128], strides = [1, 1]} : vector<4x128xf32> to vector<1x128xf32>
    %135 = vector.broadcast %133 : vector<128x1xf32> to vector<128x128xf32>
    %136 = vector.broadcast %134 : vector<1x128xf32> to vector<128x128xf32>
    %137 = arith.addf %135, %136 : vector<128x128xf32>
    %cst_45 = arith.constant 0.000000e+00 : f32
    %138 = vector.broadcast %cst_45 : f32 to vector<128x128xf32>
    %139 = arith.cmpf ogt, %137, %138 : vector<128x128xf32>
    %cst_46 = arith.constant 2.000000e-01 : f32
    %140 = vector.broadcast %cst_46 : f32 to vector<128x128xf32>
    %141 = arith.mulf %140, %137 : vector<128x128xf32>
    %142 = arith.select %139, %137, %141 : vector<128x128xi1>, vector<128x128xf32>
    %143 = arith.addf %142, %3 : vector<128x128xf32>
    %cst_47 = arith.constant dense<0xFF800000> : vector<128xf32>
    %144 = vector.multi_reduction <maximumf>, %143, %cst_47 [1] : vector<128x128xf32> to vector<128xf32>
    %145 = vector.shape_cast %144 : vector<128xf32> to vector<128x1xf32>
    %146 = vector.broadcast %145 : vector<128x1xf32> to vector<128x128xf32>
    %147 = arith.subf %143, %146 : vector<128x128xf32>
    %148 = math.exp %147 : vector<128x128xf32>
    %cst_48 = arith.constant dense<0.000000e+00> : vector<128x1xf32>
    %149 = tpu.matmul %148, %1, %cst_48 {dimension_numbers = #tpu.dot_dimension_numbers<[1], [0], [0], [1], [0, 0, 1, 1], [], []>} : vector<128x128xf32>, vector<128x1xf32>, vector<128x1xf32> -> vector<128x1xf32>
    %150 = tpu.reciprocal %149 {approx = true} : vector<128x1xf32> -> vector<128x1xf32>
    %151 = vector.broadcast %150 : vector<128x1xf32> to vector<128x128xf32>
    %152 = arith.mulf %148, %151 : vector<128x128xf32>
    %153 = arith.truncf %152 : vector<128x128xf32> to vector<128x128xbf16>
    %154 = vector.extract_strided_slice %63 {offsets = [0, 24], sizes = [128, 8], strides = [1, 1]} : vector<128x32xbf16> to vector<128x8xbf16>
    %cst_49 = arith.constant dense<0.000000e+00> : vector<128x8xf32>
    %155 = tpu.matmul %153, %154, %cst_49 {dimension_numbers = #tpu.dot_dimension_numbers<[1], [0], [0], [1], [0, 0, 1, 1], [], []>} : vector<128x128xbf16>, vector<128x8xbf16>, vector<128x8xf32> -> vector<128x8xf32>
    %156 = tpu.concatenate %86, %109, %132, %155 in 1 : vector<128x8xf32>, vector<128x8xf32>, vector<128x8xf32>, vector<128x8xf32> -> vector<128x32xf32>
    %c6 = arith.constant 6 : index
    %c0_50 = arith.constant 0 : index
    %157 = vector.load %arg8[%c6, %c0_50] : memref<12x32xf32, #tpu.memory_space<vmem>>, vector<1x32xf32>
    %158 = vector.broadcast %157 : vector<1x32xf32> to vector<128x32xf32>
    %159 = arith.addf %156, %158 : vector<128x32xf32>
    %cst_51 = arith.constant dense<0.000000e+00> : vector<1x32xf32>
    %160 = tpu.matmul %0, %159, %cst_51 {dimension_numbers = #tpu.dot_dimension_numbers<[1], [0], [0], [1], [0, 0, 1, 1], [], []>} : vector<1x128xf32>, vector<128x32xf32>, vector<1x32xf32> -> vector<1x32xf32>
    %161 = arith.mulf %159, %159 : vector<128x32xf32>
    %cst_52 = arith.constant dense<0.000000e+00> : vector<1x32xf32>
    %162 = tpu.matmul %0, %161, %cst_52 {dimension_numbers = #tpu.dot_dimension_numbers<[1], [0], [0], [1], [0, 0, 1, 1], [], []>} : vector<1x128xf32>, vector<128x32xf32>, vector<1x32xf32> -> vector<1x32xf32>
    %163 = arith.mulf %160, %160 : vector<1x32xf32>
    %164 = arith.subf %162, %163 : vector<1x32xf32>
    %165 = vector.broadcast %160 : vector<1x32xf32> to vector<128x32xf32>
    %166 = arith.subf %159, %165 : vector<128x32xf32>
    %cst_53 = arith.constant 9.99999974E-6 : f32
    %167 = vector.broadcast %cst_53 : f32 to vector<1x32xf32>
    %168 = arith.addf %164, %167 : vector<1x32xf32>
    %169 = math.rsqrt %168 : vector<1x32xf32>
    %170 = vector.broadcast %169 : vector<1x32xf32> to vector<128x32xf32>
    %171 = arith.mulf %166, %170 : vector<128x32xf32>
    %c7 = arith.constant 7 : index
    %c0_54 = arith.constant 0 : index
    %172 = vector.load %arg8[%c7, %c0_54] : memref<12x32xf32, #tpu.memory_space<vmem>>, vector<1x32xf32>
    %173 = vector.broadcast %172 : vector<1x32xf32> to vector<128x32xf32>
    %174 = arith.mulf %171, %173 : vector<128x32xf32>
    %c8 = arith.constant 8 : index
    %c0_55 = arith.constant 0 : index
    %175 = vector.load %arg8[%c8, %c0_55] : memref<12x32xf32, #tpu.memory_space<vmem>>, vector<1x32xf32>
    %176 = vector.broadcast %175 : vector<1x32xf32> to vector<128x32xf32>
    %177 = arith.addf %174, %176 : vector<128x32xf32>
    %cst_56 = arith.constant 0.000000e+00 : f32
    %178 = vector.broadcast %cst_56 : f32 to vector<128x32xf32>
    %179 = arith.cmpf ogt, %177, %178 : vector<128x32xf32>
    %cst_57 = arith.constant 0.000000e+00 : f32
    %180 = vector.broadcast %cst_57 : f32 to vector<128x32xf32>
    %181 = arith.minimumf %177, %180 : vector<128x32xf32>
    %182 = math.exp %181 : vector<128x32xf32>
    %cst_58 = arith.constant 1.000000e+00 : f32
    %183 = vector.broadcast %cst_58 : f32 to vector<128x32xf32>
    %184 = arith.subf %182, %183 : vector<128x32xf32>
    %185 = arith.select %179, %177, %184 : vector<128x32xi1>, vector<128x32xf32>
    %186 = arith.truncf %185 : vector<128x32xf32> to vector<128x32xbf16>
    %c0_59 = arith.constant 0 : index
    %c0_60 = arith.constant 0 : index
    %187 = vector.load %arg7[%c0_59, %c0_60] : memref<32x40xbf16, #tpu.memory_space<vmem>>, vector<32x40xbf16>
    %cst_61 = arith.constant dense<0.000000e+00> : vector<128x40xf32>
    %188 = tpu.matmul %186, %187, %cst_61 {dimension_numbers = #tpu.dot_dimension_numbers<[1], [0], [0], [1], [0, 0, 1, 1], [], []>} : vector<128x32xbf16>, vector<32x40xbf16>, vector<128x40xf32> -> vector<128x40xf32>
    %189 = vector.extract_strided_slice %188 {offsets = [0, 0], sizes = [128, 32], strides = [1, 1]} : vector<128x40xf32> to vector<128x32xf32>
    %190 = vector.extract_strided_slice %188 {offsets = [0, 32], sizes = [128, 4], strides = [1, 1]} : vector<128x40xf32> to vector<128x4xf32>
    %191 = vector.extract_strided_slice %188 {offsets = [0, 36], sizes = [128, 4], strides = [1, 1]} : vector<128x40xf32> to vector<128x4xf32>
    %192 = tpu.transpose %191, [1, 0] : vector<128x4xf32> -> vector<4x128xf32>
    %193 = arith.truncf %189 : vector<128x32xf32> to vector<128x32xbf16>
    %194 = vector.extract_strided_slice %190 {offsets = [0, 0], sizes = [128, 1], strides = [1, 1]} : vector<128x4xf32> to vector<128x1xf32>
    %195 = vector.extract_strided_slice %192 {offsets = [0, 0], sizes = [1, 128], strides = [1, 1]} : vector<4x128xf32> to vector<1x128xf32>
    %196 = vector.broadcast %194 : vector<128x1xf32> to vector<128x128xf32>
    %197 = vector.broadcast %195 : vector<1x128xf32> to vector<128x128xf32>
    %198 = arith.addf %196, %197 : vector<128x128xf32>
    %cst_62 = arith.constant 0.000000e+00 : f32
    %199 = vector.broadcast %cst_62 : f32 to vector<128x128xf32>
    %200 = arith.cmpf ogt, %198, %199 : vector<128x128xf32>
    %cst_63 = arith.constant 2.000000e-01 : f32
    %201 = vector.broadcast %cst_63 : f32 to vector<128x128xf32>
    %202 = arith.mulf %201, %198 : vector<128x128xf32>
    %203 = arith.select %200, %198, %202 : vector<128x128xi1>, vector<128x128xf32>
    %204 = arith.addf %203, %3 : vector<128x128xf32>
    %cst_64 = arith.constant dense<0xFF800000> : vector<128xf32>
    %205 = vector.multi_reduction <maximumf>, %204, %cst_64 [1] : vector<128x128xf32> to vector<128xf32>
    %206 = vector.shape_cast %205 : vector<128xf32> to vector<128x1xf32>
    %207 = vector.broadcast %206 : vector<128x1xf32> to vector<128x128xf32>
    %208 = arith.subf %204, %207 : vector<128x128xf32>
    %209 = math.exp %208 : vector<128x128xf32>
    %cst_65 = arith.constant dense<0.000000e+00> : vector<128x1xf32>
    %210 = tpu.matmul %209, %1, %cst_65 {dimension_numbers = #tpu.dot_dimension_numbers<[1], [0], [0], [1], [0, 0, 1, 1], [], []>} : vector<128x128xf32>, vector<128x1xf32>, vector<128x1xf32> -> vector<128x1xf32>
    %211 = tpu.reciprocal %210 {approx = true} : vector<128x1xf32> -> vector<128x1xf32>
    %212 = vector.broadcast %211 : vector<128x1xf32> to vector<128x128xf32>
    %213 = arith.mulf %209, %212 : vector<128x128xf32>
    %214 = arith.truncf %213 : vector<128x128xf32> to vector<128x128xbf16>
    %215 = vector.extract_strided_slice %193 {offsets = [0, 0], sizes = [128, 8], strides = [1, 1]} : vector<128x32xbf16> to vector<128x8xbf16>
    %cst_66 = arith.constant dense<0.000000e+00> : vector<128x8xf32>
    %216 = tpu.matmul %214, %215, %cst_66 {dimension_numbers = #tpu.dot_dimension_numbers<[1], [0], [0], [1], [0, 0, 1, 1], [], []>} : vector<128x128xbf16>, vector<128x8xbf16>, vector<128x8xf32> -> vector<128x8xf32>
    %217 = vector.extract_strided_slice %190 {offsets = [0, 1], sizes = [128, 1], strides = [1, 1]} : vector<128x4xf32> to vector<128x1xf32>
    %218 = vector.extract_strided_slice %192 {offsets = [1, 0], sizes = [1, 128], strides = [1, 1]} : vector<4x128xf32> to vector<1x128xf32>
    %219 = vector.broadcast %217 : vector<128x1xf32> to vector<128x128xf32>
    %220 = vector.broadcast %218 : vector<1x128xf32> to vector<128x128xf32>
    %221 = arith.addf %219, %220 : vector<128x128xf32>
    %cst_67 = arith.constant 0.000000e+00 : f32
    %222 = vector.broadcast %cst_67 : f32 to vector<128x128xf32>
    %223 = arith.cmpf ogt, %221, %222 : vector<128x128xf32>
    %cst_68 = arith.constant 2.000000e-01 : f32
    %224 = vector.broadcast %cst_68 : f32 to vector<128x128xf32>
    %225 = arith.mulf %224, %221 : vector<128x128xf32>
    %226 = arith.select %223, %221, %225 : vector<128x128xi1>, vector<128x128xf32>
    %227 = arith.addf %226, %3 : vector<128x128xf32>
    %cst_69 = arith.constant dense<0xFF800000> : vector<128xf32>
    %228 = vector.multi_reduction <maximumf>, %227, %cst_69 [1] : vector<128x128xf32> to vector<128xf32>
    %229 = vector.shape_cast %228 : vector<128xf32> to vector<128x1xf32>
    %230 = vector.broadcast %229 : vector<128x1xf32> to vector<128x128xf32>
    %231 = arith.subf %227, %230 : vector<128x128xf32>
    %232 = math.exp %231 : vector<128x128xf32>
    %cst_70 = arith.constant dense<0.000000e+00> : vector<128x1xf32>
    %233 = tpu.matmul %232, %1, %cst_70 {dimension_numbers = #tpu.dot_dimension_numbers<[1], [0], [0], [1], [0, 0, 1, 1], [], []>} : vector<128x128xf32>, vector<128x1xf32>, vector<128x1xf32> -> vector<128x1xf32>
    %234 = tpu.reciprocal %233 {approx = true} : vector<128x1xf32> -> vector<128x1xf32>
    %235 = vector.broadcast %234 : vector<128x1xf32> to vector<128x128xf32>
    %236 = arith.mulf %232, %235 : vector<128x128xf32>
    %237 = arith.truncf %236 : vector<128x128xf32> to vector<128x128xbf16>
    %238 = vector.extract_strided_slice %193 {offsets = [0, 8], sizes = [128, 8], strides = [1, 1]} : vector<128x32xbf16> to vector<128x8xbf16>
    %cst_71 = arith.constant dense<0.000000e+00> : vector<128x8xf32>
    %239 = tpu.matmul %237, %238, %cst_71 {dimension_numbers = #tpu.dot_dimension_numbers<[1], [0], [0], [1], [0, 0, 1, 1], [], []>} : vector<128x128xbf16>, vector<128x8xbf16>, vector<128x8xf32> -> vector<128x8xf32>
    %240 = vector.extract_strided_slice %190 {offsets = [0, 2], sizes = [128, 1], strides = [1, 1]} : vector<128x4xf32> to vector<128x1xf32>
    %241 = vector.extract_strided_slice %192 {offsets = [2, 0], sizes = [1, 128], strides = [1, 1]} : vector<4x128xf32> to vector<1x128xf32>
    %242 = vector.broadcast %240 : vector<128x1xf32> to vector<128x128xf32>
    %243 = vector.broadcast %241 : vector<1x128xf32> to vector<128x128xf32>
    %244 = arith.addf %242, %243 : vector<128x128xf32>
    %cst_72 = arith.constant 0.000000e+00 : f32
    %245 = vector.broadcast %cst_72 : f32 to vector<128x128xf32>
    %246 = arith.cmpf ogt, %244, %245 : vector<128x128xf32>
    %cst_73 = arith.constant 2.000000e-01 : f32
    %247 = vector.broadcast %cst_73 : f32 to vector<128x128xf32>
    %248 = arith.mulf %247, %244 : vector<128x128xf32>
    %249 = arith.select %246, %244, %248 : vector<128x128xi1>, vector<128x128xf32>
    %250 = arith.addf %249, %3 : vector<128x128xf32>
    %cst_74 = arith.constant dense<0xFF800000> : vector<128xf32>
    %251 = vector.multi_reduction <maximumf>, %250, %cst_74 [1] : vector<128x128xf32> to vector<128xf32>
    %252 = vector.shape_cast %251 : vector<128xf32> to vector<128x1xf32>
    %253 = vector.broadcast %252 : vector<128x1xf32> to vector<128x128xf32>
    %254 = arith.subf %250, %253 : vector<128x128xf32>
    %255 = math.exp %254 : vector<128x128xf32>
    %cst_75 = arith.constant dense<0.000000e+00> : vector<128x1xf32>
    %256 = tpu.matmul %255, %1, %cst_75 {dimension_numbers = #tpu.dot_dimension_numbers<[1], [0], [0], [1], [0, 0, 1, 1], [], []>} : vector<128x128xf32>, vector<128x1xf32>, vector<128x1xf32> -> vector<128x1xf32>
    %257 = tpu.reciprocal %256 {approx = true} : vector<128x1xf32> -> vector<128x1xf32>
    %258 = vector.broadcast %257 : vector<128x1xf32> to vector<128x128xf32>
    %259 = arith.mulf %255, %258 : vector<128x128xf32>
    %260 = arith.truncf %259 : vector<128x128xf32> to vector<128x128xbf16>
    %261 = vector.extract_strided_slice %193 {offsets = [0, 16], sizes = [128, 8], strides = [1, 1]} : vector<128x32xbf16> to vector<128x8xbf16>
    %cst_76 = arith.constant dense<0.000000e+00> : vector<128x8xf32>
    %262 = tpu.matmul %260, %261, %cst_76 {dimension_numbers = #tpu.dot_dimension_numbers<[1], [0], [0], [1], [0, 0, 1, 1], [], []>} : vector<128x128xbf16>, vector<128x8xbf16>, vector<128x8xf32> -> vector<128x8xf32>
    %263 = vector.extract_strided_slice %190 {offsets = [0, 3], sizes = [128, 1], strides = [1, 1]} : vector<128x4xf32> to vector<128x1xf32>
    %264 = vector.extract_strided_slice %192 {offsets = [3, 0], sizes = [1, 128], strides = [1, 1]} : vector<4x128xf32> to vector<1x128xf32>
    %265 = vector.broadcast %263 : vector<128x1xf32> to vector<128x128xf32>
    %266 = vector.broadcast %264 : vector<1x128xf32> to vector<128x128xf32>
    %267 = arith.addf %265, %266 : vector<128x128xf32>
    %cst_77 = arith.constant 0.000000e+00 : f32
    %268 = vector.broadcast %cst_77 : f32 to vector<128x128xf32>
    %269 = arith.cmpf ogt, %267, %268 : vector<128x128xf32>
    %cst_78 = arith.constant 2.000000e-01 : f32
    %270 = vector.broadcast %cst_78 : f32 to vector<128x128xf32>
    %271 = arith.mulf %270, %267 : vector<128x128xf32>
    %272 = arith.select %269, %267, %271 : vector<128x128xi1>, vector<128x128xf32>
    %273 = arith.addf %272, %3 : vector<128x128xf32>
    %cst_79 = arith.constant dense<0xFF800000> : vector<128xf32>
    %274 = vector.multi_reduction <maximumf>, %273, %cst_79 [1] : vector<128x128xf32> to vector<128xf32>
    %275 = vector.shape_cast %274 : vector<128xf32> to vector<128x1xf32>
    %276 = vector.broadcast %275 : vector<128x1xf32> to vector<128x128xf32>
    %277 = arith.subf %273, %276 : vector<128x128xf32>
    %278 = math.exp %277 : vector<128x128xf32>
    %cst_80 = arith.constant dense<0.000000e+00> : vector<128x1xf32>
    %279 = tpu.matmul %278, %1, %cst_80 {dimension_numbers = #tpu.dot_dimension_numbers<[1], [0], [0], [1], [0, 0, 1, 1], [], []>} : vector<128x128xf32>, vector<128x1xf32>, vector<128x1xf32> -> vector<128x1xf32>
    %280 = tpu.reciprocal %279 {approx = true} : vector<128x1xf32> -> vector<128x1xf32>
    %281 = vector.broadcast %280 : vector<128x1xf32> to vector<128x128xf32>
    %282 = arith.mulf %278, %281 : vector<128x128xf32>
    %283 = arith.truncf %282 : vector<128x128xf32> to vector<128x128xbf16>
    %284 = vector.extract_strided_slice %193 {offsets = [0, 24], sizes = [128, 8], strides = [1, 1]} : vector<128x32xbf16> to vector<128x8xbf16>
    %cst_81 = arith.constant dense<0.000000e+00> : vector<128x8xf32>
    %285 = tpu.matmul %283, %284, %cst_81 {dimension_numbers = #tpu.dot_dimension_numbers<[1], [0], [0], [1], [0, 0, 1, 1], [], []>} : vector<128x128xbf16>, vector<128x8xbf16>, vector<128x8xf32> -> vector<128x8xf32>
    %286 = tpu.concatenate %216, %239, %262, %285 in 1 : vector<128x8xf32>, vector<128x8xf32>, vector<128x8xf32>, vector<128x8xf32> -> vector<128x32xf32>
    %c9 = arith.constant 9 : index
    %c0_82 = arith.constant 0 : index
    %287 = vector.load %arg8[%c9, %c0_82] : memref<12x32xf32, #tpu.memory_space<vmem>>, vector<1x32xf32>
    %288 = vector.broadcast %287 : vector<1x32xf32> to vector<128x32xf32>
    %289 = arith.addf %286, %288 : vector<128x32xf32>
    %cst_83 = arith.constant dense<0.000000e+00> : vector<1x32xf32>
    %290 = tpu.matmul %0, %289, %cst_83 {dimension_numbers = #tpu.dot_dimension_numbers<[1], [0], [0], [1], [0, 0, 1, 1], [], []>} : vector<1x128xf32>, vector<128x32xf32>, vector<1x32xf32> -> vector<1x32xf32>
    %291 = arith.mulf %289, %289 : vector<128x32xf32>
    %cst_84 = arith.constant dense<0.000000e+00> : vector<1x32xf32>
    %292 = tpu.matmul %0, %291, %cst_84 {dimension_numbers = #tpu.dot_dimension_numbers<[1], [0], [0], [1], [0, 0, 1, 1], [], []>} : vector<1x128xf32>, vector<128x32xf32>, vector<1x32xf32> -> vector<1x32xf32>
    %293 = arith.mulf %290, %290 : vector<1x32xf32>
    %294 = arith.subf %292, %293 : vector<1x32xf32>
    %295 = vector.broadcast %290 : vector<1x32xf32> to vector<128x32xf32>
    %296 = arith.subf %289, %295 : vector<128x32xf32>
    %cst_85 = arith.constant 9.99999974E-6 : f32
    %297 = vector.broadcast %cst_85 : f32 to vector<1x32xf32>
    %298 = arith.addf %294, %297 : vector<1x32xf32>
    %299 = math.rsqrt %298 : vector<1x32xf32>
    %300 = vector.broadcast %299 : vector<1x32xf32> to vector<128x32xf32>
    %301 = arith.mulf %296, %300 : vector<128x32xf32>
    %c10 = arith.constant 10 : index
    %c0_86 = arith.constant 0 : index
    %302 = vector.load %arg8[%c10, %c0_86] : memref<12x32xf32, #tpu.memory_space<vmem>>, vector<1x32xf32>
    %303 = vector.broadcast %302 : vector<1x32xf32> to vector<128x32xf32>
    %304 = arith.mulf %301, %303 : vector<128x32xf32>
    %c11 = arith.constant 11 : index
    %c0_87 = arith.constant 0 : index
    %305 = vector.load %arg8[%c11, %c0_87] : memref<12x32xf32, #tpu.memory_space<vmem>>, vector<1x32xf32>
    %306 = vector.broadcast %305 : vector<1x32xf32> to vector<128x32xf32>
    %307 = arith.addf %304, %306 : vector<128x32xf32>
    %cst_88 = arith.constant 0.000000e+00 : f32
    %308 = vector.broadcast %cst_88 : f32 to vector<128x32xf32>
    %309 = arith.cmpf ogt, %307, %308 : vector<128x32xf32>
    %cst_89 = arith.constant 0.000000e+00 : f32
    %310 = vector.broadcast %cst_89 : f32 to vector<128x32xf32>
    %311 = arith.minimumf %307, %310 : vector<128x32xf32>
    %312 = math.exp %311 : vector<128x32xf32>
    %cst_90 = arith.constant 1.000000e+00 : f32
    %313 = vector.broadcast %cst_90 : f32 to vector<128x32xf32>
    %314 = arith.subf %312, %313 : vector<128x32xf32>
    %315 = arith.select %309, %307, %314 : vector<128x32xi1>, vector<128x32xf32>
    %c0_91 = arith.constant 0 : index
    %c0_92 = arith.constant 0 : index
    %316 = vector.load %arg9[%c0_91, %c0_92] : memref<128x32xf32, #tpu.memory_space<vmem>>, vector<128x32xf32>
    tpu.vector_store %arg9[%c0_91, %c0_92], %315 {strides = array<i32>} : memref<128x32xf32, #tpu.memory_space<vmem>>, vector<128x32xf32>,
    return
  }
}

</mosaic_0001>

<llo_original>
// kernel: temporal_gat_forward.1
$region0: #{temporal_gat_forward.1}
  #allocation0 [shape = 'u32[]', space=smem, size = 0x4, offset = 0x4, fixed_abs, tag = 'smem constant byte address 0x4 - core index']
  #allocation1 [shape = 'u32[144,128]{1,0:T(1,128)}', space=vmem, size = 0x12000, scoped, tag = 'internal scratch']
  %s0 = inlined_call_operand.vmem [shape: bf16[128,16], index: 0, kind: input, shape index: {}]
  %s1 = inlined_call_operand.vmem [shape: bf16[128,128], index: 1, kind: input, shape index: {}]
  %s2 = inlined_call_operand.vmem [shape: f32[1,128], index: 2, kind: input, shape index: {}]
  %s3 = inlined_call_operand.vmem [shape: f32[128,1], index: 3, kind: input, shape index: {}]
  %s4 = inlined_call_operand.vmem [shape: bf16[16,32], index: 4, kind: input, shape index: {}]
  %s5 = inlined_call_operand.vmem [shape: bf16[32,32], index: 5, kind: input, shape index: {}]
  %s6 = inlined_call_operand.vmem [shape: bf16[32,40], index: 6, kind: input, shape index: {}]
  %s7 = inlined_call_operand.vmem [shape: bf16[32,40], index: 7, kind: input, shape index: {}]
  %s8 = inlined_call_operand.vmem [shape: f32[12,32], index: 8, kind: input, shape index: {}]
  %s9 = inlined_call_operand.vmem [shape: f32[128,32], index: 9, kind: output, shape index: {}]
  %s10 = sld [smem:[#allocation0]]
  $region46: #{temporal_gat_forward.1} parent=0
    _
  %s12 = ssub.s32 1, %s10
  %s13 = scalar_select 0, %s12, %s10
  // Predicated region
  $region2: #{temporal_gat_forward.1} parent=0 // pred_check
    _
  $region3: #{temporal_gat_forward.1} parent=0 // pred_check_branch
    %15 = sbr.rel (0) target = $region5
  $region4: #{temporal_gat_forward.1} parent=0 // pred_region
    _
  $region5: #{temporal_gat_forward.1} parent=0 // pred_fallthru
    _
  // Predicated region
  $region6: #{temporal_gat_forward.1} parent=0 // pred_check
    _
  $region7: #{temporal_gat_forward.1} parent=0 // pred_check_branch
    %17 = sbr.rel (0) target = $region9
  $region8: #{temporal_gat_forward.1} parent=0 // pred_region
    _
  $region9: #{temporal_gat_forward.1} parent=0 // pred_fallthru
    _
  // Predicated region
  $region10: #{temporal_gat_forward.1} parent=0 // pred_check
    _
  $region11: #{temporal_gat_forward.1} parent=0 // pred_check_branch
    %19 = sbr.rel (0) target = $region13
  $region12: #{temporal_gat_forward.1} parent=0 // pred_region
    _
  $region13: #{temporal_gat_forward.1} parent=0 // pred_fallthru
    _
  // Predicated region
  $region14: #{temporal_gat_forward.1} parent=0 // pred_check
    _
  $region15: #{temporal_gat_forward.1} parent=0 // pred_check_branch
    %21 = sbr.rel (0) target = $region17
  $region16: #{temporal_gat_forward.1} parent=0 // pred_region
    _
  $region17: #{temporal_gat_forward.1} parent=0 // pred_fallthru
    _
  // Predicated region
  $region18: #{temporal_gat_forward.1} parent=0 // pred_check
    _
  $region19: #{temporal_gat_forward.1} parent=0 // pred_check_branch
    %23 = sbr.rel (0) target = $region21
  $region20: #{temporal_gat_forward.1} parent=0 // pred_region
    _
  $region21: #{temporal_gat_forward.1} parent=0 // pred_fallthru
    _
  // Predicated region
  $region22: #{temporal_gat_forward.1} parent=0 // pred_check
    _
  $region23: #{temporal_gat_forward.1} parent=0 // pred_check_branch
    %25 = sbr.rel (0) target = $region25
  $region24: #{temporal_gat_forward.1} parent=0 // pred_region
    _
  $region25: #{temporal_gat_forward.1} parent=0 // pred_fallthru
    _
  // Predicated region
  $region26: #{temporal_gat_forward.1} parent=0 // pred_check
    _
  $region27: #{temporal_gat_forward.1} parent=0 // pred_check_branch
    %27 = sbr.rel (0) target = $region29
  $region28: #{temporal_gat_forward.1} parent=0 // pred_region
    _
  $region29: #{temporal_gat_forward.1} parent=0 // pred_fallthru
    _
  // Predicated region
  $region30: #{temporal_gat_forward.1} parent=0 // pred_check
    _
  $region31: #{temporal_gat_forward.1} parent=0 // pred_check_branch
    %29 = sbr.rel (0) target = $region33
  $region32: #{temporal_gat_forward.1} parent=0 // pred_region
    _
  $region33: #{temporal_gat_forward.1} parent=0 // pred_fallthru
    _
  // Predicated region
  $region34: #{temporal_gat_forward.1} parent=0 // pred_check
    _
  $region35: #{temporal_gat_forward.1} parent=0 // pred_check_branch
    %31 = sbr.rel (0) target = $region37
  $region36: #{temporal_gat_forward.1} parent=0 // pred_region
    _
  $region37: #{temporal_gat_forward.1} parent=0 // pred_fallthru
    _
  %v33 = vld [vmem:[%s2] sm:$0x1]
  %v34 = vld [vmem:[%s3] sm:$0xff]
  %v35 = vld [vmem:[%s3 + $0x8] sm:$0xff]
  %v36 = vld [vmem:[%s3 + $0x10] sm:$0xff]
  %v37 = vld [vmem:[%s3 + $0x18] sm:$0xff]
  %v38 = vld [vmem:[%s3 + $0x20] sm:$0xff]
  %v39 = vld [vmem:[%s3 + $0x28] sm:$0xff]
  %v40 = vld [vmem:[%s3 + $0x30] sm:$0xff]
  %v41 = vld [vmem:[%s3 + $0x38] sm:$0xff]
  %v42 = vld [vmem:[%s3 + $0x40] sm:$0xff]
  %v43 = vld [vmem:[%s3 + $0x48] sm:$0xff]
  %v44 = vld [vmem:[%s3 + $0x50] sm:$0xff]
  %v45 = vld [vmem:[%s3 + $0x58] sm:$0xff]
  %v46 = vld [vmem:[%s3 + $0x60] sm:$0xff]
  %v47 = vld [vmem:[%s3 + $0x68] sm:$0xff]
  %v48 = vld [vmem:[%s3 + $0x70] sm:$0xff]
  %v49 = vld [vmem:[%s3 + $0x78] sm:$0xff]
  %v50 = vld [vmem:[%s1] sm:$0xf]
  %v51 = vld [vmem:[%s1 + $0x4] sm:$0xf]
  %v52 = vld [vmem:[%s1 + $0x8] sm:$0xf]
  %v53 = vld [vmem:[%s1 + $0xc] sm:$0xf]
  %v54 = vld [vmem:[%s1 + $0x10] sm:$0xf]
  %v55 = vld [vmem:[%s1 + $0x14] sm:$0xf]
  %v56 = vld [vmem:[%s1 + $0x18] sm:$0xf]
  %v57 = vld [vmem:[%s1 + $0x1c] sm:$0xf]
  %v58 = vld [vmem:[%s1 + $0x20] sm:$0xf]
  %v59 = vld [vmem:[%s1 + $0x24] sm:$0xf]
  %v60 = vld [vmem:[%s1 + $0x28] sm:$0xf]
  %v61 = vld [vmem:[%s1 + $0x2c] sm:$0xf]
  %v62 = vld [vmem:[%s1 + $0x30] sm:$0xf]
  %v63 = vld [vmem:[%s1 + $0x34] sm:$0xf]
  %v64 = vld [vmem:[%s1 + $0x38] sm:$0xf]
  %v65 = vld [vmem:[%s1 + $0x3c] sm:$0xf]
  %v66 = vunpack.c.l.bf16 %v50
  %v67 = vunpack.c.l.bf16 %v51
  %v68 = vunpack.c.l.bf16 %v52
  %v69 = vunpack.c.l.bf16 %v53
  %v70 = vunpack.c.l.bf16 %v54
  %v71 = vunpack.c.l.bf16 %v55
  %v72 = vunpack.c.l.bf16 %v56
  %v73 = vunpack.c.l.bf16 %v57
  %v74 = vunpack.c.l.bf16 %v58
  %v75 = vunpack.c.l.bf16 %v59
  %v76 = vunpack.c.l.bf16 %v60
  %v77 = vunpack.c.l.bf16 %v61
  %v78 = vunpack.c.l.bf16 %v62
  %v79 = vunpack.c.l.bf16 %v63
  %v80 = vunpack.c.l.bf16 %v64
  %v81 = vunpack.c.l.bf16 %v65
  %v82 = vld [vmem:[%s0] sm:$0xf]
  %v83 = vld [vmem:[%s0 + $0x4] sm:$0xf]
  %v84 = vld [vmem:[%s0 + $0x8] sm:$0xf]
  %v85 = vld [vmem:[%s0 + $0xc] sm:$0xf]
  %v86 = vld [vmem:[%s0 + $0x10] sm:$0xf]
  %v87 = vld [vmem:[%s0 + $0x14] sm:$0xf]
  %v88 = vld [vmem:[%s0 + $0x18] sm:$0xf]
  %v89 = vld [vmem:[%s0 + $0x1c] sm:$0xf]
  %v90 = vld [vmem:[%s0 + $0x20] sm:$0xf]
  %v91 = vld [vmem:[%s0 + $0x24] sm:$0xf]
  %v92 = vld [vmem:[%s0 + $0x28] sm:$0xf]
  %v93 = vld [vmem:[%s0 + $0x2c] sm:$0xf]
  %v94 = vld [vmem:[%s0 + $0x30] sm:$0xf]
  %v95 = vld [vmem:[%s0 + $0x34] sm:$0xf]
  %v96 = vld [vmem:[%s0 + $0x38] sm:$0xf]
  %v97 = vld [vmem:[%s0 + $0x3c] sm:$0xf]
  %v98 = vld [vmem:[%s4] sm:$0xf]
  %v99 = vld [vmem:[%s4 + $0x4] sm:$0xf]
  %v100 = vld [vmem:[%s8] sm:$0x1]
  %v101 = vlaneseq
  %v102 = vshrl.u32 %v101, 7
  %v103 = vsub.s32 0, %v102
  %v104 = vrot.slane %v100, %v103
  %v121 = vunpack.c.l.b16 %v82
  %v122 = vunpack.c.l.b16 %v83
  %v123 = vunpack.c.l.b16 %v84
  %v124 = vunpack.c.l.b16 %v85
  %v125 = vunpack.c.l.b16 %v86
  %v126 = vunpack.c.l.b16 %v87
  %v127 = vunpack.c.l.b16 %v88
  %v128 = vunpack.c.l.b16 %v89
  %v129 = vunpack.c.l.b16 %v90
  %v130 = vunpack.c.l.b16 %v91
  %v131 = vunpack.c.l.b16 %v92
  %v132 = vunpack.c.l.b16 %v93
  %v133 = vunpack.c.l.b16 %v94
  %v134 = vunpack.c.l.b16 %v95
  %v135 = vunpack.c.l.b16 %v96
  %v136 = vunpack.c.l.b16 %v97
  %v137 = vpack.c.b16 %v122, %v121
  %v138 = vpack.c.b16 %v124, %v123
  %v139 = vpack.c.b16 %v126, %v125
  %v140 = vpack.c.b16 %v128, %v127
  %v141 = vpack.c.b16 %v130, %v129
  %v142 = vpack.c.b16 %v132, %v131
  %v143 = vpack.c.b16 %v134, %v133
  %v144 = vpack.c.b16 %v136, %v135
  %v147 = vunpack.c.l.b16 %v98
  %v148 = vunpack.c.l.b16 %v99
  %v149 = vpack.c.b16 %v148, %v147
  %vm151 = vcmask 130048
  %v153 = vsel %vm151, %v137, 0
  %v156 = vsel %vm151, %v138, 0
  %v159 = vsel %vm151, %v139, 0
  %v162 = vsel %vm151, %v140, 0
  %v165 = vsel %vm151, %v141, 0
  %v168 = vsel %vm151, %v142, 0
  %v171 = vsel %vm151, %v143, 0
  %v174 = vsel %vm151, %v144, 0
  %176 = vmatprep.subr.bf16.mxu0 0
  %177 = vmatpush1.bf16.msra.mxu0 %v149
  %178 = vmatprep.subr.bf16.mxu0 0
  %179 = vmatpush1.bf16.msra.mxu0 0
  %180 = vmatprep.subr.bf16.mxu0 0
  %181 = vmatpush1.bf16.msra.mxu0 0
  %182 = vmatprep.subr.bf16.mxu0 0
  %183 = vmatpush1.bf16.msra.mxu0 0
  %184 = vmatprep.subr.bf16.mxu0 0
  %185 = vmatpush1.bf16.msra.mxu0 0
  %186 = vmatprep.subr.bf16.mxu0 0
  %187 = vmatpush1.bf16.msra.mxu0 0
  %188 = vmatprep.subr.bf16.mxu0 0
  %189 = vmatpush1.bf16.msra.mxu0 0
  %190 = vmatprep.subr.bf16.mxu0 0
  %191 = vmatpush1.bf16.msra.mxu0 0
  %192 = vmatprep.subr.bf16.mxu0 0
  %193 = vmatpush1.bf16.msra.mxu0 0
  %194 = vmatprep.subr.bf16.mxu0 0
  %195 = vmatpush1.bf16.msra.mxu0 0
  %196 = vmatprep.subr.bf16.mxu0 0
  %197 = vmatpush1.bf16.msra.mxu0 0
  %198 = vmatprep.subr.bf16.mxu0 0
  %199 = vmatpush1.bf16.msra.mxu0 0
  %200 = vmatprep.subr.bf16.mxu0 0
  %201 = vmatpush1.bf16.msra.mxu0 0
  %202 = vmatprep.subr.bf16.mxu0 0
  %203 = vmatpush1.bf16.msra.mxu0 0
  %204 = vmatprep.subr.bf16.mxu0 0
  %205 = vmatpush1.bf16.msra.mxu0 0
  %206 = vmatprep.subr.bf16.mxu0 0
  %207 = vmatpush1.bf16.msra.mxu0 0
  %208 = vmatprep.mubr.bf16.mxu0 0
  %209 = vmatmul.mubr.bf16.gmra.mrb[0].mxu0 %v153
  %v210 = vpop.f32.mrb[0].mxu0
  %v211 = vadd.f32 %v104, %v210
  %v212 = vpop.f32.mrb[0].mxu0
  %v213 = vpop.f32.mrb[0].mxu0
  %v214 = vadd.f32 %v104, %v213
  %v215 = vpop.f32.mrb[0].mxu0
  %216 = vmatprep.mubr.bf16.mxu0 0
  %217 = vmatmul.mubr.bf16.gmra.mrb[0].mxu0 %v156
  %v218 = vpop.f32.mrb[0].mxu0
  %v219 = vadd.f32 %v104, %v218
  %v220 = vpop.f32.mrb[0].mxu0
  %v221 = vpop.f32.mrb[0].mxu0
  %v222 = vadd.f32 %v104, %v221
  %v223 = vpop.f32.mrb[0].mxu0
  %224 = vmatprep.mubr.bf16.mxu0 0
  %225 = vmatmul.mubr.bf16.gmra.mrb[0].mxu0 %v159
  %v226 = vpop.f32.mrb[0].mxu0
  %v227 = vadd.f32 %v104, %v226
  %v228 = vpop.f32.mrb[0].mxu0
  %v229 = vpop.f32.mrb[0].mxu0
  %v230 = vadd.f32 %v104, %v229
  %v231 = vpop.f32.mrb[0].mxu0
  %232 = vmatprep.mubr.bf16.mxu0 0
  %233 = vmatmul.mubr.bf16.gmra.mrb[0].mxu0 %v162
  %v234 = vpop.f32.mrb[0].mxu0
  %v235 = vadd.f32 %v104, %v234
  %v236 = vpop.f32.mrb[0].mxu0
  %v237 = vpop.f32.mrb[0].mxu0
  %v238 = vadd.f32 %v104, %v237
  %v239 = vpop.f32.mrb[0].mxu0
  %240 = vmatprep.mubr.bf16.mxu0 0
  %241 = vmatmul.mubr.bf16.gmra.mrb[0].mxu0 %v165
  %v242 = vpop.f32.mrb[0].mxu0
  %v243 = vadd.f32 %v104, %v242
  %v244 = vpop.f32.mrb[0].mxu0
  %v245 = vpop.f32.mrb[0].mxu0
  %v246 = vadd.f32 %v104, %v245
  %v247 = vpop.f32.mrb[0].mxu0
  %248 = vmatprep.mubr.bf16.mxu0 0
  %249 = vmatmul.mubr.bf16.gmra.mrb[0].mxu0 %v168
  %v250 = vpop.f32.mrb[0].mxu0
  %v251 = vadd.f32 %v104, %v250
  %v252 = vpop.f32.mrb[0].mxu0
  %v253 = vpop.f32.mrb[0].mxu0
  %v254 = vadd.f32 %v104, %v253
  %v255 = vpop.f32.mrb[0].mxu0
  %256 = vmatprep.mubr.bf16.mxu0 0
  %257 = vmatmul.mubr.bf16.gmra.mrb[0].mxu0 %v171
  %v258 = vpop.f32.mrb[0].mxu0
  %v259 = vadd.f32 %v104, %v258
  %v260 = vpop.f32.mrb[0].mxu0
  %v261 = vpop.f32.mrb[0].mxu0
  %v262 = vadd.f32 %v104, %v261
  %v263 = vpop.f32.mrb[0].mxu0
  %264 = vmatprep.mubr.bf16.mxu0 0
  %265 = vmatmul.mubr.bf16.gmra.mrb[0].mxu0 %v174
  %v266 = vpop.f32.mrb[0].mxu0
  %v267 = vadd.f32 %v104, %v266
  %v268 = vpop.f32.mrb[0].mxu0
  %v269 = vpop.f32.mrb[0].mxu0
  %v270 = vadd.f32 %v104, %v269
  %v271 = vpop.f32.mrb[0].mxu0
  %272 = vdwg.mxu0
  %v273 = vmax.f32 %v211, 0.0
  %v274 = vmax.f32 %v214, 0.0
  %v275 = vmax.f32 %v219, 0.0
  %v276 = vmax.f32 %v222, 0.0
  %v277 = vmax.f32 %v227, 0.0
  %v278 = vmax.f32 %v230, 0.0
  %v279 = vmax.f32 %v235, 0.0
  %v280 = vmax.f32 %v238, 0.0
  %v281 = vmax.f32 %v243, 0.0
  %v282 = vmax.f32 %v246, 0.0
  %v283 = vmax.f32 %v251, 0.0
  %v284 = vmax.f32 %v254, 0.0
  %v285 = vmax.f32 %v259, 0.0
  %v286 = vmax.f32 %v262, 0.0
  %v287 = vmax.f32 %v267, 0.0
  %v288 = vmax.f32 %v270, 0.0
  %289 = vmatprep.subr.mxu0 0.0
  %290 = vmatpush1.msra.mxu0 %v273
  %291 = vmatprep.subr.mxu0 0.0
  %292 = vmatpush1.msra.mxu0 %v274
  %293 = vmatprep.subr.mxu0 0.0
  %294 = vmatpush1.msra.mxu0 %v275
  %295 = vmatprep.subr.mxu0 0.0
  %296 = vmatpush1.msra.mxu0 %v276
  %297 = vmatprep.subr.mxu0 0.0
  %298 = vmatpush1.msra.mxu0 %v277
  %299 = vmatprep.subr.mxu0 0.0
  %300 = vmatpush1.msra.mxu0 %v278
  %301 = vmatprep.subr.mxu0 0.0
  %302 = vmatpush1.msra.mxu0 %v279
  %303 = vmatprep.subr.mxu0 0.0
  %304 = vmatpush1.msra.mxu0 %v280
  %305 = vmatprep.subr.mxu0 0.0
  %306 = vmatpush1.msra.mxu0 %v281
  %307 = vmatprep.subr.mxu0 0.0
  %308 = vmatpush1.msra.mxu0 %v282
  %309 = vmatprep.subr.mxu0 0.0
  %310 = vmatpush1.msra.mxu0 %v283
  %311 = vmatprep.subr.mxu0 0.0
  %312 = vmatpush1.msra.mxu0 %v284
  %313 = vmatprep.subr.mxu0 0.0
  %314 = vmatpush1.msra.mxu0 %v285
  %315 = vmatprep.subr.mxu0 0.0
  %316 = vmatpush1.msra.mxu0 %v286
  %317 = vmatprep.subr.mxu0 0.0
  %318 = vmatpush1.msra.mxu0 %v287
  %319 = vmatprep.subr.mxu0 0.0
  %320 = vmatpush1.msra.mxu0 %v288
  %321 = vmatprep.subr.mxu0 0.0
  %322 = vmatpush1.msra.mxu0 0.0
  %323 = vmatprep.subr.mxu0 0.0
  %324 = vmatpush1.msra.mxu0 0.0
  %325 = vmatprep.subr.mxu0 0.0
  %326 = vmatpush1.msra.mxu0 0.0
  %327 = vmatprep.subr.mxu0 0.0
  %328 = vmatpush1.msra.mxu0 0.0
  %329 = vmatprep.subr.mxu0 0.0
  %330 = vmatpush1.msra.mxu0 0.0
  %331 = vmatprep.subr.mxu0 0.0
  %332 = vmatpush1.msra.mxu0 0.0
  %333 = vmatprep.subr.mxu0 0.0
  %334 = vmatpush1.msra.mxu0 0.0
  %335 = vmatprep.subr.mxu0 0.0
  %336 = vmatpush1.msra.mxu0 0.0
  %337 = vmatprep.subr.mxu0 0.0
  %338 = vmatpush1.msra.mxu0 0.0
  %339 = vmatprep.subr.mxu0 0.0
  %340 = vmatpush1.msra.mxu0 0.0
  %341 = vmatprep.subr.mxu0 0.0
  %342 = vmatpush1.msra.mxu0 0.0
  %343 = vmatprep.subr.mxu0 0.0
  %344 = vmatpush1.msra.mxu0 0.0
  %345 = vmatprep.subr.mxu0 0.0
  %346 = vmatpush1.msra.mxu0 0.0
  %347 = vmatprep.subr.mxu0 0.0
  %348 = vmatpush1.msra.mxu0 0.0
  %349 = vmatprep.subr.mxu0 0.0
  %350 = vmatpush1.msra.mxu0 0.0
  %351 = vmatprep.subr.mxu0 0.0
  %352 = vmatpush1.msra.mxu0 0.0
  %353 = vmatprep.mubr.f32.mxu0 0.0
  %354 = vmatmul.mubr.f32.gmra.mrb[0].mxu0 %v33
  %v355 = vpop.f32.mrb[0].mxu0
  %v356 = vadd.f32 0.0, %v355
  %v357 = vpop.f32.mrb[0].mxu0
  %358 = vdwg.mxu0
  %v359 = vmul.f32 %v273, %v273
  %v360 = vmul.f32 %v274, %v274
  %v361 = vmul.f32 %v275, %v275
  %v362 = vmul.f32 %v276, %v276
  %v363 = vmul.f32 %v277, %v277
  %v364 = vmul.f32 %v278, %v278
  %v365 = vmul.f32 %v279, %v279
  %v366 = vmul.f32 %v280, %v280
  %v367 = vmul.f32 %v281, %v281
  %v368 = vmul.f32 %v282, %v282
  %v369 = vmul.f32 %v283, %v283
  %v370 = vmul.f32 %v284, %v284
  %v371 = vmul.f32 %v285, %v285
  %v372 = vmul.f32 %v286, %v286
  %v373 = vmul.f32 %v287, %v287
  %v374 = vmul.f32 %v288, %v288
  %375 = vmatprep.subr.mxu0 0.0
  %376 = vmatpush1.msra.mxu0 %v359
  %377 = vmatprep.subr.mxu0 0.0
  %378 = vmatpush1.msra.mxu0 %v360
  %379 = vmatprep.subr.mxu0 0.0
  %380 = vmatpush1.msra.mxu0 %v361
  %381 = vmatprep.subr.mxu0 0.0
  %382 = vmatpush1.msra.mxu0 %v362
  %383 = vmatprep.subr.mxu0 0.0
  %384 = vmatpush1.msra.mxu0 %v363
  %385 = vmatprep.subr.mxu0 0.0
  %386 = vmatpush1.msra.mxu0 %v364
  %387 = vmatprep.subr.mxu0 0.0
  %388 = vmatpush1.msra.mxu0 %v365
  %389 = vmatprep.subr.mxu0 0.0
  %390 = vmatpush1.msra.mxu0 %v366
  %391 = vmatprep.subr.mxu0 0.0
  %392 = vmatpush1.msra.mxu0 %v367
  %393 = vmatprep.subr.mxu0 0.0
  %394 = vmatpush1.msra.mxu0 %v368
  %395 = vmatprep.subr.mxu0 0.0
  %396 = vmatpush1.msra.mxu0 %v369
  %397 = vmatprep.subr.mxu0 0.0
  %398 = vmatpush1.msra.mxu0 %v370
  %399 = vmatprep.subr.mxu0 0.0
  %400 = vmatpush1.msra.mxu0 %v371
  %401 = vmatprep.subr.mxu0 0.0
  %402 = vmatpush1.msra.mxu0 %v372
  %403 = vmatprep.subr.mxu0 0.0
  %404 = vmatpush1.msra.mxu0 %v373
  %405 = vmatprep.subr.mxu0 0.0
  %406 = vmatpush1.msra.mxu0 %v374
  %407 = vmatprep.subr.mxu0 0.0
  %408 = vmatpush1.msra.mxu0 0.0
  %409 = vmatprep.subr.mxu0 0.0
  %410 = vmatpush1.msra.mxu0 0.0
  %411 = vmatprep.subr.mxu0 0.0
  %412 = vmatpush1.msra.mxu0 0.0
  %413 = vmatprep.subr.mxu0 0.0
  %414 = vmatpush1.msra.mxu0 0.0
  %415 = vmatprep.subr.mxu0 0.0
  %416 = vmatpush1.msra.mxu0 0.0
  %417 = vmatprep.subr.mxu0 0.0
  %418 = vmatpush1.msra.mxu0 0.0
  %419 = vmatprep.subr.mxu0 0.0
  %420 = vmatpush1.msra.mxu0 0.0
  %421 = vmatprep.subr.mxu0 0.0
  %422 = vmatpush1.msra.mxu0 0.0
  %423 = vmatprep.subr.mxu0 0.0
  %424 = vmatpush1.msra.mxu0 0.0
  %425 = vmatprep.subr.mxu0 0.0
  %426 = vmatpush1.msra.mxu0 0.0
  %427 = vmatprep.subr.mxu0 0.0
  %428 = vmatpush1.msra.mxu0 0.0
  %429 = vmatprep.subr.mxu0 0.0
  %430 = vmatpush1.msra.mxu0 0.0
  %431 = vmatprep.subr.mxu0 0.0
  %432 = vmatpush1.msra.mxu0 0.0
  %433 = vmatprep.subr.mxu0 0.0
  %434 = vmatpush1.msra.mxu0 0.0
  %435 = vmatprep.subr.mxu0 0.0
  %436 = vmatpush1.msra.mxu0 0.0
  %437 = vmatprep.subr.mxu0 0.0
  %438 = vmatpush1.msra.mxu0 0.0
  %439 = vmatprep.mubr.f32.mxu0 0.0
  %440 = vmatmul.mubr.f32.gmra.mrb[0].mxu0 %v33
  %v441 = vpop.f32.mrb[0].mxu0
  %v442 = vadd.f32 0.0, %v441
  %v443 = vpop.f32.mrb[0].mxu0
  %444 = vdwg.mxu0
  %v445 = vmul.f32 %v356, %v356
  %v446 = vsub.f32 %v442, %v445
  %v447 = vlaneseq
  %v448 = vshrl.u32 %v447, 7
  %v449 = vsub.s32 0, %v448
  %v450 = vrot.slane %v356, %v449
  %v451 = vsub.f32 %v273, %v450
  %v452 = vsub.f32 %v274, %v450
  %v453 = vsub.f32 %v275, %v450
  %v454 = vsub.f32 %v276, %v450
  %v455 = vsub.f32 %v277, %v450
  %v456 = vsub.f32 %v278, %v450
  %v457 = vsub.f32 %v279, %v450
  %v458 = vsub.f32 %v280, %v450
  %v459 = vsub.f32 %v281, %v450
  %v460 = vsub.f32 %v282, %v450
  %v461 = vsub.f32 %v283, %v450
  %v462 = vsub.f32 %v284, %v450
  %v463 = vsub.f32 %v285, %v450
  %v464 = vsub.f32 %v286, %v450
  %v465 = vsub.f32 %v287, %v450
  %v466 = vsub.f32 %v288, %v450
  %v467 = vadd.f32 %v446, 1e-05
  %v468 = vrsqrt.pop %v467
  %v469 = vlaneseq
  %v470 = vshrl.u32 %v469, 7
  %v471 = vsub.s32 0, %v470
  %v472 = vrot.slane %v468, %v471
  %v473 = vmul.f32 %v451, %v472
  %v474 = vmul.f32 %v452, %v472
  %v475 = vmul.f32 %v453, %v472
  %v476 = vmul.f32 %v454, %v472
  %v477 = vmul.f32 %v455, %v472
  %v478 = vmul.f32 %v456, %v472
  %v479 = vmul.f32 %v457, %v472
  %v480 = vmul.f32 %v458, %v472
  %v481 = vmul.f32 %v459, %v472
  %v482 = vmul.f32 %v460, %v472
  %v483 = vmul.f32 %v461, %v472
  %v484 = vmul.f32 %v462, %v472
  %v485 = vmul.f32 %v463, %v472
  %v486 = vmul.f32 %v464, %v472
  %v487 = vmul.f32 %v465, %v472
  %v488 = vmul.f32 %v466, %v472
  %v489 = vld [vmem:[%s8 + $0x1] sm:$0x1]
  %v490 = vlaneseq
  %v491 = vshrl.u32 %v490, 7
  %v492 = vsub.s32 0, %v491
  %v493 = vrot.slane %v489, %v492
  %v494 = vmul.f32 %v473, %v493
  %v495 = vmul.f32 %v474, %v493
  %v496 = vmul.f32 %v475, %v493
  %v497 = vmul.f32 %v476, %v493
  %v498 = vmul.f32 %v477, %v493
  %v499 = vmul.f32 %v478, %v493
  %v500 = vmul.f32 %v479, %v493
  %v501 = vmul.f32 %v480, %v493
  %v502 = vmul.f32 %v481, %v493
  %v503 = vmul.f32 %v482, %v493
  %v504 = vmul.f32 %v483, %v493
  %v505 = vmul.f32 %v484, %v493
  %v506 = vmul.f32 %v485, %v493
  %v507 = vmul.f32 %v486, %v493
  %v508 = vmul.f32 %v487, %v493
  %v509 = vmul.f32 %v488, %v493
  %v510 = vld [vmem:[%s8 + $0x2] sm:$0x1]
  %v511 = vlaneseq
  %v512 = vshrl.u32 %v511, 7
  %v513 = vsub.s32 0, %v512
  %v514 = vrot.slane %v510, %v513
  %v515 = vadd.f32 %v494, %v514
  %v516 = vadd.f32 %v495, %v514
  %v517 = vadd.f32 %v496, %v514
  %v518 = vadd.f32 %v497, %v514
  %v519 = vadd.f32 %v498, %v514
  %v520 = vadd.f32 %v499, %v514
  %v521 = vadd.f32 %v500, %v514
  %v522 = vadd.f32 %v501, %v514
  %v523 = vadd.f32 %v502, %v514
  %v524 = vadd.f32 %v503, %v514
  %v525 = vadd.f32 %v504, %v514
  %v526 = vadd.f32 %v505, %v514
  %v527 = vadd.f32 %v506, %v514
  %v528 = vadd.f32 %v507, %v514
  %v529 = vadd.f32 %v508, %v514
  %v530 = vadd.f32 %v509, %v514
  %v531 = vpack.c.bf16 %v516, %v515
  %v532 = vpack.c.bf16 %v518, %v517
  %v533 = vpack.c.bf16 %v520, %v519
  %v534 = vpack.c.bf16 %v522, %v521
  %v535 = vpack.c.bf16 %v524, %v523
  %v536 = vpack.c.bf16 %v526, %v525
  %v537 = vpack.c.bf16 %v528, %v527
  %v538 = vpack.c.bf16 %v530, %v529
  %v539 = vld [vmem:[%s5] sm:$0xf]
  %v540 = vld [vmem:[%s5 + $0x4] sm:$0xf]
  %v541 = vld [vmem:[%s5 + $0x8] sm:$0xf]
  %v542 = vld [vmem:[%s5 + $0xc] sm:$0xf]
  %v543 = vld [vmem:[%s8 + $0x3] sm:$0x1]
  %v544 = vlaneseq
  %v545 = vshrl.u32 %v544, 7
  %v546 = vsub.s32 0, %v545
  %v547 = vrot.slane %v543, %v546
  %v552 = vunpack.c.l.b16 %v539
  %v553 = vunpack.c.l.b16 %v540
  %v554 = vunpack.c.l.b16 %v541
  %v555 = vunpack.c.l.b16 %v542
  %v556 = vpack.c.b16 %v553, %v552
  %v557 = vpack.c.b16 %v555, %v554
  %vm560 = vcmask 261120
  %v562 = vsel %vm560, %v531, 0
  %v565 = vsel %vm560, %v532, 0
  %v568 = vsel %vm560, %v533, 0
  %v571 = vsel %vm560, %v534, 0
  %v574 = vsel %vm560, %v535, 0
  %v577 = vsel %vm560, %v536, 0
  %v580 = vsel %vm560, %v537, 0
  %v583 = vsel %vm560, %v538, 0
  %585 = vmatprep.subr.bf16.mxu0 0
  %586 = vmatpush1.bf16.msra.mxu0 %v556
  %587 = vmatprep.subr.bf16.mxu0 0
  %588 = vmatpush1.bf16.msra.mxu0 %v557
  %589 = vmatprep.subr.bf16.mxu0 0
  %590 = vmatpush1.bf16.msra.mxu0 0
  %591 = vmatprep.subr.bf16.mxu0 0
  %592 = vmatpush1.bf16.msra.mxu0 0
  %593 = vmatprep.subr.bf16.mxu0 0
  %594 = vmatpush1.bf16.msra.mxu0 0
  %595 = vmatprep.subr.bf16.mxu0 0
  %596 = vmatpush1.bf16.msra.mxu0 0
  %597 = vmatprep.subr.bf16.mxu0 0
  %598 = vmatpush1.bf16.msra.mxu0 0
  %599 = vmatprep.subr.bf16.mxu0 0
  %600 = vmatpush1.bf16.msra.mxu0 0
  %601 = vmatprep.subr.bf16.mxu0 0
  %602 = vmatpush1.bf16.msra.mxu0 0
  %603 = vmatprep.subr.bf16.mxu0 0
  %604 = vmatpush1.bf16.msra.mxu0 0
  %605 = vmatprep.subr.bf16.mxu0 0
  %606 = vmatpush1.bf16.msra.mxu0 0
  %607 = vmatprep.subr.bf16.mxu0 0
  %608 = vmatpush1.bf16.msra.mxu0 0
  %609 = vmatprep.subr.bf16.mxu0 0
  %610 = vmatpush1.bf16.msra.mxu0 0
  %611 = vmatprep.subr.bf16.mxu0 0
  %612 = vmatpush1.bf16.msra.mxu0 0
  %613 = vmatprep.subr.bf16.mxu0 0
  %614 = vmatpush1.bf16.msra.mxu0 0
  %615 = vmatprep.subr.bf16.mxu0 0
  %616 = vmatpush1.bf16.msra.mxu0 0
  %617 = vmatprep.mubr.bf16.mxu0 0
  %618 = vmatmul.mubr.bf16.gmra.mrb[0].mxu0 %v562
  %v619 = vpop.f32.mrb[0].mxu0
  %v620 = vadd.f32 %v547, %v619
  %v621 = vpop.f32.mrb[0].mxu0
  %v622 = vpop.f32.mrb[0].mxu0
  %v623 = vadd.f32 %v547, %v622
  %v624 = vpop.f32.mrb[0].mxu0
  %625 = vmatprep.mubr.bf16.mxu0 0
  %626 = vmatmul.mubr.bf16.gmra.mrb[0].mxu0 %v565
  %v627 = vpop.f32.mrb[0].mxu0
  %v628 = vadd.f32 %v547, %v627
  %v629 = vpop.f32.mrb[0].mxu0
  %v630 = vpop.f32.mrb[0].mxu0
  %v631 = vadd.f32 %v547, %v630
  %v632 = vpop.f32.mrb[0].mxu0
  %633 = vmatprep.mubr.bf16.mxu0 0
  %634 = vmatmul.mubr.bf16.gmra.mrb[0].mxu0 %v568
  %v635 = vpop.f32.mrb[0].mxu0
  %v636 = vadd.f32 %v547, %v635
  %v637 = vpop.f32.mrb[0].mxu0
  %v638 = vpop.f32.mrb[0].mxu0
  %v639 = vadd.f32 %v547, %v638
  %v640 = vpop.f32.mrb[0].mxu0
  %641 = vmatprep.mubr.bf16.mxu0 0
  %642 = vmatmul.mubr.bf16.gmra.mrb[0].mxu0 %v571
  %v643 = vpop.f32.mrb[0].mxu0
  %v644 = vadd.f32 %v547, %v643
  %v645 = vpop.f32.mrb[0].mxu0
  %v646 = vpop.f32.mrb[0].mxu0
  %v647 = vadd.f32 %v547, %v646
  %v648 = vpop.f32.mrb[0].mxu0
  %649 = vmatprep.mubr.bf16.mxu0 0
  %650 = vmatmul.mubr.bf16.gmra.mrb[0].mxu0 %v574
  %v651 = vpop.f32.mrb[0].mxu0
  %v652 = vadd.f32 %v547, %v651
  %v653 = vpop.f32.mrb[0].mxu0
  %v654 = vpop.f32.mrb[0].mxu0
  %v655 = vadd.f32 %v547, %v654
  %v656 = vpop.f32.mrb[0].mxu0
  %657 = vmatprep.mubr.bf16.mxu0 0
  %658 = vmatmul.mubr.bf16.gmra.mrb[0].mxu0 %v577
  %v659 = vpop.f32.mrb[0].mxu0
  %v660 = vadd.f32 %v547, %v659
  %v661 = vpop.f32.mrb[0].mxu0
  %v662 = vpop.f32.mrb[0].mxu0
  %v663 = vadd.f32 %v547, %v662
  %v664 = vpop.f32.mrb[0].mxu0
  %665 = vmatprep.mubr.bf16.mxu0 0
  %666 = vmatmul.mubr.bf16.gmra.mrb[0].mxu0 %v580
  %v667 = vpop.f32.mrb[0].mxu0
  %v668 = vadd.f32 %v547, %v667
  %v669 = vpop.f32.mrb[0].mxu0
  %v670 = vpop.f32.mrb[0].mxu0
  %v671 = vadd.f32 %v547, %v670
  %v672 = vpop.f32.mrb[0].mxu0
  %673 = vmatprep.mubr.bf16.mxu0 0
  %674 = vmatmul.mubr.bf16.gmra.mrb[0].mxu0 %v583
  %v675 = vpop.f32.mrb[0].mxu0
  %v676 = vadd.f32 %v547, %v675
  %v677 = vpop.f32.mrb[0].mxu0
  %v678 = vpop.f32.mrb[0].mxu0
  %v679 = vadd.f32 %v547, %v678
  %v680 = vpop.f32.mrb[0].mxu0
  %681 = vdwg.mxu0
  %682 = vmatprep.subr.mxu0 0.0
  %683 = vmatpush1.msra.mxu0 %v620
  %684 = vmatprep.subr.mxu0 0.0
  %685 = vmatpush1.msra.mxu0 %v623
  %686 = vmatprep.subr.mxu0 0.0
  %687 = vmatpush1.msra.mxu0 %v628
  %688 = vmatprep.subr.mxu0 0.0
  %689 = vmatpush1.msra.mxu0 %v631
  %690 = vmatprep.subr.mxu0 0.0
  %691 = vmatpush1.msra.mxu0 %v636
  %692 = vmatprep.subr.mxu0 0.0
  %693 = vmatpush1.msra.mxu0 %v639
  %694 = vmatprep.subr.mxu0 0.0
  %695 = vmatpush1.msra.mxu0 %v644
  %696 = vmatprep.subr.mxu0 0.0
  %697 = vmatpush1.msra.mxu0 %v647
  %698 = vmatprep.subr.mxu0 0.0
  %699 = vmatpush1.msra.mxu0 %v652
  %700 = vmatprep.subr.mxu0 0.0
  %701 = vmatpush1.msra.mxu0 %v655
  %702 = vmatprep.subr.mxu0 0.0
  %703 = vmatpush1.msra.mxu0 %v660
  %704 = vmatprep.subr.mxu0 0.0
  %705 = vmatpush1.msra.mxu0 %v663
  %706 = vmatprep.subr.mxu0 0.0
  %707 = vmatpush1.msra.mxu0 %v668
  %708 = vmatprep.subr.mxu0 0.0
  %709 = vmatpush1.msra.mxu0 %v671
  %710 = vmatprep.subr.mxu0 0.0
  %711 = vmatpush1.msra.mxu0 %v676
  %712 = vmatprep.subr.mxu0 0.0
  %713 = vmatpush1.msra.mxu0 %v679
  %714 = vmatprep.subr.mxu0 0.0
  %715 = vmatpush1.msra.mxu0 0.0
  %716 = vmatprep.subr.mxu0 0.0
  %717 = vmatpush1.msra.mxu0 0.0
  %718 = vmatprep.subr.mxu0 0.0
  %719 = vmatpush1.msra.mxu0 0.0
  %720 = vmatprep.subr.mxu0 0.0
  %721 = vmatpush1.msra.mxu0 0.0
  %722 = vmatprep.subr.mxu0 0.0
  %723 = vmatpush1.msra.mxu0 0.0
  %724 = vmatprep.subr.mxu0 0.0
  %725 = vmatpush1.msra.mxu0 0.0
  %726 = vmatprep.subr.mxu0 0.0
  %727 = vmatpush1.msra.mxu0 0.0
  %728 = vmatprep.subr.mxu0 0.0
  %729 = vmatpush1.msra.mxu0 0.0
  %730 = vmatprep.subr.mxu0 0.0
  %731 = vmatpush1.msra.mxu0 0.0
  %732 = vmatprep.subr.mxu0 0.0
  %733 = vmatpush1.msra.mxu0 0.0
  %734 = vmatprep.subr.mxu0 0.0
  %735 = vmatpush1.msra.mxu0 0.0
  %736 = vmatprep.subr.mxu0 0.0
  %737 = vmatpush1.msra.mxu0 0.0
  %738 = vmatprep.subr.mxu0 0.0
  %739 = vmatpush1.msra.mxu0 0.0
  %740 = vmatprep.subr.mxu0 0.0
  %741 = vmatpush1.msra.mxu0 0.0
  %742 = vmatprep.subr.mxu0 0.0
  %743 = vmatpush1.msra.mxu0 0.0
  %744 = vmatprep.subr.mxu0 0.0
  %745 = vmatpush1.msra.mxu0 0.0
  %746 = vmatprep.mubr.f32.mxu0 0.0
  %747 = vmatmul.mubr.f32.gmra.mrb[0].mxu0 %v33
  %v748 = vpop.f32.mrb[0].mxu0
  %v749 = vadd.f32 0.0, %v748
  %v750 = vpop.f32.mrb[0].mxu0
  %751 = vdwg.mxu0
  %v752 = vmul.f32 %v620, %v620
  %v753 = vmul.f32 %v623, %v623
  %v754 = vmul.f32 %v628, %v628
  %v755 = vmul.f32 %v631, %v631
  %v756 = vmul.f32 %v636, %v636
  %v757 = vmul.f32 %v639, %v639
  %v758 = vmul.f32 %v644, %v644
  %v759 = vmul.f32 %v647, %v647
  %v760 = vmul.f32 %v652, %v652
  %v761 = vmul.f32 %v655, %v655
  %v762 = vmul.f32 %v660, %v660
  %v763 = vmul.f32 %v663, %v663
  %v764 = vmul.f32 %v668, %v668
  %v765 = vmul.f32 %v671, %v671
  %v766 = vmul.f32 %v676, %v676
  %v767 = vmul.f32 %v679, %v679
  %768 = vmatprep.subr.mxu0 0.0
  %769 = vmatpush1.msra.mxu0 %v752
  %770 = vmatprep.subr.mxu0 0.0
  %771 = vmatpush1.msra.mxu0 %v753
  %772 = vmatprep.subr.mxu0 0.0
  %773 = vmatpush1.msra.mxu0 %v754
  %774 = vmatprep.subr.mxu0 0.0
  %775 = vmatpush1.msra.mxu0 %v755
  %776 = vmatprep.subr.mxu0 0.0
  %777 = vmatpush1.msra.mxu0 %v756
  %778 = vmatprep.subr.mxu0 0.0
  %779 = vmatpush1.msra.mxu0 %v757
  %780 = vmatprep.subr.mxu0 0.0
  %781 = vmatpush1.msra.mxu0 %v758
  %782 = vmatprep.subr.mxu0 0.0
  %783 = vmatpush1.msra.mxu0 %v759
  %784 = vmatprep.subr.mxu0 0.0
  %785 = vmatpush1.msra.mxu0 %v760
  %786 = vmatprep.subr.mxu0 0.0
  %787 = vmatpush1.msra.mxu0 %v761
  %788 = vmatprep.subr.mxu0 0.0
  %789 = vmatpush1.msra.mxu0 %v762
  %790 = vmatprep.subr.mxu0 0.0
  %791 = vmatpush1.msra.mxu0 %v763
  %792 = vmatprep.subr.mxu0 0.0
  %793 = vmatpush1.msra.mxu0 %v764
  %794 = vmatprep.subr.mxu0 0.0
  %795 = vmatpush1.msra.mxu0 %v765
  %796 = vmatprep.subr.mxu0 0.0
  %797 = vmatpush1.msra.mxu0 %v766
  %798 = vmatprep.subr.mxu0 0.0
  %799 = vmatpush1.msra.mxu0 %v767
  %800 = vmatprep.subr.mxu0 0.0
  %801 = vmatpush1.msra.mxu0 0.0
  %802 = vmatprep.subr.mxu0 0.0
  %803 = vmatpush1.msra.mxu0 0.0
  %804 = vmatprep.subr.mxu0 0.0
  %805 = vmatpush1.msra.mxu0 0.0
  %806 = vmatprep.subr.mxu0 0.0
  %807 = vmatpush1.msra.mxu0 0.0
  %808 = vmatprep.subr.mxu0 0.0
  %809 = vmatpush1.msra.mxu0 0.0
  %810 = vmatprep.subr.mxu0 0.0
  %811 = vmatpush1.msra.mxu0 0.0
  %812 = vmatprep.subr.mxu0 0.0
  %813 = vmatpush1.msra.mxu0 0.0
  %814 = vmatprep.subr.mxu0 0.0
  %815 = vmatpush1.msra.mxu0 0.0
  %816 = vmatprep.subr.mxu0 0.0
  %817 = vmatpush1.msra.mxu0 0.0
  %818 = vmatprep.subr.mxu0 0.0
  %819 = vmatpush1.msra.mxu0 0.0
  %820 = vmatprep.subr.mxu0 0.0
  %821 = vmatpush1.msra.mxu0 0.0
  %822 = vmatprep.subr.mxu0 0.0
  %823 = vmatpush1.msra.mxu0 0.0
  %824 = vmatprep.subr.mxu0 0.0
  %825 = vmatpush1.msra.mxu0 0.0
  %826 = vmatprep.subr.mxu0 0.0
  %827 = vmatpush1.msra.mxu0 0.0
  %828 = vmatprep.subr.mxu0 0.0
  %829 = vmatpush1.msra.mxu0 0.0
  %830 = vmatprep.subr.mxu0 0.0
  %831 = vmatpush1.msra.mxu0 0.0
  %832 = vmatprep.mubr.f32.mxu0 0.0
  %833 = vmatmul.mubr.f32.gmra.mrb[0].mxu0 %v33
  %v834 = vpop.f32.mrb[0].mxu0
  %v835 = vadd.f32 0.0, %v834
  %v836 = vpop.f32.mrb[0].mxu0
  %837 = vdwg.mxu0
  %v838 = vmul.f32 %v749, %v749
  %v839 = vsub.f32 %v835, %v838
  %v840 = vlaneseq
  %v841 = vshrl.u32 %v840, 7
  %v842 = vsub.s32 0, %v841
  %v843 = vrot.slane %v749, %v842
  %v844 = vsub.f32 %v620, %v843
  %v845 = vsub.f32 %v623, %v843
  %v846 = vsub.f32 %v628, %v843
  %v847 = vsub.f32 %v631, %v843
  %v848 = vsub.f32 %v636, %v843
  %v849 = vsub.f32 %v639, %v843
  %v850 = vsub.f32 %v644, %v843
  %v851 = vsub.f32 %v647, %v843
  %v852 = vsub.f32 %v652, %v843
  %v853 = vsub.f32 %v655, %v843
  %v854 = vsub.f32 %v660, %v843
  %v855 = vsub.f32 %v663, %v843
  %v856 = vsub.f32 %v668, %v843
  %v857 = vsub.f32 %v671, %v843
  %v858 = vsub.f32 %v676, %v843
  %v859 = vsub.f32 %v679, %v843
  %v860 = vadd.f32 %v839, 1e-05
  %v861 = vrsqrt.pop %v860
  %v862 = vlaneseq
  %v863 = vshrl.u32 %v862, 7
  %v864 = vsub.s32 0, %v863
  %v865 = vrot.slane %v861, %v864
  %v866 = vmul.f32 %v844, %v865
  %v867 = vmul.f32 %v845, %v865
  %v868 = vmul.f32 %v846, %v865
  %v869 = vmul.f32 %v847, %v865
  %v870 = vmul.f32 %v848, %v865
  %v871 = vmul.f32 %v849, %v865
  %v872 = vmul.f32 %v850, %v865
  %v873 = vmul.f32 %v851, %v865
  %v874 = vmul.f32 %v852, %v865
  %v875 = vmul.f32 %v853, %v865
  %v876 = vmul.f32 %v854, %v865
  %v877 = vmul.f32 %v855, %v865
  %v878 = vmul.f32 %v856, %v865
  %v879 = vmul.f32 %v857, %v865
  %v880 = vmul.f32 %v858, %v865
  %v881 = vmul.f32 %v859, %v865
  %v882 = vld [vmem:[%s8 + $0x4] sm:$0x1]
  %v883 = vlaneseq
  %v884 = vshrl.u32 %v883, 7
  %v885 = vsub.s32 0, %v884
  %v886 = vrot.slane %v882, %v885
  %v887 = vmul.f32 %v866, %v886
  %v888 = vmul.f32 %v867, %v886
  %v889 = vmul.f32 %v868, %v886
  %v890 = vmul.f32 %v869, %v886
  %v891 = vmul.f32 %v870, %v886
  %v892 = vmul.f32 %v871, %v886
  %v893 = vmul.f32 %v872, %v886
  %v894 = vmul.f32 %v873, %v886
  %v895 = vmul.f32 %v874, %v886
  %v896 = vmul.f32 %v875, %v886
  %v897 = vmul.f32 %v876, %v886
  %v898 = vmul.f32 %v877, %v886
  %v899 = vmul.f32 %v878, %v886
  %v900 = vmul.f32 %v879, %v886
  %v901 = vmul.f32 %v880, %v886
  %v902 = vmul.f32 %v881, %v886
  %v903 = vld [vmem:[%s8 + $0x5] sm:$0x1]
  %v904 = vlaneseq
  %v905 = vshrl.u32 %v904, 7
  %v906 = vsub.s32 0, %v905
  %v907 = vrot.slane %v903, %v906
  %v908 = vadd.f32 %v887, %v907
  %v909 = vadd.f32 %v888, %v907
  %v910 = vadd.f32 %v889, %v907
  %v911 = vadd.f32 %v890, %v907
  %v912 = vadd.f32 %v891, %v907
  %v913 = vadd.f32 %v892, %v907
  %v914 = vadd.f32 %v893, %v907
  %v915 = vadd.f32 %v894, %v907
  %v916 = vadd.f32 %v895, %v907
  %v917 = vadd.f32 %v896, %v907
  %v918 = vadd.f32 %v897, %v907
  %v919 = vadd.f32 %v898, %v907
  %v920 = vadd.f32 %v899, %v907
  %v921 = vadd.f32 %v900, %v907
  %v922 = vadd.f32 %v901, %v907
  %v923 = vadd.f32 %v902, %v907
  %v924 = vmax.f32 %v908, 0.0
  %v925 = vmax.f32 %v909, 0.0
  %v926 = vmax.f32 %v910, 0.0
  %v927 = vmax.f32 %v911, 0.0
  %v928 = vmax.f32 %v912, 0.0
  %v929 = vmax.f32 %v913, 0.0
  %v930 = vmax.f32 %v914, 0.0
  %v931 = vmax.f32 %v915, 0.0
  %v932 = vmax.f32 %v916, 0.0
  %v933 = vmax.f32 %v917, 0.0
  %v934 = vmax.f32 %v918, 0.0
  %v935 = vmax.f32 %v919, 0.0
  %v936 = vmax.f32 %v920, 0.0
  %v937 = vmax.f32 %v921, 0.0
  %v938 = vmax.f32 %v922, 0.0
  %v939 = vmax.f32 %v923, 0.0
  %v940 = vpack.c.bf16 %v925, %v924
  %v941 = vpack.c.bf16 %v927, %v926
  %v942 = vpack.c.bf16 %v929, %v928
  %v943 = vpack.c.bf16 %v931, %v930
  %v944 = vpack.c.bf16 %v933, %v932
  %v945 = vpack.c.bf16 %v935, %v934
  %v946 = vpack.c.bf16 %v937, %v936
  %v947 = vpack.c.bf16 %v939, %v938
  %v948 = vld [vmem:[%s6] sm:$0xf]
  %v949 = vld [vmem:[%s6 + $0x4] sm:$0xf]
  %v950 = vld [vmem:[%s6 + $0x8] sm:$0xf]
  %v951 = vld [vmem:[%s6 + $0xc] sm:$0xf]
  %v956 = vunpack.c.l.b16 %v948
  %v957 = vunpack.c.l.b16 %v949
  %v958 = vunpack.c.l.b16 %v950
  %v959 = vunpack.c.l.b16 %v951
  %v960 = vpack.c.b16 %v957, %v956
  %v961 = vpack.c.b16 %v959, %v958
  %v965 = vsel %vm560, %v940, 0
  %v968 = vsel %vm560, %v941, 0
  %v971 = vsel %vm560, %v942, 0
  %v974 = vsel %vm560, %v943, 0
  %v977 = vsel %vm560, %v944, 0
  %v980 = vsel %vm560, %v945, 0
  %v983 = vsel %vm560, %v946, 0
  %v986 = vsel %vm560, %v947, 0
  %988 = vmatprep.subr.bf16.mxu0 0
  %989 = vmatpush1.bf16.msra.mxu0 %v960
  %990 = vmatprep.subr.bf16.mxu0 0
  %991 = vmatpush1.bf16.msra.mxu0 %v961
  %992 = vmatprep.subr.bf16.mxu0 0
  %993 = vmatpush1.bf16.msra.mxu0 0
  %994 = vmatprep.subr.bf16.mxu0 0
  %995 = vmatpush1.bf16.msra.mxu0 0
  %996 = vmatprep.subr.bf16.mxu0 0
  %997 = vmatpush1.bf16.msra.mxu0 0
  %998 = vmatprep.subr.bf16.mxu0 0
  %999 = vmatpush1.bf16.msra.mxu0 0
  %1000 = vmatprep.subr.bf16.mxu0 0
  %1001 = vmatpush1.bf16.msra.mxu0 0
  %1002 = vmatprep.subr.bf16.mxu0 0
  %1003 = vmatpush1.bf16.msra.mxu0 0
  %1004 = vmatprep.subr.bf16.mxu0 0
  %1005 = vmatpush1.bf16.msra.mxu0 0
  %1006 = vmatprep.subr.bf16.mxu0 0
  %1007 = vmatpush1.bf16.msra.mxu0 0
  %1008 = vmatprep.subr.bf16.mxu0 0
  %1009 = vmatpush1.bf16.msra.mxu0 0
  %1010 = vmatprep.subr.bf16.mxu0 0
  %1011 = vmatpush1.bf16.msra.mxu0 0
  %1012 = vmatprep.subr.bf16.mxu0 0
  %1013 = vmatpush1.bf16.msra.mxu0 0
  %1014 = vmatprep.subr.bf16.mxu0 0
  %1015 = vmatpush1.bf16.msra.mxu0 0
  %1016 = vmatprep.subr.bf16.mxu0 0
  %1017 = vmatpush1.bf16.msra.mxu0 0
  %1018 = vmatprep.subr.bf16.mxu0 0
  %1019 = vmatpush1.bf16.msra.mxu0 0
  %1020 = vmatprep.mubr.bf16.mxu0 0
  %1021 = vmatmul.mubr.bf16.gmra.mrb[0].mxu0 %v965
  %v1022 = vpop.f32.mrb[0].mxu0
  %v1023 = vadd.f32 0.0, %v1022
  %v1024 = vpop.f32.mrb[0].mxu0
  %v1025 = vpop.f32.mrb[0].mxu0
  %v1026 = vadd.f32 0.0, %v1025
  %v1027 = vpop.f32.mrb[0].mxu0
  %1028 = vmatprep.mubr.bf16.mxu0 0
  %1029 = vmatmul.mubr.bf16.gmra.mrb[0].mxu0 %v968
  %v1030 = vpop.f32.mrb[0].mxu0
  %v1031 = vadd.f32 0.0, %v1030
  %v1032 = vpop.f32.mrb[0].mxu0
  %v1033 = vpop.f32.mrb[0].mxu0
  %v1034 = vadd.f32 0.0, %v1033
  %v1035 = vpop.f32.mrb[0].mxu0
  %1036 = vmatprep.mubr.bf16.mxu0 0
  %1037 = vmatmul.mubr.bf16.gmra.mrb[0].mxu0 %v971
  %v1038 = vpop.f32.mrb[0].mxu0
  %v1039 = vadd.f32 0.0, %v1038
  %v1040 = vpop.f32.mrb[0].mxu0
  %v1041 = vpop.f32.mrb[0].mxu0
  %v1042 = vadd.f32 0.0, %v1041
  %v1043 = vpop.f32.mrb[0].mxu0
  %1044 = vmatprep.mubr.bf16.mxu0 0
  %1045 = vmatmul.mubr.bf16.gmra.mrb[0].mxu0 %v974
  %v1046 = vpop.f32.mrb[0].mxu0
  %v1047 = vadd.f32 0.0, %v1046
  %v1048 = vpop.f32.mrb[0].mxu0
  %v1049 = vpop.f32.mrb[0].mxu0
  %v1050 = vadd.f32 0.0, %v1049
  %v1051 = vpop.f32.mrb[0].mxu0
  %1052 = vmatprep.mubr.bf16.mxu0 0
  %1053 = vmatmul.mubr.bf16.gmra.mrb[0].mxu0 %v977
  %v1054 = vpop.f32.mrb[0].mxu0
  %v1055 = vadd.f32 0.0, %v1054
  %v1056 = vpop.f32.mrb[0].mxu0
  %v1057 = vpop.f32.mrb[0].mxu0
  %v1058 = vadd.f32 0.0, %v1057
  %v1059 = vpop.f32.mrb[0].mxu0
  %1060 = vmatprep.mubr.bf16.mxu0 0
  %1061 = vmatmul.mubr.bf16.gmra.mrb[0].mxu0 %v980
  %v1062 = vpop.f32.mrb[0].mxu0
  %v1063 = vadd.f32 0.0, %v1062
  %v1064 = vpop.f32.mrb[0].mxu0
  %v1065 = vpop.f32.mrb[0].mxu0
  %v1066 = vadd.f32 0.0, %v1065
  %v1067 = vpop.f32.mrb[0].mxu0
  %1068 = vmatprep.mubr.bf16.mxu0 0
  %1069 = vmatmul.mubr.bf16.gmra.mrb[0].mxu0 %v983
  %v1070 = vpop.f32.mrb[0].mxu0
  %v1071 = vadd.f32 0.0, %v1070
  %v1072 = vpop.f32.mrb[0].mxu0
  %v1073 = vpop.f32.mrb[0].mxu0
  %v1074 = vadd.f32 0.0, %v1073
  %v1075 = vpop.f32.mrb[0].mxu0
  %1076 = vmatprep.mubr.bf16.mxu0 0
  %1077 = vmatmul.mubr.bf16.gmra.mrb[0].mxu0 %v986
  %v1078 = vpop.f32.mrb[0].mxu0
  %v1079 = vadd.f32 0.0, %v1078
  %v1080 = vpop.f32.mrb[0].mxu0
  %v1081 = vpop.f32.mrb[0].mxu0
  %v1082 = vadd.f32 0.0, %v1081
  %v1083 = vpop.f32.mrb[0].mxu0
  %1084 = vdwg.mxu0
  %1101 = vrot.lane.b32.xlu0 %v1023, 92
  %v1102 = vpop.permute.xlu0 %1101
  %1103 = vrot.lane.b32.xlu0 %v1026, 92
  %v1104 = vpop.permute.xlu0 %1103
  %1105 = vrot.lane.b32.xlu0 %v1031, 92
  %v1106 = vpop.permute.xlu0 %1105
  %1107 = vrot.lane.b32.xlu0 %v1034, 92
  %v1108 = vpop.permute.xlu0 %1107
  %1109 = vrot.lane.b32.xlu0 %v1039, 92
  %v1110 = vpop.permute.xlu0 %1109
  %1111 = vrot.lane.b32.xlu0 %v1042, 92
  %v1112 = vpop.permute.xlu0 %1111
  %1113 = vrot.lane.b32.xlu0 %v1047, 92
  %v1114 = vpop.permute.xlu0 %1113
  %1115 = vrot.lane.b32.xlu0 %v1050, 92
  %v1116 = vpop.permute.xlu0 %1115
  %1117 = vrot.lane.b32.xlu0 %v1055, 92
  %v1118 = vpop.permute.xlu0 %1117
  %1119 = vrot.lane.b32.xlu0 %v1058, 92
  %v1120 = vpop.permute.xlu0 %1119
  %1121 = vrot.lane.b32.xlu0 %v1063, 92
  %v1122 = vpop.permute.xlu0 %1121
  %1123 = vrot.lane.b32.xlu0 %v1066, 92
  %v1124 = vpop.permute.xlu0 %1123
  %1125 = vrot.lane.b32.xlu0 %v1071, 92
  %v1126 = vpop.permute.xlu0 %1125
  %1127 = vrot.lane.b32.xlu0 %v1074, 92
  %v1128 = vpop.permute.xlu0 %1127
  %1129 = vrot.lane.b32.xlu0 %v1079, 92
  %v1130 = vpop.permute.xlu0 %1129
  %1131 = vrot.lane.b32.xlu0 %v1082, 92
  %v1132 = vpop.permute.xlu0 %1131
  %1149 = vxpose.xlu0.b32.start [1/16] %v1102, 128
  %1150 = vxpose.xlu0.b32.cont [2/16] %v1104, 128
  %1151 = vxpose.xlu0.b32.cont [3/16] %v1106, 128
  %1152 = vxpose.xlu0.b32.cont [4/16] %v1108, 128
  %1153 = vxpose.xlu0.b32.cont [5/16] %v1110, 128
  %1154 = vxpose.xlu0.b32.cont [6/16] %v1112, 128
  %1155 = vxpose.xlu0.b32.cont [7/16] %v1114, 128
  %1156 = vxpose.xlu0.b32.cont [8/16] %v1116, 128
  %1157 = vxpose.xlu0.b32.cont [9/16] %v1118, 128
  %1158 = vxpose.xlu0.b32.cont [10/16] %v1120, 128
  %1159 = vxpose.xlu0.b32.cont [11/16] %v1122, 128
  %1160 = vxpose.xlu0.b32.cont [12/16] %v1124, 128
  %1161 = vxpose.xlu0.b32.cont [13/16] %v1126, 128
  %1162 = vxpose.xlu0.b32.cont [14/16] %v1128, 128
  %1163 = vxpose.xlu0.b32.cont [15/16] %v1130, 128
  %1164 = vxpose.xlu0.b32.end [16/16] %v1132, 128
  %v1165 = vpop.trf.xlu0
  %v1166 = vpop.trf.xlu0
  %v1167 = vpop.trf.xlu0
  %v1168 = vpop.trf.xlu0
  %v1169 = vpop.trf.xlu0
  %v1170 = vpop.trf.xlu0
  %v1171 = vpop.trf.xlu0
  %v1172 = vpop.trf.xlu0
  %v1173 = vpop.trf.xlu0
  %v1174 = vpop.trf.xlu0
  %v1175 = vpop.trf.xlu0
  %v1176 = vpop.trf.xlu0
  %v1177 = vpop.trf.xlu0
  %v1178 = vpop.trf.xlu0
  %v1179 = vpop.trf.xlu0
  %v1180 = vpop.trf.xlu0
  %v1181 = vpack.c.bf16 %v1026, %v1023
  %v1182 = vpack.c.bf16 %v1034, %v1031
  %v1183 = vpack.c.bf16 %v1042, %v1039
  %v1184 = vpack.c.bf16 %v1050, %v1047
  %v1185 = vpack.c.bf16 %v1058, %v1055
  %v1186 = vpack.c.bf16 %v1066, %v1063
  %v1187 = vpack.c.bf16 %v1074, %v1071
  %v1188 = vpack.c.bf16 %v1082, %v1079
  %1189 = vset.pattern.permute.xlu0 32
  %1190 = vperm.xlu0 %1189, %v1023
  %v1191 = vpop.permute.xlu0 %1190
  %1193 = vset.pattern.permute.xlu0 32
  %1194 = vperm.xlu0 %1193, %v1026
  %v1195 = vpop.permute.xlu0 %1194
  %1197 = vset.pattern.permute.xlu0 32
  %1198 = vperm.xlu0 %1197, %v1031
  %v1199 = vpop.permute.xlu0 %1198
  %1201 = vset.pattern.permute.xlu0 32
  %1202 = vperm.xlu0 %1201, %v1034
  %v1203 = vpop.permute.xlu0 %1202
  %1205 = vset.pattern.permute.xlu0 32
  %1206 = vperm.xlu0 %1205, %v1039
  %v1207 = vpop.permute.xlu0 %1206
  %1209 = vset.pattern.permute.xlu0 32
  %1210 = vperm.xlu0 %1209, %v1042
  %v1211 = vpop.permute.xlu0 %1210
  %1213 = vset.pattern.permute.xlu0 32
  %1214 = vperm.xlu0 %1213, %v1047
  %v1215 = vpop.permute.xlu0 %1214
  %1217 = vset.pattern.permute.xlu0 32
  %1218 = vperm.xlu0 %1217, %v1050
  %v1219 = vpop.permute.xlu0 %1218
  %1221 = vset.pattern.permute.xlu0 32
  %1222 = vperm.xlu0 %1221, %v1055
  %v1223 = vpop.permute.xlu0 %1222
  %1225 = vset.pattern.permute.xlu0 32
  %1226 = vperm.xlu0 %1225, %v1058
  %v1227 = vpop.permute.xlu0 %1226
  %1229 = vset.pattern.permute.xlu0 32
  %1230 = vperm.xlu0 %1229, %v1063
  %v1231 = vpop.permute.xlu0 %1230
  %1233 = vset.pattern.permute.xlu0 32
  %1234 = vperm.xlu0 %1233, %v1066
  %v1235 = vpop.permute.xlu0 %1234
  %1237 = vset.pattern.permute.xlu0 32
  %1238 = vperm.xlu0 %1237, %v1071
  %v1239 = vpop.permute.xlu0 %1238
  %1241 = vset.pattern.permute.xlu0 32
  %1242 = vperm.xlu0 %1241, %v1074
  %v1243 = vpop.permute.xlu0 %1242
  %1245 = vset.pattern.permute.xlu0 32
  %1246 = vperm.xlu0 %1245, %v1079
  %v1247 = vpop.permute.xlu0 %1246
  %1249 = vset.pattern.permute.xlu0 32
  %1250 = vperm.xlu0 %1249, %v1082
  %v1251 = vpop.permute.xlu0 %1250
  %v1253 = vlaneseq
  %v1254 = vshrl.u32 %v1253, 7
  %v1255 = vsub.s32 0, %v1254
  %v1256 = vrot.slane %v1165, %v1255
  %v1257 = vadd.f32 %v1191, %v1256
  %v1258 = vadd.f32 %v1195, %v1256
  %v1259 = vadd.f32 %v1199, %v1256
  %v1260 = vadd.f32 %v1203, %v1256
  %v1261 = vadd.f32 %v1207, %v1256
  %v1262 = vadd.f32 %v1211, %v1256
  %v1263 = vadd.f32 %v1215, %v1256
  %v1264 = vadd.f32 %v1219, %v1256
  %v1265 = vadd.f32 %v1223, %v1256
  %v1266 = vadd.f32 %v1227, %v1256
  %v1267 = vadd.f32 %v1231, %v1256
  %v1268 = vadd.f32 %v1235, %v1256
  %v1269 = vadd.f32 %v1239, %v1256
  %v1270 = vadd.f32 %v1243, %v1256
  %v1271 = vadd.f32 %v1247, %v1256
  %v1272 = vadd.f32 %v1251, %v1256
  %vm1273 = vcmp.gt.f32.partialorder %v1257, 0.0
  %vm1274 = vcmp.gt.f32.partialorder %v1258, 0.0
  %vm1275 = vcmp.gt.f32.partialorder %v1259, 0.0
  %vm1276 = vcmp.gt.f32.partialorder %v1260, 0.0
  %vm1277 = vcmp.gt.f32.partialorder %v1261, 0.0
  %vm1278 = vcmp.gt.f32.partialorder %v1262, 0.0
  %vm1279 = vcmp.gt.f32.partialorder %v1263, 0.0
  %vm1280 = vcmp.gt.f32.partialorder %v1264, 0.0
  %vm1281 = vcmp.gt.f32.partialorder %v1265, 0.0
  %vm1282 = vcmp.gt.f32.partialorder %v1266, 0.0
  %vm1283 = vcmp.gt.f32.partialorder %v1267, 0.0
  %vm1284 = vcmp.gt.f32.partialorder %v1268, 0.0
  %vm1285 = vcmp.gt.f32.partialorder %v1269, 0.0
  %vm1286 = vcmp.gt.f32.partialorder %v1270, 0.0
  %vm1287 = vcmp.gt.f32.partialorder %v1271, 0.0
  %vm1288 = vcmp.gt.f32.partialorder %v1272, 0.0
  %v1289 = vmul.f32 %v1257, 0.2
  %v1290 = vmul.f32 %v1258, 0.2
  %v1291 = vmul.f32 %v1259, 0.2
  %v1292 = vmul.f32 %v1260, 0.2
  %v1293 = vmul.f32 %v1261, 0.2
  %v1294 = vmul.f32 %v1262, 0.2
  %v1295 = vmul.f32 %v1263, 0.2
  %v1296 = vmul.f32 %v1264, 0.2
  %v1297 = vmul.f32 %v1265, 0.2
  %v1298 = vmul.f32 %v1266, 0.2
  %v1299 = vmul.f32 %v1267, 0.2
  %v1300 = vmul.f32 %v1268, 0.2
  %v1301 = vmul.f32 %v1269, 0.2
  %v1302 = vmul.f32 %v1270, 0.2
  %v1303 = vmul.f32 %v1271, 0.2
  %v1304 = vmul.f32 %v1272, 0.2
  %v1305 = vsel %vm1273, %v1257, %v1289
  %v1306 = vsel %vm1274, %v1258, %v1290
  %v1307 = vsel %vm1275, %v1259, %v1291
  %v1308 = vsel %vm1276, %v1260, %v1292
  %v1309 = vsel %vm1277, %v1261, %v1293
  %v1310 = vsel %vm1278, %v1262, %v1294
  %v1311 = vsel %vm1279, %v1263, %v1295
  %v1312 = vsel %vm1280, %v1264, %v1296
  %v1313 = vsel %vm1281, %v1265, %v1297
  %v1314 = vsel %vm1282, %v1266, %v1298
  %v1315 = vsel %vm1283, %v1267, %v1299
  %v1316 = vsel %vm1284, %v1268, %v1300
  %v1317 = vsel %vm1285, %v1269, %v1301
  %v1318 = vsel %vm1286, %v1270, %v1302
  %v1319 = vsel %vm1287, %v1271, %v1303
  %v1320 = vsel %vm1288, %v1272, %v1304
  %v1321 = vadd.f32 %v1305, %v66
  %v1322 = vadd.f32 %v1306, %v67
  %v1323 = vadd.f32 %v1307, %v68
  %v1324 = vadd.f32 %v1308, %v69
  %v1325 = vadd.f32 %v1309, %v70
  %v1326 = vadd.f32 %v1310, %v71
  %v1327 = vadd.f32 %v1311, %v72
  %v1328 = vadd.f32 %v1312, %v73
  %v1329 = vadd.f32 %v1313, %v74
  %v1330 = vadd.f32 %v1314, %v75
  %v1331 = vadd.f32 %v1315, %v76
  %v1332 = vadd.f32 %v1316, %v77
  %v1333 = vadd.f32 %v1317, %v78
  %v1334 = vadd.f32 %v1318, %v79
  %v1335 = vadd.f32 %v1319, %v80
  %v1336 = vadd.f32 %v1320, %v81
  %1337 = vmax.xlane.f32.xlu0 %v1321
  %v1338 = vpop.xlane.xlu0 %1337
  %1339 = vmax.xlane.f32.xlu0 %v1322
  %v1340 = vpop.xlane.xlu0 %1339
  %1341 = vmax.xlane.f32.xlu0 %v1323
  %v1342 = vpop.xlane.xlu0 %1341
  %1343 = vmax.xlane.f32.xlu0 %v1324
  %v1344 = vpop.xlane.xlu0 %1343
  %1345 = vmax.xlane.f32.xlu0 %v1325
  %v1346 = vpop.xlane.xlu0 %1345
  %1347 = vmax.xlane.f32.xlu0 %v1326
  %v1348 = vpop.xlane.xlu0 %1347
  %1349 = vmax.xlane.f32.xlu0 %v1327
  %v1350 = vpop.xlane.xlu0 %1349
  %1351 = vmax.xlane.f32.xlu0 %v1328
  %v1352 = vpop.xlane.xlu0 %1351
  %1353 = vmax.xlane.f32.xlu0 %v1329
  %v1354 = vpop.xlane.xlu0 %1353
  %1355 = vmax.xlane.f32.xlu0 %v1330
  %v1356 = vpop.xlane.xlu0 %1355
  %1357 = vmax.xlane.f32.xlu0 %v1331
  %v1358 = vpop.xlane.xlu0 %1357
  %1359 = vmax.xlane.f32.xlu0 %v1332
  %v1360 = vpop.xlane.xlu0 %1359
  %1361 = vmax.xlane.f32.xlu0 %v1333
  %v1362 = vpop.xlane.xlu0 %1361
  %1363 = vmax.xlane.f32.xlu0 %v1334
  %v1364 = vpop.xlane.xlu0 %1363
  %1365 = vmax.xlane.f32.xlu0 %v1335
  %v1366 = vpop.xlane.xlu0 %1365
  %1367 = vmax.xlane.f32.xlu0 %v1336
  %v1368 = vpop.xlane.xlu0 %1367
  %v1369 = vsub.f32 %v1321, %v1338
  %v1370 = vsub.f32 %v1322, %v1340
  %v1371 = vsub.f32 %v1323, %v1342
  %v1372 = vsub.f32 %v1324, %v1344
  %v1373 = vsub.f32 %v1325, %v1346
  %v1374 = vsub.f32 %v1326, %v1348
  %v1375 = vsub.f32 %v1327, %v1350
  %v1376 = vsub.f32 %v1328, %v1352
  %v1377 = vsub.f32 %v1329, %v1354
  %v1378 = vsub.f32 %v1330, %v1356
  %v1379 = vsub.f32 %v1331, %v1358
  %v1380 = vsub.f32 %v1332, %v1360
  %v1381 = vsub.f32 %v1333, %v1362
  %v1382 = vsub.f32 %v1334, %v1364
  %v1383 = vsub.f32 %v1335, %v1366
  %v1384 = vsub.f32 %v1336, %v1368
  %v1385 = vmul.f32 %v1369, 1.442695
  %v1386 = vpow.pop %v1385
  %v1387 = vmul.f32 %v1370, 1.442695
  %v1388 = vpow.pop %v1387
  %v1389 = vmul.f32 %v1371, 1.442695
  %v1390 = vpow.pop %v1389
  %v1391 = vmul.f32 %v1372, 1.442695
  %v1392 = vpow.pop %v1391
  %v1393 = vmul.f32 %v1373, 1.442695
  %v1394 = vpow.pop %v1393
  %v1395 = vmul.f32 %v1374, 1.442695
  %v1396 = vpow.pop %v1395
  %v1397 = vmul.f32 %v1375, 1.442695
  %v1398 = vpow.pop %v1397
  %v1399 = vmul.f32 %v1376, 1.442695
  %v1400 = vpow.pop %v1399
  %v1401 = vmul.f32 %v1377, 1.442695
  %v1402 = vpow.pop %v1401
  %v1403 = vmul.f32 %v1378, 1.442695
  %v1404 = vpow.pop %v1403
  %v1405 = vmul.f32 %v1379, 1.442695
  %v1406 = vpow.pop %v1405
  %v1407 = vmul.f32 %v1380, 1.442695
  %v1408 = vpow.pop %v1407
  %v1409 = vmul.f32 %v1381, 1.442695
  %v1410 = vpow.pop %v1409
  %v1411 = vmul.f32 %v1382, 1.442695
  %v1412 = vpow.pop %v1411
  %v1413 = vmul.f32 %v1383, 1.442695
  %v1414 = vpow.pop %v1413
  %v1415 = vmul.f32 %v1384, 1.442695
  %v1416 = vpow.pop %v1415
  %1417 = vmatprep.subr.mxu0 0.0
  %1418 = vmatpush1.msra.mxu0 %v34
  %1419 = vmatprep.subr.mxu0 0.0
  %1420 = vmatpush1.msra.mxu0 %v35
  %1421 = vmatprep.subr.mxu0 0.0
  %1422 = vmatpush1.msra.mxu0 %v36
  %1423 = vmatprep.subr.mxu0 0.0
  %1424 = vmatpush1.msra.mxu0 %v37
  %1425 = vmatprep.subr.mxu0 0.0
  %1426 = vmatpush1.msra.mxu0 %v38
  %1427 = vmatprep.subr.mxu0 0.0
  %1428 = vmatpush1.msra.mxu0 %v39
  %1429 = vmatprep.subr.mxu0 0.0
  %1430 = vmatpush1.msra.mxu0 %v40
  %1431 = vmatprep.subr.mxu0 0.0
  %1432 = vmatpush1.msra.mxu0 %v41
  %1433 = vmatprep.subr.mxu0 0.0
  %1434 = vmatpush1.msra.mxu0 %v42
  %1435 = vmatprep.subr.mxu0 0.0
  %1436 = vmatpush1.msra.mxu0 %v43
  %1437 = vmatprep.subr.mxu0 0.0
  %1438 = vmatpush1.msra.mxu0 %v44
  %1439 = vmatprep.subr.mxu0 0.0
  %1440 = vmatpush1.msra.mxu0 %v45
  %1441 = vmatprep.subr.mxu0 0.0
  %1442 = vmatpush1.msra.mxu0 %v46
  %1443 = vmatprep.subr.mxu0 0.0
  %1444 = vmatpush1.msra.mxu0 %v47
  %1445 = vmatprep.subr.mxu0 0.0
  %1446 = vmatpush1.msra.mxu0 %v48
  %1447 = vmatprep.subr.mxu0 0.0
  %1448 = vmatpush1.msra.mxu0 %v49
  %1449 = vmatprep.subr.mxu0 0.0
  %1450 = vmatpush1.msra.mxu0 0.0
  %1451 = vmatprep.subr.mxu0 0.0
  %1452 = vmatpush1.msra.mxu0 0.0
  %1453 = vmatprep.subr.mxu0 0.0
  %1454 = vmatpush1.msra.mxu0 0.0
  %1455 = vmatprep.subr.mxu0 0.0
  %1456 = vmatpush1.msra.mxu0 0.0
  %1457 = vmatprep.subr.mxu0 0.0
  %1458 = vmatpush1.msra.mxu0 0.0
  %1459 = vmatprep.subr.mxu0 0.0
  %1460 = vmatpush1.msra.mxu0 0.0
  %1461 = vmatprep.subr.mxu0 0.0
  %1462 = vmatpush1.msra.mxu0 0.0
  %1463 = vmatprep.subr.mxu0 0.0
  %1464 = vmatpush1.msra.mxu0 0.0
  %1465 = vmatprep.subr.mxu0 0.0
  %1466 = vmatpush1.msra.mxu0 0.0
  %1467 = vmatprep.subr.mxu0 0.0
  %1468 = vmatpush1.msra.mxu0 0.0
  %1469 = vmatprep.subr.mxu0 0.0
  %1470 = vmatpush1.msra.mxu0 0.0
  %1471 = vmatprep.subr.mxu0 0.0
  %1472 = vmatpush1.msra.mxu0 0.0
  %1473 = vmatprep.subr.mxu0 0.0
  %1474 = vmatpush1.msra.mxu0 0.0
  %1475 = vmatprep.subr.mxu0 0.0
  %1476 = vmatpush1.msra.mxu0 0.0
  %1477 = vmatprep.subr.mxu0 0.0
  %1478 = vmatpush1.msra.mxu0 0.0
  %1479 = vmatprep.subr.mxu0 0.0
  %1480 = vmatpush1.msra.mxu0 0.0
  %1481 = vmatprep.mubr.f32.mxu0 0.0
  %1482 = vmatmul.mubr.f32.gmra.mrb[0].mxu0 %v1386
  %v1483 = vpop.f32.mrb[0].mxu0
  %v1484 = vadd.f32 0.0, %v1483
  %v1485 = vpop.f32.mrb[0].mxu0
  %1486 = vmatprep.mubr.f32.mxu0 0.0
  %1487 = vmatmul.mubr.f32.gmra.mrb[0].mxu0 %v1388
  %v1488 = vpop.f32.mrb[0].mxu0
  %v1489 = vadd.f32 0.0, %v1488
  %v1490 = vpop.f32.mrb[0].mxu0
  %1491 = vmatprep.mubr.f32.mxu0 0.0
  %1492 = vmatmul.mubr.f32.gmra.mrb[0].mxu0 %v1390
  %v1493 = vpop.f32.mrb[0].mxu0
  %v1494 = vadd.f32 0.0, %v1493
  %v1495 = vpop.f32.mrb[0].mxu0
  %1496 = vmatprep.mubr.f32.mxu0 0.0
  %1497 = vmatmul.mubr.f32.gmra.mrb[0].mxu0 %v1392
  %v1498 = vpop.f32.mrb[0].mxu0
  %v1499 = vadd.f32 0.0, %v1498
  %v1500 = vpop.f32.mrb[0].mxu0
  %1501 = vmatprep.mubr.f32.mxu0 0.0
  %1502 = vmatmul.mubr.f32.gmra.mrb[0].mxu0 %v1394
  %v1503 = vpop.f32.mrb[0].mxu0
  %v1504 = vadd.f32 0.0, %v1503
  %v1505 = vpop.f32.mrb[0].mxu0
  %1506 = vmatprep.mubr.f32.mxu0 0.0
  %1507 = vmatmul.mubr.f32.gmra.mrb[0].mxu0 %v1396
  %v1508 = vpop.f32.mrb[0].mxu0
  %v1509 = vadd.f32 0.0, %v1508
  %v1510 = vpop.f32.mrb[0].mxu0
  %1511 = vmatprep.mubr.f32.mxu0 0.0
  %1512 = vmatmul.mubr.f32.gmra.mrb[0].mxu0 %v1398
  %v1513 = vpop.f32.mrb[0].mxu0
  %v1514 = vadd.f32 0.0, %v1513
  %v1515 = vpop.f32.mrb[0].mxu0
  %1516 = vmatprep.mubr.f32.mxu0 0.0
  %1517 = vmatmul.mubr.f32.gmra.mrb[0].mxu0 %v1400
  %v1518 = vpop.f32.mrb[0].mxu0
  %v1519 = vadd.f32 0.0, %v1518
  %v1520 = vpop.f32.mrb[0].mxu0
  %1521 = vmatprep.mubr.f32.mxu0 0.0
  %1522 = vmatmul.mubr.f32.gmra.mrb[0].mxu0 %v1402
  %v1523 = vpop.f32.mrb[0].mxu0
  %v1524 = vadd.f32 0.0, %v1523
  %v1525 = vpop.f32.mrb[0].mxu0
  %1526 = vmatprep.mubr.f32.mxu0 0.0
  %1527 = vmatmul.mubr.f32.gmra.mrb[0].mxu0 %v1404
  %v1528 = vpop.f32.mrb[0].mxu0
  %v1529 = vadd.f32 0.0, %v1528
  %v1530 = vpop.f32.mrb[0].mxu0
  %1531 = vmatprep.mubr.f32.mxu0 0.0
  %1532 = vmatmul.mubr.f32.gmra.mrb[0].mxu0 %v1406
  %v1533 = vpop.f32.mrb[0].mxu0
  %v1534 = vadd.f32 0.0, %v1533
  %v1535 = vpop.f32.mrb[0].mxu0
  %1536 = vmatprep.mubr.f32.mxu0 0.0
  %1537 = vmatmul.mubr.f32.gmra.mrb[0].mxu0 %v1408
  %v1538 = vpop.f32.mrb[0].mxu0
  %v1539 = vadd.f32 0.0, %v1538
  %v1540 = vpop.f32.mrb[0].mxu0
  %1541 = vmatprep.mubr.f32.mxu0 0.0
  %1542 = vmatmul.mubr.f32.gmra.mrb[0].mxu0 %v1410
  %v1543 = vpop.f32.mrb[0].mxu0
  %v1544 = vadd.f32 0.0, %v1543
  %v1545 = vpop.f32.mrb[0].mxu0
  %1546 = vmatprep.mubr.f32.mxu0 0.0
  %1547 = vmatmul.mubr.f32.gmra.mrb[0].mxu0 %v1412
  %v1548 = vpop.f32.mrb[0].mxu0
  %v1549 = vadd.f32 0.0, %v1548
  %v1550 = vpop.f32.mrb[0].mxu0
  %1551 = vmatprep.mubr.f32.mxu0 0.0
  %1552 = vmatmul.mubr.f32.gmra.mrb[0].mxu0 %v1414
  %v1553 = vpop.f32.mrb[0].mxu0
  %v1554 = vadd.f32 0.0, %v1553
  %v1555 = vpop.f32.mrb[0].mxu0
  %1556 = vmatprep.mubr.f32.mxu0 0.0
  %1557 = vmatmul.mubr.f32.gmra.mrb[0].mxu0 %v1416
  %v1558 = vpop.f32.mrb[0].mxu0
  %v1559 = vadd.f32 0.0, %v1558
  %v1560 = vpop.f32.mrb[0].mxu0
  %1561 = vdwg.mxu0
  %v1562 = vrcp.pop %v1484
  %v1563 = vrcp.pop %v1489
  %v1564 = vrcp.pop %v1494
  %v1565 = vrcp.pop %v1499
  %v1566 = vrcp.pop %v1504
  %v1567 = vrcp.pop %v1509
  %v1568 = vrcp.pop %v1514
  %v1569 = vrcp.pop %v1519
  %v1570 = vrcp.pop %v1524
  %v1571 = vrcp.pop %v1529
  %v1572 = vrcp.pop %v1534
  %v1573 = vrcp.pop %v1539
  %v1574 = vrcp.pop %v1544
  %v1575 = vrcp.pop %v1549
  %v1576 = vrcp.pop %v1554
  %v1577 = vrcp.pop %v1559
  %1579 = vset.pattern.permute.xlu0 0
  %1580 = vperm.xlu0 %1579, %v1562
  %v1581 = vpop.permute.xlu0 %1580
  %1584 = vset.pattern.permute.xlu0 0
  %1585 = vperm.xlu0 %1584, %v1563
  %v1586 = vpop.permute.xlu0 %1585
  %1589 = vset.pattern.permute.xlu0 0
  %1590 = vperm.xlu0 %1589, %v1564
  %v1591 = vpop.permute.xlu0 %1590
  %1594 = vset.pattern.permute.xlu0 0
  %1595 = vperm.xlu0 %1594, %v1565
  %v1596 = vpop.permute.xlu0 %1595
  %1599 = vset.pattern.permute.xlu0 0
  %1600 = vperm.xlu0 %1599, %v1566
  %v1601 = vpop.permute.xlu0 %1600
  %1604 = vset.pattern.permute.xlu0 0
  %1605 = vperm.xlu0 %1604, %v1567
  %v1606 = vpop.permute.xlu0 %1605
  %1609 = vset.pattern.permute.xlu0 0
  %1610 = vperm.xlu0 %1609, %v1568
  %v1611 = vpop.permute.xlu0 %1610
  %1614 = vset.pattern.permute.xlu0 0
  %1615 = vperm.xlu0 %1614, %v1569
  %v1616 = vpop.permute.xlu0 %1615
  %1619 = vset.pattern.permute.xlu0 0
  %1620 = vperm.xlu0 %1619, %v1570
  %v1621 = vpop.permute.xlu0 %1620
  %1624 = vset.pattern.permute.xlu0 0
  %1625 = vperm.xlu0 %1624, %v1571
  %v1626 = vpop.permute.xlu0 %1625
  %1629 = vset.pattern.permute.xlu0 0
  %1630 = vperm.xlu0 %1629, %v1572
  %v1631 = vpop.permute.xlu0 %1630
  %1634 = vset.pattern.permute.xlu0 0
  %1635 = vperm.xlu0 %1634, %v1573
  %v1636 = vpop.permute.xlu0 %1635
  %1639 = vset.pattern.permute.xlu0 0
  %1640 = vperm.xlu0 %1639, %v1574
  %v1641 = vpop.permute.xlu0 %1640
  %1644 = vset.pattern.permute.xlu0 0
  %1645 = vperm.xlu0 %1644, %v1575
  %v1646 = vpop.permute.xlu0 %1645
  %1649 = vset.pattern.permute.xlu0 0
  %1650 = vperm.xlu0 %1649, %v1576
  %v1651 = vpop.permute.xlu0 %1650
  %1654 = vset.pattern.permute.xlu0 0
  %1655 = vperm.xlu0 %1654, %v1577
  %v1656 = vpop.permute.xlu0 %1655
  %v1658 = vmul.f32 %v1386, %v1581
  %v1659 = vmul.f32 %v1388, %v1586
  %v1660 = vmul.f32 %v1390, %v1591
  %v1661 = vmul.f32 %v1392, %v1596
  %v1662 = vmul.f32 %v1394, %v1601
  %v1663 = vmul.f32 %v1396, %v1606
  %v1664 = vmul.f32 %v1398, %v1611
  %v1665 = vmul.f32 %v1400, %v1616
  %v1666 = vmul.f32 %v1402, %v1621
  %v1667 = vmul.f32 %v1404, %v1626
  %v1668 = vmul.f32 %v1406, %v1631
  %v1669 = vmul.f32 %v1408, %v1636
  %v1670 = vmul.f32 %v1410, %v1641
  %v1671 = vmul.f32 %v1412, %v1646
  %v1672 = vmul.f32 %v1414, %v1651
  %v1673 = vmul.f32 %v1416, %v1656
  %v1674 = vpack.c.bf16 %v1659, %v1658
  %v1675 = vpack.c.bf16 %v1661, %v1660
  %v1676 = vpack.c.bf16 %v1663, %v1662
  %v1677 = vpack.c.bf16 %v1665, %v1664
  %v1678 = vpack.c.bf16 %v1667, %v1666
  %v1679 = vpack.c.bf16 %v1669, %v1668
  %v1680 = vpack.c.bf16 %v1671, %v1670
  %v1681 = vpack.c.bf16 %v1673, %v1672
  %1682 = vmatprep.subr.bf16.mxu0 0
  %1683 = vmatpush1.bf16.msra.mxu0 %v1181
  %1684 = vmatprep.subr.bf16.mxu0 0
  %1685 = vmatpush1.bf16.msra.mxu0 %v1182
  %1686 = vmatprep.subr.bf16.mxu0 0
  %1687 = vmatpush1.bf16.msra.mxu0 %v1183
  %1688 = vmatprep.subr.bf16.mxu0 0
  %1689 = vmatpush1.bf16.msra.mxu0 %v1184
  %1690 = vmatprep.subr.bf16.mxu0 0
  %1691 = vmatpush1.bf16.msra.mxu0 %v1185
  %1692 = vmatprep.subr.bf16.mxu0 0
  %1693 = vmatpush1.bf16.msra.mxu0 %v1186
  %1694 = vmatprep.subr.bf16.mxu0 0
  %1695 = vmatpush1.bf16.msra.mxu0 %v1187
  %1696 = vmatprep.subr.bf16.mxu0 0
  %1697 = vmatpush1.bf16.msra.mxu0 %v1188
  %1698 = vmatprep.subr.bf16.mxu0 0
  %1699 = vmatpush1.bf16.msra.mxu0 0
  %1700 = vmatprep.subr.bf16.mxu0 0
  %1701 = vmatpush1.bf16.msra.mxu0 0
  %1702 = vmatprep.subr.bf16.mxu0 0
  %1703 = vmatpush1.bf16.msra.mxu0 0
  %1704 = vmatprep.subr.bf16.mxu0 0
  %1705 = vmatpush1.bf16.msra.mxu0 0
  %1706 = vmatprep.subr.bf16.mxu0 0
  %1707 = vmatpush1.bf16.msra.mxu0 0
  %1708 = vmatprep.subr.bf16.mxu0 0
  %1709 = vmatpush1.bf16.msra.mxu0 0
  %1710 = vmatprep.subr.bf16.mxu0 0
  %1711 = vmatpush1.bf16.msra.mxu0 0
  %1712 = vmatprep.subr.bf16.mxu0 0
  %1713 = vmatpush1.bf16.msra.mxu0 0
  %1714 = vmatprep.mubr.bf16.mxu0 0
  %1715 = vmatmul.mubr.bf16.gmra.mrb[0].mxu0 %v1674
  %v1716 = vpop.f32.mrb[0].mxu0
  %v1717 = vadd.f32 0.0, %v1716
  %v1718 = vpop.f32.mrb[0].mxu0
  %v1719 = vpop.f32.mrb[0].mxu0
  %v1720 = vadd.f32 0.0, %v1719
  %v1721 = vpop.f32.mrb[0].mxu0
  %1722 = vmatprep.mubr.bf16.mxu0 0
  %1723 = vmatmul.mubr.bf16.gmra.mrb[0].mxu0 %v1675
  %v1724 = vpop.f32.mrb[0].mxu0
  %v1725 = vadd.f32 0.0, %v1724
  %v1726 = vpop.f32.mrb[0].mxu0
  %v1727 = vpop.f32.mrb[0].mxu0
  %v1728 = vadd.f32 0.0, %v1727
  %v1729 = vpop.f32.mrb[0].mxu0
  %1730 = vmatprep.mubr.bf16.mxu0 0
  %1731 = vmatmul.mubr.bf16.gmra.mrb[0].mxu0 %v1676
  %v1732 = vpop.f32.mrb[0].mxu0
  %v1733 = vadd.f32 0.0, %v1732
  %v1734 = vpop.f32.mrb[0].mxu0
  %v1735 = vpop.f32.mrb[0].mxu0
  %v1736 = vadd.f32 0.0, %v1735
  %v1737 = vpop.f32.mrb[0].mxu0
  %1738 = vmatprep.mubr.bf16.mxu0 0
  %1739 = vmatmul.mubr.bf16.gmra.mrb[0].mxu0 %v1677
  %v1740 = vpop.f32.mrb[0].mxu0
  %v1741 = vadd.f32 0.0, %v1740
  %v1742 = vpop.f32.mrb[0].mxu0
  %v1743 = vpop.f32.mrb[0].mxu0
  %v1744 = vadd.f32 0.0, %v1743
  %v1745 = vpop.f32.mrb[0].mxu0
  %1746 = vmatprep.mubr.bf16.mxu0 0
  %1747 = vmatmul.mubr.bf16.gmra.mrb[0].mxu0 %v1678
  %v1748 = vpop.f32.mrb[0].mxu0
  %v1749 = vadd.f32 0.0, %v1748
  %v1750 = vpop.f32.mrb[0].mxu0
  %v1751 = vpop.f32.mrb[0].mxu0
  %v1752 = vadd.f32 0.0, %v1751
  %v1753 = vpop.f32.mrb[0].mxu0
  %1754 = vmatprep.mubr.bf16.mxu0 0
  %1755 = vmatmul.mubr.bf16.gmra.mrb[0].mxu0 %v1679
  %v1756 = vpop.f32.mrb[0].mxu0
  %v1757 = vadd.f32 0.0, %v1756
  %v1758 = vpop.f32.mrb[0].mxu0
  %v1759 = vpop.f32.mrb[0].mxu0
  %v1760 = vadd.f32 0.0, %v1759
  %v1761 = vpop.f32.mrb[0].mxu0
  %1762 = vmatprep.mubr.bf16.mxu0 0
  %1763 = vmatmul.mubr.bf16.gmra.mrb[0].mxu0 %v1680
  %v1764 = vpop.f32.mrb[0].mxu0
  %v1765 = vadd.f32 0.0, %v1764
  %v1766 = vpop.f32.mrb[0].mxu0
  %v1767 = vpop.f32.mrb[0].mxu0
  %v1768 = vadd.f32 0.0, %v1767
  %v1769 = vpop.f32.mrb[0].mxu0
  %1770 = vmatprep.mubr.bf16.mxu0 0
  %1771 = vmatmul.mubr.bf16.gmra.mrb[0].mxu0 %v1681
  %v1772 = vpop.f32.mrb[0].mxu0
  %v1773 = vadd.f32 0.0, %v1772
  %v1774 = vpop.f32.mrb[0].mxu0
  %v1775 = vpop.f32.mrb[0].mxu0
  %v1776 = vadd.f32 0.0, %v1775
  %v1777 = vpop.f32.mrb[0].mxu0
  %1778 = vdwg.mxu0
  %1779 = vset.pattern.permute.xlu0 33
  %1780 = vperm.xlu0 %1779, %v1023
  %v1781 = vpop.permute.xlu0 %1780
  %1783 = vset.pattern.permute.xlu0 33
  %1784 = vperm.xlu0 %1783, %v1026
  %v1785 = vpop.permute.xlu0 %1784
  %1787 = vset.pattern.permute.xlu0 33
  %1788 = vperm.xlu0 %1787, %v1031
  %v1789 = vpop.permute.xlu0 %1788
  %1791 = vset.pattern.permute.xlu0 33
  %1792 = vperm.xlu0 %1791, %v1034
  %v1793 = vpop.permute.xlu0 %1792
  %1795 = vset.pattern.permute.xlu0 33
  %1796 = vperm.xlu0 %1795, %v1039
  %v1797 = vpop.permute.xlu0 %1796
  %1799 = vset.pattern.permute.xlu0 33
  %1800 = vperm.xlu0 %1799, %v1042
  %v1801 = vpop.permute.xlu0 %1800
  %1803 = vset.pattern.permute.xlu0 33
  %1804 = vperm.xlu0 %1803, %v1047
  %v1805 = vpop.permute.xlu0 %1804
  %1807 = vset.pattern.permute.xlu0 33
  %1808 = vperm.xlu0 %1807, %v1050
  %v1809 = vpop.permute.xlu0 %1808
  %1811 = vset.pattern.permute.xlu0 33
  %1812 = vperm.xlu0 %1811, %v1055
  %v1813 = vpop.permute.xlu0 %1812
  %1815 = vset.pattern.permute.xlu0 33
  %1816 = vperm.xlu0 %1815, %v1058
  %v1817 = vpop.permute.xlu0 %1816
  %1819 = vset.pattern.permute.xlu0 33
  %1820 = vperm.xlu0 %1819, %v1063
  %v1821 = vpop.permute.xlu0 %1820
  %1823 = vset.pattern.permute.xlu0 33
  %1824 = vperm.xlu0 %1823, %v1066
  %v1825 = vpop.permute.xlu0 %1824
  %1827 = vset.pattern.permute.xlu0 33
  %1828 = vperm.xlu0 %1827, %v1071
  %v1829 = vpop.permute.xlu0 %1828
  %1831 = vset.pattern.permute.xlu0 33
  %1832 = vperm.xlu0 %1831, %v1074
  %v1833 = vpop.permute.xlu0 %1832
  %1835 = vset.pattern.permute.xlu0 33
  %1836 = vperm.xlu0 %1835, %v1079
  %v1837 = vpop.permute.xlu0 %1836
  %1839 = vset.pattern.permute.xlu0 33
  %1840 = vperm.xlu0 %1839, %v1082
  %v1841 = vpop.permute.xlu0 %1840
  %v1843 = vlaneseq
  %v1844 = vshrl.u32 %v1843, 7
  %v1845 = vsub.s32 1, %v1844
  %v1846 = vrot.slane %v1165, %v1845
  %v1847 = vadd.f32 %v1781, %v1846
  %v1848 = vadd.f32 %v1785, %v1846
  %v1849 = vadd.f32 %v1789, %v1846
  %v1850 = vadd.f32 %v1793, %v1846
  %v1851 = vadd.f32 %v1797, %v1846
  %v1852 = vadd.f32 %v1801, %v1846
  %v1853 = vadd.f32 %v1805, %v1846
  %v1854 = vadd.f32 %v1809, %v1846
  %v1855 = vadd.f32 %v1813, %v1846
  %v1856 = vadd.f32 %v1817, %v1846
  %v1857 = vadd.f32 %v1821, %v1846
  %v1858 = vadd.f32 %v1825, %v1846
  %v1859 = vadd.f32 %v1829, %v1846
  %v1860 = vadd.f32 %v1833, %v1846
  %v1861 = vadd.f32 %v1837, %v1846
  %v1862 = vadd.f32 %v1841, %v1846
  %vm1863 = vcmp.gt.f32.partialorder %v1847, 0.0
  %vm1864 = vcmp.gt.f32.partialorder %v1848, 0.0
  %vm1865 = vcmp.gt.f32.partialorder %v1849, 0.0
  %vm1866 = vcmp.gt.f32.partialorder %v1850, 0.0
  %vm1867 = vcmp.gt.f32.partialorder %v1851, 0.0
  %vm1868 = vcmp.gt.f32.partialorder %v1852, 0.0
  %vm1869 = vcmp.gt.f32.partialorder %v1853, 0.0
  %vm1870 = vcmp.gt.f32.partialorder %v1854, 0.0
  %vm1871 = vcmp.gt.f32.partialorder %v1855, 0.0
  %vm1872 = vcmp.gt.f32.partialorder %v1856, 0.0
  %vm1873 = vcmp.gt.f32.partialorder %v1857, 0.0
  %vm1874 = vcmp.gt.f32.partialorder %v1858, 0.0
  %vm1875 = vcmp.gt.f32.partialorder %v1859, 0.0
  %vm1876 = vcmp.gt.f32.partialorder %v1860, 0.0
  %vm1877 = vcmp.gt.f32.partialorder %v1861, 0.0
  %vm1878 = vcmp.gt.f32.partialorder %v1862, 0.0
  %v1879 = vmul.f32 %v1847, 0.2
  %v1880 = vmul.f32 %v1848, 0.2
  %v1881 = vmul.f32 %v1849, 0.2
  %v1882 = vmul.f32 %v1850, 0.2
  %v1883 = vmul.f32 %v1851, 0.2
  %v1884 = vmul.f32 %v1852, 0.2
  %v1885 = vmul.f32 %v1853, 0.2
  %v1886 = vmul.f32 %v1854, 0.2
  %v1887 = vmul.f32 %v1855, 0.2
  %v1888 = vmul.f32 %v1856, 0.2
  %v1889 = vmul.f32 %v1857, 0.2
  %v1890 = vmul.f32 %v1858, 0.2
  %v1891 = vmul.f32 %v1859, 0.2
  %v1892 = vmul.f32 %v1860, 0.2
  %v1893 = vmul.f32 %v1861, 0.2
  %v1894 = vmul.f32 %v1862, 0.2
  %v1895 = vsel %vm1863, %v1847, %v1879
  %v1896 = vsel %vm1864, %v1848, %v1880
  %v1897 = vsel %vm1865, %v1849, %v1881
  %v1898 = vsel %vm1866, %v1850, %v1882
  %v1899 = vsel %vm1867, %v1851, %v1883
  %v1900 = vsel %vm1868, %v1852, %v1884
  %v1901 = vsel %vm1869, %v1853, %v1885
  %v1902 = vsel %vm1870, %v1854, %v1886
  %v1903 = vsel %vm1871, %v1855, %v1887
  %v1904 = vsel %vm1872, %v1856, %v1888
  %v1905 = vsel %vm1873, %v1857, %v1889
  %v1906 = vsel %vm1874, %v1858, %v1890
  %v1907 = vsel %vm1875, %v1859, %v1891
  %v1908 = vsel %vm1876, %v1860, %v1892
  %v1909 = vsel %vm1877, %v1861, %v1893
  %v1910 = vsel %vm1878, %v1862, %v1894
  %v1911 = vadd.f32 %v1895, %v66
  %v1912 = vadd.f32 %v1896, %v67
  %v1913 = vadd.f32 %v1897, %v68
  %v1914 = vadd.f32 %v1898, %v69
  %v1915 = vadd.f32 %v1899, %v70
  %v1916 = vadd.f32 %v1900, %v71
  %v1917 = vadd.f32 %v1901, %v72
  %v1918 = vadd.f32 %v1902, %v73
  %v1919 = vadd.f32 %v1903, %v74
  %v1920 = vadd.f32 %v1904, %v75
  %v1921 = vadd.f32 %v1905, %v76
  %v1922 = vadd.f32 %v1906, %v77
  %v1923 = vadd.f32 %v1907, %v78
  %v1924 = vadd.f32 %v1908, %v79
  %v1925 = vadd.f32 %v1909, %v80
  %v1926 = vadd.f32 %v1910, %v81
  %1927 = vmax.xlane.f32.xlu0 %v1911
  %v1928 = vpop.xlane.xlu0 %1927
  %1929 = vmax.xlane.f32.xlu0 %v1912
  %v1930 = vpop.xlane.xlu0 %1929
  %1931 = vmax.xlane.f32.xlu0 %v1913
  %v1932 = vpop.xlane.xlu0 %1931
  %1933 = vmax.xlane.f32.xlu0 %v1914
  %v1934 = vpop.xlane.xlu0 %1933
  %1935 = vmax.xlane.f32.xlu0 %v1915
  %v1936 = vpop.xlane.xlu0 %1935
  %1937 = vmax.xlane.f32.xlu0 %v1916
  %v1938 = vpop.xlane.xlu0 %1937
  %1939 = vmax.xlane.f32.xlu0 %v1917
  %v1940 = vpop.xlane.xlu0 %1939
  %1941 = vmax.xlane.f32.xlu0 %v1918
  %v1942 = vpop.xlane.xlu0 %1941
  %1943 = vmax.xlane.f32.xlu0 %v1919
  %v1944 = vpop.xlane.xlu0 %1943
  %1945 = vmax.xlane.f32.xlu0 %v1920
  %v1946 = vpop.xlane.xlu0 %1945
  %1947 = vmax.xlane.f32.xlu0 %v1921
  %v1948 = vpop.xlane.xlu0 %1947
  %1949 = vmax.xlane.f32.xlu0 %v1922
  %v1950 = vpop.xlane.xlu0 %1949
  %1951 = vmax.xlane.f32.xlu0 %v1923
  %v1952 = vpop.xlane.xlu0 %1951
  %1953 = vmax.xlane.f32.xlu0 %v1924
  %v1954 = vpop.xlane.xlu0 %1953
  %1955 = vmax.xlane.f32.xlu0 %v1925
  %v1956 = vpop.xlane.xlu0 %1955
  %1957 = vmax.xlane.f32.xlu0 %v1926
  %v1958 = vpop.xlane.xlu0 %1957
  %v1959 = vsub.f32 %v1911, %v1928
  %v1960 = vsub.f32 %v1912, %v1930
  %v1961 = vsub.f32 %v1913, %v1932
  %v1962 = vsub.f32 %v1914, %v1934
  %v1963 = vsub.f32 %v1915, %v1936
  %v1964 = vsub.f32 %v1916, %v1938
  %v1965 = vsub.f32 %v1917, %v1940
  %v1966 = vsub.f32 %v1918, %v1942
  %v1967 = vsub.f32 %v1919, %v1944
  %v1968 = vsub.f32 %v1920, %v1946
  %v1969 = vsub.f32 %v1921, %v1948
  %v1970 = vsub.f32 %v1922, %v1950
  %v1971 = vsub.f32 %v1923, %v1952
  %v1972 = vsub.f32 %v1924, %v1954
  %v1973 = vsub.f32 %v1925, %v1956
  %v1974 = vsub.f32 %v1926, %v1958
  %v1975 = vmul.f32 %v1959, 1.442695
  %v1976 = vpow.pop %v1975
  %v1977 = vmul.f32 %v1960, 1.442695
  %v1978 = vpow.pop %v1977
  %v1979 = vmul.f32 %v1961, 1.442695
  %v1980 = vpow.pop %v1979
  %v1981 = vmul.f32 %v1962, 1.442695
  %v1982 = vpow.pop %v1981
  %v1983 = vmul.f32 %v1963, 1.442695
  %v1984 = vpow.pop %v1983
  %v1985 = vmul.f32 %v1964, 1.442695
  %v1986 = vpow.pop %v1985
  %v1987 = vmul.f32 %v1965, 1.442695
  %v1988 = vpow.pop %v1987
  %v1989 = vmul.f32 %v1966, 1.442695
  %v1990 = vpow.pop %v1989
  %v1991 = vmul.f32 %v1967, 1.442695
  %v1992 = vpow.pop %v1991
  %v1993 = vmul.f32 %v1968, 1.442695
  %v1994 = vpow.pop %v1993
  %v1995 = vmul.f32 %v1969, 1.442695
  %v1996 = vpow.pop %v1995
  %v1997 = vmul.f32 %v1970, 1.442695
  %v1998 = vpow.pop %v1997
  %v1999 = vmul.f32 %v1971, 1.442695
  %v2000 = vpow.pop %v1999
  %v2001 = vmul.f32 %v1972, 1.442695
  %v2002 = vpow.pop %v2001
  %v2003 = vmul.f32 %v1973, 1.442695
  %v2004 = vpow.pop %v2003
  %v2005 = vmul.f32 %v1974, 1.442695
  %v2006 = vpow.pop %v2005
  %2007 = vmatprep.subr.mxu0 0.0
  %2008 = vmatpush1.msra.mxu0 %v34
  %2009 = vmatprep.subr.mxu0 0.0
  %2010 = vmatpush1.msra.mxu0 %v35
  %2011 = vmatprep.subr.mxu0 0.0
  %2012 = vmatpush1.msra.mxu0 %v36
  %2013 = vmatprep.subr.mxu0 0.0
  %2014 = vmatpush1.msra.mxu0 %v37
  %2015 = vmatprep.subr.mxu0 0.0
  %2016 = vmatpush1.msra.mxu0 %v38
  %2017 = vmatprep.subr.mxu0 0.0
  %2018 = vmatpush1.msra.mxu0 %v39
  %2019 = vmatprep.subr.mxu0 0.0
  %2020 = vmatpush1.msra.mxu0 %v40
  %2021 = vmatprep.subr.mxu0 0.0
  %2022 = vmatpush1.msra.mxu0 %v41
  %2023 = vmatprep.subr.mxu0 0.0
  %2024 = vmatpush1.msra.mxu0 %v42
  %2025 = vmatprep.subr.mxu0 0.0
  %2026 = vmatpush1.msra.mxu0 %v43
  %2027 = vmatprep.subr.mxu0 0.0
  %2028 = vmatpush1.msra.mxu0 %v44
  %2029 = vmatprep.subr.mxu0 0.0
  %2030 = vmatpush1.msra.mxu0 %v45
  %2031 = vmatprep.subr.mxu0 0.0
  %2032 = vmatpush1.msra.mxu0 %v46
  %2033 = vmatprep.subr.mxu0 0.0
  %2034 = vmatpush1.msra.mxu0 %v47
  %2035 = vmatprep.subr.mxu0 0.0
  %2036 = vmatpush1.msra.mxu0 %v48
  %2037 = vmatprep.subr.mxu0 0.0
  %2038 = vmatpush1.msra.mxu0 %v49
  %2039 = vmatprep.subr.mxu0 0.0
  %2040 = vmatpush1.msra.mxu0 0.0
  %2041 = vmatprep.subr.mxu0 0.0
  %2042 = vmatpush1.msra.mxu0 0.0
  %2043 = vmatprep.subr.mxu0 0.0
  %2044 = vmatpush1.msra.mxu0 0.0
  %2045 = vmatprep.subr.mxu0 0.0
  %2046 = vmatpush1.msra.mxu0 0.0
  %2047 = vmatprep.subr.mxu0 0.0
  %2048 = vmatpush1.msra.mxu0 0.0
  %2049 = vmatprep.subr.mxu0 0.0
  %2050 = vmatpush1.msra.mxu0 0.0
  %2051 = vmatprep.subr.mxu0 0.0
  %2052 = vmatpush1.msra.mxu0 0.0
  %2053 = vmatprep.subr.mxu0 0.0
  %2054 = vmatpush1.msra.mxu0 0.0
  %2055 = vmatprep.subr.mxu0 0.0
  %2056 = vmatpush1.msra.mxu0 0.0
  %2057 = vmatprep.subr.mxu0 0.0
  %2058 = vmatpush1.msra.mxu0 0.0
  %2059 = vmatprep.subr.mxu0 0.0
  %2060 = vmatpush1.msra.mxu0 0.0
  %2061 = vmatprep.subr.mxu0 0.0
  %2062 = vmatpush1.msra.mxu0 0.0
  %2063 = vmatprep.subr.mxu0 0.0
  %2064 = vmatpush1.msra.mxu0 0.0
  %2065 = vmatprep.subr.mxu0 0.0
  %2066 = vmatpush1.msra.mxu0 0.0
  %2067 = vmatprep.subr.mxu0 0.0
  %2068 = vmatpush1.msra.mxu0 0.0
  %2069 = vmatprep.subr.mxu0 0.0
  %2070 = vmatpush1.msra.mxu0 0.0
  %2071 = vmatprep.mubr.f32.mxu0 0.0
  %2072 = vmatmul.mubr.f32.gmra.mrb[0].mxu0 %v1976
  %v2073 = vpop.f32.mrb[0].mxu0
  %v2074 = vadd.f32 0.0, %v2073
  %v2075 = vpop.f32.mrb[0].mxu0
  %2076 = vmatprep.mubr.f32.mxu0 0.0
  %2077 = vmatmul.mubr.f32.gmra.mrb[0].mxu0 %v1978
  %v2078 = vpop.f32.mrb[0].mxu0
  %v2079 = vadd.f32 0.0, %v2078
  %v2080 = vpop.f32.mrb[0].mxu0
  %2081 = vmatprep.mubr.f32.mxu0 0.0
  %2082 = vmatmul.mubr.f32.gmra.mrb[0].mxu0 %v1980
  %v2083 = vpop.f32.mrb[0].mxu0
  %v2084 = vadd.f32 0.0, %v2083
  %v2085 = vpop.f32.mrb[0].mxu0
  %2086 = vmatprep.mubr.f32.mxu0 0.0
  %2087 = vmatmul.mubr.f32.gmra.mrb[0].mxu0 %v1982
  %v2088 = vpop.f32.mrb[0].mxu0
  %v2089 = vadd.f32 0.0, %v2088
  %v2090 = vpop.f32.mrb[0].mxu0
  %2091 = vmatprep.mubr.f32.mxu0 0.0
  %2092 = vmatmul.mubr.f32.gmra.mrb[0].mxu0 %v1984
  %v2093 = vpop.f32.mrb[0].mxu0
  %v2094 = vadd.f32 0.0, %v2093
  %v2095 = vpop.f32.mrb[0].mxu0
  %2096 = vmatprep.mubr.f32.mxu0 0.0
  %2097 = vmatmul.mubr.f32.gmra.mrb[0].mxu0 %v1986
  %v2098 = vpop.f32.mrb[0].mxu0
  %v2099 = vadd.f32 0.0, %v2098
  %v2100 = vpop.f32.mrb[0].mxu0
  %2101 = vmatprep.mubr.f32.mxu0 0.0
  %2102 = vmatmul.mubr.f32.gmra.mrb[0].mxu0 %v1988
  %v2103 = vpop.f32.mrb[0].mxu0
  %v2104 = vadd.f32 0.0, %v2103
  %v2105 = vpop.f32.mrb[0].mxu0
  %2106 = vmatprep.mubr.f32.mxu0 0.0
  %2107 = vmatmul.mubr.f32.gmra.mrb[0].mxu0 %v1990
  %v2108 = vpop.f32.mrb[0].mxu0
  %v2109 = vadd.f32 0.0, %v2108
  %v2110 = vpop.f32.mrb[0].mxu0
  %2111 = vmatprep.mubr.f32.mxu0 0.0
  %2112 = vmatmul.mubr.f32.gmra.mrb[0].mxu0 %v1992
  %v2113 = vpop.f32.mrb[0].mxu0
  %v2114 = vadd.f32 0.0, %v2113
  %v2115 = vpop.f32.mrb[0].mxu0
  %2116 = vmatprep.mubr.f32.mxu0 0.0
  %2117 = vmatmul.mubr.f32.gmra.mrb[0].mxu0 %v1994
  %v2118 = vpop.f32.mrb[0].mxu0
  %v2119 = vadd.f32 0.0, %v2118
  %v2120 = vpop.f32.mrb[0].mxu0
  %2121 = vmatprep.mubr.f32.mxu0 0.0
  %2122 = vmatmul.mubr.f32.gmra.mrb[0].mxu0 %v1996
  %v2123 = vpop.f32.mrb[0].mxu0
  %v2124 = vadd.f32 0.0, %v2123
  %v2125 = vpop.f32.mrb[0].mxu0
  %2126 = vmatprep.mubr.f32.mxu0 0.0
  %2127 = vmatmul.mubr.f32.gmra.mrb[0].mxu0 %v1998
  %v2128 = vpop.f32.mrb[0].mxu0
  %v2129 = vadd.f32 0.0, %v2128
  %v2130 = vpop.f32.mrb[0].mxu0
  %2131 = vmatprep.mubr.f32.mxu0 0.0
  %2132 = vmatmul.mubr.f32.gmra.mrb[0].mxu0 %v2000
  %v2133 = vpop.f32.mrb[0].mxu0
  %v2134 = vadd.f32 0.0, %v2133
  %v2135 = vpop.f32.mrb[0].mxu0
  %2136 = vmatprep.mubr.f32.mxu0 0.0
  %2137 = vmatmul.mubr.f32.gmra.mrb[0].mxu0 %v2002
  %v2138 = vpop.f32.mrb[0].mxu0
  %v2139 = vadd.f32 0.0, %v2138
  %v2140 = vpop.f32.mrb[0].mxu0
  %2141 = vmatprep.mubr.f32.mxu0 0.0
  %2142 = vmatmul.mubr.f32.gmra.mrb[0].mxu0 %v2004
  %v2143 = vpop.f32.mrb[0].mxu0
  %v2144 = vadd.f32 0.0, %v2143
  %v2145 = vpop.f32.mrb[0].mxu0
  %2146 = vmatprep.mubr.f32.mxu0 0.0
  %2147 = vmatmul.mubr.f32.gmra.mrb[0].mxu0 %v2006
  %v2148 = vpop.f32.mrb[0].mxu0
  %v2149 = vadd.f32 0.0, %v2148
  %v2150 = vpop.f32.mrb[0].mxu0
  %2151 = vdwg.mxu0
  %v2152 = vrcp.pop %v2074
  %v2153 = vrcp.pop %v2079
  %v2154 = vrcp.pop %v2084
  %v2155 = vrcp.pop %v2089
  %v2156 = vrcp.pop %v2094
  %v2157 = vrcp.pop %v2099
  %v2158 = vrcp.pop %v2104
  %v2159 = vrcp.pop %v2109
  %v2160 = vrcp.pop %v2114
  %v2161 = vrcp.pop %v2119
  %v2162 = vrcp.pop %v2124
  %v2163 = vrcp.pop %v2129
  %v2164 = vrcp.pop %v2134
  %v2165 = vrcp.pop %v2139
  %v2166 = vrcp.pop %v2144
  %v2167 = vrcp.pop %v2149
  %2169 = vset.pattern.permute.xlu0 0
  %2170 = vperm.xlu0 %2169, %v2152
  %v2171 = vpop.permute.xlu0 %2170
  %2174 = vset.pattern.permute.xlu0 0
  %2175 = vperm.xlu0 %2174, %v2153
  %v2176 = vpop.permute.xlu0 %2175
  %2179 = vset.pattern.permute.xlu0 0
  %2180 = vperm.xlu0 %2179, %v2154
  %v2181 = vpop.permute.xlu0 %2180
  %2184 = vset.pattern.permute.xlu0 0
  %2185 = vperm.xlu0 %2184, %v2155
  %v2186 = vpop.permute.xlu0 %2185
  %2189 = vset.pattern.permute.xlu0 0
  %2190 = vperm.xlu0 %2189, %v2156
  %v2191 = vpop.permute.xlu0 %2190
  %2194 = vset.pattern.permute.xlu0 0
  %2195 = vperm.xlu0 %2194, %v2157
  %v2196 = vpop.permute.xlu0 %2195
  %2199 = vset.pattern.permute.xlu0 0
  %2200 = vperm.xlu0 %2199, %v2158
  %v2201 = vpop.permute.xlu0 %2200
  %2204 = vset.pattern.permute.xlu0 0
  %2205 = vperm.xlu0 %2204, %v2159
  %v2206 = vpop.permute.xlu0 %2205
  %2209 = vset.pattern.permute.xlu0 0
  %2210 = vperm.xlu0 %2209, %v2160
  %v2211 = vpop.permute.xlu0 %2210
  %2214 = vset.pattern.permute.xlu0 0
  %2215 = vperm.xlu0 %2214, %v2161
  %v2216 = vpop.permute.xlu0 %2215
  %2219 = vset.pattern.permute.xlu0 0
  %2220 = vperm.xlu0 %2219, %v2162
  %v2221 = vpop.permute.xlu0 %2220
  %2224 = vset.pattern.permute.xlu0 0
  %2225 = vperm.xlu0 %2224, %v2163
  %v2226 = vpop.permute.xlu0 %2225
  %2229 = vset.pattern.permute.xlu0 0
  %2230 = vperm.xlu0 %2229, %v2164
  %v2231 = vpop.permute.xlu0 %2230
  %2234 = vset.pattern.permute.xlu0 0
  %2235 = vperm.xlu0 %2234, %v2165
  %v2236 = vpop.permute.xlu0 %2235
  %2239 = vset.pattern.permute.xlu0 0
  %2240 = vperm.xlu0 %2239, %v2166
  %v2241 = vpop.permute.xlu0 %2240
  %2244 = vset.pattern.permute.xlu0 0
  %2245 = vperm.xlu0 %2244, %v2167
  %v2246 = vpop.permute.xlu0 %2245
  %v2248 = vmul.f32 %v1976, %v2171
  %v2249 = vmul.f32 %v1978, %v2176
  %v2250 = vmul.f32 %v1980, %v2181
  %v2251 = vmul.f32 %v1982, %v2186
  %v2252 = vmul.f32 %v1984, %v2191
  %v2253 = vmul.f32 %v1986, %v2196
  %v2254 = vmul.f32 %v1988, %v2201
  %v2255 = vmul.f32 %v1990, %v2206
  %v2256 = vmul.f32 %v1992, %v2211
  %v2257 = vmul.f32 %v1994, %v2216
  %v2258 = vmul.f32 %v1996, %v2221
  %v2259 = vmul.f32 %v1998, %v2226
  %v2260 = vmul.f32 %v2000, %v2231
  %v2261 = vmul.f32 %v2002, %v2236
  %v2262 = vmul.f32 %v2004, %v2241
  %v2263 = vmul.f32 %v2006, %v2246
  %v2264 = vpack.c.bf16 %v2249, %v2248
  %v2265 = vpack.c.bf16 %v2251, %v2250
  %v2266 = vpack.c.bf16 %v2253, %v2252
  %v2267 = vpack.c.bf16 %v2255, %v2254
  %v2268 = vpack.c.bf16 %v2257, %v2256
  %v2269 = vpack.c.bf16 %v2259, %v2258
  %v2270 = vpack.c.bf16 %v2261, %v2260
  %v2271 = vpack.c.bf16 %v2263, %v2262
  %2280 = vrot.lane.b32.xlu0 %v1181, 120
  %v2281 = vpop.permute.xlu0 %2280
  %2282 = vrot.lane.b32.xlu0 %v1182, 120
  %v2283 = vpop.permute.xlu0 %2282
  %2284 = vrot.lane.b32.xlu0 %v1183, 120
  %v2285 = vpop.permute.xlu0 %2284
  %2286 = vrot.lane.b32.xlu0 %v1184, 120
  %v2287 = vpop.permute.xlu0 %2286
  %2288 = vrot.lane.b32.xlu0 %v1185, 120
  %v2289 = vpop.permute.xlu0 %2288
  %2290 = vrot.lane.b32.xlu0 %v1186, 120
  %v2291 = vpop.permute.xlu0 %2290
  %2292 = vrot.lane.b32.xlu0 %v1187, 120
  %v2293 = vpop.permute.xlu0 %2292
  %2294 = vrot.lane.b32.xlu0 %v1188, 120
  %v2295 = vpop.permute.xlu0 %2294
  %2304 = vmatprep.subr.bf16.mxu0 0
  %2305 = vmatpush1.bf16.msra.mxu0 %v2281
  %2306 = vmatprep.subr.bf16.mxu0 0
  %2307 = vmatpush1.bf16.msra.mxu0 %v2283
  %2308 = vmatprep.subr.bf16.mxu0 0
  %2309 = vmatpush1.bf16.msra.mxu0 %v2285
  %2310 = vmatprep.subr.bf16.mxu0 0
  %2311 = vmatpush1.bf16.msra.mxu0 %v2287
  %2312 = vmatprep.subr.bf16.mxu0 0
  %2313 = vmatpush1.bf16.msra.mxu0 %v2289
  %2314 = vmatprep.subr.bf16.mxu0 0
  %2315 = vmatpush1.bf16.msra.mxu0 %v2291
  %2316 = vmatprep.subr.bf16.mxu0 0
  %2317 = vmatpush1.bf16.msra.mxu0 %v2293
  %2318 = vmatprep.subr.bf16.mxu0 0
  %2319 = vmatpush1.bf16.msra.mxu0 %v2295
  %2320 = vmatprep.subr.bf16.mxu0 0
  %2321 = vmatpush1.bf16.msra.mxu0 0
  %2322 = vmatprep.subr.bf16.mxu0 0
  %2323 = vmatpush1.bf16.msra.mxu0 0
  %2324 = vmatprep.subr.bf16.mxu0 0
  %2325 = vmatpush1.bf16.msra.mxu0 0
  %2326 = vmatprep.subr.bf16.mxu0 0
  %2327 = vmatpush1.bf16.msra.mxu0 0
  %2328 = vmatprep.subr.bf16.mxu0 0
  %2329 = vmatpush1.bf16.msra.mxu0 0
  %2330 = vmatprep.subr.bf16.mxu0 0
  %2331 = vmatpush1.bf16.msra.mxu0 0
  %2332 = vmatprep.subr.bf16.mxu0 0
  %2333 = vmatpush1.bf16.msra.mxu0 0
  %2334 = vmatprep.subr.bf16.mxu0 0
  %2335 = vmatpush1.bf16.msra.mxu0 0
  %2336 = vmatprep.mubr.bf16.mxu0 0
  %2337 = vmatmul.mubr.bf16.gmra.mrb[0].mxu0 %v2264
  %v2338 = vpop.f32.mrb[0].mxu0
  %v2339 = vadd.f32 0.0, %v2338
  %v2340 = vpop.f32.mrb[0].mxu0
  %v2341 = vpop.f32.mrb[0].mxu0
  %v2342 = vadd.f32 0.0, %v2341
  %v2343 = vpop.f32.mrb[0].mxu0
  %2344 = vmatprep.mubr.bf16.mxu0 0
  %2345 = vmatmul.mubr.bf16.gmra.mrb[0].mxu0 %v2265
  %v2346 = vpop.f32.mrb[0].mxu0
  %v2347 = vadd.f32 0.0, %v2346
  %v2348 = vpop.f32.mrb[0].mxu0
  %v2349 = vpop.f32.mrb[0].mxu0
  %v2350 = vadd.f32 0.0, %v2349
  %v2351 = vpop.f32.mrb[0].mxu0
  %2352 = vmatprep.mubr.bf16.mxu0 0
  %2353 = vmatmul.mubr.bf16.gmra.mrb[0].mxu0 %v2266
  %v2354 = vpop.f32.mrb[0].mxu0
  %v2355 = vadd.f32 0.0, %v2354
  %v2356 = vpop.f32.mrb[0].mxu0
  %v2357 = vpop.f32.mrb[0].mxu0
  %v2358 = vadd.f32 0.0, %v2357
  %v2359 = vpop.f32.mrb[0].mxu0
  %2360 = vmatprep.mubr.bf16.mxu0 0
  %2361 = vmatmul.mubr.bf16.gmra.mrb[0].mxu0 %v2267
  %v2362 = vpop.f32.mrb[0].mxu0
  %v2363 = vadd.f32 0.0, %v2362
  %v2364 = vpop.f32.mrb[0].mxu0
  %v2365 = vpop.f32.mrb[0].mxu0
  %v2366 = vadd.f32 0.0, %v2365
  %v2367 = vpop.f32.mrb[0].mxu0
  %2368 = vmatprep.mubr.bf16.mxu0 0
  %2369 = vmatmul.mubr.bf16.gmra.mrb[0].mxu0 %v2268
  %v2370 = vpop.f32.mrb[0].mxu0
  %v2371 = vadd.f32 0.0, %v2370
  %v2372 = vpop.f32.mrb[0].mxu0
  %v2373 = vpop.f32.mrb[0].mxu0
  %v2374 = vadd.f32 0.0, %v2373
  %v2375 = vpop.f32.mrb[0].mxu0
  %2376 = vmatprep.mubr.bf16.mxu0 0
  %2377 = vmatmul.mubr.bf16.gmra.mrb[0].mxu0 %v2269
  %v2378 = vpop.f32.mrb[0].mxu0
  %v2379 = vadd.f32 0.0, %v2378
  %v2380 = vpop.f32.mrb[0].mxu0
  %v2381 = vpop.f32.mrb[0].mxu0
  %v2382 = vadd.f32 0.0, %v2381
  %v2383 = vpop.f32.mrb[0].mxu0
  %2384 = vmatprep.mubr.bf16.mxu0 0
  %2385 = vmatmul.mubr.bf16.gmra.mrb[0].mxu0 %v2270
  %v2386 = vpop.f32.mrb[0].mxu0
  %v2387 = vadd.f32 0.0, %v2386
  %v2388 = vpop.f32.mrb[0].mxu0
  %v2389 = vpop.f32.mrb[0].mxu0
  %v2390 = vadd.f32 0.0, %v2389
  %v2391 = vpop.f32.mrb[0].mxu0
  %2392 = vmatprep.mubr.bf16.mxu0 0
  %2393 = vmatmul.mubr.bf16.gmra.mrb[0].mxu0 %v2271
  %v2394 = vpop.f32.mrb[0].mxu0
  %v2395 = vadd.f32 0.0, %v2394
  %v2396 = vpop.f32.mrb[0].mxu0
  %v2397 = vpop.f32.mrb[0].mxu0
  %v2398 = vadd.f32 0.0, %v2397
  %v2399 = vpop.f32.mrb[0].mxu0
  %2400 = vdwg.mxu0
  %2401 = vset.pattern.permute.xlu0 34
  %2402 = vperm.xlu0 %2401, %v1023
  %v2403 = vpop.permute.xlu0 %2402
  %2405 = vset.pattern.permute.xlu0 34
  %2406 = vperm.xlu0 %2405, %v1026
  %v2407 = vpop.permute.xlu0 %2406
  %2409 = vset.pattern.permute.xlu0 34
  %2410 = vperm.xlu0 %2409, %v1031
  %v2411 = vpop.permute.xlu0 %2410
  %2413 = vset.pattern.permute.xlu0 34
  %2414 = vperm.xlu0 %2413, %v1034
  %v2415 = vpop.permute.xlu0 %2414
  %2417 = vset.pattern.permute.xlu0 34
  %2418 = vperm.xlu0 %2417, %v1039
  %v2419 = vpop.permute.xlu0 %2418
  %2421 = vset.pattern.permute.xlu0 34
  %2422 = vperm.xlu0 %2421, %v1042
  %v2423 = vpop.permute.xlu0 %2422
  %2425 = vset.pattern.permute.xlu0 34
  %2426 = vperm.xlu0 %2425, %v1047
  %v2427 = vpop.permute.xlu0 %2426
  %2429 = vset.pattern.permute.xlu0 34
  %2430 = vperm.xlu0 %2429, %v1050
  %v2431 = vpop.permute.xlu0 %2430
  %2433 = vset.pattern.permute.xlu0 34
  %2434 = vperm.xlu0 %2433, %v1055
  %v2435 = vpop.permute.xlu0 %2434
  %2437 = vset.pattern.permute.xlu0 34
  %2438 = vperm.xlu0 %2437, %v1058
  %v2439 = vpop.permute.xlu0 %2438
  %2441 = vset.pattern.permute.xlu0 34
  %2442 = vperm.xlu0 %2441, %v1063
  %v2443 = vpop.permute.xlu0 %2442
  %2445 = vset.pattern.permute.xlu0 34
  %2446 = vperm.xlu0 %2445, %v1066
  %v2447 = vpop.permute.xlu0 %2446
  %2449 = vset.pattern.permute.xlu0 34
  %2450 = vperm.xlu0 %2449, %v1071
  %v2451 = vpop.permute.xlu0 %2450
  %2453 = vset.pattern.permute.xlu0 34
  %2454 = vperm.xlu0 %2453, %v1074
  %v2455 = vpop.permute.xlu0 %2454
  %2457 = vset.pattern.permute.xlu0 34
  %2458 = vperm.xlu0 %2457, %v1079
  %v2459 = vpop.permute.xlu0 %2458
  %2461 = vset.pattern.permute.xlu0 34
  %2462 = vperm.xlu0 %2461, %v1082
  %v2463 = vpop.permute.xlu0 %2462
  %v2465 = vlaneseq
  %v2466 = vshrl.u32 %v2465, 7
  %v2467 = vsub.s32 2, %v2466
  %v2468 = vrot.slane %v1165, %v2467
  %v2469 = vadd.f32 %v2403, %v2468
  %v2470 = vadd.f32 %v2407, %v2468
  %v2471 = vadd.f32 %v2411, %v2468
  %v2472 = vadd.f32 %v2415, %v2468
  %v2473 = vadd.f32 %v2419, %v2468
  %v2474 = vadd.f32 %v2423, %v2468
  %v2475 = vadd.f32 %v2427, %v2468
  %v2476 = vadd.f32 %v2431, %v2468
  %v2477 = vadd.f32 %v2435, %v2468
  %v2478 = vadd.f32 %v2439, %v2468
  %v2479 = vadd.f32 %v2443, %v2468
  %v2480 = vadd.f32 %v2447, %v2468
  %v2481 = vadd.f32 %v2451, %v2468
  %v2482 = vadd.f32 %v2455, %v2468
  %v2483 = vadd.f32 %v2459, %v2468
  %v2484 = vadd.f32 %v2463, %v2468
  %vm2485 = vcmp.gt.f32.partialorder %v2469, 0.0
  %vm2486 = vcmp.gt.f32.partialorder %v2470, 0.0
  %vm2487 = vcmp.gt.f32.partialorder %v2471, 0.0
  %vm2488 = vcmp.gt.f32.partialorder %v2472, 0.0
  %vm2489 = vcmp.gt.f32.partialorder %v2473, 0.0
  %vm2490 = vcmp.gt.f32.partialorder %v2474, 0.0
  %vm2491 = vcmp.gt.f32.partialorder %v2475, 0.0
  %vm2492 = vcmp.gt.f32.partialorder %v2476, 0.0
  %vm2493 = vcmp.gt.f32.partialorder %v2477, 0.0
  %vm2494 = vcmp.gt.f32.partialorder %v2478, 0.0
  %vm2495 = vcmp.gt.f32.partialorder %v2479, 0.0
  %vm2496 = vcmp.gt.f32.partialorder %v2480, 0.0
  %vm2497 = vcmp.gt.f32.partialorder %v2481, 0.0
  %vm2498 = vcmp.gt.f32.partialorder %v2482, 0.0
  %vm2499 = vcmp.gt.f32.partialorder %v2483, 0.0
  %vm2500 = vcmp.gt.f32.partialorder %v2484, 0.0
  %v2501 = vmul.f32 %v2469, 0.2
  %v2502 = vmul.f32 %v2470, 0.2
  %v2503 = vmul.f32 %v2471, 0.2
  %v2504 = vmul.f32 %v2472, 0.2
  %v2505 = vmul.f32 %v2473, 0.2
  %v2506 = vmul.f32 %v2474, 0.2
  %v2507 = vmul.f32 %v2475, 0.2
  %v2508 = vmul.f32 %v2476, 0.2
  %v2509 = vmul.f32 %v2477, 0.2
  %v2510 = vmul.f32 %v2478, 0.2
  %v2511 = vmul.f32 %v2479, 0.2
  %v2512 = vmul.f32 %v2480, 0.2
  %v2513 = vmul.f32 %v2481, 0.2
  %v2514 = vmul.f32 %v2482, 0.2
  %v2515 = vmul.f32 %v2483, 0.2
  %v2516 = vmul.f32 %v2484, 0.2
  %v2517 = vsel %vm2485, %v2469, %v2501
  %v2518 = vsel %vm2486, %v2470, %v2502
  %v2519 = vsel %vm2487, %v2471, %v2503
  %v2520 = vsel %vm2488, %v2472, %v2504
  %v2521 = vsel %vm2489, %v2473, %v2505
  %v2522 = vsel %vm2490, %v2474, %v2506
  %v2523 = vsel %vm2491, %v2475, %v2507
  %v2524 = vsel %vm2492, %v2476, %v2508
  %v2525 = vsel %vm2493, %v2477, %v2509
  %v2526 = vsel %vm2494, %v2478, %v2510
  %v2527 = vsel %vm2495, %v2479, %v2511
  %v2528 = vsel %vm2496, %v2480, %v2512
  %v2529 = vsel %vm2497, %v2481, %v2513
  %v2530 = vsel %vm2498, %v2482, %v2514
  %v2531 = vsel %vm2499, %v2483, %v2515
  %v2532 = vsel %vm2500, %v2484, %v2516
  %v2533 = vadd.f32 %v2517, %v66
  %v2534 = vadd.f32 %v2518, %v67
  %v2535 = vadd.f32 %v2519, %v68
  %v2536 = vadd.f32 %v2520, %v69
  %v2537 = vadd.f32 %v2521, %v70
  %v2538 = vadd.f32 %v2522, %v71
  %v2539 = vadd.f32 %v2523, %v72
  %v2540 = vadd.f32 %v2524, %v73
  %v2541 = vadd.f32 %v2525, %v74
  %v2542 = vadd.f32 %v2526, %v75
  %v2543 = vadd.f32 %v2527, %v76
  %v2544 = vadd.f32 %v2528, %v77
  %v2545 = vadd.f32 %v2529, %v78
  %v2546 = vadd.f32 %v2530, %v79
  %v2547 = vadd.f32 %v2531, %v80
  %v2548 = vadd.f32 %v2532, %v81
  %2549 = vmax.xlane.f32.xlu0 %v2533
  %v2550 = vpop.xlane.xlu0 %2549
  %2551 = vmax.xlane.f32.xlu0 %v2534
  %v2552 = vpop.xlane.xlu0 %2551
  %2553 = vmax.xlane.f32.xlu0 %v2535
  %v2554 = vpop.xlane.xlu0 %2553
  %2555 = vmax.xlane.f32.xlu0 %v2536
  %v2556 = vpop.xlane.xlu0 %2555
  %2557 = vmax.xlane.f32.xlu0 %v2537
  %v2558 = vpop.xlane.xlu0 %2557
  %2559 = vmax.xlane.f32.xlu0 %v2538
  %v2560 = vpop.xlane.xlu0 %2559
  %2561 = vmax.xlane.f32.xlu0 %v2539
  %v2562 = vpop.xlane.xlu0 %2561
  %2563 = vmax.xlane.f32.xlu0 %v2540
  %v2564 = vpop.xlane.xlu0 %2563
  %2565 = vmax.xlane.f32.xlu0 %v2541
  %v2566 = vpop.xlane.xlu0 %2565
  %2567 = vmax.xlane.f32.xlu0 %v2542
  %v2568 = vpop.xlane.xlu0 %2567
  %2569 = vmax.xlane.f32.xlu0 %v2543
  %v2570 = vpop.xlane.xlu0 %2569
  %2571 = vmax.xlane.f32.xlu0 %v2544
  %v2572 = vpop.xlane.xlu0 %2571
  %2573 = vmax.xlane.f32.xlu0 %v2545
  %v2574 = vpop.xlane.xlu0 %2573
  %2575 = vmax.xlane.f32.xlu0 %v2546
  %v2576 = vpop.xlane.xlu0 %2575
  %2577 = vmax.xlane.f32.xlu0 %v2547
  %v2578 = vpop.xlane.xlu0 %2577
  %2579 = vmax.xlane.f32.xlu0 %v2548
  %v2580 = vpop.xlane.xlu0 %2579
  %v2581 = vsub.f32 %v2533, %v2550
  %v2582 = vsub.f32 %v2534, %v2552
  %v2583 = vsub.f32 %v2535, %v2554
  %v2584 = vsub.f32 %v2536, %v2556
  %v2585 = vsub.f32 %v2537, %v2558
  %v2586 = vsub.f32 %v2538, %v2560
  %v2587 = vsub.f32 %v2539, %v2562
  %v2588 = vsub.f32 %v2540, %v2564
  %v2589 = vsub.f32 %v2541, %v2566
  %v2590 = vsub.f32 %v2542, %v2568
  %v2591 = vsub.f32 %v2543, %v2570
  %v2592 = vsub.f32 %v2544, %v2572
  %v2593 = vsub.f32 %v2545, %v2574
  %v2594 = vsub.f32 %v2546, %v2576
  %v2595 = vsub.f32 %v2547, %v2578
  %v2596 = vsub.f32 %v2548, %v2580
  %v2597 = vmul.f32 %v2581, 1.442695
  %v2598 = vpow.pop %v2597
  %v2599 = vmul.f32 %v2582, 1.442695
  %v2600 = vpow.pop %v2599
  %v2601 = vmul.f32 %v2583, 1.442695
  %v2602 = vpow.pop %v2601
  %v2603 = vmul.f32 %v2584, 1.442695
  %v2604 = vpow.pop %v2603
  %v2605 = vmul.f32 %v2585, 1.442695
  %v2606 = vpow.pop %v2605
  %v2607 = vmul.f32 %v2586, 1.442695
  %v2608 = vpow.pop %v2607
  %v2609 = vmul.f32 %v2587, 1.442695
  %v2610 = vpow.pop %v2609
  %v2611 = vmul.f32 %v2588, 1.442695
  %v2612 = vpow.pop %v2611
  %v2613 = vmul.f32 %v2589, 1.442695
  %v2614 = vpow.pop %v2613
  %v2615 = vmul.f32 %v2590, 1.442695
  %v2616 = vpow.pop %v2615
  %v2617 = vmul.f32 %v2591, 1.442695
  %v2618 = vpow.pop %v2617
  %v2619 = vmul.f32 %v2592, 1.442695
  %v2620 = vpow.pop %v2619
  %v2621 = vmul.f32 %v2593, 1.442695
  %v2622 = vpow.pop %v2621
  %v2623 = vmul.f32 %v2594, 1.442695
  %v2624 = vpow.pop %v2623
  %v2625 = vmul.f32 %v2595, 1.442695
  %v2626 = vpow.pop %v2625
  %v2627 = vmul.f32 %v2596, 1.442695
  %v2628 = vpow.pop %v2627
  %2629 = vmatprep.subr.mxu0 0.0
  %2630 = vmatpush1.msra.mxu0 %v34
  %2631 = vmatprep.subr.mxu0 0.0
  %2632 = vmatpush1.msra.mxu0 %v35
  %2633 = vmatprep.subr.mxu0 0.0
  %2634 = vmatpush1.msra.mxu0 %v36
  %2635 = vmatprep.subr.mxu0 0.0
  %2636 = vmatpush1.msra.mxu0 %v37
  %2637 = vmatprep.subr.mxu0 0.0
  %2638 = vmatpush1.msra.mxu0 %v38
  %2639 = vmatprep.subr.mxu0 0.0
  %2640 = vmatpush1.msra.mxu0 %v39
  %2641 = vmatprep.subr.mxu0 0.0
  %2642 = vmatpush1.msra.mxu0 %v40
  %2643 = vmatprep.subr.mxu0 0.0
  %2644 = vmatpush1.msra.mxu0 %v41
  %2645 = vmatprep.subr.mxu0 0.0
  %2646 = vmatpush1.msra.mxu0 %v42
  %2647 = vmatprep.subr.mxu0 0.0
  %2648 = vmatpush1.msra.mxu0 %v43
  %2649 = vmatprep.subr.mxu0 0.0
  %2650 = vmatpush1.msra.mxu0 %v44
  %2651 = vmatprep.subr.mxu0 0.0
  %2652 = vmatpush1.msra.mxu0 %v45
  %2653 = vmatprep.subr.mxu0 0.0
  %2654 = vmatpush1.msra.mxu0 %v46
  %2655 = vmatprep.subr.mxu0 0.0
  %2656 = vmatpush1.msra.mxu0 %v47
  %2657 = vmatprep.subr.mxu0 0.0
  %2658 = vmatpush1.msra.mxu0 %v48
  %2659 = vmatprep.subr.mxu0 0.0
  %2660 = vmatpush1.msra.mxu0 %v49
  %2661 = vmatprep.subr.mxu0 0.0
  %2662 = vmatpush1.msra.mxu0 0.0
  %2663 = vmatprep.subr.mxu0 0.0
  %2664 = vmatpush1.msra.mxu0 0.0
  %2665 = vmatprep.subr.mxu0 0.0
  %2666 = vmatpush1.msra.mxu0 0.0
  %2667 = vmatprep.subr.mxu0 0.0
  %2668 = vmatpush1.msra.mxu0 0.0
  %2669 = vmatprep.subr.mxu0 0.0
  %2670 = vmatpush1.msra.mxu0 0.0
  %2671 = vmatprep.subr.mxu0 0.0
  %2672 = vmatpush1.msra.mxu0 0.0
  %2673 = vmatprep.subr.mxu0 0.0
  %2674 = vmatpush1.msra.mxu0 0.0
  %2675 = vmatprep.subr.mxu0 0.0
  %2676 = vmatpush1.msra.mxu0 0.0
  %2677 = vmatprep.subr.mxu0 0.0
  %2678 = vmatpush1.msra.mxu0 0.0
  %2679 = vmatprep.subr.mxu0 0.0
  %2680 = vmatpush1.msra.mxu0 0.0
  %2681 = vmatprep.subr.mxu0 0.0
  %2682 = vmatpush1.msra.mxu0 0.0
  %2683 = vmatprep.subr.mxu0 0.0
  %2684 = vmatpush1.msra.mxu0 0.0
  %2685 = vmatprep.subr.mxu0 0.0
  %2686 = vmatpush1.msra.mxu0 0.0
  %2687 = vmatprep.subr.mxu0 0.0
  %2688 = vmatpush1.msra.mxu0 0.0
  %2689 = vmatprep.subr.mxu0 0.0
  %2690 = vmatpush1.msra.mxu0 0.0
  %2691 = vmatprep.subr.mxu0 0.0
  %2692 = vmatpush1.msra.mxu0 0.0
  %2693 = vmatprep.mubr.f32.mxu0 0.0
  %2694 = vmatmul.mubr.f32.gmra.mrb[0].mxu0 %v2598
  %v2695 = vpop.f32.mrb[0].mxu0
  %v2696 = vadd.f32 0.0, %v2695
  %v2697 = vpop.f32.mrb[0].mxu0
  %2698 = vmatprep.mubr.f32.mxu0 0.0
  %2699 = vmatmul.mubr.f32.gmra.mrb[0].mxu0 %v2600
  %v2700 = vpop.f32.mrb[0].mxu0
  %v2701 = vadd.f32 0.0, %v2700
  %v2702 = vpop.f32.mrb[0].mxu0
  %2703 = vmatprep.mubr.f32.mxu0 0.0
  %2704 = vmatmul.mubr.f32.gmra.mrb[0].mxu0 %v2602
  %v2705 = vpop.f32.mrb[0].mxu0
  %v2706 = vadd.f32 0.0, %v2705
  %v2707 = vpop.f32.mrb[0].mxu0
  %2708 = vmatprep.mubr.f32.mxu0 0.0
  %2709 = vmatmul.mubr.f32.gmra.mrb[0].mxu0 %v2604
  %v2710 = vpop.f32.mrb[0].mxu0
  %v2711 = vadd.f32 0.0, %v2710
  %v2712 = vpop.f32.mrb[0].mxu0
  %2713 = vmatprep.mubr.f32.mxu0 0.0
  %2714 = vmatmul.mubr.f32.gmra.mrb[0].mxu0 %v2606
  %v2715 = vpop.f32.mrb[0].mxu0
  %v2716 = vadd.f32 0.0, %v2715
  %v2717 = vpop.f32.mrb[0].mxu0
  %2718 = vmatprep.mubr.f32.mxu0 0.0
  %2719 = vmatmul.mubr.f32.gmra.mrb[0].mxu0 %v2608
  %v2720 = vpop.f32.mrb[0].mxu0
  %v2721 = vadd.f32 0.0, %v2720
  %v2722 = vpop.f32.mrb[0].mxu0
  %2723 = vmatprep.mubr.f32.mxu0 0.0
  %2724 = vmatmul.mubr.f32.gmra.mrb[0].mxu0 %v2610
  %v2725 = vpop.f32.mrb[0].mxu0
  %v2726 = vadd.f32 0.0, %v2725
  %v2727 = vpop.f32.mrb[0].mxu0
  %2728 = vmatprep.mubr.f32.mxu0 0.0
  %2729 = vmatmul.mubr.f32.gmra.mrb[0].mxu0 %v2612
  %v2730 = vpop.f32.mrb[0].mxu0
  %v2731 = vadd.f32 0.0, %v2730
  %v2732 = vpop.f32.mrb[0].mxu0
  %2733 = vmatprep.mubr.f32.mxu0 0.0
  %2734 = vmatmul.mubr.f32.gmra.mrb[0].mxu0 %v2614
  %v2735 = vpop.f32.mrb[0].mxu0
  %v2736 = vadd.f32 0.0, %v2735
  %v2737 = vpop.f32.mrb[0].mxu0
  %2738 = vmatprep.mubr.f32.mxu0 0.0
  %2739 = vmatmul.mubr.f32.gmra.mrb[0].mxu0 %v2616
  %v2740 = vpop.f32.mrb[0].mxu0
  %v2741 = vadd.f32 0.0, %v2740
  %v2742 = vpop.f32.mrb[0].mxu0
  %2743 = vmatprep.mubr.f32.mxu0 0.0
  %2744 = vmatmul.mubr.f32.gmra.mrb[0].mxu0 %v2618
  %v2745 = vpop.f32.mrb[0].mxu0
  %v2746 = vadd.f32 0.0, %v2745
  %v2747 = vpop.f32.mrb[0].mxu0
  %2748 = vmatprep.mubr.f32.mxu0 0.0
  %2749 = vmatmul.mubr.f32.gmra.mrb[0].mxu0 %v2620
  %v2750 = vpop.f32.mrb[0].mxu0
  %v2751 = vadd.f32 0.0, %v2750
  %v2752 = vpop.f32.mrb[0].mxu0
  %2753 = vmatprep.mubr.f32.mxu0 0.0
  %2754 = vmatmul.mubr.f32.gmra.mrb[0].mxu0 %v2622
  %v2755 = vpop.f32.mrb[0].mxu0
  %v2756 = vadd.f32 0.0, %v2755
  %v2757 = vpop.f32.mrb[0].mxu0
  %2758 = vmatprep.mubr.f32.mxu0 0.0
  %2759 = vmatmul.mubr.f32.gmra.mrb[0].mxu0 %v2624
  %v2760 = vpop.f32.mrb[0].mxu0
  %v2761 = vadd.f32 0.0, %v2760
  %v2762 = vpop.f32.mrb[0].mxu0
  %2763 = vmatprep.mubr.f32.mxu0 0.0
  %2764 = vmatmul.mubr.f32.gmra.mrb[0].mxu0 %v2626
  %v2765 = vpop.f32.mrb[0].mxu0
  %v2766 = vadd.f32 0.0, %v2765
  %v2767 = vpop.f32.mrb[0].mxu0
  %2768 = vmatprep.mubr.f32.mxu0 0.0
  %2769 = vmatmul.mubr.f32.gmra.mrb[0].mxu0 %v2628
  %v2770 = vpop.f32.mrb[0].mxu0
  %v2771 = vadd.f32 0.0, %v2770
  %v2772 = vpop.f32.mrb[0].mxu0
  %2773 = vdwg.mxu0
  %v2774 = vrcp.pop %v2696
  %v2775 = vrcp.pop %v2701
  %v2776 = vrcp.pop %v2706
  %v2777 = vrcp.pop %v2711
  %v2778 = vrcp.pop %v2716
  %v2779 = vrcp.pop %v2721
  %v2780 = vrcp.pop %v2726
  %v2781 = vrcp.pop %v2731
  %v2782 = vrcp.pop %v2736
  %v2783 = vrcp.pop %v2741
  %v2784 = vrcp.pop %v2746
  %v2785 = vrcp.pop %v2751
  %v2786 = vrcp.pop %v2756
  %v2787 = vrcp.pop %v2761
  %v2788 = vrcp.pop %v2766
  %v2789 = vrcp.pop %v2771
  %2791 = vset.pattern.permute.xlu0 0
  %2792 = vperm.xlu0 %2791, %v2774
  %v2793 = vpop.permute.xlu0 %2792
  %2796 = vset.pattern.permute.xlu0 0
  %2797 = vperm.xlu0 %2796, %v2775
  %v2798 = vpop.permute.xlu0 %2797
  %2801 = vset.pattern.permute.xlu0 0
  %2802 = vperm.xlu0 %2801, %v2776
  %v2803 = vpop.permute.xlu0 %2802
  %2806 = vset.pattern.permute.xlu0 0
  %2807 = vperm.xlu0 %2806, %v2777
  %v2808 = vpop.permute.xlu0 %2807
  %2811 = vset.pattern.permute.xlu0 0
  %2812 = vperm.xlu0 %2811, %v2778
  %v2813 = vpop.permute.xlu0 %2812
  %2816 = vset.pattern.permute.xlu0 0
  %2817 = vperm.xlu0 %2816, %v2779
  %v2818 = vpop.permute.xlu0 %2817
  %2821 = vset.pattern.permute.xlu0 0
  %2822 = vperm.xlu0 %2821, %v2780
  %v2823 = vpop.permute.xlu0 %2822
  %2826 = vset.pattern.permute.xlu0 0
  %2827 = vperm.xlu0 %2826, %v2781
  %v2828 = vpop.permute.xlu0 %2827
  %2831 = vset.pattern.permute.xlu0 0
  %2832 = vperm.xlu0 %2831, %v2782
  %v2833 = vpop.permute.xlu0 %2832
  %2836 = vset.pattern.permute.xlu0 0
  %2837 = vperm.xlu0 %2836, %v2783
  %v2838 = vpop.permute.xlu0 %2837
  %2841 = vset.pattern.permute.xlu0 0
  %2842 = vperm.xlu0 %2841, %v2784
  %v2843 = vpop.permute.xlu0 %2842
  %2846 = vset.pattern.permute.xlu0 0
  %2847 = vperm.xlu0 %2846, %v2785
  %v2848 = vpop.permute.xlu0 %2847
  %2851 = vset.pattern.permute.xlu0 0
  %2852 = vperm.xlu0 %2851, %v2786
  %v2853 = vpop.permute.xlu0 %2852
  %2856 = vset.pattern.permute.xlu0 0
  %2857 = vperm.xlu0 %2856, %v2787
  %v2858 = vpop.permute.xlu0 %2857
  %2861 = vset.pattern.permute.xlu0 0
  %2862 = vperm.xlu0 %2861, %v2788
  %v2863 = vpop.permute.xlu0 %2862
  %2866 = vset.pattern.permute.xlu0 0
  %2867 = vperm.xlu0 %2866, %v2789
  %v2868 = vpop.permute.xlu0 %2867
  %v2870 = vmul.f32 %v2598, %v2793
  %v2871 = vmul.f32 %v2600, %v2798
  %v2872 = vmul.f32 %v2602, %v2803
  %v2873 = vmul.f32 %v2604, %v2808
  %v2874 = vmul.f32 %v2606, %v2813
  %v2875 = vmul.f32 %v2608, %v2818
  %v2876 = vmul.f32 %v2610, %v2823
  %v2877 = vmul.f32 %v2612, %v2828
  %v2878 = vmul.f32 %v2614, %v2833
  %v2879 = vmul.f32 %v2616, %v2838
  %v2880 = vmul.f32 %v2618, %v2843
  %v2881 = vmul.f32 %v2620, %v2848
  %v2882 = vmul.f32 %v2622, %v2853
  %v2883 = vmul.f32 %v2624, %v2858
  %v2884 = vmul.f32 %v2626, %v2863
  %v2885 = vmul.f32 %v2628, %v2868
  %v2886 = vpack.c.bf16 %v2871, %v2870
  %v2887 = vpack.c.bf16 %v2873, %v2872
  %v2888 = vpack.c.bf16 %v2875, %v2874
  %v2889 = vpack.c.bf16 %v2877, %v2876
  %v2890 = vpack.c.bf16 %v2879, %v2878
  %v2891 = vpack.c.bf16 %v2881, %v2880
  %v2892 = vpack.c.bf16 %v2883, %v2882
  %v2893 = vpack.c.bf16 %v2885, %v2884
  %2894 = vrot.lane.b32.xlu0 %v1181, 112
  %v2895 = vpop.permute.xlu0 %2894
  %2896 = vrot.lane.b32.xlu0 %v1182, 112
  %v2897 = vpop.permute.xlu0 %2896
  %2898 = vrot.lane.b32.xlu0 %v1183, 112
  %v2899 = vpop.permute.xlu0 %2898
  %2900 = vrot.lane.b32.xlu0 %v1184, 112
  %v2901 = vpop.permute.xlu0 %2900
  %2902 = vrot.lane.b32.xlu0 %v1185, 112
  %v2903 = vpop.permute.xlu0 %2902
  %2904 = vrot.lane.b32.xlu0 %v1186, 112
  %v2905 = vpop.permute.xlu0 %2904
  %2906 = vrot.lane.b32.xlu0 %v1187, 112
  %v2907 = vpop.permute.xlu0 %2906
  %2908 = vrot.lane.b32.xlu0 %v1188, 112
  %v2909 = vpop.permute.xlu0 %2908
  %2918 = vmatprep.subr.bf16.mxu0 0
  %2919 = vmatpush1.bf16.msra.mxu0 %v2895
  %2920 = vmatprep.subr.bf16.mxu0 0
  %2921 = vmatpush1.bf16.msra.mxu0 %v2897
  %2922 = vmatprep.subr.bf16.mxu0 0
  %2923 = vmatpush1.bf16.msra.mxu0 %v2899
  %2924 = vmatprep.subr.bf16.mxu0 0
  %2925 = vmatpush1.bf16.msra.mxu0 %v2901
  %2926 = vmatprep.subr.bf16.mxu0 0
  %2927 = vmatpush1.bf16.msra.mxu0 %v2903
  %2928 = vmatprep.subr.bf16.mxu0 0
  %2929 = vmatpush1.bf16.msra.mxu0 %v2905
  %2930 = vmatprep.subr.bf16.mxu0 0
  %2931 = vmatpush1.bf16.msra.mxu0 %v2907
  %2932 = vmatprep.subr.bf16.mxu0 0
  %2933 = vmatpush1.bf16.msra.mxu0 %v2909
  %2934 = vmatprep.subr.bf16.mxu0 0
  %2935 = vmatpush1.bf16.msra.mxu0 0
  %2936 = vmatprep.subr.bf16.mxu0 0
  %2937 = vmatpush1.bf16.msra.mxu0 0
  %2938 = vmatprep.subr.bf16.mxu0 0
  %2939 = vmatpush1.bf16.msra.mxu0 0
  %2940 = vmatprep.subr.bf16.mxu0 0
  %2941 = vmatpush1.bf16.msra.mxu0 0
  %2942 = vmatprep.subr.bf16.mxu0 0
  %2943 = vmatpush1.bf16.msra.mxu0 0
  %2944 = vmatprep.subr.bf16.mxu0 0
  %2945 = vmatpush1.bf16.msra.mxu0 0
  %2946 = vmatprep.subr.bf16.mxu0 0
  %2947 = vmatpush1.bf16.msra.mxu0 0
  %2948 = vmatprep.subr.bf16.mxu0 0
  %2949 = vmatpush1.bf16.msra.mxu0 0
  %2950 = vmatprep.mubr.bf16.mxu0 0
  %2951 = vmatmul.mubr.bf16.gmra.mrb[0].mxu0 %v2886
  %v2952 = vpop.f32.mrb[0].mxu0
  %v2953 = vadd.f32 0.0, %v2952
  %v2954 = vpop.f32.mrb[0].mxu0
  %v2955 = vpop.f32.mrb[0].mxu0
  %v2956 = vadd.f32 0.0, %v2955
  %v2957 = vpop.f32.mrb[0].mxu0
  %2958 = vmatprep.mubr.bf16.mxu0 0
  %2959 = vmatmul.mubr.bf16.gmra.mrb[0].mxu0 %v2887
  %v2960 = vpop.f32.mrb[0].mxu0
  %v2961 = vadd.f32 0.0, %v2960
  %v2962 = vpop.f32.mrb[0].mxu0
  %v2963 = vpop.f32.mrb[0].mxu0
  %v2964 = vadd.f32 0.0, %v2963
  %v2965 = vpop.f32.mrb[0].mxu0
  %2966 = vmatprep.mubr.bf16.mxu0 0
  %2967 = vmatmul.mubr.bf16.gmra.mrb[0].mxu0 %v2888
  %v2968 = vpop.f32.mrb[0].mxu0
  %v2969 = vadd.f32 0.0, %v2968
  %v2970 = vpop.f32.mrb[0].mxu0
  %v2971 = vpop.f32.mrb[0].mxu0
  %v2972 = vadd.f32 0.0, %v2971
  %v2973 = vpop.f32.mrb[0].mxu0
  %2974 = vmatprep.mubr.bf16.mxu0 0
  %2975 = vmatmul.mubr.bf16.gmra.mrb[0].mxu0 %v2889
  %v2976 = vpop.f32.mrb[0].mxu0
  %v2977 = vadd.f32 0.0, %v2976
  %v2978 = vpop.f32.mrb[0].mxu0
  %v2979 = vpop.f32.mrb[0].mxu0
  %v2980 = vadd.f32 0.0, %v2979
  %v2981 = vpop.f32.mrb[0].mxu0
  %2982 = vmatprep.mubr.bf16.mxu0 0
  %2983 = vmatmul.mubr.bf16.gmra.mrb[0].mxu0 %v2890
  %v2984 = vpop.f32.mrb[0].mxu0
  %v2985 = vadd.f32 0.0, %v2984
  %v2986 = vpop.f32.mrb[0].mxu0
  %v2987 = vpop.f32.mrb[0].mxu0
  %v2988 = vadd.f32 0.0, %v2987
  %v2989 = vpop.f32.mrb[0].mxu0
  %2990 = vmatprep.mubr.bf16.mxu0 0
  %2991 = vmatmul.mubr.bf16.gmra.mrb[0].mxu0 %v2891
  %v2992 = vpop.f32.mrb[0].mxu0
  %v2993 = vadd.f32 0.0, %v2992
  %v2994 = vpop.f32.mrb[0].mxu0
  %v2995 = vpop.f32.mrb[0].mxu0
  %v2996 = vadd.f32 0.0, %v2995
  %v2997 = vpop.f32.mrb[0].mxu0
  %2998 = vmatprep.mubr.bf16.mxu0 0
  %2999 = vmatmul.mubr.bf16.gmra.mrb[0].mxu0 %v2892
  %v3000 = vpop.f32.mrb[0].mxu0
  %v3001 = vadd.f32 0.0, %v3000
  %v3002 = vpop.f32.mrb[0].mxu0
  %v3003 = vpop.f32.mrb[0].mxu0
  %v3004 = vadd.f32 0.0, %v3003
  %v3005 = vpop.f32.mrb[0].mxu0
  %3006 = vmatprep.mubr.bf16.mxu0 0
  %3007 = vmatmul.mubr.bf16.gmra.mrb[0].mxu0 %v2893
  %v3008 = vpop.f32.mrb[0].mxu0
  %v3009 = vadd.f32 0.0, %v3008
  %v3010 = vpop.f32.mrb[0].mxu0
  %v3011 = vpop.f32.mrb[0].mxu0
  %v3012 = vadd.f32 0.0, %v3011
  %v3013 = vpop.f32.mrb[0].mxu0
  %3014 = vdwg.mxu0
  %3015 = vset.pattern.permute.xlu0 35
  %3016 = vperm.xlu0 %3015, %v1023
  %v3017 = vpop.permute.xlu0 %3016
  %3019 = vset.pattern.permute.xlu0 35
  %3020 = vperm.xlu0 %3019, %v1026
  %v3021 = vpop.permute.xlu0 %3020
  %3023 = vset.pattern.permute.xlu0 35
  %3024 = vperm.xlu0 %3023, %v1031
  %v3025 = vpop.permute.xlu0 %3024
  %3027 = vset.pattern.permute.xlu0 35
  %3028 = vperm.xlu0 %3027, %v1034
  %v3029 = vpop.permute.xlu0 %3028
  %3031 = vset.pattern.permute.xlu0 35
  %3032 = vperm.xlu0 %3031, %v1039
  %v3033 = vpop.permute.xlu0 %3032
  %3035 = vset.pattern.permute.xlu0 35
  %3036 = vperm.xlu0 %3035, %v1042
  %v3037 = vpop.permute.xlu0 %3036
  %3039 = vset.pattern.permute.xlu0 35
  %3040 = vperm.xlu0 %3039, %v1047
  %v3041 = vpop.permute.xlu0 %3040
  %3043 = vset.pattern.permute.xlu0 35
  %3044 = vperm.xlu0 %3043, %v1050
  %v3045 = vpop.permute.xlu0 %3044
  %3047 = vset.pattern.permute.xlu0 35
  %3048 = vperm.xlu0 %3047, %v1055
  %v3049 = vpop.permute.xlu0 %3048
  %3051 = vset.pattern.permute.xlu0 35
  %3052 = vperm.xlu0 %3051, %v1058
  %v3053 = vpop.permute.xlu0 %3052
  %3055 = vset.pattern.permute.xlu0 35
  %3056 = vperm.xlu0 %3055, %v1063
  %v3057 = vpop.permute.xlu0 %3056
  %3059 = vset.pattern.permute.xlu0 35
  %3060 = vperm.xlu0 %3059, %v1066
  %v3061 = vpop.permute.xlu0 %3060
  %3063 = vset.pattern.permute.xlu0 35
  %3064 = vperm.xlu0 %3063, %v1071
  %v3065 = vpop.permute.xlu0 %3064
  %3067 = vset.pattern.permute.xlu0 35
  %3068 = vperm.xlu0 %3067, %v1074
  %v3069 = vpop.permute.xlu0 %3068
  %3071 = vset.pattern.permute.xlu0 35
  %3072 = vperm.xlu0 %3071, %v1079
  %v3073 = vpop.permute.xlu0 %3072
  %3075 = vset.pattern.permute.xlu0 35
  %3076 = vperm.xlu0 %3075, %v1082
  %v3077 = vpop.permute.xlu0 %3076
  %v3079 = vlaneseq
  %v3080 = vshrl.u32 %v3079, 7
  %v3081 = vsub.s32 3, %v3080
  %v3082 = vrot.slane %v1165, %v3081
  %v3083 = vadd.f32 %v3017, %v3082
  %v3084 = vadd.f32 %v3021, %v3082
  %v3085 = vadd.f32 %v3025, %v3082
  %v3086 = vadd.f32 %v3029, %v3082
  %v3087 = vadd.f32 %v3033, %v3082
  %v3088 = vadd.f32 %v3037, %v3082
  %v3089 = vadd.f32 %v3041, %v3082
  %v3090 = vadd.f32 %v3045, %v3082
  %v3091 = vadd.f32 %v3049, %v3082
  %v3092 = vadd.f32 %v3053, %v3082
  %v3093 = vadd.f32 %v3057, %v3082
  %v3094 = vadd.f32 %v3061, %v3082
  %v3095 = vadd.f32 %v3065, %v3082
  %v3096 = vadd.f32 %v3069, %v3082
  %v3097 = vadd.f32 %v3073, %v3082
  %v3098 = vadd.f32 %v3077, %v3082
  %vm3099 = vcmp.gt.f32.partialorder %v3083, 0.0
  %vm3100 = vcmp.gt.f32.partialorder %v3084, 0.0
  %vm3101 = vcmp.gt.f32.partialorder %v3085, 0.0
  %vm3102 = vcmp.gt.f32.partialorder %v3086, 0.0
  %vm3103 = vcmp.gt.f32.partialorder %v3087, 0.0
  %vm3104 = vcmp.gt.f32.partialorder %v3088, 0.0
  %vm3105 = vcmp.gt.f32.partialorder %v3089, 0.0
  %vm3106 = vcmp.gt.f32.partialorder %v3090, 0.0
  %vm3107 = vcmp.gt.f32.partialorder %v3091, 0.0
  %vm3108 = vcmp.gt.f32.partialorder %v3092, 0.0
  %vm3109 = vcmp.gt.f32.partialorder %v3093, 0.0
  %vm3110 = vcmp.gt.f32.partialorder %v3094, 0.0
  %vm3111 = vcmp.gt.f32.partialorder %v3095, 0.0
  %vm3112 = vcmp.gt.f32.partialorder %v3096, 0.0
  %vm3113 = vcmp.gt.f32.partialorder %v3097, 0.0
  %vm3114 = vcmp.gt.f32.partialorder %v3098, 0.0
  %v3115 = vmul.f32 %v3083, 0.2
  %v3116 = vmul.f32 %v3084, 0.2
  %v3117 = vmul.f32 %v3085, 0.2
  %v3118 = vmul.f32 %v3086, 0.2
  %v3119 = vmul.f32 %v3087, 0.2
  %v3120 = vmul.f32 %v3088, 0.2
  %v3121 = vmul.f32 %v3089, 0.2
  %v3122 = vmul.f32 %v3090, 0.2
  %v3123 = vmul.f32 %v3091, 0.2
  %v3124 = vmul.f32 %v3092, 0.2
  %v3125 = vmul.f32 %v3093, 0.2
  %v3126 = vmul.f32 %v3094, 0.2
  %v3127 = vmul.f32 %v3095, 0.2
  %v3128 = vmul.f32 %v3096, 0.2
  %v3129 = vmul.f32 %v3097, 0.2
  %v3130 = vmul.f32 %v3098, 0.2
  %v3131 = vsel %vm3099, %v3083, %v3115
  %v3132 = vsel %vm3100, %v3084, %v3116
  %v3133 = vsel %vm3101, %v3085, %v3117
  %v3134 = vsel %vm3102, %v3086, %v3118
  %v3135 = vsel %vm3103, %v3087, %v3119
  %v3136 = vsel %vm3104, %v3088, %v3120
  %v3137 = vsel %vm3105, %v3089, %v3121
  %v3138 = vsel %vm3106, %v3090, %v3122
  %v3139 = vsel %vm3107, %v3091, %v3123
  %v3140 = vsel %vm3108, %v3092, %v3124
  %v3141 = vsel %vm3109, %v3093, %v3125
  %v3142 = vsel %vm3110, %v3094, %v3126
  %v3143 = vsel %vm3111, %v3095, %v3127
  %v3144 = vsel %vm3112, %v3096, %v3128
  %v3145 = vsel %vm3113, %v3097, %v3129
  %v3146 = vsel %vm3114, %v3098, %v3130
  %v3147 = vadd.f32 %v3131, %v66
  %v3148 = vadd.f32 %v3132, %v67
  %v3149 = vadd.f32 %v3133, %v68
  %v3150 = vadd.f32 %v3134, %v69
  %v3151 = vadd.f32 %v3135, %v70
  %v3152 = vadd.f32 %v3136, %v71
  %v3153 = vadd.f32 %v3137, %v72
  %v3154 = vadd.f32 %v3138, %v73
  %v3155 = vadd.f32 %v3139, %v74
  %v3156 = vadd.f32 %v3140, %v75
  %v3157 = vadd.f32 %v3141, %v76
  %v3158 = vadd.f32 %v3142, %v77
  %v3159 = vadd.f32 %v3143, %v78
  %v3160 = vadd.f32 %v3144, %v79
  %v3161 = vadd.f32 %v3145, %v80
  %v3162 = vadd.f32 %v3146, %v81
  %3163 = vmax.xlane.f32.xlu0 %v3147
  %v3164 = vpop.xlane.xlu0 %3163
  %3165 = vmax.xlane.f32.xlu0 %v3148
  %v3166 = vpop.xlane.xlu0 %3165
  %3167 = vmax.xlane.f32.xlu0 %v3149
  %v3168 = vpop.xlane.xlu0 %3167
  %3169 = vmax.xlane.f32.xlu0 %v3150
  %v3170 = vpop.xlane.xlu0 %3169
  %3171 = vmax.xlane.f32.xlu0 %v3151
  %v3172 = vpop.xlane.xlu0 %3171
  %3173 = vmax.xlane.f32.xlu0 %v3152
  %v3174 = vpop.xlane.xlu0 %3173
  %3175 = vmax.xlane.f32.xlu0 %v3153
  %v3176 = vpop.xlane.xlu0 %3175
  %3177 = vmax.xlane.f32.xlu0 %v3154
  %v3178 = vpop.xlane.xlu0 %3177
  %3179 = vmax.xlane.f32.xlu0 %v3155
  %v3180 = vpop.xlane.xlu0 %3179
  %3181 = vmax.xlane.f32.xlu0 %v3156
  %v3182 = vpop.xlane.xlu0 %3181
  %3183 = vmax.xlane.f32.xlu0 %v3157
  %v3184 = vpop.xlane.xlu0 %3183
  %3185 = vmax.xlane.f32.xlu0 %v3158
  %v3186 = vpop.xlane.xlu0 %3185
  %3187 = vmax.xlane.f32.xlu0 %v3159
  %v3188 = vpop.xlane.xlu0 %3187
  %3189 = vmax.xlane.f32.xlu0 %v3160
  %v3190 = vpop.xlane.xlu0 %3189
  %3191 = vmax.xlane.f32.xlu0 %v3161
  %v3192 = vpop.xlane.xlu0 %3191
  %3193 = vmax.xlane.f32.xlu0 %v3162
  %v3194 = vpop.xlane.xlu0 %3193
  %v3195 = vsub.f32 %v3147, %v3164
  %v3196 = vsub.f32 %v3148, %v3166
  %v3197 = vsub.f32 %v3149, %v3168
  %v3198 = vsub.f32 %v3150, %v3170
  %v3199 = vsub.f32 %v3151, %v3172
  %v3200 = vsub.f32 %v3152, %v3174
  %v3201 = vsub.f32 %v3153, %v3176
  %v3202 = vsub.f32 %v3154, %v3178
  %v3203 = vsub.f32 %v3155, %v3180
  %v3204 = vsub.f32 %v3156, %v3182
  %v3205 = vsub.f32 %v3157, %v3184
  %v3206 = vsub.f32 %v3158, %v3186
  %v3207 = vsub.f32 %v3159, %v3188
  %v3208 = vsub.f32 %v3160, %v3190
  %v3209 = vsub.f32 %v3161, %v3192
  %v3210 = vsub.f32 %v3162, %v3194
  %v3211 = vmul.f32 %v3195, 1.442695
  %v3212 = vpow.pop %v3211
  %v3213 = vmul.f32 %v3196, 1.442695
  %v3214 = vpow.pop %v3213
  %v3215 = vmul.f32 %v3197, 1.442695
  %v3216 = vpow.pop %v3215
  %v3217 = vmul.f32 %v3198, 1.442695
  %v3218 = vpow.pop %v3217
  %v3219 = vmul.f32 %v3199, 1.442695
  %v3220 = vpow.pop %v3219
  %v3221 = vmul.f32 %v3200, 1.442695
  %v3222 = vpow.pop %v3221
  %v3223 = vmul.f32 %v3201, 1.442695
  %v3224 = vpow.pop %v3223
  %v3225 = vmul.f32 %v3202, 1.442695
  %v3226 = vpow.pop %v3225
  %v3227 = vmul.f32 %v3203, 1.442695
  %v3228 = vpow.pop %v3227
  %v3229 = vmul.f32 %v3204, 1.442695
  %v3230 = vpow.pop %v3229
  %v3231 = vmul.f32 %v3205, 1.442695
  %v3232 = vpow.pop %v3231
  %v3233 = vmul.f32 %v3206, 1.442695
  %v3234 = vpow.pop %v3233
  %v3235 = vmul.f32 %v3207, 1.442695
  %v3236 = vpow.pop %v3235
  %v3237 = vmul.f32 %v3208, 1.442695
  %v3238 = vpow.pop %v3237
  %v3239 = vmul.f32 %v3209, 1.442695
  %v3240 = vpow.pop %v3239
  %v3241 = vmul.f32 %v3210, 1.442695
  %v3242 = vpow.pop %v3241
  %3243 = vmatprep.subr.mxu0 0.0
  %3244 = vmatpush1.msra.mxu0 %v34
  %3245 = vmatprep.subr.mxu0 0.0
  %3246 = vmatpush1.msra.mxu0 %v35
  %3247 = vmatprep.subr.mxu0 0.0
  %3248 = vmatpush1.msra.mxu0 %v36
  %3249 = vmatprep.subr.mxu0 0.0
  %3250 = vmatpush1.msra.mxu0 %v37
  %3251 = vmatprep.subr.mxu0 0.0
  %3252 = vmatpush1.msra.mxu0 %v38
  %3253 = vmatprep.subr.mxu0 0.0
  %3254 = vmatpush1.msra.mxu0 %v39
  %3255 = vmatprep.subr.mxu0 0.0
  %3256 = vmatpush1.msra.mxu0 %v40
  %3257 = vmatprep.subr.mxu0 0.0
  %3258 = vmatpush1.msra.mxu0 %v41
  %3259 = vmatprep.subr.mxu0 0.0
  %3260 = vmatpush1.msra.mxu0 %v42
  %3261 = vmatprep.subr.mxu0 0.0
  %3262 = vmatpush1.msra.mxu0 %v43
  %3263 = vmatprep.subr.mxu0 0.0
  %3264 = vmatpush1.msra.mxu0 %v44
  %3265 = vmatprep.subr.mxu0 0.0
  %3266 = vmatpush1.msra.mxu0 %v45
  %3267 = vmatprep.subr.mxu0 0.0
  %3268 = vmatpush1.msra.mxu0 %v46
  %3269 = vmatprep.subr.mxu0 0.0
  %3270 = vmatpush1.msra.mxu0 %v47
  %3271 = vmatprep.subr.mxu0 0.0
  %3272 = vmatpush1.msra.mxu0 %v48
  %3273 = vmatprep.subr.mxu0 0.0
  %3274 = vmatpush1.msra.mxu0 %v49
  %3275 = vmatprep.subr.mxu0 0.0
  %3276 = vmatpush1.msra.mxu0 0.0
  %3277 = vmatprep.subr.mxu0 0.0
  %3278 = vmatpush1.msra.mxu0 0.0
  %3279 = vmatprep.subr.mxu0 0.0
  %3280 = vmatpush1.msra.mxu0 0.0
  %3281 = vmatprep.subr.mxu0 0.0
  %3282 = vmatpush1.msra.mxu0 0.0
  %3283 = vmatprep.subr.mxu0 0.0
  %3284 = vmatpush1.msra.mxu0 0.0
  %3285 = vmatprep.subr.mxu0 0.0
  %3286 = vmatpush1.msra.mxu0 0.0
  %3287 = vmatprep.subr.mxu0 0.0
  %3288 = vmatpush1.msra.mxu0 0.0
  %3289 = vmatprep.subr.mxu0 0.0
  %3290 = vmatpush1.msra.mxu0 0.0
  %3291 = vmatprep.subr.mxu0 0.0
  %3292 = vmatpush1.msra.mxu0 0.0
  %3293 = vmatprep.subr.mxu0 0.0
  %3294 = vmatpush1.msra.mxu0 0.0
  %3295 = vmatprep.subr.mxu0 0.0
  %3296 = vmatpush1.msra.mxu0 0.0
  %3297 = vmatprep.subr.mxu0 0.0
  %3298 = vmatpush1.msra.mxu0 0.0
  %3299 = vmatprep.subr.mxu0 0.0
  %3300 = vmatpush1.msra.mxu0 0.0
  %3301 = vmatprep.subr.mxu0 0.0
  %3302 = vmatpush1.msra.mxu0 0.0
  %3303 = vmatprep.subr.mxu0 0.0
  %3304 = vmatpush1.msra.mxu0 0.0
  %3305 = vmatprep.subr.mxu0 0.0
  %3306 = vmatpush1.msra.mxu0 0.0
  %3307 = vmatprep.mubr.f32.mxu0 0.0
  %3308 = vmatmul.mubr.f32.gmra.mrb[0].mxu0 %v3212
  %v3309 = vpop.f32.mrb[0].mxu0
  %v3310 = vadd.f32 0.0, %v3309
  %v3311 = vpop.f32.mrb[0].mxu0
  %3312 = vmatprep.mubr.f32.mxu0 0.0
  %3313 = vmatmul.mubr.f32.gmra.mrb[0].mxu0 %v3214
  %v3314 = vpop.f32.mrb[0].mxu0
  %v3315 = vadd.f32 0.0, %v3314
  %v3316 = vpop.f32.mrb[0].mxu0
  %3317 = vmatprep.mubr.f32.mxu0 0.0
  %3318 = vmatmul.mubr.f32.gmra.mrb[0].mxu0 %v3216
  %v3319 = vpop.f32.mrb[0].mxu0
  %v3320 = vadd.f32 0.0, %v3319
  %v3321 = vpop.f32.mrb[0].mxu0
  %3322 = vmatprep.mubr.f32.mxu0 0.0
  %3323 = vmatmul.mubr.f32.gmra.mrb[0].mxu0 %v3218
  %v3324 = vpop.f32.mrb[0].mxu0
  %v3325 = vadd.f32 0.0, %v3324
  %v3326 = vpop.f32.mrb[0].mxu0
  %3327 = vmatprep.mubr.f32.mxu0 0.0
  %3328 = vmatmul.mubr.f32.gmra.mrb[0].mxu0 %v3220
  %v3329 = vpop.f32.mrb[0].mxu0
  %v3330 = vadd.f32 0.0, %v3329
  %v3331 = vpop.f32.mrb[0].mxu0
  %3332 = vmatprep.mubr.f32.mxu0 0.0
  %3333 = vmatmul.mubr.f32.gmra.mrb[0].mxu0 %v3222
  %v3334 = vpop.f32.mrb[0].mxu0
  %v3335 = vadd.f32 0.0, %v3334
  %v3336 = vpop.f32.mrb[0].mxu0
  %3337 = vmatprep.mubr.f32.mxu0 0.0
  %3338 = vmatmul.mubr.f32.gmra.mrb[0].mxu0 %v3224
  %v3339 = vpop.f32.mrb[0].mxu0
  %v3340 = vadd.f32 0.0, %v3339
  %v3341 = vpop.f32.mrb[0].mxu0
  %3342 = vmatprep.mubr.f32.mxu0 0.0
  %3343 = vmatmul.mubr.f32.gmra.mrb[0].mxu0 %v3226
  %v3344 = vpop.f32.mrb[0].mxu0
  %v3345 = vadd.f32 0.0, %v3344
  %v3346 = vpop.f32.mrb[0].mxu0
  %3347 = vmatprep.mubr.f32.mxu0 0.0
  %3348 = vmatmul.mubr.f32.gmra.mrb[0].mxu0 %v3228
  %v3349 = vpop.f32.mrb[0].mxu0
  %v3350 = vadd.f32 0.0, %v3349
  %v3351 = vpop.f32.mrb[0].mxu0
  %3352 = vmatprep.mubr.f32.mxu0 0.0
  %3353 = vmatmul.mubr.f32.gmra.mrb[0].mxu0 %v3230
  %v3354 = vpop.f32.mrb[0].mxu0
  %v3355 = vadd.f32 0.0, %v3354
  %v3356 = vpop.f32.mrb[0].mxu0
  %3357 = vmatprep.mubr.f32.mxu0 0.0
  %3358 = vmatmul.mubr.f32.gmra.mrb[0].mxu0 %v3232
  %v3359 = vpop.f32.mrb[0].mxu0
  %v3360 = vadd.f32 0.0, %v3359
  %v3361 = vpop.f32.mrb[0].mxu0
  %3362 = vmatprep.mubr.f32.mxu0 0.0
  %3363 = vmatmul.mubr.f32.gmra.mrb[0].mxu0 %v3234
  %v3364 = vpop.f32.mrb[0].mxu0
  %v3365 = vadd.f32 0.0, %v3364
  %v3366 = vpop.f32.mrb[0].mxu0
  %3367 = vmatprep.mubr.f32.mxu0 0.0
  %3368 = vmatmul.mubr.f32.gmra.mrb[0].mxu0 %v3236
  %v3369 = vpop.f32.mrb[0].mxu0
  %v3370 = vadd.f32 0.0, %v3369
  %v3371 = vpop.f32.mrb[0].mxu0
  %3372 = vmatprep.mubr.f32.mxu0 0.0
  %3373 = vmatmul.mubr.f32.gmra.mrb[0].mxu0 %v3238
  %v3374 = vpop.f32.mrb[0].mxu0
  %v3375 = vadd.f32 0.0, %v3374
  %v3376 = vpop.f32.mrb[0].mxu0
  %3377 = vmatprep.mubr.f32.mxu0 0.0
  %3378 = vmatmul.mubr.f32.gmra.mrb[0].mxu0 %v3240
  %v3379 = vpop.f32.mrb[0].mxu0
  %v3380 = vadd.f32 0.0, %v3379
  %v3381 = vpop.f32.mrb[0].mxu0
  %3382 = vmatprep.mubr.f32.mxu0 0.0
  %3383 = vmatmul.mubr.f32.gmra.mrb[0].mxu0 %v3242
  %v3384 = vpop.f32.mrb[0].mxu0
  %v3385 = vadd.f32 0.0, %v3384
  %v3386 = vpop.f32.mrb[0].mxu0
  %3387 = vdwg.mxu0
  %v3388 = vrcp.pop %v3310
  %v3389 = vrcp.pop %v3315
  %v3390 = vrcp.pop %v3320
  %v3391 = vrcp.pop %v3325
  %v3392 = vrcp.pop %v3330
  %v3393 = vrcp.pop %v3335
  %v3394 = vrcp.pop %v3340
  %v3395 = vrcp.pop %v3345
  %v3396 = vrcp.pop %v3350
  %v3397 = vrcp.pop %v3355
  %v3398 = vrcp.pop %v3360
  %v3399 = vrcp.pop %v3365
  %v3400 = vrcp.pop %v3370
  %v3401 = vrcp.pop %v3375
  %v3402 = vrcp.pop %v3380
  %v3403 = vrcp.pop %v3385
  %3405 = vset.pattern.permute.xlu0 0
  %3406 = vperm.xlu0 %3405, %v3388
  %v3407 = vpop.permute.xlu0 %3406
  %3410 = vset.pattern.permute.xlu0 0
  %3411 = vperm.xlu0 %3410, %v3389
  %v3412 = vpop.permute.xlu0 %3411
  %3415 = vset.pattern.permute.xlu0 0
  %3416 = vperm.xlu0 %3415, %v3390
  %v3417 = vpop.permute.xlu0 %3416
  %3420 = vset.pattern.permute.xlu0 0
  %3421 = vperm.xlu0 %3420, %v3391
  %v3422 = vpop.permute.xlu0 %3421
  %3425 = vset.pattern.permute.xlu0 0
  %3426 = vperm.xlu0 %3425, %v3392
  %v3427 = vpop.permute.xlu0 %3426
  %3430 = vset.pattern.permute.xlu0 0
  %3431 = vperm.xlu0 %3430, %v3393
  %v3432 = vpop.permute.xlu0 %3431
  %3435 = vset.pattern.permute.xlu0 0
  %3436 = vperm.xlu0 %3435, %v3394
  %v3437 = vpop.permute.xlu0 %3436
  %3440 = vset.pattern.permute.xlu0 0
  %3441 = vperm.xlu0 %3440, %v3395
  %v3442 = vpop.permute.xlu0 %3441
  %3445 = vset.pattern.permute.xlu0 0
  %3446 = vperm.xlu0 %3445, %v3396
  %v3447 = vpop.permute.xlu0 %3446
  %3450 = vset.pattern.permute.xlu0 0
  %3451 = vperm.xlu0 %3450, %v3397
  %v3452 = vpop.permute.xlu0 %3451
  %3455 = vset.pattern.permute.xlu0 0
  %3456 = vperm.xlu0 %3455, %v3398
  %v3457 = vpop.permute.xlu0 %3456
  %3460 = vset.pattern.permute.xlu0 0
  %3461 = vperm.xlu0 %3460, %v3399
  %v3462 = vpop.permute.xlu0 %3461
  %3465 = vset.pattern.permute.xlu0 0
  %3466 = vperm.xlu0 %3465, %v3400
  %v3467 = vpop.permute.xlu0 %3466
  %3470 = vset.pattern.permute.xlu0 0
  %3471 = vperm.xlu0 %3470, %v3401
  %v3472 = vpop.permute.xlu0 %3471
  %3475 = vset.pattern.permute.xlu0 0
  %3476 = vperm.xlu0 %3475, %v3402
  %v3477 = vpop.permute.xlu0 %3476
  %3480 = vset.pattern.permute.xlu0 0
  %3481 = vperm.xlu0 %3480, %v3403
  %v3482 = vpop.permute.xlu0 %3481
  %v3484 = vmul.f32 %v3212, %v3407
  %v3485 = vmul.f32 %v3214, %v3412
  %v3486 = vmul.f32 %v3216, %v3417
  %v3487 = vmul.f32 %v3218, %v3422
  %v3488 = vmul.f32 %v3220, %v3427
  %v3489 = vmul.f32 %v3222, %v3432
  %v3490 = vmul.f32 %v3224, %v3437
  %v3491 = vmul.f32 %v3226, %v3442
  %v3492 = vmul.f32 %v3228, %v3447
  %v3493 = vmul.f32 %v3230, %v3452
  %v3494 = vmul.f32 %v3232, %v3457
  %v3495 = vmul.f32 %v3234, %v3462
  %v3496 = vmul.f32 %v3236, %v3467
  %v3497 = vmul.f32 %v3238, %v3472
  %v3498 = vmul.f32 %v3240, %v3477
  %v3499 = vmul.f32 %v3242, %v3482
  %v3500 = vpack.c.bf16 %v3485, %v3484
  %v3501 = vpack.c.bf16 %v3487, %v3486
  %v3502 = vpack.c.bf16 %v3489, %v3488
  %v3503 = vpack.c.bf16 %v3491, %v3490
  %v3504 = vpack.c.bf16 %v3493, %v3492
  %v3505 = vpack.c.bf16 %v3495, %v3494
  %v3506 = vpack.c.bf16 %v3497, %v3496
  %v3507 = vpack.c.bf16 %v3499, %v3498
  %3508 = vrot.lane.b32.xlu0 %v1181, 104
  %v3509 = vpop.permute.xlu0 %3508
  %3510 = vrot.lane.b32.xlu0 %v1182, 104
  %v3511 = vpop.permute.xlu0 %3510
  %3512 = vrot.lane.b32.xlu0 %v1183, 104
  %v3513 = vpop.permute.xlu0 %3512
  %3514 = vrot.lane.b32.xlu0 %v1184, 104
  %v3515 = vpop.permute.xlu0 %3514
  %3516 = vrot.lane.b32.xlu0 %v1185, 104
  %v3517 = vpop.permute.xlu0 %3516
  %3518 = vrot.lane.b32.xlu0 %v1186, 104
  %v3519 = vpop.permute.xlu0 %3518
  %3520 = vrot.lane.b32.xlu0 %v1187, 104
  %v3521 = vpop.permute.xlu0 %3520
  %3522 = vrot.lane.b32.xlu0 %v1188, 104
  %v3523 = vpop.permute.xlu0 %3522
  %3532 = vmatprep.subr.bf16.mxu0 0
  %3533 = vmatpush1.bf16.msra.mxu0 %v3509
  %3534 = vmatprep.subr.bf16.mxu0 0
  %3535 = vmatpush1.bf16.msra.mxu0 %v3511
  %3536 = vmatprep.subr.bf16.mxu0 0
  %3537 = vmatpush1.bf16.msra.mxu0 %v3513
  %3538 = vmatprep.subr.bf16.mxu0 0
  %3539 = vmatpush1.bf16.msra.mxu0 %v3515
  %3540 = vmatprep.subr.bf16.mxu0 0
  %3541 = vmatpush1.bf16.msra.mxu0 %v3517
  %3542 = vmatprep.subr.bf16.mxu0 0
  %3543 = vmatpush1.bf16.msra.mxu0 %v3519
  %3544 = vmatprep.subr.bf16.mxu0 0
  %3545 = vmatpush1.bf16.msra.mxu0 %v3521
  %3546 = vmatprep.subr.bf16.mxu0 0
  %3547 = vmatpush1.bf16.msra.mxu0 %v3523
  %3548 = vmatprep.subr.bf16.mxu0 0
  %3549 = vmatpush1.bf16.msra.mxu0 0
  %3550 = vmatprep.subr.bf16.mxu0 0
  %3551 = vmatpush1.bf16.msra.mxu0 0
  %3552 = vmatprep.subr.bf16.mxu0 0
  %3553 = vmatpush1.bf16.msra.mxu0 0
  %3554 = vmatprep.subr.bf16.mxu0 0
  %3555 = vmatpush1.bf16.msra.mxu0 0
  %3556 = vmatprep.subr.bf16.mxu0 0
  %3557 = vmatpush1.bf16.msra.mxu0 0
  %3558 = vmatprep.subr.bf16.mxu0 0
  %3559 = vmatpush1.bf16.msra.mxu0 0
  %3560 = vmatprep.subr.bf16.mxu0 0
  %3561 = vmatpush1.bf16.msra.mxu0 0
  %3562 = vmatprep.subr.bf16.mxu0 0
  %3563 = vmatpush1.bf16.msra.mxu0 0
  %3564 = vmatprep.mubr.bf16.mxu0 0
  %3565 = vmatmul.mubr.bf16.gmra.mrb[0].mxu0 %v3500
  %v3566 = vpop.f32.mrb[0].mxu0
  %v3567 = vadd.f32 0.0, %v3566
  %v3568 = vpop.f32.mrb[0].mxu0
  %v3569 = vpop.f32.mrb[0].mxu0
  %v3570 = vadd.f32 0.0, %v3569
  %v3571 = vpop.f32.mrb[0].mxu0
  %3572 = vmatprep.mubr.bf16.mxu0 0
  %3573 = vmatmul.mubr.bf16.gmra.mrb[0].mxu0 %v3501
  %v3574 = vpop.f32.mrb[0].mxu0
  %v3575 = vadd.f32 0.0, %v3574
  %v3576 = vpop.f32.mrb[0].mxu0
  %v3577 = vpop.f32.mrb[0].mxu0
  %v3578 = vadd.f32 0.0, %v3577
  %v3579 = vpop.f32.mrb[0].mxu0
  %3580 = vmatprep.mubr.bf16.mxu0 0
  %3581 = vmatmul.mubr.bf16.gmra.mrb[0].mxu0 %v3502
  %v3582 = vpop.f32.mrb[0].mxu0
  %v3583 = vadd.f32 0.0, %v3582
  %v3584 = vpop.f32.mrb[0].mxu0
  %v3585 = vpop.f32.mrb[0].mxu0
  %v3586 = vadd.f32 0.0, %v3585
  %v3587 = vpop.f32.mrb[0].mxu0
  %3588 = vmatprep.mubr.bf16.mxu0 0
  %3589 = vmatmul.mubr.bf16.gmra.mrb[0].mxu0 %v3503
  %v3590 = vpop.f32.mrb[0].mxu0
  %v3591 = vadd.f32 0.0, %v3590
  %v3592 = vpop.f32.mrb[0].mxu0
  %v3593 = vpop.f32.mrb[0].mxu0
  %v3594 = vadd.f32 0.0, %v3593
  %v3595 = vpop.f32.mrb[0].mxu0
  %3596 = vmatprep.mubr.bf16.mxu0 0
  %3597 = vmatmul.mubr.bf16.gmra.mrb[0].mxu0 %v3504
  %v3598 = vpop.f32.mrb[0].mxu0
  %v3599 = vadd.f32 0.0, %v3598
  %v3600 = vpop.f32.mrb[0].mxu0
  %v3601 = vpop.f32.mrb[0].mxu0
  %v3602 = vadd.f32 0.0, %v3601
  %v3603 = vpop.f32.mrb[0].mxu0
  %3604 = vmatprep.mubr.bf16.mxu0 0
  %3605 = vmatmul.mubr.bf16.gmra.mrb[0].mxu0 %v3505
  %v3606 = vpop.f32.mrb[0].mxu0
  %v3607 = vadd.f32 0.0, %v3606
  %v3608 = vpop.f32.mrb[0].mxu0
  %v3609 = vpop.f32.mrb[0].mxu0
  %v3610 = vadd.f32 0.0, %v3609
  %v3611 = vpop.f32.mrb[0].mxu0
  %3612 = vmatprep.mubr.bf16.mxu0 0
  %3613 = vmatmul.mubr.bf16.gmra.mrb[0].mxu0 %v3506
  %v3614 = vpop.f32.mrb[0].mxu0
  %v3615 = vadd.f32 0.0, %v3614
  %v3616 = vpop.f32.mrb[0].mxu0
  %v3617 = vpop.f32.mrb[0].mxu0
  %v3618 = vadd.f32 0.0, %v3617
  %v3619 = vpop.f32.mrb[0].mxu0
  %3620 = vmatprep.mubr.bf16.mxu0 0
  %3621 = vmatmul.mubr.bf16.gmra.mrb[0].mxu0 %v3507
  %v3622 = vpop.f32.mrb[0].mxu0
  %v3623 = vadd.f32 0.0, %v3622
  %v3624 = vpop.f32.mrb[0].mxu0
  %v3625 = vpop.f32.mrb[0].mxu0
  %v3626 = vadd.f32 0.0, %v3625
  %v3627 = vpop.f32.mrb[0].mxu0
  %3628 = vdwg.mxu0
  %3645 = vrot.lane.b32.xlu0 %v2339, 8
  %v3646 = vpop.permute.xlu0 %3645
  %3647 = vrot.lane.b32.xlu0 %v2342, 8
  %v3648 = vpop.permute.xlu0 %3647
  %3649 = vrot.lane.b32.xlu0 %v2347, 8
  %v3650 = vpop.permute.xlu0 %3649
  %3651 = vrot.lane.b32.xlu0 %v2350, 8
  %v3652 = vpop.permute.xlu0 %3651
  %3653 = vrot.lane.b32.xlu0 %v2355, 8
  %v3654 = vpop.permute.xlu0 %3653
  %3655 = vrot.lane.b32.xlu0 %v2358, 8
  %v3656 = vpop.permute.xlu0 %3655
  %3657 = vrot.lane.b32.xlu0 %v2363, 8
  %v3658 = vpop.permute.xlu0 %3657
  %3659 = vrot.lane.b32.xlu0 %v2366, 8
  %v3660 = vpop.permute.xlu0 %3659
  %3661 = vrot.lane.b32.xlu0 %v2371, 8
  %v3662 = vpop.permute.xlu0 %3661
  %3663 = vrot.lane.b32.xlu0 %v2374, 8
  %v3664 = vpop.permute.xlu0 %3663
  %3665 = vrot.lane.b32.xlu0 %v2379, 8
  %v3666 = vpop.permute.xlu0 %3665
  %3667 = vrot.lane.b32.xlu0 %v2382, 8
  %v3668 = vpop.permute.xlu0 %3667
  %3669 = vrot.lane.b32.xlu0 %v2387, 8
  %v3670 = vpop.permute.xlu0 %3669
  %3671 = vrot.lane.b32.xlu0 %v2390, 8
  %v3672 = vpop.permute.xlu0 %3671
  %3673 = vrot.lane.b32.xlu0 %v2395, 8
  %v3674 = vpop.permute.xlu0 %3673
  %3675 = vrot.lane.b32.xlu0 %v2398, 8
  %v3676 = vpop.permute.xlu0 %3675
  %3709 = vrot.lane.b32.xlu0 %v2953, 16
  %v3710 = vpop.permute.xlu0 %3709
  %3711 = vrot.lane.b32.xlu0 %v2956, 16
  %v3712 = vpop.permute.xlu0 %3711
  %3713 = vrot.lane.b32.xlu0 %v2961, 16
  %v3714 = vpop.permute.xlu0 %3713
  %3715 = vrot.lane.b32.xlu0 %v2964, 16
  %v3716 = vpop.permute.xlu0 %3715
  %3717 = vrot.lane.b32.xlu0 %v2969, 16
  %v3718 = vpop.permute.xlu0 %3717
  %3719 = vrot.lane.b32.xlu0 %v2972, 16
  %v3720 = vpop.permute.xlu0 %3719
  %3721 = vrot.lane.b32.xlu0 %v2977, 16
  %v3722 = vpop.permute.xlu0 %3721
  %3723 = vrot.lane.b32.xlu0 %v2980, 16
  %v3724 = vpop.permute.xlu0 %3723
  %3725 = vrot.lane.b32.xlu0 %v2985, 16
  %v3726 = vpop.permute.xlu0 %3725
  %3727 = vrot.lane.b32.xlu0 %v2988, 16
  %v3728 = vpop.permute.xlu0 %3727
  %3729 = vrot.lane.b32.xlu0 %v2993, 16
  %v3730 = vpop.permute.xlu0 %3729
  %3731 = vrot.lane.b32.xlu0 %v2996, 16
  %v3732 = vpop.permute.xlu0 %3731
  %3733 = vrot.lane.b32.xlu0 %v3001, 16
  %v3734 = vpop.permute.xlu0 %3733
  %3735 = vrot.lane.b32.xlu0 %v3004, 16
  %v3736 = vpop.permute.xlu0 %3735
  %3737 = vrot.lane.b32.xlu0 %v3009, 16
  %v3738 = vpop.permute.xlu0 %3737
  %3739 = vrot.lane.b32.xlu0 %v3012, 16
  %v3740 = vpop.permute.xlu0 %3739
  %3773 = vrot.lane.b32.xlu0 %v3567, 24
  %v3774 = vpop.permute.xlu0 %3773
  %3775 = vrot.lane.b32.xlu0 %v3570, 24
  %v3776 = vpop.permute.xlu0 %3775
  %3777 = vrot.lane.b32.xlu0 %v3575, 24
  %v3778 = vpop.permute.xlu0 %3777
  %3779 = vrot.lane.b32.xlu0 %v3578, 24
  %v3780 = vpop.permute.xlu0 %3779
  %3781 = vrot.lane.b32.xlu0 %v3583, 24
  %v3782 = vpop.permute.xlu0 %3781
  %3783 = vrot.lane.b32.xlu0 %v3586, 24
  %v3784 = vpop.permute.xlu0 %3783
  %3785 = vrot.lane.b32.xlu0 %v3591, 24
  %v3786 = vpop.permute.xlu0 %3785
  %3787 = vrot.lane.b32.xlu0 %v3594, 24
  %v3788 = vpop.permute.xlu0 %3787
  %3789 = vrot.lane.b32.xlu0 %v3599, 24
  %v3790 = vpop.permute.xlu0 %3789
  %3791 = vrot.lane.b32.xlu0 %v3602, 24
  %v3792 = vpop.permute.xlu0 %3791
  %3793 = vrot.lane.b32.xlu0 %v3607, 24
  %v3794 = vpop.permute.xlu0 %3793
  %3795 = vrot.lane.b32.xlu0 %v3610, 24
  %v3796 = vpop.permute.xlu0 %3795
  %3797 = vrot.lane.b32.xlu0 %v3615, 24
  %v3798 = vpop.permute.xlu0 %3797
  %3799 = vrot.lane.b32.xlu0 %v3618, 24
  %v3800 = vpop.permute.xlu0 %3799
  %3801 = vrot.lane.b32.xlu0 %v3623, 24
  %v3802 = vpop.permute.xlu0 %3801
  %3803 = vrot.lane.b32.xlu0 %v3626, 24
  %v3804 = vpop.permute.xlu0 %3803
  %vm3821 = vcmask 64512
  %v3822 = vsel %vm3821, %v1717, %v3646
  %v3823 = vsel %vm3821, %v1720, %v3648
  %v3824 = vsel %vm3821, %v1725, %v3650
  %v3825 = vsel %vm3821, %v1728, %v3652
  %v3826 = vsel %vm3821, %v1733, %v3654
  %v3827 = vsel %vm3821, %v1736, %v3656
  %v3828 = vsel %vm3821, %v1741, %v3658
  %v3829 = vsel %vm3821, %v1744, %v3660
  %v3830 = vsel %vm3821, %v1749, %v3662
  %v3831 = vsel %vm3821, %v1752, %v3664
  %v3832 = vsel %vm3821, %v1757, %v3666
  %v3833 = vsel %vm3821, %v1760, %v3668
  %v3834 = vsel %vm3821, %v1765, %v3670
  %v3835 = vsel %vm3821, %v1768, %v3672
  %v3836 = vsel %vm3821, %v1773, %v3674
  %v3837 = vsel %vm3821, %v1776, %v3676
  %v3838 = vsel %vm151, %v3822, %v3710
  %v3839 = vsel %vm151, %v3823, %v3712
  %v3840 = vsel %vm151, %v3824, %v3714
  %v3841 = vsel %vm151, %v3825, %v3716
  %v3842 = vsel %vm151, %v3826, %v3718
  %v3843 = vsel %vm151, %v3827, %v3720
  %v3844 = vsel %vm151, %v3828, %v3722
  %v3845 = vsel %vm151, %v3829, %v3724
  %v3846 = vsel %vm151, %v3830, %v3726
  %v3847 = vsel %vm151, %v3831, %v3728
  %v3848 = vsel %vm151, %v3832, %v3730
  %v3849 = vsel %vm151, %v3833, %v3732
  %v3850 = vsel %vm151, %v3834, %v3734
  %v3851 = vsel %vm151, %v3835, %v3736
  %v3852 = vsel %vm151, %v3836, %v3738
  %v3853 = vsel %vm151, %v3837, %v3740
  %vm3854 = vcmask 195584
  %v3855 = vsel %vm3854, %v3838, %v3774
  %v3856 = vsel %vm3854, %v3839, %v3776
  %v3857 = vsel %vm3854, %v3840, %v3778
  %v3858 = vsel %vm3854, %v3841, %v3780
  %v3859 = vsel %vm3854, %v3842, %v3782
  %v3860 = vsel %vm3854, %v3843, %v3784
  %v3861 = vsel %vm3854, %v3844, %v3786
  %v3862 = vsel %vm3854, %v3845, %v3788
  %v3863 = vsel %vm3854, %v3846, %v3790
  %v3864 = vsel %vm3854, %v3847, %v3792
  %v3865 = vsel %vm3854, %v3848, %v3794
  %v3866 = vsel %vm3854, %v3849, %v3796
  %v3867 = vsel %vm3854, %v3850, %v3798
  %v3868 = vsel %vm3854, %v3851, %v3800
  %v3869 = vsel %vm3854, %v3852, %v3802
  %v3870 = vsel %vm3854, %v3853, %v3804
  %v3871 = vld [vmem:[%s8 + $0x6] sm:$0x1]
  %v3872 = vlaneseq
  %v3873 = vshrl.u32 %v3872, 7
  %v3874 = vsub.s32 0, %v3873
  %v3875 = vrot.slane %v3871, %v3874
  %v3876 = vadd.f32 %v3855, %v3875
  %v3877 = vadd.f32 %v3856, %v3875
  %v3878 = vadd.f32 %v3857, %v3875
  %v3879 = vadd.f32 %v3858, %v3875
  %v3880 = vadd.f32 %v3859, %v3875
  %v3881 = vadd.f32 %v3860, %v3875
  %v3882 = vadd.f32 %v3861, %v3875
  %v3883 = vadd.f32 %v3862, %v3875
  %v3884 = vadd.f32 %v3863, %v3875
  %v3885 = vadd.f32 %v3864, %v3875
  %v3886 = vadd.f32 %v3865, %v3875
  %v3887 = vadd.f32 %v3866, %v3875
  %v3888 = vadd.f32 %v3867, %v3875
  %v3889 = vadd.f32 %v3868, %v3875
  %v3890 = vadd.f32 %v3869, %v3875
  %v3891 = vadd.f32 %v3870, %v3875
  %3892 = vmatprep.subr.mxu0 0.0
  %3893 = vmatpush1.msra.mxu0 %v3876
  %3894 = vmatprep.subr.mxu0 0.0
  %3895 = vmatpush1.msra.mxu0 %v3877
  %3896 = vmatprep.subr.mxu0 0.0
  %3897 = vmatpush1.msra.mxu0 %v3878
  %3898 = vmatprep.subr.mxu0 0.0
  %3899 = vmatpush1.msra.mxu0 %v3879
  %3900 = vmatprep.subr.mxu0 0.0
  %3901 = vmatpush1.msra.mxu0 %v3880
  %3902 = vmatprep.subr.mxu0 0.0
  %3903 = vmatpush1.msra.mxu0 %v3881
  %3904 = vmatprep.subr.mxu0 0.0
  %3905 = vmatpush1.msra.mxu0 %v3882
  %3906 = vmatprep.subr.mxu0 0.0
  %3907 = vmatpush1.msra.mxu0 %v3883
  %3908 = vmatprep.subr.mxu0 0.0
  %3909 = vmatpush1.msra.mxu0 %v3884
  %3910 = vmatprep.subr.mxu0 0.0
  %3911 = vmatpush1.msra.mxu0 %v3885
  %3912 = vmatprep.subr.mxu0 0.0
  %3913 = vmatpush1.msra.mxu0 %v3886
  %3914 = vmatprep.subr.mxu0 0.0
  %3915 = vmatpush1.msra.mxu0 %v3887
  %3916 = vmatprep.subr.mxu0 0.0
  %3917 = vmatpush1.msra.mxu0 %v3888
  %3918 = vmatprep.subr.mxu0 0.0
  %3919 = vmatpush1.msra.mxu0 %v3889
  %3920 = vmatprep.subr.mxu0 0.0
  %3921 = vmatpush1.msra.mxu0 %v3890
  %3922 = vmatprep.subr.mxu0 0.0
  %3923 = vmatpush1.msra.mxu0 %v3891
  %3924 = vmatprep.subr.mxu0 0.0
  %3925 = vmatpush1.msra.mxu0 0.0
  %3926 = vmatprep.subr.mxu0 0.0
  %3927 = vmatpush1.msra.mxu0 0.0
  %3928 = vmatprep.subr.mxu0 0.0
  %3929 = vmatpush1.msra.mxu0 0.0
  %3930 = vmatprep.subr.mxu0 0.0
  %3931 = vmatpush1.msra.mxu0 0.0
  %3932 = vmatprep.subr.mxu0 0.0
  %3933 = vmatpush1.msra.mxu0 0.0
  %3934 = vmatprep.subr.mxu0 0.0
  %3935 = vmatpush1.msra.mxu0 0.0
  %3936 = vmatprep.subr.mxu0 0.0
  %3937 = vmatpush1.msra.mxu0 0.0
  %3938 = vmatprep.subr.mxu0 0.0
  %3939 = vmatpush1.msra.mxu0 0.0
  %3940 = vmatprep.subr.mxu0 0.0
  %3941 = vmatpush1.msra.mxu0 0.0
  %3942 = vmatprep.subr.mxu0 0.0
  %3943 = vmatpush1.msra.mxu0 0.0
  %3944 = vmatprep.subr.mxu0 0.0
  %3945 = vmatpush1.msra.mxu0 0.0
  %3946 = vmatprep.subr.mxu0 0.0
  %3947 = vmatpush1.msra.mxu0 0.0
  %3948 = vmatprep.subr.mxu0 0.0
  %3949 = vmatpush1.msra.mxu0 0.0
  %3950 = vmatprep.subr.mxu0 0.0
  %3951 = vmatpush1.msra.mxu0 0.0
  %3952 = vmatprep.subr.mxu0 0.0
  %3953 = vmatpush1.msra.mxu0 0.0
  %3954 = vmatprep.subr.mxu0 0.0
  %3955 = vmatpush1.msra.mxu0 0.0
  %3956 = vmatprep.mubr.f32.mxu0 0.0
  %3957 = vmatmul.mubr.f32.gmra.mrb[0].mxu0 %v33
  %v3958 = vpop.f32.mrb[0].mxu0
  %v3959 = vadd.f32 0.0, %v3958
  %v3960 = vpop.f32.mrb[0].mxu0
  %3961 = vdwg.mxu0
  %v3962 = vmul.f32 %v3876, %v3876
  %v3963 = vmul.f32 %v3877, %v3877
  %v3964 = vmul.f32 %v3878, %v3878
  %v3965 = vmul.f32 %v3879, %v3879
  %v3966 = vmul.f32 %v3880, %v3880
  %v3967 = vmul.f32 %v3881, %v3881
  %v3968 = vmul.f32 %v3882, %v3882
  %v3969 = vmul.f32 %v3883, %v3883
  %v3970 = vmul.f32 %v3884, %v3884
  %v3971 = vmul.f32 %v3885, %v3885
  %v3972 = vmul.f32 %v3886, %v3886
  %v3973 = vmul.f32 %v3887, %v3887
  %v3974 = vmul.f32 %v3888, %v3888
  %v3975 = vmul.f32 %v3889, %v3889
  %v3976 = vmul.f32 %v3890, %v3890
  %v3977 = vmul.f32 %v3891, %v3891
  %3978 = vmatprep.subr.mxu0 0.0
  %3979 = vmatpush1.msra.mxu0 %v3962
  %3980 = vmatprep.subr.mxu0 0.0
  %3981 = vmatpush1.msra.mxu0 %v3963
  %3982 = vmatprep.subr.mxu0 0.0
  %3983 = vmatpush1.msra.mxu0 %v3964
  %3984 = vmatprep.subr.mxu0 0.0
  %3985 = vmatpush1.msra.mxu0 %v3965
  %3986 = vmatprep.subr.mxu0 0.0
  %3987 = vmatpush1.msra.mxu0 %v3966
  %3988 = vmatprep.subr.mxu0 0.0
  %3989 = vmatpush1.msra.mxu0 %v3967
  %3990 = vmatprep.subr.mxu0 0.0
  %3991 = vmatpush1.msra.mxu0 %v3968
  %3992 = vmatprep.subr.mxu0 0.0
  %3993 = vmatpush1.msra.mxu0 %v3969
  %3994 = vmatprep.subr.mxu0 0.0
  %3995 = vmatpush1.msra.mxu0 %v3970
  %3996 = vmatprep.subr.mxu0 0.0
  %3997 = vmatpush1.msra.mxu0 %v3971
  %3998 = vmatprep.subr.mxu0 0.0
  %3999 = vmatpush1.msra.mxu0 %v3972
  %4000 = vmatprep.subr.mxu0 0.0
  %4001 = vmatpush1.msra.mxu0 %v3973
  %4002 = vmatprep.subr.mxu0 0.0
  %4003 = vmatpush1.msra.mxu0 %v3974
  %4004 = vmatprep.subr.mxu0 0.0
  %4005 = vmatpush1.msra.mxu0 %v3975
  %4006 = vmatprep.subr.mxu0 0.0
  %4007 = vmatpush1.msra.mxu0 %v3976
  %4008 = vmatprep.subr.mxu0 0.0
  %4009 = vmatpush1.msra.mxu0 %v3977
  %4010 = vmatprep.subr.mxu0 0.0
  %4011 = vmatpush1.msra.mxu0 0.0
  %4012 = vmatprep.subr.mxu0 0.0
  %4013 = vmatpush1.msra.mxu0 0.0
  %4014 = vmatprep.subr.mxu0 0.0
  %4015 = vmatpush1.msra.mxu0 0.0
  %4016 = vmatprep.subr.mxu0 0.0
  %4017 = vmatpush1.msra.mxu0 0.0
  %4018 = vmatprep.subr.mxu0 0.0
  %4019 = vmatpush1.msra.mxu0 0.0
  %4020 = vmatprep.subr.mxu0 0.0
  %4021 = vmatpush1.msra.mxu0 0.0
  %4022 = vmatprep.subr.mxu0 0.0
  %4023 = vmatpush1.msra.mxu0 0.0
  %4024 = vmatprep.subr.mxu0 0.0
  %4025 = vmatpush1.msra.mxu0 0.0
  %4026 = vmatprep.subr.mxu0 0.0
  %4027 = vmatpush1.msra.mxu0 0.0
  %4028 = vmatprep.subr.mxu0 0.0
  %4029 = vmatpush1.msra.mxu0 0.0
  %4030 = vmatprep.subr.mxu0 0.0
  %4031 = vmatpush1.msra.mxu0 0.0
  %4032 = vmatprep.subr.mxu0 0.0
  %4033 = vmatpush1.msra.mxu0 0.0
  %4034 = vmatprep.subr.mxu0 0.0
  %4035 = vmatpush1.msra.mxu0 0.0
  %4036 = vmatprep.subr.mxu0 0.0
  %4037 = vmatpush1.msra.mxu0 0.0
  %4038 = vmatprep.subr.mxu0 0.0
  %4039 = vmatpush1.msra.mxu0 0.0
  %4040 = vmatprep.subr.mxu0 0.0
  %4041 = vmatpush1.msra.mxu0 0.0
  %4042 = vmatprep.mubr.f32.mxu0 0.0
  %4043 = vmatmul.mubr.f32.gmra.mrb[0].mxu0 %v33
  %v4044 = vpop.f32.mrb[0].mxu0
  %v4045 = vadd.f32 0.0, %v4044
  %v4046 = vpop.f32.mrb[0].mxu0
  %4047 = vdwg.mxu0
  %v4048 = vmul.f32 %v3959, %v3959
  %v4049 = vsub.f32 %v4045, %v4048
  %v4050 = vlaneseq
  %v4051 = vshrl.u32 %v4050, 7
  %v4052 = vsub.s32 0, %v4051
  %v4053 = vrot.slane %v3959, %v4052
  %v4054 = vsub.f32 %v3876, %v4053
  %v4055 = vsub.f32 %v3877, %v4053
  %v4056 = vsub.f32 %v3878, %v4053
  %v4057 = vsub.f32 %v3879, %v4053
  %v4058 = vsub.f32 %v3880, %v4053
  %v4059 = vsub.f32 %v3881, %v4053
  %v4060 = vsub.f32 %v3882, %v4053
  %v4061 = vsub.f32 %v3883, %v4053
  %v4062 = vsub.f32 %v3884, %v4053
  %v4063 = vsub.f32 %v3885, %v4053
  %v4064 = vsub.f32 %v3886, %v4053
  %v4065 = vsub.f32 %v3887, %v4053
  %v4066 = vsub.f32 %v3888, %v4053
  %v4067 = vsub.f32 %v3889, %v4053
  %v4068 = vsub.f32 %v3890, %v4053
  %v4069 = vsub.f32 %v3891, %v4053
  %v4070 = vadd.f32 %v4049, 1e-05
  %v4071 = vrsqrt.pop %v4070
  %v4072 = vlaneseq
  %v4073 = vshrl.u32 %v4072, 7
  %v4074 = vsub.s32 0, %v4073
  %v4075 = vrot.slane %v4071, %v4074
  %v4076 = vmul.f32 %v4054, %v4075
  %v4077 = vmul.f32 %v4055, %v4075
  %v4078 = vmul.f32 %v4056, %v4075
  %v4079 = vmul.f32 %v4057, %v4075
  %v4080 = vmul.f32 %v4058, %v4075
  %v4081 = vmul.f32 %v4059, %v4075
  %v4082 = vmul.f32 %v4060, %v4075
  %v4083 = vmul.f32 %v4061, %v4075
  %v4084 = vmul.f32 %v4062, %v4075
  %v4085 = vmul.f32 %v4063, %v4075
  %v4086 = vmul.f32 %v4064, %v4075
  %v4087 = vmul.f32 %v4065, %v4075
  %v4088 = vmul.f32 %v4066, %v4075
  %v4089 = vmul.f32 %v4067, %v4075
  %v4090 = vmul.f32 %v4068, %v4075
  %v4091 = vmul.f32 %v4069, %v4075
  %v4092 = vld [vmem:[%s8 + $0x7] sm:$0x1]
  %v4093 = vlaneseq
  %v4094 = vshrl.u32 %v4093, 7
  %v4095 = vsub.s32 0, %v4094
  %v4096 = vrot.slane %v4092, %v4095
  %v4097 = vmul.f32 %v4076, %v4096
  %v4098 = vmul.f32 %v4077, %v4096
  %v4099 = vmul.f32 %v4078, %v4096
  %v4100 = vmul.f32 %v4079, %v4096
  %v4101 = vmul.f32 %v4080, %v4096
  %v4102 = vmul.f32 %v4081, %v4096
  %v4103 = vmul.f32 %v4082, %v4096
  %v4104 = vmul.f32 %v4083, %v4096
  %v4105 = vmul.f32 %v4084, %v4096
  %v4106 = vmul.f32 %v4085, %v4096
  %v4107 = vmul.f32 %v4086, %v4096
  %v4108 = vmul.f32 %v4087, %v4096
  %v4109 = vmul.f32 %v4088, %v4096
  %v4110 = vmul.f32 %v4089, %v4096
  %v4111 = vmul.f32 %v4090, %v4096
  %v4112 = vmul.f32 %v4091, %v4096
  %v4113 = vld [vmem:[%s8 + $0x8] sm:$0x1]
  %v4114 = vlaneseq
  %v4115 = vshrl.u32 %v4114, 7
  %v4116 = vsub.s32 0, %v4115
  %v4117 = vrot.slane %v4113, %v4116
  %v4118 = vadd.f32 %v4097, %v4117
  %v4119 = vadd.f32 %v4098, %v4117
  %v4120 = vadd.f32 %v4099, %v4117
  %v4121 = vadd.f32 %v4100, %v4117
  %v4122 = vadd.f32 %v4101, %v4117
  %v4123 = vadd.f32 %v4102, %v4117
  %v4124 = vadd.f32 %v4103, %v4117
  %v4125 = vadd.f32 %v4104, %v4117
  %v4126 = vadd.f32 %v4105, %v4117
  %v4127 = vadd.f32 %v4106, %v4117
  %v4128 = vadd.f32 %v4107, %v4117
  %v4129 = vadd.f32 %v4108, %v4117
  %v4130 = vadd.f32 %v4109, %v4117
  %v4131 = vadd.f32 %v4110, %v4117
  %v4132 = vadd.f32 %v4111, %v4117
  %v4133 = vadd.f32 %v4112, %v4117
  %vm4134 = vcmp.gt.f32.partialorder %v4118, 0.0
  %vm4135 = vcmp.gt.f32.partialorder %v4119, 0.0
  %vm4136 = vcmp.gt.f32.partialorder %v4120, 0.0
  %vm4137 = vcmp.gt.f32.partialorder %v4121, 0.0
  %vm4138 = vcmp.gt.f32.partialorder %v4122, 0.0
  %vm4139 = vcmp.gt.f32.partialorder %v4123, 0.0
  %vm4140 = vcmp.gt.f32.partialorder %v4124, 0.0
  %vm4141 = vcmp.gt.f32.partialorder %v4125, 0.0
  %vm4142 = vcmp.gt.f32.partialorder %v4126, 0.0
  %vm4143 = vcmp.gt.f32.partialorder %v4127, 0.0
  %vm4144 = vcmp.gt.f32.partialorder %v4128, 0.0
  %vm4145 = vcmp.gt.f32.partialorder %v4129, 0.0
  %vm4146 = vcmp.gt.f32.partialorder %v4130, 0.0
  %vm4147 = vcmp.gt.f32.partialorder %v4131, 0.0
  %vm4148 = vcmp.gt.f32.partialorder %v4132, 0.0
  %vm4149 = vcmp.gt.f32.partialorder %v4133, 0.0
  %v4150 = vmin.f32 %v4118, 0.0
  %v4151 = vmin.f32 %v4119, 0.0
  %v4152 = vmin.f32 %v4120, 0.0
  %v4153 = vmin.f32 %v4121, 0.0
  %v4154 = vmin.f32 %v4122, 0.0
  %v4155 = vmin.f32 %v4123, 0.0
  %v4156 = vmin.f32 %v4124, 0.0
  %v4157 = vmin.f32 %v4125, 0.0
  %v4158 = vmin.f32 %v4126, 0.0
  %v4159 = vmin.f32 %v4127, 0.0
  %v4160 = vmin.f32 %v4128, 0.0
  %v4161 = vmin.f32 %v4129, 0.0
  %v4162 = vmin.f32 %v4130, 0.0
  %v4163 = vmin.f32 %v4131, 0.0
  %v4164 = vmin.f32 %v4132, 0.0
  %v4165 = vmin.f32 %v4133, 0.0
  %v4166 = vmul.f32 %v4150, 1.442695
  %v4167 = vpow.pop %v4166
  %v4168 = vmul.f32 %v4151, 1.442695
  %v4169 = vpow.pop %v4168
  %v4170 = vmul.f32 %v4152, 1.442695
  %v4171 = vpow.pop %v4170
  %v4172 = vmul.f32 %v4153, 1.442695
  %v4173 = vpow.pop %v4172
  %v4174 = vmul.f32 %v4154, 1.442695
  %v4175 = vpow.pop %v4174
  %v4176 = vmul.f32 %v4155, 1.442695
  %v4177 = vpow.pop %v4176
  %v4178 = vmul.f32 %v4156, 1.442695
  %v4179 = vpow.pop %v4178
  %v4180 = vmul.f32 %v4157, 1.442695
  %v4181 = vpow.pop %v4180
  %v4182 = vmul.f32 %v4158, 1.442695
  %v4183 = vpow.pop %v4182
  %v4184 = vmul.f32 %v4159, 1.442695
  %v4185 = vpow.pop %v4184
  %v4186 = vmul.f32 %v4160, 1.442695
  %v4187 = vpow.pop %v4186
  %v4188 = vmul.f32 %v4161, 1.442695
  %v4189 = vpow.pop %v4188
  %v4190 = vmul.f32 %v4162, 1.442695
  %v4191 = vpow.pop %v4190
  %v4192 = vmul.f32 %v4163, 1.442695
  %v4193 = vpow.pop %v4192
  %v4194 = vmul.f32 %v4164, 1.442695
  %v4195 = vpow.pop %v4194
  %v4196 = vmul.f32 %v4165, 1.442695
  %v4197 = vpow.pop %v4196
  %v4198 = vsub.f32 %v4167, 1.0
  %v4199 = vsub.f32 %v4169, 1.0
  %v4200 = vsub.f32 %v4171, 1.0
  %v4201 = vsub.f32 %v4173, 1.0
  %v4202 = vsub.f32 %v4175, 1.0
  %v4203 = vsub.f32 %v4177, 1.0
  %v4204 = vsub.f32 %v4179, 1.0
  %v4205 = vsub.f32 %v4181, 1.0
  %v4206 = vsub.f32 %v4183, 1.0
  %v4207 = vsub.f32 %v4185, 1.0
  %v4208 = vsub.f32 %v4187, 1.0
  %v4209 = vsub.f32 %v4189, 1.0
  %v4210 = vsub.f32 %v4191, 1.0
  %v4211 = vsub.f32 %v4193, 1.0
  %v4212 = vsub.f32 %v4195, 1.0
  %v4213 = vsub.f32 %v4197, 1.0
  %v4214 = vsel %vm4134, %v4118, %v4198
  %v4215 = vsel %vm4135, %v4119, %v4199
  %v4216 = vsel %vm4136, %v4120, %v4200
  %v4217 = vsel %vm4137, %v4121, %v4201
  %v4218 = vsel %vm4138, %v4122, %v4202
  %v4219 = vsel %vm4139, %v4123, %v4203
  %v4220 = vsel %vm4140, %v4124, %v4204
  %v4221 = vsel %vm4141, %v4125, %v4205
  %v4222 = vsel %vm4142, %v4126, %v4206
  %v4223 = vsel %vm4143, %v4127, %v4207
  %v4224 = vsel %vm4144, %v4128, %v4208
  %v4225 = vsel %vm4145, %v4129, %v4209
  %v4226 = vsel %vm4146, %v4130, %v4210
  %v4227 = vsel %vm4147, %v4131, %v4211
  %v4228 = vsel %vm4148, %v4132, %v4212
  %v4229 = vsel %vm4149, %v4133, %v4213
  %v4230 = vpack.c.bf16 %v4215, %v4214
  %v4231 = vpack.c.bf16 %v4217, %v4216
  %v4232 = vpack.c.bf16 %v4219, %v4218
  %v4233 = vpack.c.bf16 %v4221, %v4220
  %v4234 = vpack.c.bf16 %v4223, %v4222
  %v4235 = vpack.c.bf16 %v4225, %v4224
  %v4236 = vpack.c.bf16 %v4227, %v4226
  %v4237 = vpack.c.bf16 %v4229, %v4228
  %v4238 = vld [vmem:[%s7] sm:$0xf]
  %v4239 = vld [vmem:[%s7 + $0x4] sm:$0xf]
  %v4240 = vld [vmem:[%s7 + $0x8] sm:$0xf]
  %v4241 = vld [vmem:[%s7 + $0xc] sm:$0xf]
  %v4246 = vunpack.c.l.b16 %v4238
  %v4247 = vunpack.c.l.b16 %v4239
  %v4248 = vunpack.c.l.b16 %v4240
  %v4249 = vunpack.c.l.b16 %v4241
  %v4250 = vpack.c.b16 %v4247, %v4246
  %v4251 = vpack.c.b16 %v4249, %v4248
  %v4255 = vsel %vm560, %v4230, 0
  %v4258 = vsel %vm560, %v4231, 0
  %v4261 = vsel %vm560, %v4232, 0
  %v4264 = vsel %vm560, %v4233, 0
  %v4267 = vsel %vm560, %v4234, 0
  %v4270 = vsel %vm560, %v4235, 0
  %v4273 = vsel %vm560, %v4236, 0
  %v4276 = vsel %vm560, %v4237, 0
  %4278 = vmatprep.subr.bf16.mxu0 0
  %4279 = vmatpush1.bf16.msra.mxu0 %v4250
  %4280 = vmatprep.subr.bf16.mxu0 0
  %4281 = vmatpush1.bf16.msra.mxu0 %v4251
  %4282 = vmatprep.subr.bf16.mxu0 0
  %4283 = vmatpush1.bf16.msra.mxu0 0
  %4284 = vmatprep.subr.bf16.mxu0 0
  %4285 = vmatpush1.bf16.msra.mxu0 0
  %4286 = vmatprep.subr.bf16.mxu0 0
  %4287 = vmatpush1.bf16.msra.mxu0 0
  %4288 = vmatprep.subr.bf16.mxu0 0
  %4289 = vmatpush1.bf16.msra.mxu0 0
  %4290 = vmatprep.subr.bf16.mxu0 0
  %4291 = vmatpush1.bf16.msra.mxu0 0
  %4292 = vmatprep.subr.bf16.mxu0 0
  %4293 = vmatpush1.bf16.msra.mxu0 0
  %4294 = vmatprep.subr.bf16.mxu0 0
  %4295 = vmatpush1.bf16.msra.mxu0 0
  %4296 = vmatprep.subr.bf16.mxu0 0
  %4297 = vmatpush1.bf16.msra.mxu0 0
  %4298 = vmatprep.subr.bf16.mxu0 0
  %4299 = vmatpush1.bf16.msra.mxu0 0
  %4300 = vmatprep.subr.bf16.mxu0 0
  %4301 = vmatpush1.bf16.msra.mxu0 0
  %4302 = vmatprep.subr.bf16.mxu0 0
  %4303 = vmatpush1.bf16.msra.mxu0 0
  %4304 = vmatprep.subr.bf16.mxu0 0
  %4305 = vmatpush1.bf16.msra.mxu0 0
  %4306 = vmatprep.subr.bf16.mxu0 0
  %4307 = vmatpush1.bf16.msra.mxu0 0
  %4308 = vmatprep.subr.bf16.mxu0 0
  %4309 = vmatpush1.bf16.msra.mxu0 0
  %4310 = vmatprep.mubr.bf16.mxu0 0
  %4311 = vmatmul.mubr.bf16.gmra.mrb[0].mxu0 %v4255
  %v4312 = vpop.f32.mrb[0].mxu0
  %v4313 = vadd.f32 0.0, %v4312
  %v4314 = vpop.f32.mrb[0].mxu0
  %v4315 = vpop.f32.mrb[0].mxu0
  %v4316 = vadd.f32 0.0, %v4315
  %v4317 = vpop.f32.mrb[0].mxu0
  %4318 = vmatprep.mubr.bf16.mxu0 0
  %4319 = vmatmul.mubr.bf16.gmra.mrb[0].mxu0 %v4258
  %v4320 = vpop.f32.mrb[0].mxu0
  %v4321 = vadd.f32 0.0, %v4320
  %v4322 = vpop.f32.mrb[0].mxu0
  %v4323 = vpop.f32.mrb[0].mxu0
  %v4324 = vadd.f32 0.0, %v4323
  %v4325 = vpop.f32.mrb[0].mxu0
  %4326 = vmatprep.mubr.bf16.mxu0 0
  %4327 = vmatmul.mubr.bf16.gmra.mrb[0].mxu0 %v4261
  %v4328 = vpop.f32.mrb[0].mxu0
  %v4329 = vadd.f32 0.0, %v4328
  %v4330 = vpop.f32.mrb[0].mxu0
  %v4331 = vpop.f32.mrb[0].mxu0
  %v4332 = vadd.f32 0.0, %v4331
  %v4333 = vpop.f32.mrb[0].mxu0
  %4334 = vmatprep.mubr.bf16.mxu0 0
  %4335 = vmatmul.mubr.bf16.gmra.mrb[0].mxu0 %v4264
  %v4336 = vpop.f32.mrb[0].mxu0
  %v4337 = vadd.f32 0.0, %v4336
  %v4338 = vpop.f32.mrb[0].mxu0
  %v4339 = vpop.f32.mrb[0].mxu0
  %v4340 = vadd.f32 0.0, %v4339
  %v4341 = vpop.f32.mrb[0].mxu0
  %4342 = vmatprep.mubr.bf16.mxu0 0
  %4343 = vmatmul.mubr.bf16.gmra.mrb[0].mxu0 %v4267
  %v4344 = vpop.f32.mrb[0].mxu0
  %v4345 = vadd.f32 0.0, %v4344
  %v4346 = vpop.f32.mrb[0].mxu0
  %v4347 = vpop.f32.mrb[0].mxu0
  %v4348 = vadd.f32 0.0, %v4347
  %v4349 = vpop.f32.mrb[0].mxu0
  %4350 = vmatprep.mubr.bf16.mxu0 0
  %4351 = vmatmul.mubr.bf16.gmra.mrb[0].mxu0 %v4270
  %v4352 = vpop.f32.mrb[0].mxu0
  %v4353 = vadd.f32 0.0, %v4352
  %v4354 = vpop.f32.mrb[0].mxu0
  %v4355 = vpop.f32.mrb[0].mxu0
  %v4356 = vadd.f32 0.0, %v4355
  %v4357 = vpop.f32.mrb[0].mxu0
  %4358 = vmatprep.mubr.bf16.mxu0 0
  %4359 = vmatmul.mubr.bf16.gmra.mrb[0].mxu0 %v4273
  %v4360 = vpop.f32.mrb[0].mxu0
  %v4361 = vadd.f32 0.0, %v4360
  %v4362 = vpop.f32.mrb[0].mxu0
  %v4363 = vpop.f32.mrb[0].mxu0
  %v4364 = vadd.f32 0.0, %v4363
  %v4365 = vpop.f32.mrb[0].mxu0
  %4366 = vmatprep.mubr.bf16.mxu0 0
  %4367 = vmatmul.mubr.bf16.gmra.mrb[0].mxu0 %v4276
  %v4368 = vpop.f32.mrb[0].mxu0
  %v4369 = vadd.f32 0.0, %v4368
  %v4370 = vpop.f32.mrb[0].mxu0
  %v4371 = vpop.f32.mrb[0].mxu0
  %v4372 = vadd.f32 0.0, %v4371
  %v4373 = vpop.f32.mrb[0].mxu0
  %4374 = vdwg.mxu0
  %4391 = vrot.lane.b32.xlu0 %v4313, 92
  %v4392 = vpop.permute.xlu0 %4391
  %4393 = vrot.lane.b32.xlu0 %v4316, 92
  %v4394 = vpop.permute.xlu0 %4393
  %4395 = vrot.lane.b32.xlu0 %v4321, 92
  %v4396 = vpop.permute.xlu0 %4395
  %4397 = vrot.lane.b32.xlu0 %v4324, 92
  %v4398 = vpop.permute.xlu0 %4397
  %4399 = vrot.lane.b32.xlu0 %v4329, 92
  %v4400 = vpop.permute.xlu0 %4399
  %4401 = vrot.lane.b32.xlu0 %v4332, 92
  %v4402 = vpop.permute.xlu0 %4401
  %4403 = vrot.lane.b32.xlu0 %v4337, 92
  %v4404 = vpop.permute.xlu0 %4403
  %4405 = vrot.lane.b32.xlu0 %v4340, 92
  %v4406 = vpop.permute.xlu0 %4405
  %4407 = vrot.lane.b32.xlu0 %v4345, 92
  %v4408 = vpop.permute.xlu0 %4407
  %4409 = vrot.lane.b32.xlu0 %v4348, 92
  %v4410 = vpop.permute.xlu0 %4409
  %4411 = vrot.lane.b32.xlu0 %v4353, 92
  %v4412 = vpop.permute.xlu0 %4411
  %4413 = vrot.lane.b32.xlu0 %v4356, 92
  %v4414 = vpop.permute.xlu0 %4413
  %4415 = vrot.lane.b32.xlu0 %v4361, 92
  %v4416 = vpop.permute.xlu0 %4415
  %4417 = vrot.lane.b32.xlu0 %v4364, 92
  %v4418 = vpop.permute.xlu0 %4417
  %4419 = vrot.lane.b32.xlu0 %v4369, 92
  %v4420 = vpop.permute.xlu0 %4419
  %4421 = vrot.lane.b32.xlu0 %v4372, 92
  %v4422 = vpop.permute.xlu0 %4421
  %4439 = vxpose.xlu0.b32.start [1/16] %v4392, 128
  %4440 = vxpose.xlu0.b32.cont [2/16] %v4394, 128
  %4441 = vxpose.xlu0.b32.cont [3/16] %v4396, 128
  %4442 = vxpose.xlu0.b32.cont [4/16] %v4398, 128
  %4443 = vxpose.xlu0.b32.cont [5/16] %v4400, 128
  %4444 = vxpose.xlu0.b32.cont [6/16] %v4402, 128
  %4445 = vxpose.xlu0.b32.cont [7/16] %v4404, 128
  %4446 = vxpose.xlu0.b32.cont [8/16] %v4406, 128
  %4447 = vxpose.xlu0.b32.cont [9/16] %v4408, 128
  %4448 = vxpose.xlu0.b32.cont [10/16] %v4410, 128
  %4449 = vxpose.xlu0.b32.cont [11/16] %v4412, 128
  %4450 = vxpose.xlu0.b32.cont [12/16] %v4414, 128
  %4451 = vxpose.xlu0.b32.cont [13/16] %v4416, 128
  %4452 = vxpose.xlu0.b32.cont [14/16] %v4418, 128
  %4453 = vxpose.xlu0.b32.cont [15/16] %v4420, 128
  %4454 = vxpose.xlu0.b32.end [16/16] %v4422, 128
  %v4455 = vpop.trf.xlu0
  %v4456 = vpop.trf.xlu0
  %v4457 = vpop.trf.xlu0
  %v4458 = vpop.trf.xlu0
  %v4459 = vpop.trf.xlu0
  %v4460 = vpop.trf.xlu0
  %v4461 = vpop.trf.xlu0
  %v4462 = vpop.trf.xlu0
  %v4463 = vpop.trf.xlu0
  %v4464 = vpop.trf.xlu0
  %v4465 = vpop.trf.xlu0
  %v4466 = vpop.trf.xlu0
  %v4467 = vpop.trf.xlu0
  %v4468 = vpop.trf.xlu0
  %v4469 = vpop.trf.xlu0
  %v4470 = vpop.trf.xlu0
  %v4471 = vpack.c.bf16 %v4316, %v4313
  %v4472 = vpack.c.bf16 %v4324, %v4321
  %v4473 = vpack.c.bf16 %v4332, %v4329
  %v4474 = vpack.c.bf16 %v4340, %v4337
  %v4475 = vpack.c.bf16 %v4348, %v4345
  %v4476 = vpack.c.bf16 %v4356, %v4353
  %v4477 = vpack.c.bf16 %v4364, %v4361
  %v4478 = vpack.c.bf16 %v4372, %v4369
  %4479 = vset.pattern.permute.xlu0 32
  %4480 = vperm.xlu0 %4479, %v4313
  %v4481 = vpop.permute.xlu0 %4480
  %4483 = vset.pattern.permute.xlu0 32
  %4484 = vperm.xlu0 %4483, %v4316
  %v4485 = vpop.permute.xlu0 %4484
  %4487 = vset.pattern.permute.xlu0 32
  %4488 = vperm.xlu0 %4487, %v4321
  %v4489 = vpop.permute.xlu0 %4488
  %4491 = vset.pattern.permute.xlu0 32
  %4492 = vperm.xlu0 %4491, %v4324
  %v4493 = vpop.permute.xlu0 %4492
  %4495 = vset.pattern.permute.xlu0 32
  %4496 = vperm.xlu0 %4495, %v4329
  %v4497 = vpop.permute.xlu0 %4496
  %4499 = vset.pattern.permute.xlu0 32
  %4500 = vperm.xlu0 %4499, %v4332
  %v4501 = vpop.permute.xlu0 %4500
  %4503 = vset.pattern.permute.xlu0 32
  %4504 = vperm.xlu0 %4503, %v4337
  %v4505 = vpop.permute.xlu0 %4504
  %4507 = vset.pattern.permute.xlu0 32
  %4508 = vperm.xlu0 %4507, %v4340
  %v4509 = vpop.permute.xlu0 %4508
  %4511 = vset.pattern.permute.xlu0 32
  %4512 = vperm.xlu0 %4511, %v4345
  %v4513 = vpop.permute.xlu0 %4512
  %4515 = vset.pattern.permute.xlu0 32
  %4516 = vperm.xlu0 %4515, %v4348
  %v4517 = vpop.permute.xlu0 %4516
  %4519 = vset.pattern.permute.xlu0 32
  %4520 = vperm.xlu0 %4519, %v4353
  %v4521 = vpop.permute.xlu0 %4520
  %4523 = vset.pattern.permute.xlu0 32
  %4524 = vperm.xlu0 %4523, %v4356
  %v4525 = vpop.permute.xlu0 %4524
  %4527 = vset.pattern.permute.xlu0 32
  %4528 = vperm.xlu0 %4527, %v4361
  %v4529 = vpop.permute.xlu0 %4528
  %4531 = vset.pattern.permute.xlu0 32
  %4532 = vperm.xlu0 %4531, %v4364
  %v4533 = vpop.permute.xlu0 %4532
  %4535 = vset.pattern.permute.xlu0 32
  %4536 = vperm.xlu0 %4535, %v4369
  %v4537 = vpop.permute.xlu0 %4536
  %4539 = vset.pattern.permute.xlu0 32
  %4540 = vperm.xlu0 %4539, %v4372
  %v4541 = vpop.permute.xlu0 %4540
  %v4543 = vlaneseq
  %v4544 = vshrl.u32 %v4543, 7
  %v4545 = vsub.s32 0, %v4544
  %v4546 = vrot.slane %v4455, %v4545
  %v4547 = vadd.f32 %v4481, %v4546
  %v4548 = vadd.f32 %v4485, %v4546
  %v4549 = vadd.f32 %v4489, %v4546
  %v4550 = vadd.f32 %v4493, %v4546
  %v4551 = vadd.f32 %v4497, %v4546
  %v4552 = vadd.f32 %v4501, %v4546
  %v4553 = vadd.f32 %v4505, %v4546
  %v4554 = vadd.f32 %v4509, %v4546
  %v4555 = vadd.f32 %v4513, %v4546
  %v4556 = vadd.f32 %v4517, %v4546
  %v4557 = vadd.f32 %v4521, %v4546
  %v4558 = vadd.f32 %v4525, %v4546
  %v4559 = vadd.f32 %v4529, %v4546
  %v4560 = vadd.f32 %v4533, %v4546
  %v4561 = vadd.f32 %v4537, %v4546
  %v4562 = vadd.f32 %v4541, %v4546
  %vm4563 = vcmp.gt.f32.partialorder %v4547, 0.0
  %vm4564 = vcmp.gt.f32.partialorder %v4548, 0.0
  %vm4565 = vcmp.gt.f32.partialorder %v4549, 0.0
  %vm4566 = vcmp.gt.f32.partialorder %v4550, 0.0
  %vm4567 = vcmp.gt.f32.partialorder %v4551, 0.0
  %vm4568 = vcmp.gt.f32.partialorder %v4552, 0.0
  %vm4569 = vcmp.gt.f32.partialorder %v4553, 0.0
  %vm4570 = vcmp.gt.f32.partialorder %v4554, 0.0
  %vm4571 = vcmp.gt.f32.partialorder %v4555, 0.0
  %vm4572 = vcmp.gt.f32.partialorder %v4556, 0.0
  %vm4573 = vcmp.gt.f32.partialorder %v4557, 0.0
  %vm4574 = vcmp.gt.f32.partialorder %v4558, 0.0
  %vm4575 = vcmp.gt.f32.partialorder %v4559, 0.0
  %vm4576 = vcmp.gt.f32.partialorder %v4560, 0.0
  %vm4577 = vcmp.gt.f32.partialorder %v4561, 0.0
  %vm4578 = vcmp.gt.f32.partialorder %v4562, 0.0
  %v4579 = vmul.f32 %v4547, 0.2
  %v4580 = vmul.f32 %v4548, 0.2
  %v4581 = vmul.f32 %v4549, 0.2
  %v4582 = vmul.f32 %v4550, 0.2
  %v4583 = vmul.f32 %v4551, 0.2
  %v4584 = vmul.f32 %v4552, 0.2
  %v4585 = vmul.f32 %v4553, 0.2
  %v4586 = vmul.f32 %v4554, 0.2
  %v4587 = vmul.f32 %v4555, 0.2
  %v4588 = vmul.f32 %v4556, 0.2
  %v4589 = vmul.f32 %v4557, 0.2
  %v4590 = vmul.f32 %v4558, 0.2
  %v4591 = vmul.f32 %v4559, 0.2
  %v4592 = vmul.f32 %v4560, 0.2
  %v4593 = vmul.f32 %v4561, 0.2
  %v4594 = vmul.f32 %v4562, 0.2
  %v4595 = vsel %vm4563, %v4547, %v4579
  %v4596 = vsel %vm4564, %v4548, %v4580
  %v4597 = vsel %vm4565, %v4549, %v4581
  %v4598 = vsel %vm4566, %v4550, %v4582
  %v4599 = vsel %vm4567, %v4551, %v4583
  %v4600 = vsel %vm4568, %v4552, %v4584
  %v4601 = vsel %vm4569, %v4553, %v4585
  %v4602 = vsel %vm4570, %v4554, %v4586
  %v4603 = vsel %vm4571, %v4555, %v4587
  %v4604 = vsel %vm4572, %v4556, %v4588
  %v4605 = vsel %vm4573, %v4557, %v4589
  %v4606 = vsel %vm4574, %v4558, %v4590
  %v4607 = vsel %vm4575, %v4559, %v4591
  %v4608 = vsel %vm4576, %v4560, %v4592
  %v4609 = vsel %vm4577, %v4561, %v4593
  %v4610 = vsel %vm4578, %v4562, %v4594
  %v4611 = vadd.f32 %v4595, %v66
  %v4612 = vadd.f32 %v4596, %v67
  %v4613 = vadd.f32 %v4597, %v68
  %v4614 = vadd.f32 %v4598, %v69
  %v4615 = vadd.f32 %v4599, %v70
  %v4616 = vadd.f32 %v4600, %v71
  %v4617 = vadd.f32 %v4601, %v72
  %v4618 = vadd.f32 %v4602, %v73
  %v4619 = vadd.f32 %v4603, %v74
  %v4620 = vadd.f32 %v4604, %v75
  %v4621 = vadd.f32 %v4605, %v76
  %v4622 = vadd.f32 %v4606, %v77
  %v4623 = vadd.f32 %v4607, %v78
  %v4624 = vadd.f32 %v4608, %v79
  %v4625 = vadd.f32 %v4609, %v80
  %v4626 = vadd.f32 %v4610, %v81
  %4627 = vmax.xlane.f32.xlu0 %v4611
  %v4628 = vpop.xlane.xlu0 %4627
  %4629 = vmax.xlane.f32.xlu0 %v4612
  %v4630 = vpop.xlane.xlu0 %4629
  %4631 = vmax.xlane.f32.xlu0 %v4613
  %v4632 = vpop.xlane.xlu0 %4631
  %4633 = vmax.xlane.f32.xlu0 %v4614
  %v4634 = vpop.xlane.xlu0 %4633
  %4635 = vmax.xlane.f32.xlu0 %v4615
  %v4636 = vpop.xlane.xlu0 %4635
  %4637 = vmax.xlane.f32.xlu0 %v4616
  %v4638 = vpop.xlane.xlu0 %4637
  %4639 = vmax.xlane.f32.xlu0 %v4617
  %v4640 = vpop.xlane.xlu0 %4639
  %4641 = vmax.xlane.f32.xlu0 %v4618
  %v4642 = vpop.xlane.xlu0 %4641
  %4643 = vmax.xlane.f32.xlu0 %v4619
  %v4644 = vpop.xlane.xlu0 %4643
  %4645 = vmax.xlane.f32.xlu0 %v4620
  %v4646 = vpop.xlane.xlu0 %4645
  %4647 = vmax.xlane.f32.xlu0 %v4621
  %v4648 = vpop.xlane.xlu0 %4647
  %4649 = vmax.xlane.f32.xlu0 %v4622
  %v4650 = vpop.xlane.xlu0 %4649
  %4651 = vmax.xlane.f32.xlu0 %v4623
  %v4652 = vpop.xlane.xlu0 %4651
  %4653 = vmax.xlane.f32.xlu0 %v4624
  %v4654 = vpop.xlane.xlu0 %4653
  %4655 = vmax.xlane.f32.xlu0 %v4625
  %v4656 = vpop.xlane.xlu0 %4655
  %4657 = vmax.xlane.f32.xlu0 %v4626
  %v4658 = vpop.xlane.xlu0 %4657
  %v4659 = vsub.f32 %v4611, %v4628
  %v4660 = vsub.f32 %v4612, %v4630
  %v4661 = vsub.f32 %v4613, %v4632
  %v4662 = vsub.f32 %v4614, %v4634
  %v4663 = vsub.f32 %v4615, %v4636
  %v4664 = vsub.f32 %v4616, %v4638
  %v4665 = vsub.f32 %v4617, %v4640
  %v4666 = vsub.f32 %v4618, %v4642
  %v4667 = vsub.f32 %v4619, %v4644
  %v4668 = vsub.f32 %v4620, %v4646
  %v4669 = vsub.f32 %v4621, %v4648
  %v4670 = vsub.f32 %v4622, %v4650
  %v4671 = vsub.f32 %v4623, %v4652
  %v4672 = vsub.f32 %v4624, %v4654
  %v4673 = vsub.f32 %v4625, %v4656
  %v4674 = vsub.f32 %v4626, %v4658
  %v4675 = vmul.f32 %v4659, 1.442695
  %v4676 = vpow.pop %v4675
  %v4677 = vmul.f32 %v4660, 1.442695
  %v4678 = vpow.pop %v4677
  %v4679 = vmul.f32 %v4661, 1.442695
  %v4680 = vpow.pop %v4679
  %v4681 = vmul.f32 %v4662, 1.442695
  %v4682 = vpow.pop %v4681
  %v4683 = vmul.f32 %v4663, 1.442695
  %v4684 = vpow.pop %v4683
  %v4685 = vmul.f32 %v4664, 1.442695
  %v4686 = vpow.pop %v4685
  %v4687 = vmul.f32 %v4665, 1.442695
  %v4688 = vpow.pop %v4687
  %v4689 = vmul.f32 %v4666, 1.442695
  %v4690 = vpow.pop %v4689
  %v4691 = vmul.f32 %v4667, 1.442695
  %v4692 = vpow.pop %v4691
  %v4693 = vmul.f32 %v4668, 1.442695
  %v4694 = vpow.pop %v4693
  %v4695 = vmul.f32 %v4669, 1.442695
  %v4696 = vpow.pop %v4695
  %v4697 = vmul.f32 %v4670, 1.442695
  %v4698 = vpow.pop %v4697
  %v4699 = vmul.f32 %v4671, 1.442695
  %v4700 = vpow.pop %v4699
  %v4701 = vmul.f32 %v4672, 1.442695
  %v4702 = vpow.pop %v4701
  %v4703 = vmul.f32 %v4673, 1.442695
  %v4704 = vpow.pop %v4703
  %v4705 = vmul.f32 %v4674, 1.442695
  %v4706 = vpow.pop %v4705
  %4707 = vmatprep.subr.mxu0 0.0
  %4708 = vmatpush1.msra.mxu0 %v34
  %4709 = vmatprep.subr.mxu0 0.0
  %4710 = vmatpush1.msra.mxu0 %v35
  %4711 = vmatprep.subr.mxu0 0.0
  %4712 = vmatpush1.msra.mxu0 %v36
  %4713 = vmatprep.subr.mxu0 0.0
  %4714 = vmatpush1.msra.mxu0 %v37
  %4715 = vmatprep.subr.mxu0 0.0
  %4716 = vmatpush1.msra.mxu0 %v38
  %4717 = vmatprep.subr.mxu0 0.0
  %4718 = vmatpush1.msra.mxu0 %v39
  %4719 = vmatprep.subr.mxu0 0.0
  %4720 = vmatpush1.msra.mxu0 %v40
  %4721 = vmatprep.subr.mxu0 0.0
  %4722 = vmatpush1.msra.mxu0 %v41
  %4723 = vmatprep.subr.mxu0 0.0
  %4724 = vmatpush1.msra.mxu0 %v42
  %4725 = vmatprep.subr.mxu0 0.0
  %4726 = vmatpush1.msra.mxu0 %v43
  %4727 = vmatprep.subr.mxu0 0.0
  %4728 = vmatpush1.msra.mxu0 %v44
  %4729 = vmatprep.subr.mxu0 0.0
  %4730 = vmatpush1.msra.mxu0 %v45
  %4731 = vmatprep.subr.mxu0 0.0
  %4732 = vmatpush1.msra.mxu0 %v46
  %4733 = vmatprep.subr.mxu0 0.0
  %4734 = vmatpush1.msra.mxu0 %v47
  %4735 = vmatprep.subr.mxu0 0.0
  %4736 = vmatpush1.msra.mxu0 %v48
  %4737 = vmatprep.subr.mxu0 0.0
  %4738 = vmatpush1.msra.mxu0 %v49
  %4739 = vmatprep.subr.mxu0 0.0
  %4740 = vmatpush1.msra.mxu0 0.0
  %4741 = vmatprep.subr.mxu0 0.0
  %4742 = vmatpush1.msra.mxu0 0.0
  %4743 = vmatprep.subr.mxu0 0.0
  %4744 = vmatpush1.msra.mxu0 0.0
  %4745 = vmatprep.subr.mxu0 0.0
  %4746 = vmatpush1.msra.mxu0 0.0
  %4747 = vmatprep.subr.mxu0 0.0
  %4748 = vmatpush1.msra.mxu0 0.0
  %4749 = vmatprep.subr.mxu0 0.0
  %4750 = vmatpush1.msra.mxu0 0.0
  %4751 = vmatprep.subr.mxu0 0.0
  %4752 = vmatpush1.msra.mxu0 0.0
  %4753 = vmatprep.subr.mxu0 0.0
  %4754 = vmatpush1.msra.mxu0 0.0
  %4755 = vmatprep.subr.mxu0 0.0
  %4756 = vmatpush1.msra.mxu0 0.0
  %4757 = vmatprep.subr.mxu0 0.0
  %4758 = vmatpush1.msra.mxu0 0.0
  %4759 = vmatprep.subr.mxu0 0.0
  %4760 = vmatpush1.msra.mxu0 0.0
  %4761 = vmatprep.subr.mxu0 0.0
  %4762 = vmatpush1.msra.mxu0 0.0
  %4763 = vmatprep.subr.mxu0 0.0
  %4764 = vmatpush1.msra.mxu0 0.0
  %4765 = vmatprep.subr.mxu0 0.0
  %4766 = vmatpush1.msra.mxu0 0.0
  %4767 = vmatprep.subr.mxu0 0.0
  %4768 = vmatpush1.msra.mxu0 0.0
  %4769 = vmatprep.subr.mxu0 0.0
  %4770 = vmatpush1.msra.mxu0 0.0
  %4771 = vmatprep.mubr.f32.mxu0 0.0
  %4772 = vmatmul.mubr.f32.gmra.mrb[0].mxu0 %v4676
  %v4773 = vpop.f32.mrb[0].mxu0
  %v4774 = vadd.f32 0.0, %v4773
  %v4775 = vpop.f32.mrb[0].mxu0
  %4776 = vmatprep.mubr.f32.mxu0 0.0
  %4777 = vmatmul.mubr.f32.gmra.mrb[0].mxu0 %v4678
  %v4778 = vpop.f32.mrb[0].mxu0
  %v4779 = vadd.f32 0.0, %v4778
  %v4780 = vpop.f32.mrb[0].mxu0
  %4781 = vmatprep.mubr.f32.mxu0 0.0
  %4782 = vmatmul.mubr.f32.gmra.mrb[0].mxu0 %v4680
  %v4783 = vpop.f32.mrb[0].mxu0
  %v4784 = vadd.f32 0.0, %v4783
  %v4785 = vpop.f32.mrb[0].mxu0
  %4786 = vmatprep.mubr.f32.mxu0 0.0
  %4787 = vmatmul.mubr.f32.gmra.mrb[0].mxu0 %v4682
  %v4788 = vpop.f32.mrb[0].mxu0
  %v4789 = vadd.f32 0.0, %v4788
  %v4790 = vpop.f32.mrb[0].mxu0
  %4791 = vmatprep.mubr.f32.mxu0 0.0
  %4792 = vmatmul.mubr.f32.gmra.mrb[0].mxu0 %v4684
  %v4793 = vpop.f32.mrb[0].mxu0
  %v4794 = vadd.f32 0.0, %v4793
  %v4795 = vpop.f32.mrb[0].mxu0
  %4796 = vmatprep.mubr.f32.mxu0 0.0
  %4797 = vmatmul.mubr.f32.gmra.mrb[0].mxu0 %v4686
  %v4798 = vpop.f32.mrb[0].mxu0
  %v4799 = vadd.f32 0.0, %v4798
  %v4800 = vpop.f32.mrb[0].mxu0
  %4801 = vmatprep.mubr.f32.mxu0 0.0
  %4802 = vmatmul.mubr.f32.gmra.mrb[0].mxu0 %v4688
  %v4803 = vpop.f32.mrb[0].mxu0
  %v4804 = vadd.f32 0.0, %v4803
  %v4805 = vpop.f32.mrb[0].mxu0
  %4806 = vmatprep.mubr.f32.mxu0 0.0
  %4807 = vmatmul.mubr.f32.gmra.mrb[0].mxu0 %v4690
  %v4808 = vpop.f32.mrb[0].mxu0
  %v4809 = vadd.f32 0.0, %v4808
  %v4810 = vpop.f32.mrb[0].mxu0
  %4811 = vmatprep.mubr.f32.mxu0 0.0
  %4812 = vmatmul.mubr.f32.gmra.mrb[0].mxu0 %v4692
  %v4813 = vpop.f32.mrb[0].mxu0
  %v4814 = vadd.f32 0.0, %v4813
  %v4815 = vpop.f32.mrb[0].mxu0
  %4816 = vmatprep.mubr.f32.mxu0 0.0
  %4817 = vmatmul.mubr.f32.gmra.mrb[0].mxu0 %v4694
  %v4818 = vpop.f32.mrb[0].mxu0
  %v4819 = vadd.f32 0.0, %v4818
  %v4820 = vpop.f32.mrb[0].mxu0
  %4821 = vmatprep.mubr.f32.mxu0 0.0
  %4822 = vmatmul.mubr.f32.gmra.mrb[0].mxu0 %v4696
  %v4823 = vpop.f32.mrb[0].mxu0
  %v4824 = vadd.f32 0.0, %v4823
  %v4825 = vpop.f32.mrb[0].mxu0
  %4826 = vmatprep.mubr.f32.mxu0 0.0
  %4827 = vmatmul.mubr.f32.gmra.mrb[0].mxu0 %v4698
  %v4828 = vpop.f32.mrb[0].mxu0
  %v4829 = vadd.f32 0.0, %v4828
  %v4830 = vpop.f32.mrb[0].mxu0
  %4831 = vmatprep.mubr.f32.mxu0 0.0
  %4832 = vmatmul.mubr.f32.gmra.mrb[0].mxu0 %v4700
  %v4833 = vpop.f32.mrb[0].mxu0
  %v4834 = vadd.f32 0.0, %v4833
  %v4835 = vpop.f32.mrb[0].mxu0
  %4836 = vmatprep.mubr.f32.mxu0 0.0
  %4837 = vmatmul.mubr.f32.gmra.mrb[0].mxu0 %v4702
  %v4838 = vpop.f32.mrb[0].mxu0
  %v4839 = vadd.f32 0.0, %v4838
  %v4840 = vpop.f32.mrb[0].mxu0
  %4841 = vmatprep.mubr.f32.mxu0 0.0
  %4842 = vmatmul.mubr.f32.gmra.mrb[0].mxu0 %v4704
  %v4843 = vpop.f32.mrb[0].mxu0
  %v4844 = vadd.f32 0.0, %v4843
  %v4845 = vpop.f32.mrb[0].mxu0
  %4846 = vmatprep.mubr.f32.mxu0 0.0
  %4847 = vmatmul.mubr.f32.gmra.mrb[0].mxu0 %v4706
  %v4848 = vpop.f32.mrb[0].mxu0
  %v4849 = vadd.f32 0.0, %v4848
  %v4850 = vpop.f32.mrb[0].mxu0
  %4851 = vdwg.mxu0
  %v4852 = vrcp.pop %v4774
  %v4853 = vrcp.pop %v4779
  %v4854 = vrcp.pop %v4784
  %v4855 = vrcp.pop %v4789
  %v4856 = vrcp.pop %v4794
  %v4857 = vrcp.pop %v4799
  %v4858 = vrcp.pop %v4804
  %v4859 = vrcp.pop %v4809
  %v4860 = vrcp.pop %v4814
  %v4861 = vrcp.pop %v4819
  %v4862 = vrcp.pop %v4824
  %v4863 = vrcp.pop %v4829
  %v4864 = vrcp.pop %v4834
  %v4865 = vrcp.pop %v4839
  %v4866 = vrcp.pop %v4844
  %v4867 = vrcp.pop %v4849
  %4869 = vset.pattern.permute.xlu0 0
  %4870 = vperm.xlu0 %4869, %v4852
  %v4871 = vpop.permute.xlu0 %4870
  %4874 = vset.pattern.permute.xlu0 0
  %4875 = vperm.xlu0 %4874, %v4853
  %v4876 = vpop.permute.xlu0 %4875
  %4879 = vset.pattern.permute.xlu0 0
  %4880 = vperm.xlu0 %4879, %v4854
  %v4881 = vpop.permute.xlu0 %4880
  %4884 = vset.pattern.permute.xlu0 0
  %4885 = vperm.xlu0 %4884, %v4855
  %v4886 = vpop.permute.xlu0 %4885
  %4889 = vset.pattern.permute.xlu0 0
  %4890 = vperm.xlu0 %4889, %v4856
  %v4891 = vpop.permute.xlu0 %4890
  %4894 = vset.pattern.permute.xlu0 0
  %4895 = vperm.xlu0 %4894, %v4857
  %v4896 = vpop.permute.xlu0 %4895
  %4899 = vset.pattern.permute.xlu0 0
  %4900 = vperm.xlu0 %4899, %v4858
  %v4901 = vpop.permute.xlu0 %4900
  %4904 = vset.pattern.permute.xlu0 0
  %4905 = vperm.xlu0 %4904, %v4859
  %v4906 = vpop.permute.xlu0 %4905
  %4909 = vset.pattern.permute.xlu0 0
  %4910 = vperm.xlu0 %4909, %v4860
  %v4911 = vpop.permute.xlu0 %4910
  %4914 = vset.pattern.permute.xlu0 0
  %4915 = vperm.xlu0 %4914, %v4861
  %v4916 = vpop.permute.xlu0 %4915
  %4919 = vset.pattern.permute.xlu0 0
  %4920 = vperm.xlu0 %4919, %v4862
  %v4921 = vpop.permute.xlu0 %4920
  %4924 = vset.pattern.permute.xlu0 0
  %4925 = vperm.xlu0 %4924, %v4863
  %v4926 = vpop.permute.xlu0 %4925
  %4929 = vset.pattern.permute.xlu0 0
  %4930 = vperm.xlu0 %4929, %v4864
  %v4931 = vpop.permute.xlu0 %4930
  %4934 = vset.pattern.permute.xlu0 0
  %4935 = vperm.xlu0 %4934, %v4865
  %v4936 = vpop.permute.xlu0 %4935
  %4939 = vset.pattern.permute.xlu0 0
  %4940 = vperm.xlu0 %4939, %v4866
  %v4941 = vpop.permute.xlu0 %4940
  %4944 = vset.pattern.permute.xlu0 0
  %4945 = vperm.xlu0 %4944, %v4867
  %v4946 = vpop.permute.xlu0 %4945
  %v4948 = vmul.f32 %v4676, %v4871
  %v4949 = vmul.f32 %v4678, %v4876
  %v4950 = vmul.f32 %v4680, %v4881
  %v4951 = vmul.f32 %v4682, %v4886
  %v4952 = vmul.f32 %v4684, %v4891
  %v4953 = vmul.f32 %v4686, %v4896
  %v4954 = vmul.f32 %v4688, %v4901
  %v4955 = vmul.f32 %v4690, %v4906
  %v4956 = vmul.f32 %v4692, %v4911
  %v4957 = vmul.f32 %v4694, %v4916
  %v4958 = vmul.f32 %v4696, %v4921
  %v4959 = vmul.f32 %v4698, %v4926
  %v4960 = vmul.f32 %v4700, %v4931
  %v4961 = vmul.f32 %v4702, %v4936
  %v4962 = vmul.f32 %v4704, %v4941
  %v4963 = vmul.f32 %v4706, %v4946
  %v4964 = vpack.c.bf16 %v4949, %v4948
  %v4965 = vpack.c.bf16 %v4951, %v4950
  %v4966 = vpack.c.bf16 %v4953, %v4952
  %v4967 = vpack.c.bf16 %v4955, %v4954
  %v4968 = vpack.c.bf16 %v4957, %v4956
  %v4969 = vpack.c.bf16 %v4959, %v4958
  %v4970 = vpack.c.bf16 %v4961, %v4960
  %v4971 = vpack.c.bf16 %v4963, %v4962
  %4972 = vmatprep.subr.bf16.mxu0 0
  %4973 = vmatpush1.bf16.msra.mxu0 %v4471
  %4974 = vmatprep.subr.bf16.mxu0 0
  %4975 = vmatpush1.bf16.msra.mxu0 %v4472
  %4976 = vmatprep.subr.bf16.mxu0 0
  %4977 = vmatpush1.bf16.msra.mxu0 %v4473
  %4978 = vmatprep.subr.bf16.mxu0 0
  %4979 = vmatpush1.bf16.msra.mxu0 %v4474
  %4980 = vmatprep.subr.bf16.mxu0 0
  %4981 = vmatpush1.bf16.msra.mxu0 %v4475
  %4982 = vmatprep.subr.bf16.mxu0 0
  %4983 = vmatpush1.bf16.msra.mxu0 %v4476
  %4984 = vmatprep.subr.bf16.mxu0 0
  %4985 = vmatpush1.bf16.msra.mxu0 %v4477
  %4986 = vmatprep.subr.bf16.mxu0 0
  %4987 = vmatpush1.bf16.msra.mxu0 %v4478
  %4988 = vmatprep.subr.bf16.mxu0 0
  %4989 = vmatpush1.bf16.msra.mxu0 0
  %4990 = vmatprep.subr.bf16.mxu0 0
  %4991 = vmatpush1.bf16.msra.mxu0 0
  %4992 = vmatprep.subr.bf16.mxu0 0
  %4993 = vmatpush1.bf16.msra.mxu0 0
  %4994 = vmatprep.subr.bf16.mxu0 0
  %4995 = vmatpush1.bf16.msra.mxu0 0
  %4996 = vmatprep.subr.bf16.mxu0 0
  %4997 = vmatpush1.bf16.msra.mxu0 0
  %4998 = vmatprep.subr.bf16.mxu0 0
  %4999 = vmatpush1.bf16.msra.mxu0 0
  %5000 = vmatprep.subr.bf16.mxu0 0
  %5001 = vmatpush1.bf16.msra.mxu0 0
  %5002 = vmatprep.subr.bf16.mxu0 0
  %5003 = vmatpush1.bf16.msra.mxu0 0
  %5004 = vmatprep.mubr.bf16.mxu0 0
  %5005 = vmatmul.mubr.bf16.gmra.mrb[0].mxu0 %v4964
  %v5006 = vpop.f32.mrb[0].mxu0
  %v5007 = vadd.f32 0.0, %v5006
  %v5008 = vpop.f32.mrb[0].mxu0
  %v5009 = vpop.f32.mrb[0].mxu0
  %v5010 = vadd.f32 0.0, %v5009
  %v5011 = vpop.f32.mrb[0].mxu0
  %5012 = vmatprep.mubr.bf16.mxu0 0
  %5013 = vmatmul.mubr.bf16.gmra.mrb[0].mxu0 %v4965
  %v5014 = vpop.f32.mrb[0].mxu0
  %v5015 = vadd.f32 0.0, %v5014
  %v5016 = vpop.f32.mrb[0].mxu0
  %v5017 = vpop.f32.mrb[0].mxu0
  %v5018 = vadd.f32 0.0, %v5017
  %v5019 = vpop.f32.mrb[0].mxu0
  %5020 = vmatprep.mubr.bf16.mxu0 0
  %5021 = vmatmul.mubr.bf16.gmra.mrb[0].mxu0 %v4966
  %v5022 = vpop.f32.mrb[0].mxu0
  %v5023 = vadd.f32 0.0, %v5022
  %v5024 = vpop.f32.mrb[0].mxu0
  %v5025 = vpop.f32.mrb[0].mxu0
  %v5026 = vadd.f32 0.0, %v5025
  %v5027 = vpop.f32.mrb[0].mxu0
  %5028 = vmatprep.mubr.bf16.mxu0 0
  %5029 = vmatmul.mubr.bf16.gmra.mrb[0].mxu0 %v4967
  %v5030 = vpop.f32.mrb[0].mxu0
  %v5031 = vadd.f32 0.0, %v5030
  %v5032 = vpop.f32.mrb[0].mxu0
  %v5033 = vpop.f32.mrb[0].mxu0
  %v5034 = vadd.f32 0.0, %v5033
  %v5035 = vpop.f32.mrb[0].mxu0
  %5036 = vmatprep.mubr.bf16.mxu0 0
  %5037 = vmatmul.mubr.bf16.gmra.mrb[0].mxu0 %v4968
  %v5038 = vpop.f32.mrb[0].mxu0
  %v5039 = vadd.f32 0.0, %v5038
  %v5040 = vpop.f32.mrb[0].mxu0
  %v5041 = vpop.f32.mrb[0].mxu0
  %v5042 = vadd.f32 0.0, %v5041
  %v5043 = vpop.f32.mrb[0].mxu0
  %5044 = vmatprep.mubr.bf16.mxu0 0
  %5045 = vmatmul.mubr.bf16.gmra.mrb[0].mxu0 %v4969
  %v5046 = vpop.f32.mrb[0].mxu0
  %v5047 = vadd.f32 0.0, %v5046
  %v5048 = vpop.f32.mrb[0].mxu0
  %v5049 = vpop.f32.mrb[0].mxu0
  %v5050 = vadd.f32 0.0, %v5049
  %v5051 = vpop.f32.mrb[0].mxu0
  %5052 = vmatprep.mubr.bf16.mxu0 0
  %5053 = vmatmul.mubr.bf16.gmra.mrb[0].mxu0 %v4970
  %v5054 = vpop.f32.mrb[0].mxu0
  %v5055 = vadd.f32 0.0, %v5054
  %v5056 = vpop.f32.mrb[0].mxu0
  %v5057 = vpop.f32.mrb[0].mxu0
  %v5058 = vadd.f32 0.0, %v5057
  %v5059 = vpop.f32.mrb[0].mxu0
  %5060 = vmatprep.mubr.bf16.mxu0 0
  %5061 = vmatmul.mubr.bf16.gmra.mrb[0].mxu0 %v4971
  %v5062 = vpop.f32.mrb[0].mxu0
  %v5063 = vadd.f32 0.0, %v5062
  %v5064 = vpop.f32.mrb[0].mxu0
  %v5065 = vpop.f32.mrb[0].mxu0
  %v5066 = vadd.f32 0.0, %v5065
  %v5067 = vpop.f32.mrb[0].mxu0
  %5068 = vdwg.mxu0
  %5069 = vset.pattern.permute.xlu0 33
  %5070 = vperm.xlu0 %5069, %v4313
  %v5071 = vpop.permute.xlu0 %5070
  %5073 = vset.pattern.permute.xlu0 33
  %5074 = vperm.xlu0 %5073, %v4316
  %v5075 = vpop.permute.xlu0 %5074
  %5077 = vset.pattern.permute.xlu0 33
  %5078 = vperm.xlu0 %5077, %v4321
  %v5079 = vpop.permute.xlu0 %5078
  %5081 = vset.pattern.permute.xlu0 33
  %5082 = vperm.xlu0 %5081, %v4324
  %v5083 = vpop.permute.xlu0 %5082
  %5085 = vset.pattern.permute.xlu0 33
  %5086 = vperm.xlu0 %5085, %v4329
  %v5087 = vpop.permute.xlu0 %5086
  %5089 = vset.pattern.permute.xlu0 33
  %5090 = vperm.xlu0 %5089, %v4332
  %v5091 = vpop.permute.xlu0 %5090
  %5093 = vset.pattern.permute.xlu0 33
  %5094 = vperm.xlu0 %5093, %v4337
  %v5095 = vpop.permute.xlu0 %5094
  %5097 = vset.pattern.permute.xlu0 33
  %5098 = vperm.xlu0 %5097, %v4340
  %v5099 = vpop.permute.xlu0 %5098
  %5101 = vset.pattern.permute.xlu0 33
  %5102 = vperm.xlu0 %5101, %v4345
  %v5103 = vpop.permute.xlu0 %5102
  %5105 = vset.pattern.permute.xlu0 33
  %5106 = vperm.xlu0 %5105, %v4348
  %v5107 = vpop.permute.xlu0 %5106
  %5109 = vset.pattern.permute.xlu0 33
  %5110 = vperm.xlu0 %5109, %v4353
  %v5111 = vpop.permute.xlu0 %5110
  %5113 = vset.pattern.permute.xlu0 33
  %5114 = vperm.xlu0 %5113, %v4356
  %v5115 = vpop.permute.xlu0 %5114
  %5117 = vset.pattern.permute.xlu0 33
  %5118 = vperm.xlu0 %5117, %v4361
  %v5119 = vpop.permute.xlu0 %5118
  %5121 = vset.pattern.permute.xlu0 33
  %5122 = vperm.xlu0 %5121, %v4364
  %v5123 = vpop.permute.xlu0 %5122
  %5125 = vset.pattern.permute.xlu0 33
  %5126 = vperm.xlu0 %5125, %v4369
  %v5127 = vpop.permute.xlu0 %5126
  %5129 = vset.pattern.permute.xlu0 33
  %5130 = vperm.xlu0 %5129, %v4372
  %v5131 = vpop.permute.xlu0 %5130
  %v5133 = vlaneseq
  %v5134 = vshrl.u32 %v5133, 7
  %v5135 = vsub.s32 1, %v5134
  %v5136 = vrot.slane %v4455, %v5135
  %v5137 = vadd.f32 %v5071, %v5136
  %v5138 = vadd.f32 %v5075, %v5136
  %v5139 = vadd.f32 %v5079, %v5136
  %v5140 = vadd.f32 %v5083, %v5136
  %v5141 = vadd.f32 %v5087, %v5136
  %v5142 = vadd.f32 %v5091, %v5136
  %v5143 = vadd.f32 %v5095, %v5136
  %v5144 = vadd.f32 %v5099, %v5136
  %v5145 = vadd.f32 %v5103, %v5136
  %v5146 = vadd.f32 %v5107, %v5136
  %v5147 = vadd.f32 %v5111, %v5136
  %v5148 = vadd.f32 %v5115, %v5136
  %v5149 = vadd.f32 %v5119, %v5136
  %v5150 = vadd.f32 %v5123, %v5136
  %v5151 = vadd.f32 %v5127, %v5136
  %v5152 = vadd.f32 %v5131, %v5136
  %vm5153 = vcmp.gt.f32.partialorder %v5137, 0.0
  %vm5154 = vcmp.gt.f32.partialorder %v5138, 0.0
  %vm5155 = vcmp.gt.f32.partialorder %v5139, 0.0
  %vm5156 = vcmp.gt.f32.partialorder %v5140, 0.0
  %vm5157 = vcmp.gt.f32.partialorder %v5141, 0.0
  %vm5158 = vcmp.gt.f32.partialorder %v5142, 0.0
  %vm5159 = vcmp.gt.f32.partialorder %v5143, 0.0
  %vm5160 = vcmp.gt.f32.partialorder %v5144, 0.0
  %vm5161 = vcmp.gt.f32.partialorder %v5145, 0.0
  %vm5162 = vcmp.gt.f32.partialorder %v5146, 0.0
  %vm5163 = vcmp.gt.f32.partialorder %v5147, 0.0
  %vm5164 = vcmp.gt.f32.partialorder %v5148, 0.0
  %vm5165 = vcmp.gt.f32.partialorder %v5149, 0.0
  %vm5166 = vcmp.gt.f32.partialorder %v5150, 0.0
  %vm5167 = vcmp.gt.f32.partialorder %v5151, 0.0
  %vm5168 = vcmp.gt.f32.partialorder %v5152, 0.0
  %v5169 = vmul.f32 %v5137, 0.2
  %v5170 = vmul.f32 %v5138, 0.2
  %v5171 = vmul.f32 %v5139, 0.2
  %v5172 = vmul.f32 %v5140, 0.2
  %v5173 = vmul.f32 %v5141, 0.2
  %v5174 = vmul.f32 %v5142, 0.2
  %v5175 = vmul.f32 %v5143, 0.2
  %v5176 = vmul.f32 %v5144, 0.2
  %v5177 = vmul.f32 %v5145, 0.2
  %v5178 = vmul.f32 %v5146, 0.2
  %v5179 = vmul.f32 %v5147, 0.2
  %v5180 = vmul.f32 %v5148, 0.2
  %v5181 = vmul.f32 %v5149, 0.2
  %v5182 = vmul.f32 %v5150, 0.2
  %v5183 = vmul.f32 %v5151, 0.2
  %v5184 = vmul.f32 %v5152, 0.2
  %v5185 = vsel %vm5153, %v5137, %v5169
  %v5186 = vsel %vm5154, %v5138, %v5170
  %v5187 = vsel %vm5155, %v5139, %v5171
  %v5188 = vsel %vm5156, %v5140, %v5172
  %v5189 = vsel %vm5157, %v5141, %v5173
  %v5190 = vsel %vm5158, %v5142, %v5174
  %v5191 = vsel %vm5159, %v5143, %v5175
  %v5192 = vsel %vm5160, %v5144, %v5176
  %v5193 = vsel %vm5161, %v5145, %v5177
  %v5194 = vsel %vm5162, %v5146, %v5178
  %v5195 = vsel %vm5163, %v5147, %v5179
  %v5196 = vsel %vm5164, %v5148, %v5180
  %v5197 = vsel %vm5165, %v5149, %v5181
  %v5198 = vsel %vm5166, %v5150, %v5182
  %v5199 = vsel %vm5167, %v5151, %v5183
  %v5200 = vsel %vm5168, %v5152, %v5184
  %v5201 = vadd.f32 %v5185, %v66
  %v5202 = vadd.f32 %v5186, %v67
  %v5203 = vadd.f32 %v5187, %v68
  %v5204 = vadd.f32 %v5188, %v69
  %v5205 = vadd.f32 %v5189, %v70
  %v5206 = vadd.f32 %v5190, %v71
  %v5207 = vadd.f32 %v5191, %v72
  %v5208 = vadd.f32 %v5192, %v73
  %v5209 = vadd.f32 %v5193, %v74
  %v5210 = vadd.f32 %v5194, %v75
  %v5211 = vadd.f32 %v5195, %v76
  %v5212 = vadd.f32 %v5196, %v77
  %v5213 = vadd.f32 %v5197, %v78
  %v5214 = vadd.f32 %v5198, %v79
  %v5215 = vadd.f32 %v5199, %v80
  %v5216 = vadd.f32 %v5200, %v81
  %5217 = vmax.xlane.f32.xlu0 %v5201
  %v5218 = vpop.xlane.xlu0 %5217
  %5219 = vmax.xlane.f32.xlu0 %v5202
  %v5220 = vpop.xlane.xlu0 %5219
  %5221 = vmax.xlane.f32.xlu0 %v5203
  %v5222 = vpop.xlane.xlu0 %5221
  %5223 = vmax.xlane.f32.xlu0 %v5204
  %v5224 = vpop.xlane.xlu0 %5223
  %5225 = vmax.xlane.f32.xlu0 %v5205
  %v5226 = vpop.xlane.xlu0 %5225
  %5227 = vmax.xlane.f32.xlu0 %v5206
  %v5228 = vpop.xlane.xlu0 %5227
  %5229 = vmax.xlane.f32.xlu0 %v5207
  %v5230 = vpop.xlane.xlu0 %5229
  %5231 = vmax.xlane.f32.xlu0 %v5208
  %v5232 = vpop.xlane.xlu0 %5231
  %5233 = vmax.xlane.f32.xlu0 %v5209
  %v5234 = vpop.xlane.xlu0 %5233
  %5235 = vmax.xlane.f32.xlu0 %v5210
  %v5236 = vpop.xlane.xlu0 %5235
  %5237 = vmax.xlane.f32.xlu0 %v5211
  %v5238 = vpop.xlane.xlu0 %5237
  %5239 = vmax.xlane.f32.xlu0 %v5212
  %v5240 = vpop.xlane.xlu0 %5239
  %5241 = vmax.xlane.f32.xlu0 %v5213
  %v5242 = vpop.xlane.xlu0 %5241
  %5243 = vmax.xlane.f32.xlu0 %v5214
  %v5244 = vpop.xlane.xlu0 %5243
  %5245 = vmax.xlane.f32.xlu0 %v5215
  %v5246 = vpop.xlane.xlu0 %5245
  %5247 = vmax.xlane.f32.xlu0 %v5216
  %v5248 = vpop.xlane.xlu0 %5247
  %v5249 = vsub.f32 %v5201, %v5218
  %v5250 = vsub.f32 %v5202, %v5220
  %v5251 = vsub.f32 %v5203, %v5222
  %v5252 = vsub.f32 %v5204, %v5224
  %v5253 = vsub.f32 %v5205, %v5226
  %v5254 = vsub.f32 %v5206, %v5228
  %v5255 = vsub.f32 %v5207, %v5230
  %v5256 = vsub.f32 %v5208, %v5232
  %v5257 = vsub.f32 %v5209, %v5234
  %v5258 = vsub.f32 %v5210, %v5236
  %v5259 = vsub.f32 %v5211, %v5238
  %v5260 = vsub.f32 %v5212, %v5240
  %v5261 = vsub.f32 %v5213, %v5242
  %v5262 = vsub.f32 %v5214, %v5244
  %v5263 = vsub.f32 %v5215, %v5246
  %v5264 = vsub.f32 %v5216, %v5248
  %v5265 = vmul.f32 %v5249, 1.442695
  %v5266 = vpow.pop %v5265
  %v5267 = vmul.f32 %v5250, 1.442695
  %v5268 = vpow.pop %v5267
  %v5269 = vmul.f32 %v5251, 1.442695
  %v5270 = vpow.pop %v5269
  %v5271 = vmul.f32 %v5252, 1.442695
  %v5272 = vpow.pop %v5271
  %v5273 = vmul.f32 %v5253, 1.442695
  %v5274 = vpow.pop %v5273
  %v5275 = vmul.f32 %v5254, 1.442695
  %v5276 = vpow.pop %v5275
  %v5277 = vmul.f32 %v5255, 1.442695
  %v5278 = vpow.pop %v5277
  %v5279 = vmul.f32 %v5256, 1.442695
  %v5280 = vpow.pop %v5279
  %v5281 = vmul.f32 %v5257, 1.442695
  %v5282 = vpow.pop %v5281
  %v5283 = vmul.f32 %v5258, 1.442695
  %v5284 = vpow.pop %v5283
  %v5285 = vmul.f32 %v5259, 1.442695
  %v5286 = vpow.pop %v5285
  %v5287 = vmul.f32 %v5260, 1.442695
  %v5288 = vpow.pop %v5287
  %v5289 = vmul.f32 %v5261, 1.442695
  %v5290 = vpow.pop %v5289
  %v5291 = vmul.f32 %v5262, 1.442695
  %v5292 = vpow.pop %v5291
  %v5293 = vmul.f32 %v5263, 1.442695
  %v5294 = vpow.pop %v5293
  %v5295 = vmul.f32 %v5264, 1.442695
  %v5296 = vpow.pop %v5295
  %5297 = vmatprep.subr.mxu0 0.0
  %5298 = vmatpush1.msra.mxu0 %v34
  %5299 = vmatprep.subr.mxu0 0.0
  %5300 = vmatpush1.msra.mxu0 %v35
  %5301 = vmatprep.subr.mxu0 0.0
  %5302 = vmatpush1.msra.mxu0 %v36
  %5303 = vmatprep.subr.mxu0 0.0
  %5304 = vmatpush1.msra.mxu0 %v37
  %5305 = vmatprep.subr.mxu0 0.0
  %5306 = vmatpush1.msra.mxu0 %v38
  %5307 = vmatprep.subr.mxu0 0.0
  %5308 = vmatpush1.msra.mxu0 %v39
  %5309 = vmatprep.subr.mxu0 0.0
  %5310 = vmatpush1.msra.mxu0 %v40
  %5311 = vmatprep.subr.mxu0 0.0
  %5312 = vmatpush1.msra.mxu0 %v41
  %5313 = vmatprep.subr.mxu0 0.0
  %5314 = vmatpush1.msra.mxu0 %v42
  %5315 = vmatprep.subr.mxu0 0.0
  %5316 = vmatpush1.msra.mxu0 %v43
  %5317 = vmatprep.subr.mxu0 0.0
  %5318 = vmatpush1.msra.mxu0 %v44
  %5319 = vmatprep.subr.mxu0 0.0
  %5320 = vmatpush1.msra.mxu0 %v45
  %5321 = vmatprep.subr.mxu0 0.0
  %5322 = vmatpush1.msra.mxu0 %v46
  %5323 = vmatprep.subr.mxu0 0.0
  %5324 = vmatpush1.msra.mxu0 %v47
  %5325 = vmatprep.subr.mxu0 0.0
  %5326 = vmatpush1.msra.mxu0 %v48
  %5327 = vmatprep.subr.mxu0 0.0
  %5328 = vmatpush1.msra.mxu0 %v49
  %5329 = vmatprep.subr.mxu0 0.0
  %5330 = vmatpush1.msra.mxu0 0.0
  %5331 = vmatprep.subr.mxu0 0.0
  %5332 = vmatpush1.msra.mxu0 0.0
  %5333 = vmatprep.subr.mxu0 0.0
  %5334 = vmatpush1.msra.mxu0 0.0
  %5335 = vmatprep.subr.mxu0 0.0
  %5336 = vmatpush1.msra.mxu0 0.0
  %5337 = vmatprep.subr.mxu0 0.0
  %5338 = vmatpush1.msra.mxu0 0.0
  %5339 = vmatprep.subr.mxu0 0.0
  %5340 = vmatpush1.msra.mxu0 0.0
  %5341 = vmatprep.subr.mxu0 0.0
  %5342 = vmatpush1.msra.mxu0 0.0
  %5343 = vmatprep.subr.mxu0 0.0
  %5344 = vmatpush1.msra.mxu0 0.0
  %5345 = vmatprep.subr.mxu0 0.0
  %5346 = vmatpush1.msra.mxu0 0.0
  %5347 = vmatprep.subr.mxu0 0.0
  %5348 = vmatpush1.msra.mxu0 0.0
  %5349 = vmatprep.subr.mxu0 0.0
  %5350 = vmatpush1.msra.mxu0 0.0
  %5351 = vmatprep.subr.mxu0 0.0
  %5352 = vmatpush1.msra.mxu0 0.0
  %5353 = vmatprep.subr.mxu0 0.0
  %5354 = vmatpush1.msra.mxu0 0.0
  %5355 = vmatprep.subr.mxu0 0.0
  %5356 = vmatpush1.msra.mxu0 0.0
  %5357 = vmatprep.subr.mxu0 0.0
  %5358 = vmatpush1.msra.mxu0 0.0
  %5359 = vmatprep.subr.mxu0 0.0
  %5360 = vmatpush1.msra.mxu0 0.0
  %5361 = vmatprep.mubr.f32.mxu0 0.0
  %5362 = vmatmul.mubr.f32.gmra.mrb[0].mxu0 %v5266
  %v5363 = vpop.f32.mrb[0].mxu0
  %v5364 = vadd.f32 0.0, %v5363
  %v5365 = vpop.f32.mrb[0].mxu0
  %5366 = vmatprep.mubr.f32.mxu0 0.0
  %5367 = vmatmul.mubr.f32.gmra.mrb[0].mxu0 %v5268
  %v5368 = vpop.f32.mrb[0].mxu0
  %v5369 = vadd.f32 0.0, %v5368
  %v5370 = vpop.f32.mrb[0].mxu0
  %5371 = vmatprep.mubr.f32.mxu0 0.0
  %5372 = vmatmul.mubr.f32.gmra.mrb[0].mxu0 %v5270
  %v5373 = vpop.f32.mrb[0].mxu0
  %v5374 = vadd.f32 0.0, %v5373
  %v5375 = vpop.f32.mrb[0].mxu0
  %5376 = vmatprep.mubr.f32.mxu0 0.0
  %5377 = vmatmul.mubr.f32.gmra.mrb[0].mxu0 %v5272
  %v5378 = vpop.f32.mrb[0].mxu0
  %v5379 = vadd.f32 0.0, %v5378
  %v5380 = vpop.f32.mrb[0].mxu0
  %5381 = vmatprep.mubr.f32.mxu0 0.0
  %5382 = vmatmul.mubr.f32.gmra.mrb[0].mxu0 %v5274
  %v5383 = vpop.f32.mrb[0].mxu0
  %v5384 = vadd.f32 0.0, %v5383
  %v5385 = vpop.f32.mrb[0].mxu0
  %5386 = vmatprep.mubr.f32.mxu0 0.0
  %5387 = vmatmul.mubr.f32.gmra.mrb[0].mxu0 %v5276
  %v5388 = vpop.f32.mrb[0].mxu0
  %v5389 = vadd.f32 0.0, %v5388
  %v5390 = vpop.f32.mrb[0].mxu0
  %5391 = vmatprep.mubr.f32.mxu0 0.0
  %5392 = vmatmul.mubr.f32.gmra.mrb[0].mxu0 %v5278
  %v5393 = vpop.f32.mrb[0].mxu0
  %v5394 = vadd.f32 0.0, %v5393
  %v5395 = vpop.f32.mrb[0].mxu0
  %5396 = vmatprep.mubr.f32.mxu0 0.0
  %5397 = vmatmul.mubr.f32.gmra.mrb[0].mxu0 %v5280
  %v5398 = vpop.f32.mrb[0].mxu0
  %v5399 = vadd.f32 0.0, %v5398
  %v5400 = vpop.f32.mrb[0].mxu0
  %5401 = vmatprep.mubr.f32.mxu0 0.0
  %5402 = vmatmul.mubr.f32.gmra.mrb[0].mxu0 %v5282
  %v5403 = vpop.f32.mrb[0].mxu0
  %v5404 = vadd.f32 0.0, %v5403
  %v5405 = vpop.f32.mrb[0].mxu0
  %5406 = vmatprep.mubr.f32.mxu0 0.0
  %5407 = vmatmul.mubr.f32.gmra.mrb[0].mxu0 %v5284
  %v5408 = vpop.f32.mrb[0].mxu0
  %v5409 = vadd.f32 0.0, %v5408
  %v5410 = vpop.f32.mrb[0].mxu0
  %5411 = vmatprep.mubr.f32.mxu0 0.0
  %5412 = vmatmul.mubr.f32.gmra.mrb[0].mxu0 %v5286
  %v5413 = vpop.f32.mrb[0].mxu0
  %v5414 = vadd.f32 0.0, %v5413
  %v5415 = vpop.f32.mrb[0].mxu0
  %5416 = vmatprep.mubr.f32.mxu0 0.0
  %5417 = vmatmul.mubr.f32.gmra.mrb[0].mxu0 %v5288
  %v5418 = vpop.f32.mrb[0].mxu0
  %v5419 = vadd.f32 0.0, %v5418
  %v5420 = vpop.f32.mrb[0].mxu0
  %5421 = vmatprep.mubr.f32.mxu0 0.0
  %5422 = vmatmul.mubr.f32.gmra.mrb[0].mxu0 %v5290
  %v5423 = vpop.f32.mrb[0].mxu0
  %v5424 = vadd.f32 0.0, %v5423
  %v5425 = vpop.f32.mrb[0].mxu0
  %5426 = vmatprep.mubr.f32.mxu0 0.0
  %5427 = vmatmul.mubr.f32.gmra.mrb[0].mxu0 %v5292
  %v5428 = vpop.f32.mrb[0].mxu0
  %v5429 = vadd.f32 0.0, %v5428
  %v5430 = vpop.f32.mrb[0].mxu0
  %5431 = vmatprep.mubr.f32.mxu0 0.0
  %5432 = vmatmul.mubr.f32.gmra.mrb[0].mxu0 %v5294
  %v5433 = vpop.f32.mrb[0].mxu0
  %v5434 = vadd.f32 0.0, %v5433
  %v5435 = vpop.f32.mrb[0].mxu0
  %5436 = vmatprep.mubr.f32.mxu0 0.0
  %5437 = vmatmul.mubr.f32.gmra.mrb[0].mxu0 %v5296
  %v5438 = vpop.f32.mrb[0].mxu0
  %v5439 = vadd.f32 0.0, %v5438
  %v5440 = vpop.f32.mrb[0].mxu0
  %5441 = vdwg.mxu0
  %v5442 = vrcp.pop %v5364
  %v5443 = vrcp.pop %v5369
  %v5444 = vrcp.pop %v5374
  %v5445 = vrcp.pop %v5379
  %v5446 = vrcp.pop %v5384
  %v5447 = vrcp.pop %v5389
  %v5448 = vrcp.pop %v5394
  %v5449 = vrcp.pop %v5399
  %v5450 = vrcp.pop %v5404
  %v5451 = vrcp.pop %v5409
  %v5452 = vrcp.pop %v5414
  %v5453 = vrcp.pop %v5419
  %v5454 = vrcp.pop %v5424
  %v5455 = vrcp.pop %v5429
  %v5456 = vrcp.pop %v5434
  %v5457 = vrcp.pop %v5439
  %5459 = vset.pattern.permute.xlu0 0
  %5460 = vperm.xlu0 %5459, %v5442
  %v5461 = vpop.permute.xlu0 %5460
  %5464 = vset.pattern.permute.xlu0 0
  %5465 = vperm.xlu0 %5464, %v5443
  %v5466 = vpop.permute.xlu0 %5465
  %5469 = vset.pattern.permute.xlu0 0
  %5470 = vperm.xlu0 %5469, %v5444
  %v5471 = vpop.permute.xlu0 %5470
  %5474 = vset.pattern.permute.xlu0 0
  %5475 = vperm.xlu0 %5474, %v5445
  %v5476 = vpop.permute.xlu0 %5475
  %5479 = vset.pattern.permute.xlu0 0
  %5480 = vperm.xlu0 %5479, %v5446
  %v5481 = vpop.permute.xlu0 %5480
  %5484 = vset.pattern.permute.xlu0 0
  %5485 = vperm.xlu0 %5484, %v5447
  %v5486 = vpop.permute.xlu0 %5485
  %5489 = vset.pattern.permute.xlu0 0
  %5490 = vperm.xlu0 %5489, %v5448
  %v5491 = vpop.permute.xlu0 %5490
  %5494 = vset.pattern.permute.xlu0 0
  %5495 = vperm.xlu0 %5494, %v5449
  %v5496 = vpop.permute.xlu0 %5495
  %5499 = vset.pattern.permute.xlu0 0
  %5500 = vperm.xlu0 %5499, %v5450
  %v5501 = vpop.permute.xlu0 %5500
  %5504 = vset.pattern.permute.xlu0 0
  %5505 = vperm.xlu0 %5504, %v5451
  %v5506 = vpop.permute.xlu0 %5505
  %5509 = vset.pattern.permute.xlu0 0
  %5510 = vperm.xlu0 %5509, %v5452
  %v5511 = vpop.permute.xlu0 %5510
  %5514 = vset.pattern.permute.xlu0 0
  %5515 = vperm.xlu0 %5514, %v5453
  %v5516 = vpop.permute.xlu0 %5515
  %5519 = vset.pattern.permute.xlu0 0
  %5520 = vperm.xlu0 %5519, %v5454
  %v5521 = vpop.permute.xlu0 %5520
  %5524 = vset.pattern.permute.xlu0 0
  %5525 = vperm.xlu0 %5524, %v5455
  %v5526 = vpop.permute.xlu0 %5525
  %5529 = vset.pattern.permute.xlu0 0
  %5530 = vperm.xlu0 %5529, %v5456
  %v5531 = vpop.permute.xlu0 %5530
  %5534 = vset.pattern.permute.xlu0 0
  %5535 = vperm.xlu0 %5534, %v5457
  %v5536 = vpop.permute.xlu0 %5535
  %v5538 = vmul.f32 %v5266, %v5461
  %v5539 = vmul.f32 %v5268, %v5466
  %v5540 = vmul.f32 %v5270, %v5471
  %v5541 = vmul.f32 %v5272, %v5476
  %v5542 = vmul.f32 %v5274, %v5481
  %v5543 = vmul.f32 %v5276, %v5486
  %v5544 = vmul.f32 %v5278, %v5491
  %v5545 = vmul.f32 %v5280, %v5496
  %v5546 = vmul.f32 %v5282, %v5501
  %v5547 = vmul.f32 %v5284, %v5506
  %v5548 = vmul.f32 %v5286, %v5511
  %v5549 = vmul.f32 %v5288, %v5516
  %v5550 = vmul.f32 %v5290, %v5521
  %v5551 = vmul.f32 %v5292, %v5526
  %v5552 = vmul.f32 %v5294, %v5531
  %v5553 = vmul.f32 %v5296, %v5536
  %v5554 = vpack.c.bf16 %v5539, %v5538
  %v5555 = vpack.c.bf16 %v5541, %v5540
  %v5556 = vpack.c.bf16 %v5543, %v5542
  %v5557 = vpack.c.bf16 %v5545, %v5544
  %v5558 = vpack.c.bf16 %v5547, %v5546
  %v5559 = vpack.c.bf16 %v5549, %v5548
  %v5560 = vpack.c.bf16 %v5551, %v5550
  %v5561 = vpack.c.bf16 %v5553, %v5552
  %5570 = vrot.lane.b32.xlu0 %v4471, 120
  %v5571 = vpop.permute.xlu0 %5570
  %5572 = vrot.lane.b32.xlu0 %v4472, 120
  %v5573 = vpop.permute.xlu0 %5572
  %5574 = vrot.lane.b32.xlu0 %v4473, 120
  %v5575 = vpop.permute.xlu0 %5574
  %5576 = vrot.lane.b32.xlu0 %v4474, 120
  %v5577 = vpop.permute.xlu0 %5576
  %5578 = vrot.lane.b32.xlu0 %v4475, 120
  %v5579 = vpop.permute.xlu0 %5578
  %5580 = vrot.lane.b32.xlu0 %v4476, 120
  %v5581 = vpop.permute.xlu0 %5580
  %5582 = vrot.lane.b32.xlu0 %v4477, 120
  %v5583 = vpop.permute.xlu0 %5582
  %5584 = vrot.lane.b32.xlu0 %v4478, 120
  %v5585 = vpop.permute.xlu0 %5584
  %5594 = vmatprep.subr.bf16.mxu0 0
  %5595 = vmatpush1.bf16.msra.mxu0 %v5571
  %5596 = vmatprep.subr.bf16.mxu0 0
  %5597 = vmatpush1.bf16.msra.mxu0 %v5573
  %5598 = vmatprep.subr.bf16.mxu0 0
  %5599 = vmatpush1.bf16.msra.mxu0 %v5575
  %5600 = vmatprep.subr.bf16.mxu0 0
  %5601 = vmatpush1.bf16.msra.mxu0 %v5577
  %5602 = vmatprep.subr.bf16.mxu0 0
  %5603 = vmatpush1.bf16.msra.mxu0 %v5579
  %5604 = vmatprep.subr.bf16.mxu0 0
  %5605 = vmatpush1.bf16.msra.mxu0 %v5581
  %5606 = vmatprep.subr.bf16.mxu0 0
  %5607 = vmatpush1.bf16.msra.mxu0 %v5583
  %5608 = vmatprep.subr.bf16.mxu0 0
  %5609 = vmatpush1.bf16.msra.mxu0 %v5585
  %5610 = vmatprep.subr.bf16.mxu0 0
  %5611 = vmatpush1.bf16.msra.mxu0 0
  %5612 = vmatprep.subr.bf16.mxu0 0
  %5613 = vmatpush1.bf16.msra.mxu0 0
  %5614 = vmatprep.subr.bf16.mxu0 0
  %5615 = vmatpush1.bf16.msra.mxu0 0
  %5616 = vmatprep.subr.bf16.mxu0 0
  %5617 = vmatpush1.bf16.msra.mxu0 0
  %5618 = vmatprep.subr.bf16.mxu0 0
  %5619 = vmatpush1.bf16.msra.mxu0 0
  %5620 = vmatprep.subr.bf16.mxu0 0
  %5621 = vmatpush1.bf16.msra.mxu0 0
  %5622 = vmatprep.subr.bf16.mxu0 0
  %5623 = vmatpush1.bf16.msra.mxu0 0
  %5624 = vmatprep.subr.bf16.mxu0 0
  %5625 = vmatpush1.bf16.msra.mxu0 0
  %5626 = vmatprep.mubr.bf16.mxu0 0
  %5627 = vmatmul.mubr.bf16.gmra.mrb[0].mxu0 %v5554
  %v5628 = vpop.f32.mrb[0].mxu0
  %v5629 = vadd.f32 0.0, %v5628
  %v5630 = vpop.f32.mrb[0].mxu0
  %v5631 = vpop.f32.mrb[0].mxu0
  %v5632 = vadd.f32 0.0, %v5631
  %v5633 = vpop.f32.mrb[0].mxu0
  %5634 = vmatprep.mubr.bf16.mxu0 0
  %5635 = vmatmul.mubr.bf16.gmra.mrb[0].mxu0 %v5555
  %v5636 = vpop.f32.mrb[0].mxu0
  %v5637 = vadd.f32 0.0, %v5636
  %v5638 = vpop.f32.mrb[0].mxu0
  %v5639 = vpop.f32.mrb[0].mxu0
  %v5640 = vadd.f32 0.0, %v5639
  %v5641 = vpop.f32.mrb[0].mxu0
  %5642 = vmatprep.mubr.bf16.mxu0 0
  %5643 = vmatmul.mubr.bf16.gmra.mrb[0].mxu0 %v5556
  %v5644 = vpop.f32.mrb[0].mxu0
  %v5645 = vadd.f32 0.0, %v5644
  %v5646 = vpop.f32.mrb[0].mxu0
  %v5647 = vpop.f32.mrb[0].mxu0
  %v5648 = vadd.f32 0.0, %v5647
  %v5649 = vpop.f32.mrb[0].mxu0
  %5650 = vmatprep.mubr.bf16.mxu0 0
  %5651 = vmatmul.mubr.bf16.gmra.mrb[0].mxu0 %v5557
  %v5652 = vpop.f32.mrb[0].mxu0
  %v5653 = vadd.f32 0.0, %v5652
  %v5654 = vpop.f32.mrb[0].mxu0
  %v5655 = vpop.f32.mrb[0].mxu0
  %v5656 = vadd.f32 0.0, %v5655
  %v5657 = vpop.f32.mrb[0].mxu0
  %5658 = vmatprep.mubr.bf16.mxu0 0
  %5659 = vmatmul.mubr.bf16.gmra.mrb[0].mxu0 %v5558
  %v5660 = vpop.f32.mrb[0].mxu0
  %v5661 = vadd.f32 0.0, %v5660
  %v5662 = vpop.f32.mrb[0].mxu0
  %v5663 = vpop.f32.mrb[0].mxu0
  %v5664 = vadd.f32 0.0, %v5663
  %v5665 = vpop.f32.mrb[0].mxu0
  %5666 = vmatprep.mubr.bf16.mxu0 0
  %5667 = vmatmul.mubr.bf16.gmra.mrb[0].mxu0 %v5559
  %v5668 = vpop.f32.mrb[0].mxu0
  %v5669 = vadd.f32 0.0, %v5668
  %v5670 = vpop.f32.mrb[0].mxu0
  %v5671 = vpop.f32.mrb[0].mxu0
  %v5672 = vadd.f32 0.0, %v5671
  %v5673 = vpop.f32.mrb[0].mxu0
  %5674 = vmatprep.mubr.bf16.mxu0 0
  %5675 = vmatmul.mubr.bf16.gmra.mrb[0].mxu0 %v5560
  %v5676 = vpop.f32.mrb[0].mxu0
  %v5677 = vadd.f32 0.0, %v5676
  %v5678 = vpop.f32.mrb[0].mxu0
  %v5679 = vpop.f32.mrb[0].mxu0
  %v5680 = vadd.f32 0.0, %v5679
  %v5681 = vpop.f32.mrb[0].mxu0
  %5682 = vmatprep.mubr.bf16.mxu0 0
  %5683 = vmatmul.mubr.bf16.gmra.mrb[0].mxu0 %v5561
  %v5684 = vpop.f32.mrb[0].mxu0
  %v5685 = vadd.f32 0.0, %v5684
  %v5686 = vpop.f32.mrb[0].mxu0
  %v5687 = vpop.f32.mrb[0].mxu0
  %v5688 = vadd.f32 0.0, %v5687
  %v5689 = vpop.f32.mrb[0].mxu0
  %5690 = vdwg.mxu0
  %5691 = vset.pattern.permute.xlu0 34
  %5692 = vperm.xlu0 %5691, %v4313
  %v5693 = vpop.permute.xlu0 %5692
  %5695 = vset.pattern.permute.xlu0 34
  %5696 = vperm.xlu0 %5695, %v4316
  %v5697 = vpop.permute.xlu0 %5696
  %5699 = vset.pattern.permute.xlu0 34
  %5700 = vperm.xlu0 %5699, %v4321
  %v5701 = vpop.permute.xlu0 %5700
  %5703 = vset.pattern.permute.xlu0 34
  %5704 = vperm.xlu0 %5703, %v4324
  %v5705 = vpop.permute.xlu0 %5704
  %5707 = vset.pattern.permute.xlu0 34
  %5708 = vperm.xlu0 %5707, %v4329
  %v5709 = vpop.permute.xlu0 %5708
  %5711 = vset.pattern.permute.xlu0 34
  %5712 = vperm.xlu0 %5711, %v4332
  %v5713 = vpop.permute.xlu0 %5712
  %5715 = vset.pattern.permute.xlu0 34
  %5716 = vperm.xlu0 %5715, %v4337
  %v5717 = vpop.permute.xlu0 %5716
  %5719 = vset.pattern.permute.xlu0 34
  %5720 = vperm.xlu0 %5719, %v4340
  %v5721 = vpop.permute.xlu0 %5720
  %5723 = vset.pattern.permute.xlu0 34
  %5724 = vperm.xlu0 %5723, %v4345
  %v5725 = vpop.permute.xlu0 %5724
  %5727 = vset.pattern.permute.xlu0 34
  %5728 = vperm.xlu0 %5727, %v4348
  %v5729 = vpop.permute.xlu0 %5728
  %5731 = vset.pattern.permute.xlu0 34
  %5732 = vperm.xlu0 %5731, %v4353
  %v5733 = vpop.permute.xlu0 %5732
  %5735 = vset.pattern.permute.xlu0 34
  %5736 = vperm.xlu0 %5735, %v4356
  %v5737 = vpop.permute.xlu0 %5736
  %5739 = vset.pattern.permute.xlu0 34
  %5740 = vperm.xlu0 %5739, %v4361
  %v5741 = vpop.permute.xlu0 %5740
  %5743 = vset.pattern.permute.xlu0 34
  %5744 = vperm.xlu0 %5743, %v4364
  %v5745 = vpop.permute.xlu0 %5744
  %5747 = vset.pattern.permute.xlu0 34
  %5748 = vperm.xlu0 %5747, %v4369
  %v5749 = vpop.permute.xlu0 %5748
  %5751 = vset.pattern.permute.xlu0 34
  %5752 = vperm.xlu0 %5751, %v4372
  %v5753 = vpop.permute.xlu0 %5752
  %v5755 = vlaneseq
  %v5756 = vshrl.u32 %v5755, 7
  %v5757 = vsub.s32 2, %v5756
  %v5758 = vrot.slane %v4455, %v5757
  %v5759 = vadd.f32 %v5693, %v5758
  %v5760 = vadd.f32 %v5697, %v5758
  %v5761 = vadd.f32 %v5701, %v5758
  %v5762 = vadd.f32 %v5705, %v5758
  %v5763 = vadd.f32 %v5709, %v5758
  %v5764 = vadd.f32 %v5713, %v5758
  %v5765 = vadd.f32 %v5717, %v5758
  %v5766 = vadd.f32 %v5721, %v5758
  %v5767 = vadd.f32 %v5725, %v5758
  %v5768 = vadd.f32 %v5729, %v5758
  %v5769 = vadd.f32 %v5733, %v5758
  %v5770 = vadd.f32 %v5737, %v5758
  %v5771 = vadd.f32 %v5741, %v5758
  %v5772 = vadd.f32 %v5745, %v5758
  %v5773 = vadd.f32 %v5749, %v5758
  %v5774 = vadd.f32 %v5753, %v5758
  %vm5775 = vcmp.gt.f32.partialorder %v5759, 0.0
  %vm5776 = vcmp.gt.f32.partialorder %v5760, 0.0
  %vm5777 = vcmp.gt.f32.partialorder %v5761, 0.0
  %vm5778 = vcmp.gt.f32.partialorder %v5762, 0.0
  %vm5779 = vcmp.gt.f32.partialorder %v5763, 0.0
  %vm5780 = vcmp.gt.f32.partialorder %v5764, 0.0
  %vm5781 = vcmp.gt.f32.partialorder %v5765, 0.0
  %vm5782 = vcmp.gt.f32.partialorder %v5766, 0.0
  %vm5783 = vcmp.gt.f32.partialorder %v5767, 0.0
  %vm5784 = vcmp.gt.f32.partialorder %v5768, 0.0
  %vm5785 = vcmp.gt.f32.partialorder %v5769, 0.0
  %vm5786 = vcmp.gt.f32.partialorder %v5770, 0.0
  %vm5787 = vcmp.gt.f32.partialorder %v5771, 0.0
  %vm5788 = vcmp.gt.f32.partialorder %v5772, 0.0
  %vm5789 = vcmp.gt.f32.partialorder %v5773, 0.0
  %vm5790 = vcmp.gt.f32.partialorder %v5774, 0.0
  %v5791 = vmul.f32 %v5759, 0.2
  %v5792 = vmul.f32 %v5760, 0.2
  %v5793 = vmul.f32 %v5761, 0.2
  %v5794 = vmul.f32 %v5762, 0.2
  %v5795 = vmul.f32 %v5763, 0.2
  %v5796 = vmul.f32 %v5764, 0.2
  %v5797 = vmul.f32 %v5765, 0.2
  %v5798 = vmul.f32 %v5766, 0.2
  %v5799 = vmul.f32 %v5767, 0.2
  %v5800 = vmul.f32 %v5768, 0.2
  %v5801 = vmul.f32 %v5769, 0.2
  %v5802 = vmul.f32 %v5770, 0.2
  %v5803 = vmul.f32 %v5771, 0.2
  %v5804 = vmul.f32 %v5772, 0.2
  %v5805 = vmul.f32 %v5773, 0.2
  %v5806 = vmul.f32 %v5774, 0.2
  %v5807 = vsel %vm5775, %v5759, %v5791
  %v5808 = vsel %vm5776, %v5760, %v5792
  %v5809 = vsel %vm5777, %v5761, %v5793
  %v5810 = vsel %vm5778, %v5762, %v5794
  %v5811 = vsel %vm5779, %v5763, %v5795
  %v5812 = vsel %vm5780, %v5764, %v5796
  %v5813 = vsel %vm5781, %v5765, %v5797
  %v5814 = vsel %vm5782, %v5766, %v5798
  %v5815 = vsel %vm5783, %v5767, %v5799
  %v5816 = vsel %vm5784, %v5768, %v5800
  %v5817 = vsel %vm5785, %v5769, %v5801
  %v5818 = vsel %vm5786, %v5770, %v5802
  %v5819 = vsel %vm5787, %v5771, %v5803
  %v5820 = vsel %vm5788, %v5772, %v5804
  %v5821 = vsel %vm5789, %v5773, %v5805
  %v5822 = vsel %vm5790, %v5774, %v5806
  %v5823 = vadd.f32 %v5807, %v66
  %v5824 = vadd.f32 %v5808, %v67
  %v5825 = vadd.f32 %v5809, %v68
  %v5826 = vadd.f32 %v5810, %v69
  %v5827 = vadd.f32 %v5811, %v70
  %v5828 = vadd.f32 %v5812, %v71
  %v5829 = vadd.f32 %v5813, %v72
  %v5830 = vadd.f32 %v5814, %v73
  %v5831 = vadd.f32 %v5815, %v74
  %v5832 = vadd.f32 %v5816, %v75
  %v5833 = vadd.f32 %v5817, %v76
  %v5834 = vadd.f32 %v5818, %v77
  %v5835 = vadd.f32 %v5819, %v78
  %v5836 = vadd.f32 %v5820, %v79
  %v5837 = vadd.f32 %v5821, %v80
  %v5838 = vadd.f32 %v5822, %v81
  %5839 = vmax.xlane.f32.xlu0 %v5823
  %v5840 = vpop.xlane.xlu0 %5839
  %5841 = vmax.xlane.f32.xlu0 %v5824
  %v5842 = vpop.xlane.xlu0 %5841
  %5843 = vmax.xlane.f32.xlu0 %v5825
  %v5844 = vpop.xlane.xlu0 %5843
  %5845 = vmax.xlane.f32.xlu0 %v5826
  %v5846 = vpop.xlane.xlu0 %5845
  %5847 = vmax.xlane.f32.xlu0 %v5827
  %v5848 = vpop.xlane.xlu0 %5847
  %5849 = vmax.xlane.f32.xlu0 %v5828
  %v5850 = vpop.xlane.xlu0 %5849
  %5851 = vmax.xlane.f32.xlu0 %v5829
  %v5852 = vpop.xlane.xlu0 %5851
  %5853 = vmax.xlane.f32.xlu0 %v5830
  %v5854 = vpop.xlane.xlu0 %5853
  %5855 = vmax.xlane.f32.xlu0 %v5831
  %v5856 = vpop.xlane.xlu0 %5855
  %5857 = vmax.xlane.f32.xlu0 %v5832
  %v5858 = vpop.xlane.xlu0 %5857
  %5859 = vmax.xlane.f32.xlu0 %v5833
  %v5860 = vpop.xlane.xlu0 %5859
  %5861 = vmax.xlane.f32.xlu0 %v5834
  %v5862 = vpop.xlane.xlu0 %5861
  %5863 = vmax.xlane.f32.xlu0 %v5835
  %v5864 = vpop.xlane.xlu0 %5863
  %5865 = vmax.xlane.f32.xlu0 %v5836
  %v5866 = vpop.xlane.xlu0 %5865
  %5867 = vmax.xlane.f32.xlu0 %v5837
  %v5868 = vpop.xlane.xlu0 %5867
  %5869 = vmax.xlane.f32.xlu0 %v5838
  %v5870 = vpop.xlane.xlu0 %5869
  %v5871 = vsub.f32 %v5823, %v5840
  %v5872 = vsub.f32 %v5824, %v5842
  %v5873 = vsub.f32 %v5825, %v5844
  %v5874 = vsub.f32 %v5826, %v5846
  %v5875 = vsub.f32 %v5827, %v5848
  %v5876 = vsub.f32 %v5828, %v5850
  %v5877 = vsub.f32 %v5829, %v5852
  %v5878 = vsub.f32 %v5830, %v5854
  %v5879 = vsub.f32 %v5831, %v5856
  %v5880 = vsub.f32 %v5832, %v5858
  %v5881 = vsub.f32 %v5833, %v5860
  %v5882 = vsub.f32 %v5834, %v5862
  %v5883 = vsub.f32 %v5835, %v5864
  %v5884 = vsub.f32 %v5836, %v5866
  %v5885 = vsub.f32 %v5837, %v5868
  %v5886 = vsub.f32 %v5838, %v5870
  %v5887 = vmul.f32 %v5871, 1.442695
  %v5888 = vpow.pop %v5887
  %v5889 = vmul.f32 %v5872, 1.442695
  %v5890 = vpow.pop %v5889
  %v5891 = vmul.f32 %v5873, 1.442695
  %v5892 = vpow.pop %v5891
  %v5893 = vmul.f32 %v5874, 1.442695
  %v5894 = vpow.pop %v5893
  %v5895 = vmul.f32 %v5875, 1.442695
  %v5896 = vpow.pop %v5895
  %v5897 = vmul.f32 %v5876, 1.442695
  %v5898 = vpow.pop %v5897
  %v5899 = vmul.f32 %v5877, 1.442695
  %v5900 = vpow.pop %v5899
  %v5901 = vmul.f32 %v5878, 1.442695
  %v5902 = vpow.pop %v5901
  %v5903 = vmul.f32 %v5879, 1.442695
  %v5904 = vpow.pop %v5903
  %v5905 = vmul.f32 %v5880, 1.442695
  %v5906 = vpow.pop %v5905
  %v5907 = vmul.f32 %v5881, 1.442695
  %v5908 = vpow.pop %v5907
  %v5909 = vmul.f32 %v5882, 1.442695
  %v5910 = vpow.pop %v5909
  %v5911 = vmul.f32 %v5883, 1.442695
  %v5912 = vpow.pop %v5911
  %v5913 = vmul.f32 %v5884, 1.442695
  %v5914 = vpow.pop %v5913
  %v5915 = vmul.f32 %v5885, 1.442695
  %v5916 = vpow.pop %v5915
  %v5917 = vmul.f32 %v5886, 1.442695
  %v5918 = vpow.pop %v5917
  %5919 = vmatprep.subr.mxu0 0.0
  %5920 = vmatpush1.msra.mxu0 %v34
  %5921 = vmatprep.subr.mxu0 0.0
  %5922 = vmatpush1.msra.mxu0 %v35
  %5923 = vmatprep.subr.mxu0 0.0
  %5924 = vmatpush1.msra.mxu0 %v36
  %5925 = vmatprep.subr.mxu0 0.0
  %5926 = vmatpush1.msra.mxu0 %v37
  %5927 = vmatprep.subr.mxu0 0.0
  %5928 = vmatpush1.msra.mxu0 %v38
  %5929 = vmatprep.subr.mxu0 0.0
  %5930 = vmatpush1.msra.mxu0 %v39
  %5931 = vmatprep.subr.mxu0 0.0
  %5932 = vmatpush1.msra.mxu0 %v40
  %5933 = vmatprep.subr.mxu0 0.0
  %5934 = vmatpush1.msra.mxu0 %v41
  %5935 = vmatprep.subr.mxu0 0.0
  %5936 = vmatpush1.msra.mxu0 %v42
  %5937 = vmatprep.subr.mxu0 0.0
  %5938 = vmatpush1.msra.mxu0 %v43
  %5939 = vmatprep.subr.mxu0 0.0
  %5940 = vmatpush1.msra.mxu0 %v44
  %5941 = vmatprep.subr.mxu0 0.0
  %5942 = vmatpush1.msra.mxu0 %v45
  %5943 = vmatprep.subr.mxu0 0.0
  %5944 = vmatpush1.msra.mxu0 %v46
  %5945 = vmatprep.subr.mxu0 0.0
  %5946 = vmatpush1.msra.mxu0 %v47
  %5947 = vmatprep.subr.mxu0 0.0
  %5948 = vmatpush1.msra.mxu0 %v48
  %5949 = vmatprep.subr.mxu0 0.0
  %5950 = vmatpush1.msra.mxu0 %v49
  %5951 = vmatprep.subr.mxu0 0.0
  %5952 = vmatpush1.msra.mxu0 0.0
  %5953 = vmatprep.subr.mxu0 0.0
  %5954 = vmatpush1.msra.mxu0 0.0
  %5955 = vmatprep.subr.mxu0 0.0
  %5956 = vmatpush1.msra.mxu0 0.0
  %5957 = vmatprep.subr.mxu0 0.0
  %5958 = vmatpush1.msra.mxu0 0.0
  %5959 = vmatprep.subr.mxu0 0.0
  %5960 = vmatpush1.msra.mxu0 0.0
  %5961 = vmatprep.subr.mxu0 0.0
  %5962 = vmatpush1.msra.mxu0 0.0
  %5963 = vmatprep.subr.mxu0 0.0
  %5964 = vmatpush1.msra.mxu0 0.0
  %5965 = vmatprep.subr.mxu0 0.0
  %5966 = vmatpush1.msra.mxu0 0.0
  %5967 = vmatprep.subr.mxu0 0.0
  %5968 = vmatpush1.msra.mxu0 0.0
  %5969 = vmatprep.subr.mxu0 0.0
  %5970 = vmatpush1.msra.mxu0 0.0
  %5971 = vmatprep.subr.mxu0 0.0
  %5972 = vmatpush1.msra.mxu0 0.0
  %5973 = vmatprep.subr.mxu0 0.0
  %5974 = vmatpush1.msra.mxu0 0.0
  %5975 = vmatprep.subr.mxu0 0.0
  %5976 = vmatpush1.msra.mxu0 0.0
  %5977 = vmatprep.subr.mxu0 0.0
  %5978 = vmatpush1.msra.mxu0 0.0
  %5979 = vmatprep.subr.mxu0 0.0
  %5980 = vmatpush1.msra.mxu0 0.0
  %5981 = vmatprep.subr.mxu0 0.0
  %5982 = vmatpush1.msra.mxu0 0.0
  %5983 = vmatprep.mubr.f32.mxu0 0.0
  %5984 = vmatmul.mubr.f32.gmra.mrb[0].mxu0 %v5888
  %v5985 = vpop.f32.mrb[0].mxu0
  %v5986 = vadd.f32 0.0, %v5985
  %v5987 = vpop.f32.mrb[0].mxu0
  %5988 = vmatprep.mubr.f32.mxu0 0.0
  %5989 = vmatmul.mubr.f32.gmra.mrb[0].mxu0 %v5890
  %v5990 = vpop.f32.mrb[0].mxu0
  %v5991 = vadd.f32 0.0, %v5990
  %v5992 = vpop.f32.mrb[0].mxu0
  %5993 = vmatprep.mubr.f32.mxu0 0.0
  %5994 = vmatmul.mubr.f32.gmra.mrb[0].mxu0 %v5892
  %v5995 = vpop.f32.mrb[0].mxu0
  %v5996 = vadd.f32 0.0, %v5995
  %v5997 = vpop.f32.mrb[0].mxu0
  %5998 = vmatprep.mubr.f32.mxu0 0.0
  %5999 = vmatmul.mubr.f32.gmra.mrb[0].mxu0 %v5894
  %v6000 = vpop.f32.mrb[0].mxu0
  %v6001 = vadd.f32 0.0, %v6000
  %v6002 = vpop.f32.mrb[0].mxu0
  %6003 = vmatprep.mubr.f32.mxu0 0.0
  %6004 = vmatmul.mubr.f32.gmra.mrb[0].mxu0 %v5896
  %v6005 = vpop.f32.mrb[0].mxu0
  %v6006 = vadd.f32 0.0, %v6005
  %v6007 = vpop.f32.mrb[0].mxu0
  %6008 = vmatprep.mubr.f32.mxu0 0.0
  %6009 = vmatmul.mubr.f32.gmra.mrb[0].mxu0 %v5898
  %v6010 = vpop.f32.mrb[0].mxu0
  %v6011 = vadd.f32 0.0, %v6010
  %v6012 = vpop.f32.mrb[0].mxu0
  %6013 = vmatprep.mubr.f32.mxu0 0.0
  %6014 = vmatmul.mubr.f32.gmra.mrb[0].mxu0 %v5900
  %v6015 = vpop.f32.mrb[0].mxu0
  %v6016 = vadd.f32 0.0, %v6015
  %v6017 = vpop.f32.mrb[0].mxu0
  %6018 = vmatprep.mubr.f32.mxu0 0.0
  %6019 = vmatmul.mubr.f32.gmra.mrb[0].mxu0 %v5902
  %v6020 = vpop.f32.mrb[0].mxu0
  %v6021 = vadd.f32 0.0, %v6020
  %v6022 = vpop.f32.mrb[0].mxu0
  %6023 = vmatprep.mubr.f32.mxu0 0.0
  %6024 = vmatmul.mubr.f32.gmra.mrb[0].mxu0 %v5904
  %v6025 = vpop.f32.mrb[0].mxu0
  %v6026 = vadd.f32 0.0, %v6025
  %v6027 = vpop.f32.mrb[0].mxu0
  %6028 = vmatprep.mubr.f32.mxu0 0.0
  %6029 = vmatmul.mubr.f32.gmra.mrb[0].mxu0 %v5906
  %v6030 = vpop.f32.mrb[0].mxu0
  %v6031 = vadd.f32 0.0, %v6030
  %v6032 = vpop.f32.mrb[0].mxu0
  %6033 = vmatprep.mubr.f32.mxu0 0.0
  %6034 = vmatmul.mubr.f32.gmra.mrb[0].mxu0 %v5908
  %v6035 = vpop.f32.mrb[0].mxu0
  %v6036 = vadd.f32 0.0, %v6035
  %v6037 = vpop.f32.mrb[0].mxu0
  %6038 = vmatprep.mubr.f32.mxu0 0.0
  %6039 = vmatmul.mubr.f32.gmra.mrb[0].mxu0 %v5910
  %v6040 = vpop.f32.mrb[0].mxu0
  %v6041 = vadd.f32 0.0, %v6040
  %v6042 = vpop.f32.mrb[0].mxu0
  %6043 = vmatprep.mubr.f32.mxu0 0.0
  %6044 = vmatmul.mubr.f32.gmra.mrb[0].mxu0 %v5912
  %v6045 = vpop.f32.mrb[0].mxu0
  %v6046 = vadd.f32 0.0, %v6045
  %v6047 = vpop.f32.mrb[0].mxu0
  %6048 = vmatprep.mubr.f32.mxu0 0.0
  %6049 = vmatmul.mubr.f32.gmra.mrb[0].mxu0 %v5914
  %v6050 = vpop.f32.mrb[0].mxu0
  %v6051 = vadd.f32 0.0, %v6050
  %v6052 = vpop.f32.mrb[0].mxu0
  %6053 = vmatprep.mubr.f32.mxu0 0.0
  %6054 = vmatmul.mubr.f32.gmra.mrb[0].mxu0 %v5916
  %v6055 = vpop.f32.mrb[0].mxu0
  %v6056 = vadd.f32 0.0, %v6055
  %v6057 = vpop.f32.mrb[0].mxu0
  %6058 = vmatprep.mubr.f32.mxu0 0.0
  %6059 = vmatmul.mubr.f32.gmra.mrb[0].mxu0 %v5918
  %v6060 = vpop.f32.mrb[0].mxu0
  %v6061 = vadd.f32 0.0, %v6060
  %v6062 = vpop.f32.mrb[0].mxu0
  %6063 = vdwg.mxu0
  %v6064 = vrcp.pop %v5986
  %v6065 = vrcp.pop %v5991
  %v6066 = vrcp.pop %v5996
  %v6067 = vrcp.pop %v6001
  %v6068 = vrcp.pop %v6006
  %v6069 = vrcp.pop %v6011
  %v6070 = vrcp.pop %v6016
  %v6071 = vrcp.pop %v6021
  %v6072 = vrcp.pop %v6026
  %v6073 = vrcp.pop %v6031
  %v6074 = vrcp.pop %v6036
  %v6075 = vrcp.pop %v6041
  %v6076 = vrcp.pop %v6046
  %v6077 = vrcp.pop %v6051
  %v6078 = vrcp.pop %v6056
  %v6079 = vrcp.pop %v6061
  %6081 = vset.pattern.permute.xlu0 0
  %6082 = vperm.xlu0 %6081, %v6064
  %v6083 = vpop.permute.xlu0 %6082
  %6086 = vset.pattern.permute.xlu0 0
  %6087 = vperm.xlu0 %6086, %v6065
  %v6088 = vpop.permute.xlu0 %6087
  %6091 = vset.pattern.permute.xlu0 0
  %6092 = vperm.xlu0 %6091, %v6066
  %v6093 = vpop.permute.xlu0 %6092
  %6096 = vset.pattern.permute.xlu0 0
  %6097 = vperm.xlu0 %6096, %v6067
  %v6098 = vpop.permute.xlu0 %6097
  %6101 = vset.pattern.permute.xlu0 0
  %6102 = vperm.xlu0 %6101, %v6068
  %v6103 = vpop.permute.xlu0 %6102
  %6106 = vset.pattern.permute.xlu0 0
  %6107 = vperm.xlu0 %6106, %v6069
  %v6108 = vpop.permute.xlu0 %6107
  %6111 = vset.pattern.permute.xlu0 0
  %6112 = vperm.xlu0 %6111, %v6070
  %v6113 = vpop.permute.xlu0 %6112
  %6116 = vset.pattern.permute.xlu0 0
  %6117 = vperm.xlu0 %6116, %v6071
  %v6118 = vpop.permute.xlu0 %6117
  %6121 = vset.pattern.permute.xlu0 0
  %6122 = vperm.xlu0 %6121, %v6072
  %v6123 = vpop.permute.xlu0 %6122
  %6126 = vset.pattern.permute.xlu0 0
  %6127 = vperm.xlu0 %6126, %v6073
  %v6128 = vpop.permute.xlu0 %6127
  %6131 = vset.pattern.permute.xlu0 0
  %6132 = vperm.xlu0 %6131, %v6074
  %v6133 = vpop.permute.xlu0 %6132
  %6136 = vset.pattern.permute.xlu0 0
  %6137 = vperm.xlu0 %6136, %v6075
  %v6138 = vpop.permute.xlu0 %6137
  %6141 = vset.pattern.permute.xlu0 0
  %6142 = vperm.xlu0 %6141, %v6076
  %v6143 = vpop.permute.xlu0 %6142
  %6146 = vset.pattern.permute.xlu0 0
  %6147 = vperm.xlu0 %6146, %v6077
  %v6148 = vpop.permute.xlu0 %6147
  %6151 = vset.pattern.permute.xlu0 0
  %6152 = vperm.xlu0 %6151, %v6078
  %v6153 = vpop.permute.xlu0 %6152
  %6156 = vset.pattern.permute.xlu0 0
  %6157 = vperm.xlu0 %6156, %v6079
  %v6158 = vpop.permute.xlu0 %6157
  %v6160 = vmul.f32 %v5888, %v6083
  %v6161 = vmul.f32 %v5890, %v6088
  %v6162 = vmul.f32 %v5892, %v6093
  %v6163 = vmul.f32 %v5894, %v6098
  %v6164 = vmul.f32 %v5896, %v6103
  %v6165 = vmul.f32 %v5898, %v6108
  %v6166 = vmul.f32 %v5900, %v6113
  %v6167 = vmul.f32 %v5902, %v6118
  %v6168 = vmul.f32 %v5904, %v6123
  %v6169 = vmul.f32 %v5906, %v6128
  %v6170 = vmul.f32 %v5908, %v6133
  %v6171 = vmul.f32 %v5910, %v6138
  %v6172 = vmul.f32 %v5912, %v6143
  %v6173 = vmul.f32 %v5914, %v6148
  %v6174 = vmul.f32 %v5916, %v6153
  %v6175 = vmul.f32 %v5918, %v6158
  %v6176 = vpack.c.bf16 %v6161, %v6160
  %v6177 = vpack.c.bf16 %v6163, %v6162
  %v6178 = vpack.c.bf16 %v6165, %v6164
  %v6179 = vpack.c.bf16 %v6167, %v6166
  %v6180 = vpack.c.bf16 %v6169, %v6168
  %v6181 = vpack.c.bf16 %v6171, %v6170
  %v6182 = vpack.c.bf16 %v6173, %v6172
  %v6183 = vpack.c.bf16 %v6175, %v6174
  %6184 = vrot.lane.b32.xlu0 %v4471, 112
  %v6185 = vpop.permute.xlu0 %6184
  %6186 = vrot.lane.b32.xlu0 %v4472, 112
  %v6187 = vpop.permute.xlu0 %6186
  %6188 = vrot.lane.b32.xlu0 %v4473, 112
  %v6189 = vpop.permute.xlu0 %6188
  %6190 = vrot.lane.b32.xlu0 %v4474, 112
  %v6191 = vpop.permute.xlu0 %6190
  %6192 = vrot.lane.b32.xlu0 %v4475, 112
  %v6193 = vpop.permute.xlu0 %6192
  %6194 = vrot.lane.b32.xlu0 %v4476, 112
  %v6195 = vpop.permute.xlu0 %6194
  %6196 = vrot.lane.b32.xlu0 %v4477, 112
  %v6197 = vpop.permute.xlu0 %6196
  %6198 = vrot.lane.b32.xlu0 %v4478, 112
  %v6199 = vpop.permute.xlu0 %6198
  %6208 = vmatprep.subr.bf16.mxu0 0
  %6209 = vmatpush1.bf16.msra.mxu0 %v6185
  %6210 = vmatprep.subr.bf16.mxu0 0
  %6211 = vmatpush1.bf16.msra.mxu0 %v6187
  %6212 = vmatprep.subr.bf16.mxu0 0
  %6213 = vmatpush1.bf16.msra.mxu0 %v6189
  %6214 = vmatprep.subr.bf16.mxu0 0
  %6215 = vmatpush1.bf16.msra.mxu0 %v6191
  %6216 = vmatprep.subr.bf16.mxu0 0
  %6217 = vmatpush1.bf16.msra.mxu0 %v6193
  %6218 = vmatprep.subr.bf16.mxu0 0
  %6219 = vmatpush1.bf16.msra.mxu0 %v6195
  %6220 = vmatprep.subr.bf16.mxu0 0
  %6221 = vmatpush1.bf16.msra.mxu0 %v6197
  %6222 = vmatprep.subr.bf16.mxu0 0
  %6223 = vmatpush1.bf16.msra.mxu0 %v6199
  %6224 = vmatprep.subr.bf16.mxu0 0
  %6225 = vmatpush1.bf16.msra.mxu0 0
  %6226 = vmatprep.subr.bf16.mxu0 0
  %6227 = vmatpush1.bf16.msra.mxu0 0
  %6228 = vmatprep.subr.bf16.mxu0 0
  %6229 = vmatpush1.bf16.msra.mxu0 0
  %6230 = vmatprep.subr.bf16.mxu0 0
  %6231 = vmatpush1.bf16.msra.mxu0 0
  %6232 = vmatprep.subr.bf16.mxu0 0
  %6233 = vmatpush1.bf16.msra.mxu0 0
  %6234 = vmatprep.subr.bf16.mxu0 0
  %6235 = vmatpush1.bf16.msra.mxu0 0
  %6236 = vmatprep.subr.bf16.mxu0 0
  %6237 = vmatpush1.bf16.msra.mxu0 0
  %6238 = vmatprep.subr.bf16.mxu0 0
  %6239 = vmatpush1.bf16.msra.mxu0 0
  %6240 = vmatprep.mubr.bf16.mxu0 0
  %6241 = vmatmul.mubr.bf16.gmra.mrb[0].mxu0 %v6176
  %v6242 = vpop.f32.mrb[0].mxu0
  %v6243 = vadd.f32 0.0, %v6242
  %v6244 = vpop.f32.mrb[0].mxu0
  %v6245 = vpop.f32.mrb[0].mxu0
  %v6246 = vadd.f32 0.0, %v6245
  %v6247 = vpop.f32.mrb[0].mxu0
  %6248 = vmatprep.mubr.bf16.mxu0 0
  %6249 = vmatmul.mubr.bf16.gmra.mrb[0].mxu0 %v6177
  %v6250 = vpop.f32.mrb[0].mxu0
  %v6251 = vadd.f32 0.0, %v6250
  %v6252 = vpop.f32.mrb[0].mxu0
  %v6253 = vpop.f32.mrb[0].mxu0
  %v6254 = vadd.f32 0.0, %v6253
  %v6255 = vpop.f32.mrb[0].mxu0
  %6256 = vmatprep.mubr.bf16.mxu0 0
  %6257 = vmatmul.mubr.bf16.gmra.mrb[0].mxu0 %v6178
  %v6258 = vpop.f32.mrb[0].mxu0
  %v6259 = vadd.f32 0.0, %v6258
  %v6260 = vpop.f32.mrb[0].mxu0
  %v6261 = vpop.f32.mrb[0].mxu0
  %v6262 = vadd.f32 0.0, %v6261
  %v6263 = vpop.f32.mrb[0].mxu0
  %6264 = vmatprep.mubr.bf16.mxu0 0
  %6265 = vmatmul.mubr.bf16.gmra.mrb[0].mxu0 %v6179
  %v6266 = vpop.f32.mrb[0].mxu0
  %v6267 = vadd.f32 0.0, %v6266
  %v6268 = vpop.f32.mrb[0].mxu0
  %v6269 = vpop.f32.mrb[0].mxu0
  %v6270 = vadd.f32 0.0, %v6269
  %v6271 = vpop.f32.mrb[0].mxu0
  %6272 = vmatprep.mubr.bf16.mxu0 0
  %6273 = vmatmul.mubr.bf16.gmra.mrb[0].mxu0 %v6180
  %v6274 = vpop.f32.mrb[0].mxu0
  %v6275 = vadd.f32 0.0, %v6274
  %v6276 = vpop.f32.mrb[0].mxu0
  %v6277 = vpop.f32.mrb[0].mxu0
  %v6278 = vadd.f32 0.0, %v6277
  %v6279 = vpop.f32.mrb[0].mxu0
  %6280 = vmatprep.mubr.bf16.mxu0 0
  %6281 = vmatmul.mubr.bf16.gmra.mrb[0].mxu0 %v6181
  %v6282 = vpop.f32.mrb[0].mxu0
  %v6283 = vadd.f32 0.0, %v6282
  %v6284 = vpop.f32.mrb[0].mxu0
  %v6285 = vpop.f32.mrb[0].mxu0
  %v6286 = vadd.f32 0.0, %v6285
  %v6287 = vpop.f32.mrb[0].mxu0
  %6288 = vmatprep.mubr.bf16.mxu0 0
  %6289 = vmatmul.mubr.bf16.gmra.mrb[0].mxu0 %v6182
  %v6290 = vpop.f32.mrb[0].mxu0
  %v6291 = vadd.f32 0.0, %v6290
  %v6292 = vpop.f32.mrb[0].mxu0
  %v6293 = vpop.f32.mrb[0].mxu0
  %v6294 = vadd.f32 0.0, %v6293
  %v6295 = vpop.f32.mrb[0].mxu0
  %6296 = vmatprep.mubr.bf16.mxu0 0
  %6297 = vmatmul.mubr.bf16.gmra.mrb[0].mxu0 %v6183
  %v6298 = vpop.f32.mrb[0].mxu0
  %v6299 = vadd.f32 0.0, %v6298
  %v6300 = vpop.f32.mrb[0].mxu0
  %v6301 = vpop.f32.mrb[0].mxu0
  %v6302 = vadd.f32 0.0, %v6301
  %v6303 = vpop.f32.mrb[0].mxu0
  %6304 = vdwg.mxu0
  %6305 = vset.pattern.permute.xlu0 35
  %6306 = vperm.xlu0 %6305, %v4313
  %v6307 = vpop.permute.xlu0 %6306
  %6309 = vset.pattern.permute.xlu0 35
  %6310 = vperm.xlu0 %6309, %v4316
  %v6311 = vpop.permute.xlu0 %6310
  %6313 = vset.pattern.permute.xlu0 35
  %6314 = vperm.xlu0 %6313, %v4321
  %v6315 = vpop.permute.xlu0 %6314
  %6317 = vset.pattern.permute.xlu0 35
  %6318 = vperm.xlu0 %6317, %v4324
  %v6319 = vpop.permute.xlu0 %6318
  %6321 = vset.pattern.permute.xlu0 35
  %6322 = vperm.xlu0 %6321, %v4329
  %v6323 = vpop.permute.xlu0 %6322
  %6325 = vset.pattern.permute.xlu0 35
  %6326 = vperm.xlu0 %6325, %v4332
  %v6327 = vpop.permute.xlu0 %6326
  %6329 = vset.pattern.permute.xlu0 35
  %6330 = vperm.xlu0 %6329, %v4337
  %v6331 = vpop.permute.xlu0 %6330
  %6333 = vset.pattern.permute.xlu0 35
  %6334 = vperm.xlu0 %6333, %v4340
  %v6335 = vpop.permute.xlu0 %6334
  %6337 = vset.pattern.permute.xlu0 35
  %6338 = vperm.xlu0 %6337, %v4345
  %v6339 = vpop.permute.xlu0 %6338
  %6341 = vset.pattern.permute.xlu0 35
  %6342 = vperm.xlu0 %6341, %v4348
  %v6343 = vpop.permute.xlu0 %6342
  %6345 = vset.pattern.permute.xlu0 35
  %6346 = vperm.xlu0 %6345, %v4353
  %v6347 = vpop.permute.xlu0 %6346
  %6349 = vset.pattern.permute.xlu0 35
  %6350 = vperm.xlu0 %6349, %v4356
  %v6351 = vpop.permute.xlu0 %6350
  %6353 = vset.pattern.permute.xlu0 35
  %6354 = vperm.xlu0 %6353, %v4361
  %v6355 = vpop.permute.xlu0 %6354
  %6357 = vset.pattern.permute.xlu0 35
  %6358 = vperm.xlu0 %6357, %v4364
  %v6359 = vpop.permute.xlu0 %6358
  %6361 = vset.pattern.permute.xlu0 35
  %6362 = vperm.xlu0 %6361, %v4369
  %v6363 = vpop.permute.xlu0 %6362
  %6365 = vset.pattern.permute.xlu0 35
  %6366 = vperm.xlu0 %6365, %v4372
  %v6367 = vpop.permute.xlu0 %6366
  %v6369 = vlaneseq
  %v6370 = vshrl.u32 %v6369, 7
  %v6371 = vsub.s32 3, %v6370
  %v6372 = vrot.slane %v4455, %v6371
  %v6373 = vadd.f32 %v6307, %v6372
  %v6374 = vadd.f32 %v6311, %v6372
  %v6375 = vadd.f32 %v6315, %v6372
  %v6376 = vadd.f32 %v6319, %v6372
  %v6377 = vadd.f32 %v6323, %v6372
  %v6378 = vadd.f32 %v6327, %v6372
  %v6379 = vadd.f32 %v6331, %v6372
  %v6380 = vadd.f32 %v6335, %v6372
  %v6381 = vadd.f32 %v6339, %v6372
  %v6382 = vadd.f32 %v6343, %v6372
  %v6383 = vadd.f32 %v6347, %v6372
  %v6384 = vadd.f32 %v6351, %v6372
  %v6385 = vadd.f32 %v6355, %v6372
  %v6386 = vadd.f32 %v6359, %v6372
  %v6387 = vadd.f32 %v6363, %v6372
  %v6388 = vadd.f32 %v6367, %v6372
  %vm6389 = vcmp.gt.f32.partialorder %v6373, 0.0
  %vm6390 = vcmp.gt.f32.partialorder %v6374, 0.0
  %vm6391 = vcmp.gt.f32.partialorder %v6375, 0.0
  %vm6392 = vcmp.gt.f32.partialorder %v6376, 0.0
  %vm6393 = vcmp.gt.f32.partialorder %v6377, 0.0
  %vm6394 = vcmp.gt.f32.partialorder %v6378, 0.0
  %vm6395 = vcmp.gt.f32.partialorder %v6379, 0.0
  %vm6396 = vcmp.gt.f32.partialorder %v6380, 0.0
  %vm6397 = vcmp.gt.f32.partialorder %v6381, 0.0
  %vm6398 = vcmp.gt.f32.partialorder %v6382, 0.0
  %vm6399 = vcmp.gt.f32.partialorder %v6383, 0.0
  %vm6400 = vcmp.gt.f32.partialorder %v6384, 0.0
  %vm6401 = vcmp.gt.f32.partialorder %v6385, 0.0
  %vm6402 = vcmp.gt.f32.partialorder %v6386, 0.0
  %vm6403 = vcmp.gt.f32.partialorder %v6387, 0.0
  %vm6404 = vcmp.gt.f32.partialorder %v6388, 0.0
  %v6405 = vmul.f32 %v6373, 0.2
  %v6406 = vmul.f32 %v6374, 0.2
  %v6407 = vmul.f32 %v6375, 0.2
  %v6408 = vmul.f32 %v6376, 0.2
  %v6409 = vmul.f32 %v6377, 0.2
  %v6410 = vmul.f32 %v6378, 0.2
  %v6411 = vmul.f32 %v6379, 0.2
  %v6412 = vmul.f32 %v6380, 0.2
  %v6413 = vmul.f32 %v6381, 0.2
  %v6414 = vmul.f32 %v6382, 0.2
  %v6415 = vmul.f32 %v6383, 0.2
  %v6416 = vmul.f32 %v6384, 0.2
  %v6417 = vmul.f32 %v6385, 0.2
  %v6418 = vmul.f32 %v6386, 0.2
  %v6419 = vmul.f32 %v6387, 0.2
  %v6420 = vmul.f32 %v6388, 0.2
  %v6421 = vsel %vm6389, %v6373, %v6405
  %v6422 = vsel %vm6390, %v6374, %v6406
  %v6423 = vsel %vm6391, %v6375, %v6407
  %v6424 = vsel %vm6392, %v6376, %v6408
  %v6425 = vsel %vm6393, %v6377, %v6409
  %v6426 = vsel %vm6394, %v6378, %v6410
  %v6427 = vsel %vm6395, %v6379, %v6411
  %v6428 = vsel %vm6396, %v6380, %v6412
  %v6429 = vsel %vm6397, %v6381, %v6413
  %v6430 = vsel %vm6398, %v6382, %v6414
  %v6431 = vsel %vm6399, %v6383, %v6415
  %v6432 = vsel %vm6400, %v6384, %v6416
  %v6433 = vsel %vm6401, %v6385, %v6417
  %v6434 = vsel %vm6402, %v6386, %v6418
  %v6435 = vsel %vm6403, %v6387, %v6419
  %v6436 = vsel %vm6404, %v6388, %v6420
  %v6437 = vadd.f32 %v6421, %v66
  %v6438 = vadd.f32 %v6422, %v67
  %v6439 = vadd.f32 %v6423, %v68
  %v6440 = vadd.f32 %v6424, %v69
  %v6441 = vadd.f32 %v6425, %v70
  %v6442 = vadd.f32 %v6426, %v71
  %v6443 = vadd.f32 %v6427, %v72
  %v6444 = vadd.f32 %v6428, %v73
  %v6445 = vadd.f32 %v6429, %v74
  %v6446 = vadd.f32 %v6430, %v75
  %v6447 = vadd.f32 %v6431, %v76
  %v6448 = vadd.f32 %v6432, %v77
  %v6449 = vadd.f32 %v6433, %v78
  %v6450 = vadd.f32 %v6434, %v79
  %v6451 = vadd.f32 %v6435, %v80
  %v6452 = vadd.f32 %v6436, %v81
  %6453 = vmax.xlane.f32.xlu0 %v6437
  %v6454 = vpop.xlane.xlu0 %6453
  %6455 = vmax.xlane.f32.xlu0 %v6438
  %v6456 = vpop.xlane.xlu0 %6455
  %6457 = vmax.xlane.f32.xlu0 %v6439
  %v6458 = vpop.xlane.xlu0 %6457
  %6459 = vmax.xlane.f32.xlu0 %v6440
  %v6460 = vpop.xlane.xlu0 %6459
  %6461 = vmax.xlane.f32.xlu0 %v6441
  %v6462 = vpop.xlane.xlu0 %6461
  %6463 = vmax.xlane.f32.xlu0 %v6442
  %v6464 = vpop.xlane.xlu0 %6463
  %6465 = vmax.xlane.f32.xlu0 %v6443
  %v6466 = vpop.xlane.xlu0 %6465
  %6467 = vmax.xlane.f32.xlu0 %v6444
  %v6468 = vpop.xlane.xlu0 %6467
  %6469 = vmax.xlane.f32.xlu0 %v6445
  %v6470 = vpop.xlane.xlu0 %6469
  %6471 = vmax.xlane.f32.xlu0 %v6446
  %v6472 = vpop.xlane.xlu0 %6471
  %6473 = vmax.xlane.f32.xlu0 %v6447
  %v6474 = vpop.xlane.xlu0 %6473
  %6475 = vmax.xlane.f32.xlu0 %v6448
  %v6476 = vpop.xlane.xlu0 %6475
  %6477 = vmax.xlane.f32.xlu0 %v6449
  %v6478 = vpop.xlane.xlu0 %6477
  %6479 = vmax.xlane.f32.xlu0 %v6450
  %v6480 = vpop.xlane.xlu0 %6479
  %6481 = vmax.xlane.f32.xlu0 %v6451
  %v6482 = vpop.xlane.xlu0 %6481
  %6483 = vmax.xlane.f32.xlu0 %v6452
  %v6484 = vpop.xlane.xlu0 %6483
  %v6485 = vsub.f32 %v6437, %v6454
  %v6486 = vsub.f32 %v6438, %v6456
  %v6487 = vsub.f32 %v6439, %v6458
  %v6488 = vsub.f32 %v6440, %v6460
  %v6489 = vsub.f32 %v6441, %v6462
  %v6490 = vsub.f32 %v6442, %v6464
  %v6491 = vsub.f32 %v6443, %v6466
  %v6492 = vsub.f32 %v6444, %v6468
  %v6493 = vsub.f32 %v6445, %v6470
  %v6494 = vsub.f32 %v6446, %v6472
  %v6495 = vsub.f32 %v6447, %v6474
  %v6496 = vsub.f32 %v6448, %v6476
  %v6497 = vsub.f32 %v6449, %v6478
  %v6498 = vsub.f32 %v6450, %v6480
  %v6499 = vsub.f32 %v6451, %v6482
  %v6500 = vsub.f32 %v6452, %v6484
  %v6501 = vmul.f32 %v6485, 1.442695
  %v6502 = vpow.pop %v6501
  %v6503 = vmul.f32 %v6486, 1.442695
  %v6504 = vpow.pop %v6503
  %v6505 = vmul.f32 %v6487, 1.442695
  %v6506 = vpow.pop %v6505
  %v6507 = vmul.f32 %v6488, 1.442695
  %v6508 = vpow.pop %v6507
  %v6509 = vmul.f32 %v6489, 1.442695
  %v6510 = vpow.pop %v6509
  %v6511 = vmul.f32 %v6490, 1.442695
  %v6512 = vpow.pop %v6511
  %v6513 = vmul.f32 %v6491, 1.442695
  %v6514 = vpow.pop %v6513
  %v6515 = vmul.f32 %v6492, 1.442695
  %v6516 = vpow.pop %v6515
  %v6517 = vmul.f32 %v6493, 1.442695
  %v6518 = vpow.pop %v6517
  %v6519 = vmul.f32 %v6494, 1.442695
  %v6520 = vpow.pop %v6519
  %v6521 = vmul.f32 %v6495, 1.442695
  %v6522 = vpow.pop %v6521
  %v6523 = vmul.f32 %v6496, 1.442695
  %v6524 = vpow.pop %v6523
  %v6525 = vmul.f32 %v6497, 1.442695
  %v6526 = vpow.pop %v6525
  %v6527 = vmul.f32 %v6498, 1.442695
  %v6528 = vpow.pop %v6527
  %v6529 = vmul.f32 %v6499, 1.442695
  %v6530 = vpow.pop %v6529
  %v6531 = vmul.f32 %v6500, 1.442695
  %v6532 = vpow.pop %v6531
  %6533 = vmatprep.subr.mxu0 0.0
  %6534 = vmatpush1.msra.mxu0 %v34
  %6535 = vmatprep.subr.mxu0 0.0
  %6536 = vmatpush1.msra.mxu0 %v35
  %6537 = vmatprep.subr.mxu0 0.0
  %6538 = vmatpush1.msra.mxu0 %v36
  %6539 = vmatprep.subr.mxu0 0.0
  %6540 = vmatpush1.msra.mxu0 %v37
  %6541 = vmatprep.subr.mxu0 0.0
  %6542 = vmatpush1.msra.mxu0 %v38
  %6543 = vmatprep.subr.mxu0 0.0
  %6544 = vmatpush1.msra.mxu0 %v39
  %6545 = vmatprep.subr.mxu0 0.0
  %6546 = vmatpush1.msra.mxu0 %v40
  %6547 = vmatprep.subr.mxu0 0.0
  %6548 = vmatpush1.msra.mxu0 %v41
  %6549 = vmatprep.subr.mxu0 0.0
  %6550 = vmatpush1.msra.mxu0 %v42
  %6551 = vmatprep.subr.mxu0 0.0
  %6552 = vmatpush1.msra.mxu0 %v43
  %6553 = vmatprep.subr.mxu0 0.0
  %6554 = vmatpush1.msra.mxu0 %v44
  %6555 = vmatprep.subr.mxu0 0.0
  %6556 = vmatpush1.msra.mxu0 %v45
  %6557 = vmatprep.subr.mxu0 0.0
  %6558 = vmatpush1.msra.mxu0 %v46
  %6559 = vmatprep.subr.mxu0 0.0
  %6560 = vmatpush1.msra.mxu0 %v47
  %6561 = vmatprep.subr.mxu0 0.0
  %6562 = vmatpush1.msra.mxu0 %v48
  %6563 = vmatprep.subr.mxu0 0.0
  %6564 = vmatpush1.msra.mxu0 %v49
  %6565 = vmatprep.subr.mxu0 0.0
  %6566 = vmatpush1.msra.mxu0 0.0
  %6567 = vmatprep.subr.mxu0 0.0
  %6568 = vmatpush1.msra.mxu0 0.0
  %6569 = vmatprep.subr.mxu0 0.0
  %6570 = vmatpush1.msra.mxu0 0.0
  %6571 = vmatprep.subr.mxu0 0.0
  %6572 = vmatpush1.msra.mxu0 0.0
  %6573 = vmatprep.subr.mxu0 0.0
  %6574 = vmatpush1.msra.mxu0 0.0
  %6575 = vmatprep.subr.mxu0 0.0
  %6576 = vmatpush1.msra.mxu0 0.0
  %6577 = vmatprep.subr.mxu0 0.0
  %6578 = vmatpush1.msra.mxu0 0.0
  %6579 = vmatprep.subr.mxu0 0.0
  %6580 = vmatpush1.msra.mxu0 0.0
  %6581 = vmatprep.subr.mxu0 0.0
  %6582 = vmatpush1.msra.mxu0 0.0
  %6583 = vmatprep.subr.mxu0 0.0
  %6584 = vmatpush1.msra.mxu0 0.0
  %6585 = vmatprep.subr.mxu0 0.0
  %6586 = vmatpush1.msra.mxu0 0.0
  %6587 = vmatprep.subr.mxu0 0.0
  %6588 = vmatpush1.msra.mxu0 0.0
  %6589 = vmatprep.subr.mxu0 0.0
  %6590 = vmatpush1.msra.mxu0 0.0
  %6591 = vmatprep.subr.mxu0 0.0
  %6592 = vmatpush1.msra.mxu0 0.0
  %6593 = vmatprep.subr.mxu0 0.0
  %6594 = vmatpush1.msra.mxu0 0.0
  %6595 = vmatprep.subr.mxu0 0.0
  %6596 = vmatpush1.msra.mxu0 0.0
  %6597 = vmatprep.mubr.f32.mxu0 0.0
  %6598 = vmatmul.mubr.f32.gmra.mrb[0].mxu0 %v6502
  %v6599 = vpop.f32.mrb[0].mxu0
  %v6600 = vadd.f32 0.0, %v6599
  %v6601 = vpop.f32.mrb[0].mxu0
  %6602 = vmatprep.mubr.f32.mxu0 0.0
  %6603 = vmatmul.mubr.f32.gmra.mrb[0].mxu0 %v6504
  %v6604 = vpop.f32.mrb[0].mxu0
  %v6605 = vadd.f32 0.0, %v6604
  %v6606 = vpop.f32.mrb[0].mxu0
  %6607 = vmatprep.mubr.f32.mxu0 0.0
  %6608 = vmatmul.mubr.f32.gmra.mrb[0].mxu0 %v6506
  %v6609 = vpop.f32.mrb[0].mxu0
  %v6610 = vadd.f32 0.0, %v6609
  %v6611 = vpop.f32.mrb[0].mxu0
  %6612 = vmatprep.mubr.f32.mxu0 0.0
  %6613 = vmatmul.mubr.f32.gmra.mrb[0].mxu0 %v6508
  %v6614 = vpop.f32.mrb[0].mxu0
  %v6615 = vadd.f32 0.0, %v6614
  %v6616 = vpop.f32.mrb[0].mxu0
  %6617 = vmatprep.mubr.f32.mxu0 0.0
  %6618 = vmatmul.mubr.f32.gmra.mrb[0].mxu0 %v6510
  %v6619 = vpop.f32.mrb[0].mxu0
  %v6620 = vadd.f32 0.0, %v6619
  %v6621 = vpop.f32.mrb[0].mxu0
  %6622 = vmatprep.mubr.f32.mxu0 0.0
  %6623 = vmatmul.mubr.f32.gmra.mrb[0].mxu0 %v6512
  %v6624 = vpop.f32.mrb[0].mxu0
  %v6625 = vadd.f32 0.0, %v6624
  %v6626 = vpop.f32.mrb[0].mxu0
  %6627 = vmatprep.mubr.f32.mxu0 0.0
  %6628 = vmatmul.mubr.f32.gmra.mrb[0].mxu0 %v6514
  %v6629 = vpop.f32.mrb[0].mxu0
  %v6630 = vadd.f32 0.0, %v6629
  %v6631 = vpop.f32.mrb[0].mxu0
  %6632 = vmatprep.mubr.f32.mxu0 0.0
  %6633 = vmatmul.mubr.f32.gmra.mrb[0].mxu0 %v6516
  %v6634 = vpop.f32.mrb[0].mxu0
  %v6635 = vadd.f32 0.0, %v6634
  %v6636 = vpop.f32.mrb[0].mxu0
  %6637 = vmatprep.mubr.f32.mxu0 0.0
  %6638 = vmatmul.mubr.f32.gmra.mrb[0].mxu0 %v6518
  %v6639 = vpop.f32.mrb[0].mxu0
  %v6640 = vadd.f32 0.0, %v6639
  %v6641 = vpop.f32.mrb[0].mxu0
  %6642 = vmatprep.mubr.f32.mxu0 0.0
  %6643 = vmatmul.mubr.f32.gmra.mrb[0].mxu0 %v6520
  %v6644 = vpop.f32.mrb[0].mxu0
  %v6645 = vadd.f32 0.0, %v6644
  %v6646 = vpop.f32.mrb[0].mxu0
  %6647 = vmatprep.mubr.f32.mxu0 0.0
  %6648 = vmatmul.mubr.f32.gmra.mrb[0].mxu0 %v6522
  %v6649 = vpop.f32.mrb[0].mxu0
  %v6650 = vadd.f32 0.0, %v6649
  %v6651 = vpop.f32.mrb[0].mxu0
  %6652 = vmatprep.mubr.f32.mxu0 0.0
  %6653 = vmatmul.mubr.f32.gmra.mrb[0].mxu0 %v6524
  %v6654 = vpop.f32.mrb[0].mxu0
  %v6655 = vadd.f32 0.0, %v6654
  %v6656 = vpop.f32.mrb[0].mxu0
  %6657 = vmatprep.mubr.f32.mxu0 0.0
  %6658 = vmatmul.mubr.f32.gmra.mrb[0].mxu0 %v6526
  %v6659 = vpop.f32.mrb[0].mxu0
  %v6660 = vadd.f32 0.0, %v6659
  %v6661 = vpop.f32.mrb[0].mxu0
  %6662 = vmatprep.mubr.f32.mxu0 0.0
  %6663 = vmatmul.mubr.f32.gmra.mrb[0].mxu0 %v6528
  %v6664 = vpop.f32.mrb[0].mxu0
  %v6665 = vadd.f32 0.0, %v6664
  %v6666 = vpop.f32.mrb[0].mxu0
  %6667 = vmatprep.mubr.f32.mxu0 0.0
  %6668 = vmatmul.mubr.f32.gmra.mrb[0].mxu0 %v6530
  %v6669 = vpop.f32.mrb[0].mxu0
  %v6670 = vadd.f32 0.0, %v6669
  %v6671 = vpop.f32.mrb[0].mxu0
  %6672 = vmatprep.mubr.f32.mxu0 0.0
  %6673 = vmatmul.mubr.f32.gmra.mrb[0].mxu0 %v6532
  %v6674 = vpop.f32.mrb[0].mxu0
  %v6675 = vadd.f32 0.0, %v6674
  %v6676 = vpop.f32.mrb[0].mxu0
  %6677 = vdwg.mxu0
  %v6678 = vrcp.pop %v6600
  %v6679 = vrcp.pop %v6605
  %v6680 = vrcp.pop %v6610
  %v6681 = vrcp.pop %v6615
  %v6682 = vrcp.pop %v6620
  %v6683 = vrcp.pop %v6625
  %v6684 = vrcp.pop %v6630
  %v6685 = vrcp.pop %v6635
  %v6686 = vrcp.pop %v6640
  %v6687 = vrcp.pop %v6645
  %v6688 = vrcp.pop %v6650
  %v6689 = vrcp.pop %v6655
  %v6690 = vrcp.pop %v6660
  %v6691 = vrcp.pop %v6665
  %v6692 = vrcp.pop %v6670
  %v6693 = vrcp.pop %v6675
  %6695 = vset.pattern.permute.xlu0 0
  %6696 = vperm.xlu0 %6695, %v6678
  %v6697 = vpop.permute.xlu0 %6696
  %6700 = vset.pattern.permute.xlu0 0
  %6701 = vperm.xlu0 %6700, %v6679
  %v6702 = vpop.permute.xlu0 %6701
  %6705 = vset.pattern.permute.xlu0 0
  %6706 = vperm.xlu0 %6705, %v6680
  %v6707 = vpop.permute.xlu0 %6706
  %6710 = vset.pattern.permute.xlu0 0
  %6711 = vperm.xlu0 %6710, %v6681
  %v6712 = vpop.permute.xlu0 %6711
  %6715 = vset.pattern.permute.xlu0 0
  %6716 = vperm.xlu0 %6715, %v6682
  %v6717 = vpop.permute.xlu0 %6716
  %6720 = vset.pattern.permute.xlu0 0
  %6721 = vperm.xlu0 %6720, %v6683
  %v6722 = vpop.permute.xlu0 %6721
  %6725 = vset.pattern.permute.xlu0 0
  %6726 = vperm.xlu0 %6725, %v6684
  %v6727 = vpop.permute.xlu0 %6726
  %6730 = vset.pattern.permute.xlu0 0
  %6731 = vperm.xlu0 %6730, %v6685
  %v6732 = vpop.permute.xlu0 %6731
  %6735 = vset.pattern.permute.xlu0 0
  %6736 = vperm.xlu0 %6735, %v6686
  %v6737 = vpop.permute.xlu0 %6736
  %6740 = vset.pattern.permute.xlu0 0
  %6741 = vperm.xlu0 %6740, %v6687
  %v6742 = vpop.permute.xlu0 %6741
  %6745 = vset.pattern.permute.xlu0 0
  %6746 = vperm.xlu0 %6745, %v6688
  %v6747 = vpop.permute.xlu0 %6746
  %6750 = vset.pattern.permute.xlu0 0
  %6751 = vperm.xlu0 %6750, %v6689
  %v6752 = vpop.permute.xlu0 %6751
  %6755 = vset.pattern.permute.xlu0 0
  %6756 = vperm.xlu0 %6755, %v6690
  %v6757 = vpop.permute.xlu0 %6756
  %6760 = vset.pattern.permute.xlu0 0
  %6761 = vperm.xlu0 %6760, %v6691
  %v6762 = vpop.permute.xlu0 %6761
  %6765 = vset.pattern.permute.xlu0 0
  %6766 = vperm.xlu0 %6765, %v6692
  %v6767 = vpop.permute.xlu0 %6766
  %6770 = vset.pattern.permute.xlu0 0
  %6771 = vperm.xlu0 %6770, %v6693
  %v6772 = vpop.permute.xlu0 %6771
  %v6774 = vmul.f32 %v6502, %v6697
  %v6775 = vmul.f32 %v6504, %v6702
  %v6776 = vmul.f32 %v6506, %v6707
  %v6777 = vmul.f32 %v6508, %v6712
  %v6778 = vmul.f32 %v6510, %v6717
  %v6779 = vmul.f32 %v6512, %v6722
  %v6780 = vmul.f32 %v6514, %v6727
  %v6781 = vmul.f32 %v6516, %v6732
  %v6782 = vmul.f32 %v6518, %v6737
  %v6783 = vmul.f32 %v6520, %v6742
  %v6784 = vmul.f32 %v6522, %v6747
  %v6785 = vmul.f32 %v6524, %v6752
  %v6786 = vmul.f32 %v6526, %v6757
  %v6787 = vmul.f32 %v6528, %v6762
  %v6788 = vmul.f32 %v6530, %v6767
  %v6789 = vmul.f32 %v6532, %v6772
  %v6790 = vpack.c.bf16 %v6775, %v6774
  %v6791 = vpack.c.bf16 %v6777, %v6776
  %v6792 = vpack.c.bf16 %v6779, %v6778
  %v6793 = vpack.c.bf16 %v6781, %v6780
  %v6794 = vpack.c.bf16 %v6783, %v6782
  %v6795 = vpack.c.bf16 %v6785, %v6784
  %v6796 = vpack.c.bf16 %v6787, %v6786
  %v6797 = vpack.c.bf16 %v6789, %v6788
  %6798 = vrot.lane.b32.xlu0 %v4471, 104
  %v6799 = vpop.permute.xlu0 %6798
  %6800 = vrot.lane.b32.xlu0 %v4472, 104
  %v6801 = vpop.permute.xlu0 %6800
  %6802 = vrot.lane.b32.xlu0 %v4473, 104
  %v6803 = vpop.permute.xlu0 %6802
  %6804 = vrot.lane.b32.xlu0 %v4474, 104
  %v6805 = vpop.permute.xlu0 %6804
  %6806 = vrot.lane.b32.xlu0 %v4475, 104
  %v6807 = vpop.permute.xlu0 %6806
  %6808 = vrot.lane.b32.xlu0 %v4476, 104
  %v6809 = vpop.permute.xlu0 %6808
  %6810 = vrot.lane.b32.xlu0 %v4477, 104
  %v6811 = vpop.permute.xlu0 %6810
  %6812 = vrot.lane.b32.xlu0 %v4478, 104
  %v6813 = vpop.permute.xlu0 %6812
  %6822 = vmatprep.subr.bf16.mxu0 0
  %6823 = vmatpush1.bf16.msra.mxu0 %v6799
  %6824 = vmatprep.subr.bf16.mxu0 0
  %6825 = vmatpush1.bf16.msra.mxu0 %v6801
  %6826 = vmatprep.subr.bf16.mxu0 0
  %6827 = vmatpush1.bf16.msra.mxu0 %v6803
  %6828 = vmatprep.subr.bf16.mxu0 0
  %6829 = vmatpush1.bf16.msra.mxu0 %v6805
  %6830 = vmatprep.subr.bf16.mxu0 0
  %6831 = vmatpush1.bf16.msra.mxu0 %v6807
  %6832 = vmatprep.subr.bf16.mxu0 0
  %6833 = vmatpush1.bf16.msra.mxu0 %v6809
  %6834 = vmatprep.subr.bf16.mxu0 0
  %6835 = vmatpush1.bf16.msra.mxu0 %v6811
  %6836 = vmatprep.subr.bf16.mxu0 0
  %6837 = vmatpush1.bf16.msra.mxu0 %v6813
  %6838 = vmatprep.subr.bf16.mxu0 0
  %6839 = vmatpush1.bf16.msra.mxu0 0
  %6840 = vmatprep.subr.bf16.mxu0 0
  %6841 = vmatpush1.bf16.msra.mxu0 0
  %6842 = vmatprep.subr.bf16.mxu0 0
  %6843 = vmatpush1.bf16.msra.mxu0 0
  %6844 = vmatprep.subr.bf16.mxu0 0
  %6845 = vmatpush1.bf16.msra.mxu0 0
  %6846 = vmatprep.subr.bf16.mxu0 0
  %6847 = vmatpush1.bf16.msra.mxu0 0
  %6848 = vmatprep.subr.bf16.mxu0 0
  %6849 = vmatpush1.bf16.msra.mxu0 0
  %6850 = vmatprep.subr.bf16.mxu0 0
  %6851 = vmatpush1.bf16.msra.mxu0 0
  %6852 = vmatprep.subr.bf16.mxu0 0
  %6853 = vmatpush1.bf16.msra.mxu0 0
  %6854 = vmatprep.mubr.bf16.mxu0 0
  %6855 = vmatmul.mubr.bf16.gmra.mrb[0].mxu0 %v6790
  %v6856 = vpop.f32.mrb[0].mxu0
  %v6857 = vadd.f32 0.0, %v6856
  %v6858 = vpop.f32.mrb[0].mxu0
  %v6859 = vpop.f32.mrb[0].mxu0
  %v6860 = vadd.f32 0.0, %v6859
  %v6861 = vpop.f32.mrb[0].mxu0
  %6862 = vmatprep.mubr.bf16.mxu0 0
  %6863 = vmatmul.mubr.bf16.gmra.mrb[0].mxu0 %v6791
  %v6864 = vpop.f32.mrb[0].mxu0
  %v6865 = vadd.f32 0.0, %v6864
  %v6866 = vpop.f32.mrb[0].mxu0
  %v6867 = vpop.f32.mrb[0].mxu0
  %v6868 = vadd.f32 0.0, %v6867
  %v6869 = vpop.f32.mrb[0].mxu0
  %6870 = vmatprep.mubr.bf16.mxu0 0
  %6871 = vmatmul.mubr.bf16.gmra.mrb[0].mxu0 %v6792
  %v6872 = vpop.f32.mrb[0].mxu0
  %v6873 = vadd.f32 0.0, %v6872
  %v6874 = vpop.f32.mrb[0].mxu0
  %v6875 = vpop.f32.mrb[0].mxu0
  %v6876 = vadd.f32 0.0, %v6875
  %v6877 = vpop.f32.mrb[0].mxu0
  %6878 = vmatprep.mubr.bf16.mxu0 0
  %6879 = vmatmul.mubr.bf16.gmra.mrb[0].mxu0 %v6793
  %v6880 = vpop.f32.mrb[0].mxu0
  %v6881 = vadd.f32 0.0, %v6880
  %v6882 = vpop.f32.mrb[0].mxu0
  %v6883 = vpop.f32.mrb[0].mxu0
  %v6884 = vadd.f32 0.0, %v6883
  %v6885 = vpop.f32.mrb[0].mxu0
  %6886 = vmatprep.mubr.bf16.mxu0 0
  %6887 = vmatmul.mubr.bf16.gmra.mrb[0].mxu0 %v6794
  %v6888 = vpop.f32.mrb[0].mxu0
  %v6889 = vadd.f32 0.0, %v6888
  %v6890 = vpop.f32.mrb[0].mxu0
  %v6891 = vpop.f32.mrb[0].mxu0
  %v6892 = vadd.f32 0.0, %v6891
  %v6893 = vpop.f32.mrb[0].mxu0
  %6894 = vmatprep.mubr.bf16.mxu0 0
  %6895 = vmatmul.mubr.bf16.gmra.mrb[0].mxu0 %v6795
  %v6896 = vpop.f32.mrb[0].mxu0
  %v6897 = vadd.f32 0.0, %v6896
  %v6898 = vpop.f32.mrb[0].mxu0
  %v6899 = vpop.f32.mrb[0].mxu0
  %v6900 = vadd.f32 0.0, %v6899
  %v6901 = vpop.f32.mrb[0].mxu0
  %6902 = vmatprep.mubr.bf16.mxu0 0
  %6903 = vmatmul.mubr.bf16.gmra.mrb[0].mxu0 %v6796
  %v6904 = vpop.f32.mrb[0].mxu0
  %v6905 = vadd.f32 0.0, %v6904
  %v6906 = vpop.f32.mrb[0].mxu0
  %v6907 = vpop.f32.mrb[0].mxu0
  %v6908 = vadd.f32 0.0, %v6907
  %v6909 = vpop.f32.mrb[0].mxu0
  %6910 = vmatprep.mubr.bf16.mxu0 0
  %6911 = vmatmul.mubr.bf16.gmra.mrb[0].mxu0 %v6797
  %v6912 = vpop.f32.mrb[0].mxu0
  %v6913 = vadd.f32 0.0, %v6912
  %v6914 = vpop.f32.mrb[0].mxu0
  %v6915 = vpop.f32.mrb[0].mxu0
  %v6916 = vadd.f32 0.0, %v6915
  %v6917 = vpop.f32.mrb[0].mxu0
  %6918 = vdwg.mxu0
  %6935 = vrot.lane.b32.xlu0 %v5629, 8
  %v6936 = vpop.permute.xlu0 %6935
  %6937 = vrot.lane.b32.xlu0 %v5632, 8
  %v6938 = vpop.permute.xlu0 %6937
  %6939 = vrot.lane.b32.xlu0 %v5637, 8
  %v6940 = vpop.permute.xlu0 %6939
  %6941 = vrot.lane.b32.xlu0 %v5640, 8
  %v6942 = vpop.permute.xlu0 %6941
  %6943 = vrot.lane.b32.xlu0 %v5645, 8
  %v6944 = vpop.permute.xlu0 %6943
  %6945 = vrot.lane.b32.xlu0 %v5648, 8
  %v6946 = vpop.permute.xlu0 %6945
  %6947 = vrot.lane.b32.xlu0 %v5653, 8
  %v6948 = vpop.permute.xlu0 %6947
  %6949 = vrot.lane.b32.xlu0 %v5656, 8
  %v6950 = vpop.permute.xlu0 %6949
  %6951 = vrot.lane.b32.xlu0 %v5661, 8
  %v6952 = vpop.permute.xlu0 %6951
  %6953 = vrot.lane.b32.xlu0 %v5664, 8
  %v6954 = vpop.permute.xlu0 %6953
  %6955 = vrot.lane.b32.xlu0 %v5669, 8
  %v6956 = vpop.permute.xlu0 %6955
  %6957 = vrot.lane.b32.xlu0 %v5672, 8
  %v6958 = vpop.permute.xlu0 %6957
  %6959 = vrot.lane.b32.xlu0 %v5677, 8
  %v6960 = vpop.permute.xlu0 %6959
  %6961 = vrot.lane.b32.xlu0 %v5680, 8
  %v6962 = vpop.permute.xlu0 %6961
  %6963 = vrot.lane.b32.xlu0 %v5685, 8
  %v6964 = vpop.permute.xlu0 %6963
  %6965 = vrot.lane.b32.xlu0 %v5688, 8
  %v6966 = vpop.permute.xlu0 %6965
  %6999 = vrot.lane.b32.xlu0 %v6243, 16
  %v7000 = vpop.permute.xlu0 %6999
  %7001 = vrot.lane.b32.xlu0 %v6246, 16
  %v7002 = vpop.permute.xlu0 %7001
  %7003 = vrot.lane.b32.xlu0 %v6251, 16
  %v7004 = vpop.permute.xlu0 %7003
  %7005 = vrot.lane.b32.xlu0 %v6254, 16
  %v7006 = vpop.permute.xlu0 %7005
  %7007 = vrot.lane.b32.xlu0 %v6259, 16
  %v7008 = vpop.permute.xlu0 %7007
  %7009 = vrot.lane.b32.xlu0 %v6262, 16
  %v7010 = vpop.permute.xlu0 %7009
  %7011 = vrot.lane.b32.xlu0 %v6267, 16
  %v7012 = vpop.permute.xlu0 %7011
  %7013 = vrot.lane.b32.xlu0 %v6270, 16
  %v7014 = vpop.permute.xlu0 %7013
  %7015 = vrot.lane.b32.xlu0 %v6275, 16
  %v7016 = vpop.permute.xlu0 %7015
  %7017 = vrot.lane.b32.xlu0 %v6278, 16
  %v7018 = vpop.permute.xlu0 %7017
  %7019 = vrot.lane.b32.xlu0 %v6283, 16
  %v7020 = vpop.permute.xlu0 %7019
  %7021 = vrot.lane.b32.xlu0 %v6286, 16
  %v7022 = vpop.permute.xlu0 %7021
  %7023 = vrot.lane.b32.xlu0 %v6291, 16
  %v7024 = vpop.permute.xlu0 %7023
  %7025 = vrot.lane.b32.xlu0 %v6294, 16
  %v7026 = vpop.permute.xlu0 %7025
  %7027 = vrot.lane.b32.xlu0 %v6299, 16
  %v7028 = vpop.permute.xlu0 %7027
  %7029 = vrot.lane.b32.xlu0 %v6302, 16
  %v7030 = vpop.permute.xlu0 %7029
  %7063 = vrot.lane.b32.xlu0 %v6857, 24
  %v7064 = vpop.permute.xlu0 %7063
  %7065 = vrot.lane.b32.xlu0 %v6860, 24
  %v7066 = vpop.permute.xlu0 %7065
  %7067 = vrot.lane.b32.xlu0 %v6865, 24
  %v7068 = vpop.permute.xlu0 %7067
  %7069 = vrot.lane.b32.xlu0 %v6868, 24
  %v7070 = vpop.permute.xlu0 %7069
  %7071 = vrot.lane.b32.xlu0 %v6873, 24
  %v7072 = vpop.permute.xlu0 %7071
  %7073 = vrot.lane.b32.xlu0 %v6876, 24
  %v7074 = vpop.permute.xlu0 %7073
  %7075 = vrot.lane.b32.xlu0 %v6881, 24
  %v7076 = vpop.permute.xlu0 %7075
  %7077 = vrot.lane.b32.xlu0 %v6884, 24
  %v7078 = vpop.permute.xlu0 %7077
  %7079 = vrot.lane.b32.xlu0 %v6889, 24
  %v7080 = vpop.permute.xlu0 %7079
  %7081 = vrot.lane.b32.xlu0 %v6892, 24
  %v7082 = vpop.permute.xlu0 %7081
  %7083 = vrot.lane.b32.xlu0 %v6897, 24
  %v7084 = vpop.permute.xlu0 %7083
  %7085 = vrot.lane.b32.xlu0 %v6900, 24
  %v7086 = vpop.permute.xlu0 %7085
  %7087 = vrot.lane.b32.xlu0 %v6905, 24
  %v7088 = vpop.permute.xlu0 %7087
  %7089 = vrot.lane.b32.xlu0 %v6908, 24
  %v7090 = vpop.permute.xlu0 %7089
  %7091 = vrot.lane.b32.xlu0 %v6913, 24
  %v7092 = vpop.permute.xlu0 %7091
  %7093 = vrot.lane.b32.xlu0 %v6916, 24
  %v7094 = vpop.permute.xlu0 %7093
  %v7111 = vsel %vm3821, %v5007, %v6936
  %v7112 = vsel %vm3821, %v5010, %v6938
  %v7113 = vsel %vm3821, %v5015, %v6940
  %v7114 = vsel %vm3821, %v5018, %v6942
  %v7115 = vsel %vm3821, %v5023, %v6944
  %v7116 = vsel %vm3821, %v5026, %v6946
  %v7117 = vsel %vm3821, %v5031, %v6948
  %v7118 = vsel %vm3821, %v5034, %v6950
  %v7119 = vsel %vm3821, %v5039, %v6952
  %v7120 = vsel %vm3821, %v5042, %v6954
  %v7121 = vsel %vm3821, %v5047, %v6956
  %v7122 = vsel %vm3821, %v5050, %v6958
  %v7123 = vsel %vm3821, %v5055, %v6960
  %v7124 = vsel %vm3821, %v5058, %v6962
  %v7125 = vsel %vm3821, %v5063, %v6964
  %v7126 = vsel %vm3821, %v5066, %v6966
  %v7127 = vsel %vm151, %v7111, %v7000
  %v7128 = vsel %vm151, %v7112, %v7002
  %v7129 = vsel %vm151, %v7113, %v7004
  %v7130 = vsel %vm151, %v7114, %v7006
  %v7131 = vsel %vm151, %v7115, %v7008
  %v7132 = vsel %vm151, %v7116, %v7010
  %v7133 = vsel %vm151, %v7117, %v7012
  %v7134 = vsel %vm151, %v7118, %v7014
  %v7135 = vsel %vm151, %v7119, %v7016
  %v7136 = vsel %vm151, %v7120, %v7018
  %v7137 = vsel %vm151, %v7121, %v7020
  %v7138 = vsel %vm151, %v7122, %v7022
  %v7139 = vsel %vm151, %v7123, %v7024
  %v7140 = vsel %vm151, %v7124, %v7026
  %v7141 = vsel %vm151, %v7125, %v7028
  %v7142 = vsel %vm151, %v7126, %v7030
  %v7143 = vsel %vm3854, %v7127, %v7064
  %v7144 = vsel %vm3854, %v7128, %v7066
  %v7145 = vsel %vm3854, %v7129, %v7068
  %v7146 = vsel %vm3854, %v7130, %v7070
  %v7147 = vsel %vm3854, %v7131, %v7072
  %v7148 = vsel %vm3854, %v7132, %v7074
  %v7149 = vsel %vm3854, %v7133, %v7076
  %v7150 = vsel %vm3854, %v7134, %v7078
  %v7151 = vsel %vm3854, %v7135, %v7080
  %v7152 = vsel %vm3854, %v7136, %v7082
  %v7153 = vsel %vm3854, %v7137, %v7084
  %v7154 = vsel %vm3854, %v7138, %v7086
  %v7155 = vsel %vm3854, %v7139, %v7088
  %v7156 = vsel %vm3854, %v7140, %v7090
  %v7157 = vsel %vm3854, %v7141, %v7092
  %v7158 = vsel %vm3854, %v7142, %v7094
  %v7159 = vld [vmem:[%s8 + $0x9] sm:$0x1]
  %v7160 = vlaneseq
  %v7161 = vshrl.u32 %v7160, 7
  %v7162 = vsub.s32 0, %v7161
  %v7163 = vrot.slane %v7159, %v7162
  %v7164 = vadd.f32 %v7143, %v7163
  %v7165 = vadd.f32 %v7144, %v7163
  %v7166 = vadd.f32 %v7145, %v7163
  %v7167 = vadd.f32 %v7146, %v7163
  %v7168 = vadd.f32 %v7147, %v7163
  %v7169 = vadd.f32 %v7148, %v7163
  %v7170 = vadd.f32 %v7149, %v7163
  %v7171 = vadd.f32 %v7150, %v7163
  %v7172 = vadd.f32 %v7151, %v7163
  %v7173 = vadd.f32 %v7152, %v7163
  %v7174 = vadd.f32 %v7153, %v7163
  %v7175 = vadd.f32 %v7154, %v7163
  %v7176 = vadd.f32 %v7155, %v7163
  %v7177 = vadd.f32 %v7156, %v7163
  %v7178 = vadd.f32 %v7157, %v7163
  %v7179 = vadd.f32 %v7158, %v7163
  %7180 = vmatprep.subr.mxu0 0.0
  %7181 = vmatpush1.msra.mxu0 %v7164
  %7182 = vmatprep.subr.mxu0 0.0
  %7183 = vmatpush1.msra.mxu0 %v7165
  %7184 = vmatprep.subr.mxu0 0.0
  %7185 = vmatpush1.msra.mxu0 %v7166
  %7186 = vmatprep.subr.mxu0 0.0
  %7187 = vmatpush1.msra.mxu0 %v7167
  %7188 = vmatprep.subr.mxu0 0.0
  %7189 = vmatpush1.msra.mxu0 %v7168
  %7190 = vmatprep.subr.mxu0 0.0
  %7191 = vmatpush1.msra.mxu0 %v7169
  %7192 = vmatprep.subr.mxu0 0.0
  %7193 = vmatpush1.msra.mxu0 %v7170
  %7194 = vmatprep.subr.mxu0 0.0
  %7195 = vmatpush1.msra.mxu0 %v7171
  %7196 = vmatprep.subr.mxu0 0.0
  %7197 = vmatpush1.msra.mxu0 %v7172
  %7198 = vmatprep.subr.mxu0 0.0
  %7199 = vmatpush1.msra.mxu0 %v7173
  %7200 = vmatprep.subr.mxu0 0.0
  %7201 = vmatpush1.msra.mxu0 %v7174
  %7202 = vmatprep.subr.mxu0 0.0
  %7203 = vmatpush1.msra.mxu0 %v7175
  %7204 = vmatprep.subr.mxu0 0.0
  %7205 = vmatpush1.msra.mxu0 %v7176
  %7206 = vmatprep.subr.mxu0 0.0
  %7207 = vmatpush1.msra.mxu0 %v7177
  %7208 = vmatprep.subr.mxu0 0.0
  %7209 = vmatpush1.msra.mxu0 %v7178
  %7210 = vmatprep.subr.mxu0 0.0
  %7211 = vmatpush1.msra.mxu0 %v7179
  %7212 = vmatprep.subr.mxu0 0.0
  %7213 = vmatpush1.msra.mxu0 0.0
  %7214 = vmatprep.subr.mxu0 0.0
  %7215 = vmatpush1.msra.mxu0 0.0
  %7216 = vmatprep.subr.mxu0 0.0
  %7217 = vmatpush1.msra.mxu0 0.0
  %7218 = vmatprep.subr.mxu0 0.0
  %7219 = vmatpush1.msra.mxu0 0.0
  %7220 = vmatprep.subr.mxu0 0.0
  %7221 = vmatpush1.msra.mxu0 0.0
  %7222 = vmatprep.subr.mxu0 0.0
  %7223 = vmatpush1.msra.mxu0 0.0
  %7224 = vmatprep.subr.mxu0 0.0
  %7225 = vmatpush1.msra.mxu0 0.0
  %7226 = vmatprep.subr.mxu0 0.0
  %7227 = vmatpush1.msra.mxu0 0.0
  %7228 = vmatprep.subr.mxu0 0.0
  %7229 = vmatpush1.msra.mxu0 0.0
  %7230 = vmatprep.subr.mxu0 0.0
  %7231 = vmatpush1.msra.mxu0 0.0
  %7232 = vmatprep.subr.mxu0 0.0
  %7233 = vmatpush1.msra.mxu0 0.0
  %7234 = vmatprep.subr.mxu0 0.0
  %7235 = vmatpush1.msra.mxu0 0.0
  %7236 = vmatprep.subr.mxu0 0.0
  %7237 = vmatpush1.msra.mxu0 0.0
  %7238 = vmatprep.subr.mxu0 0.0
  %7239 = vmatpush1.msra.mxu0 0.0
  %7240 = vmatprep.subr.mxu0 0.0
  %7241 = vmatpush1.msra.mxu0 0.0
  %7242 = vmatprep.subr.mxu0 0.0
  %7243 = vmatpush1.msra.mxu0 0.0
  %7244 = vmatprep.mubr.f32.mxu0 0.0
  %7245 = vmatmul.mubr.f32.gmra.mrb[0].mxu0 %v33
  %v7246 = vpop.f32.mrb[0].mxu0
  %v7247 = vadd.f32 0.0, %v7246
  %v7248 = vpop.f32.mrb[0].mxu0
  %7249 = vdwg.mxu0
  %v7250 = vmul.f32 %v7164, %v7164
  %v7251 = vmul.f32 %v7165, %v7165
  %v7252 = vmul.f32 %v7166, %v7166
  %v7253 = vmul.f32 %v7167, %v7167
  %v7254 = vmul.f32 %v7168, %v7168
  %v7255 = vmul.f32 %v7169, %v7169
  %v7256 = vmul.f32 %v7170, %v7170
  %v7257 = vmul.f32 %v7171, %v7171
  %v7258 = vmul.f32 %v7172, %v7172
  %v7259 = vmul.f32 %v7173, %v7173
  %v7260 = vmul.f32 %v7174, %v7174
  %v7261 = vmul.f32 %v7175, %v7175
  %v7262 = vmul.f32 %v7176, %v7176
  %v7263 = vmul.f32 %v7177, %v7177
  %v7264 = vmul.f32 %v7178, %v7178
  %v7265 = vmul.f32 %v7179, %v7179
  %7266 = vmatprep.subr.mxu0 0.0
  %7267 = vmatpush1.msra.mxu0 %v7250
  %7268 = vmatprep.subr.mxu0 0.0
  %7269 = vmatpush1.msra.mxu0 %v7251
  %7270 = vmatprep.subr.mxu0 0.0
  %7271 = vmatpush1.msra.mxu0 %v7252
  %7272 = vmatprep.subr.mxu0 0.0
  %7273 = vmatpush1.msra.mxu0 %v7253
  %7274 = vmatprep.subr.mxu0 0.0
  %7275 = vmatpush1.msra.mxu0 %v7254
  %7276 = vmatprep.subr.mxu0 0.0
  %7277 = vmatpush1.msra.mxu0 %v7255
  %7278 = vmatprep.subr.mxu0 0.0
  %7279 = vmatpush1.msra.mxu0 %v7256
  %7280 = vmatprep.subr.mxu0 0.0
  %7281 = vmatpush1.msra.mxu0 %v7257
  %7282 = vmatprep.subr.mxu0 0.0
  %7283 = vmatpush1.msra.mxu0 %v7258
  %7284 = vmatprep.subr.mxu0 0.0
  %7285 = vmatpush1.msra.mxu0 %v7259
  %7286 = vmatprep.subr.mxu0 0.0
  %7287 = vmatpush1.msra.mxu0 %v7260
  %7288 = vmatprep.subr.mxu0 0.0
  %7289 = vmatpush1.msra.mxu0 %v7261
  %7290 = vmatprep.subr.mxu0 0.0
  %7291 = vmatpush1.msra.mxu0 %v7262
  %7292 = vmatprep.subr.mxu0 0.0
  %7293 = vmatpush1.msra.mxu0 %v7263
  %7294 = vmatprep.subr.mxu0 0.0
  %7295 = vmatpush1.msra.mxu0 %v7264
  %7296 = vmatprep.subr.mxu0 0.0
  %7297 = vmatpush1.msra.mxu0 %v7265
  %7298 = vmatprep.subr.mxu0 0.0
  %7299 = vmatpush1.msra.mxu0 0.0
  %7300 = vmatprep.subr.mxu0 0.0
  %7301 = vmatpush1.msra.mxu0 0.0
  %7302 = vmatprep.subr.mxu0 0.0
  %7303 = vmatpush1.msra.mxu0 0.0
  %7304 = vmatprep.subr.mxu0 0.0
  %7305 = vmatpush1.msra.mxu0 0.0
  %7306 = vmatprep.subr.mxu0 0.0
  %7307 = vmatpush1.msra.mxu0 0.0
  %7308 = vmatprep.subr.mxu0 0.0
  %7309 = vmatpush1.msra.mxu0 0.0
  %7310 = vmatprep.subr.mxu0 0.0
  %7311 = vmatpush1.msra.mxu0 0.0
  %7312 = vmatprep.subr.mxu0 0.0
  %7313 = vmatpush1.msra.mxu0 0.0
  %7314 = vmatprep.subr.mxu0 0.0
  %7315 = vmatpush1.msra.mxu0 0.0
  %7316 = vmatprep.subr.mxu0 0.0
  %7317 = vmatpush1.msra.mxu0 0.0
  %7318 = vmatprep.subr.mxu0 0.0
  %7319 = vmatpush1.msra.mxu0 0.0
  %7320 = vmatprep.subr.mxu0 0.0
  %7321 = vmatpush1.msra.mxu0 0.0
  %7322 = vmatprep.subr.mxu0 0.0
  %7323 = vmatpush1.msra.mxu0 0.0
  %7324 = vmatprep.subr.mxu0 0.0
  %7325 = vmatpush1.msra.mxu0 0.0
  %7326 = vmatprep.subr.mxu0 0.0
  %7327 = vmatpush1.msra.mxu0 0.0
  %7328 = vmatprep.subr.mxu0 0.0
  %7329 = vmatpush1.msra.mxu0 0.0
  %7330 = vmatprep.mubr.f32.mxu0 0.0
  %7331 = vmatmul.mubr.f32.gmra.mrb[0].mxu0 %v33
  %v7332 = vpop.f32.mrb[0].mxu0
  %v7333 = vadd.f32 0.0, %v7332
  %v7334 = vpop.f32.mrb[0].mxu0
  %7335 = vdwg.mxu0
  %v7336 = vmul.f32 %v7247, %v7247
  %v7337 = vsub.f32 %v7333, %v7336
  %v7338 = vlaneseq
  %v7339 = vshrl.u32 %v7338, 7
  %v7340 = vsub.s32 0, %v7339
  %v7341 = vrot.slane %v7247, %v7340
  %v7342 = vsub.f32 %v7164, %v7341
  %v7343 = vsub.f32 %v7165, %v7341
  %v7344 = vsub.f32 %v7166, %v7341
  %v7345 = vsub.f32 %v7167, %v7341
  %v7346 = vsub.f32 %v7168, %v7341
  %v7347 = vsub.f32 %v7169, %v7341
  %v7348 = vsub.f32 %v7170, %v7341
  %v7349 = vsub.f32 %v7171, %v7341
  %v7350 = vsub.f32 %v7172, %v7341
  %v7351 = vsub.f32 %v7173, %v7341
  %v7352 = vsub.f32 %v7174, %v7341
  %v7353 = vsub.f32 %v7175, %v7341
  %v7354 = vsub.f32 %v7176, %v7341
  %v7355 = vsub.f32 %v7177, %v7341
  %v7356 = vsub.f32 %v7178, %v7341
  %v7357 = vsub.f32 %v7179, %v7341
  %v7358 = vadd.f32 %v7337, 1e-05
  %v7359 = vrsqrt.pop %v7358
  %v7360 = vlaneseq
  %v7361 = vshrl.u32 %v7360, 7
  %v7362 = vsub.s32 0, %v7361
  %v7363 = vrot.slane %v7359, %v7362
  %v7364 = vmul.f32 %v7342, %v7363
  %v7365 = vmul.f32 %v7343, %v7363
  %v7366 = vmul.f32 %v7344, %v7363
  %v7367 = vmul.f32 %v7345, %v7363
  %v7368 = vmul.f32 %v7346, %v7363
  %v7369 = vmul.f32 %v7347, %v7363
  %v7370 = vmul.f32 %v7348, %v7363
  %v7371 = vmul.f32 %v7349, %v7363
  %v7372 = vmul.f32 %v7350, %v7363
  %v7373 = vmul.f32 %v7351, %v7363
  %v7374 = vmul.f32 %v7352, %v7363
  %v7375 = vmul.f32 %v7353, %v7363
  %v7376 = vmul.f32 %v7354, %v7363
  %v7377 = vmul.f32 %v7355, %v7363
  %v7378 = vmul.f32 %v7356, %v7363
  %v7379 = vmul.f32 %v7357, %v7363
  %v7380 = vld [vmem:[%s8 + $0xa] sm:$0x1]
  %v7381 = vlaneseq
  %v7382 = vshrl.u32 %v7381, 7
  %v7383 = vsub.s32 0, %v7382
  %v7384 = vrot.slane %v7380, %v7383
  %v7385 = vmul.f32 %v7364, %v7384
  %v7386 = vmul.f32 %v7365, %v7384
  %v7387 = vmul.f32 %v7366, %v7384
  %v7388 = vmul.f32 %v7367, %v7384
  %v7389 = vmul.f32 %v7368, %v7384
  %v7390 = vmul.f32 %v7369, %v7384
  %v7391 = vmul.f32 %v7370, %v7384
  %v7392 = vmul.f32 %v7371, %v7384
  %v7393 = vmul.f32 %v7372, %v7384
  %v7394 = vmul.f32 %v7373, %v7384
  %v7395 = vmul.f32 %v7374, %v7384
  %v7396 = vmul.f32 %v7375, %v7384
  %v7397 = vmul.f32 %v7376, %v7384
  %v7398 = vmul.f32 %v7377, %v7384
  %v7399 = vmul.f32 %v7378, %v7384
  %v7400 = vmul.f32 %v7379, %v7384
  %v7401 = vld [vmem:[%s8 + $0xb] sm:$0x1]
  %v7402 = vlaneseq
  %v7403 = vshrl.u32 %v7402, 7
  %v7404 = vsub.s32 0, %v7403
  %v7405 = vrot.slane %v7401, %v7404
  %v7406 = vadd.f32 %v7385, %v7405
  %v7407 = vadd.f32 %v7386, %v7405
  %v7408 = vadd.f32 %v7387, %v7405
  %v7409 = vadd.f32 %v7388, %v7405
  %v7410 = vadd.f32 %v7389, %v7405
  %v7411 = vadd.f32 %v7390, %v7405
  %v7412 = vadd.f32 %v7391, %v7405
  %v7413 = vadd.f32 %v7392, %v7405
  %v7414 = vadd.f32 %v7393, %v7405
  %v7415 = vadd.f32 %v7394, %v7405
  %v7416 = vadd.f32 %v7395, %v7405
  %v7417 = vadd.f32 %v7396, %v7405
  %v7418 = vadd.f32 %v7397, %v7405
  %v7419 = vadd.f32 %v7398, %v7405
  %v7420 = vadd.f32 %v7399, %v7405
  %v7421 = vadd.f32 %v7400, %v7405
  %vm7422 = vcmp.gt.f32.partialorder %v7406, 0.0
  %vm7423 = vcmp.gt.f32.partialorder %v7407, 0.0
  %vm7424 = vcmp.gt.f32.partialorder %v7408, 0.0
  %vm7425 = vcmp.gt.f32.partialorder %v7409, 0.0
  %vm7426 = vcmp.gt.f32.partialorder %v7410, 0.0
  %vm7427 = vcmp.gt.f32.partialorder %v7411, 0.0
  %vm7428 = vcmp.gt.f32.partialorder %v7412, 0.0
  %vm7429 = vcmp.gt.f32.partialorder %v7413, 0.0
  %vm7430 = vcmp.gt.f32.partialorder %v7414, 0.0
  %vm7431 = vcmp.gt.f32.partialorder %v7415, 0.0
  %vm7432 = vcmp.gt.f32.partialorder %v7416, 0.0
  %vm7433 = vcmp.gt.f32.partialorder %v7417, 0.0
  %vm7434 = vcmp.gt.f32.partialorder %v7418, 0.0
  %vm7435 = vcmp.gt.f32.partialorder %v7419, 0.0
  %vm7436 = vcmp.gt.f32.partialorder %v7420, 0.0
  %vm7437 = vcmp.gt.f32.partialorder %v7421, 0.0
  %v7438 = vmin.f32 %v7406, 0.0
  %v7439 = vmin.f32 %v7407, 0.0
  %v7440 = vmin.f32 %v7408, 0.0
  %v7441 = vmin.f32 %v7409, 0.0
  %v7442 = vmin.f32 %v7410, 0.0
  %v7443 = vmin.f32 %v7411, 0.0
  %v7444 = vmin.f32 %v7412, 0.0
  %v7445 = vmin.f32 %v7413, 0.0
  %v7446 = vmin.f32 %v7414, 0.0
  %v7447 = vmin.f32 %v7415, 0.0
  %v7448 = vmin.f32 %v7416, 0.0
  %v7449 = vmin.f32 %v7417, 0.0
  %v7450 = vmin.f32 %v7418, 0.0
  %v7451 = vmin.f32 %v7419, 0.0
  %v7452 = vmin.f32 %v7420, 0.0
  %v7453 = vmin.f32 %v7421, 0.0
  %v7454 = vmul.f32 %v7438, 1.442695
  %v7455 = vpow.pop %v7454
  %v7456 = vmul.f32 %v7439, 1.442695
  %v7457 = vpow.pop %v7456
  %v7458 = vmul.f32 %v7440, 1.442695
  %v7459 = vpow.pop %v7458
  %v7460 = vmul.f32 %v7441, 1.442695
  %v7461 = vpow.pop %v7460
  %v7462 = vmul.f32 %v7442, 1.442695
  %v7463 = vpow.pop %v7462
  %v7464 = vmul.f32 %v7443, 1.442695
  %v7465 = vpow.pop %v7464
  %v7466 = vmul.f32 %v7444, 1.442695
  %v7467 = vpow.pop %v7466
  %v7468 = vmul.f32 %v7445, 1.442695
  %v7469 = vpow.pop %v7468
  %v7470 = vmul.f32 %v7446, 1.442695
  %v7471 = vpow.pop %v7470
  %v7472 = vmul.f32 %v7447, 1.442695
  %v7473 = vpow.pop %v7472
  %v7474 = vmul.f32 %v7448, 1.442695
  %v7475 = vpow.pop %v7474
  %v7476 = vmul.f32 %v7449, 1.442695
  %v7477 = vpow.pop %v7476
  %v7478 = vmul.f32 %v7450, 1.442695
  %v7479 = vpow.pop %v7478
  %v7480 = vmul.f32 %v7451, 1.442695
  %v7481 = vpow.pop %v7480
  %v7482 = vmul.f32 %v7452, 1.442695
  %v7483 = vpow.pop %v7482
  %v7484 = vmul.f32 %v7453, 1.442695
  %v7485 = vpow.pop %v7484
  %v7486 = vsub.f32 %v7455, 1.0
  %v7487 = vsub.f32 %v7457, 1.0
  %v7488 = vsub.f32 %v7459, 1.0
  %v7489 = vsub.f32 %v7461, 1.0
  %v7490 = vsub.f32 %v7463, 1.0
  %v7491 = vsub.f32 %v7465, 1.0
  %v7492 = vsub.f32 %v7467, 1.0
  %v7493 = vsub.f32 %v7469, 1.0
  %v7494 = vsub.f32 %v7471, 1.0
  %v7495 = vsub.f32 %v7473, 1.0
  %v7496 = vsub.f32 %v7475, 1.0
  %v7497 = vsub.f32 %v7477, 1.0
  %v7498 = vsub.f32 %v7479, 1.0
  %v7499 = vsub.f32 %v7481, 1.0
  %v7500 = vsub.f32 %v7483, 1.0
  %v7501 = vsub.f32 %v7485, 1.0
  %v7502 = vsel %vm7422, %v7406, %v7486
  %v7503 = vsel %vm7423, %v7407, %v7487
  %v7504 = vsel %vm7424, %v7408, %v7488
  %v7505 = vsel %vm7425, %v7409, %v7489
  %v7506 = vsel %vm7426, %v7410, %v7490
  %v7507 = vsel %vm7427, %v7411, %v7491
  %v7508 = vsel %vm7428, %v7412, %v7492
  %v7509 = vsel %vm7429, %v7413, %v7493
  %v7510 = vsel %vm7430, %v7414, %v7494
  %v7511 = vsel %vm7431, %v7415, %v7495
  %v7512 = vsel %vm7432, %v7416, %v7496
  %v7513 = vsel %vm7433, %v7417, %v7497
  %v7514 = vsel %vm7434, %v7418, %v7498
  %v7515 = vsel %vm7435, %v7419, %v7499
  %v7516 = vsel %vm7436, %v7420, %v7500
  %v7517 = vsel %vm7437, %v7421, %v7501
  %7518 = vst.msk [vmem:[%s9] sm:$0xff] %vm560, %v7502
  %7519 = vst.msk [vmem:[%s9 + $0x8] sm:$0xff] %vm560, %v7503
  %7520 = vst.msk [vmem:[%s9 + $0x10] sm:$0xff] %vm560, %v7504
  %7521 = vst.msk [vmem:[%s9 + $0x18] sm:$0xff] %vm560, %v7505
  %7522 = vst.msk [vmem:[%s9 + $0x20] sm:$0xff] %vm560, %v7506
  %7523 = vst.msk [vmem:[%s9 + $0x28] sm:$0xff] %vm560, %v7507
  %7524 = vst.msk [vmem:[%s9 + $0x30] sm:$0xff] %vm560, %v7508
  %7525 = vst.msk [vmem:[%s9 + $0x38] sm:$0xff] %vm560, %v7509
  %7526 = vst.msk [vmem:[%s9 + $0x40] sm:$0xff] %vm560, %v7510
  %7527 = vst.msk [vmem:[%s9 + $0x48] sm:$0xff] %vm560, %v7511
  %7528 = vst.msk [vmem:[%s9 + $0x50] sm:$0xff] %vm560, %v7512
  %7529 = vst.msk [vmem:[%s9 + $0x58] sm:$0xff] %vm560, %v7513
  %7530 = vst.msk [vmem:[%s9 + $0x60] sm:$0xff] %vm560, %v7514
  %7531 = vst.msk [vmem:[%s9 + $0x68] sm:$0xff] %vm560, %v7515
  %7532 = vst.msk [vmem:[%s9 + $0x70] sm:$0xff] %vm560, %v7516
  %7533 = vst.msk [vmem:[%s9 + $0x78] sm:$0xff] %vm560, %v7517
  // Predicated region
  $region38: #{temporal_gat_forward.1} parent=0 // pred_check
    _
  $region39: #{temporal_gat_forward.1} parent=0 // pred_check_branch
    %7535 = sbr.rel (0) target = $region41
  $region40: #{temporal_gat_forward.1} parent=0 // pred_region
    _
  $region41: #{temporal_gat_forward.1} parent=0 // pred_fallthru
    _
  // Predicated region
  $region42: #{temporal_gat_forward.1} parent=0 // pred_check
    _
  $region43: #{temporal_gat_forward.1} parent=0 // pred_check_branch
    %7537 = sbr.rel (0) target = $region45
  $region44: #{temporal_gat_forward.1} parent=0 // pred_region
    _
  $region45: #{temporal_gat_forward.1} parent=0 // pred_fallthru
    _

</llo_original>
